<compile_context>
chip_gen: v6e
topology: v6e:2x2x1
jax: 0.10.0
libtpu: 0.0.40
codegen_flags: <defaults>
</compile_context>

<pallas_src>
import functools
import math

import jax
import jax.numpy as jnp
from jax import lax
from jax.experimental import pallas as pl
from jax.experimental.pallas import tpu as pltpu

_EPS = 1e-5      # nn.InstanceNorm2d default eps (affine=False, no running stats)
_LANE = 128      # TPU lane width == Cout block size


# ------------------------------------------------------------------ Pallas kernel

def _conv3x3_in_kernel(x_ref, w_ref, *rest, mode, row_chunk):
    """Fused 3x3 conv + InstanceNorm (+ReLU&reflect-pad | +residual) for one
    (sample, Cout-block) grid step.

    x_ref : (1, H+2, W+2, Cin) bf16   reflection-padded input tile (full Cin)
    w_ref : (9, Cin, Cb)       bf16   conv taps of this Cout block, [ki*3+kj]
    mode == "pad_relu":
        o_ref : (1, H+2, W+2, Cb) bf16  ReLU(IN(conv)) with reflected border
    mode == "residual":
        r_ref : (1, H*W, Cb) f32        residual (block input x)
        o_ref : (1, H*W, Cb) f32        residual + IN(conv)
    y_buf            : (H*W, Cb) bf16   VMEM scratch, pre-norm conv result
    sum_ref, ssq_ref : (1, Cb)   f32    InstanceNorm statistics accumulators
    """
    if mode == "residual":
        r_ref, o_ref, y_buf, sum_ref, ssq_ref = rest
    else:
        o_ref, y_buf, sum_ref, ssq_ref = rest
        r_ref = None

    Hp, Wp, Cin = x_ref.shape[1], x_ref.shape[2], x_ref.shape[3]
    Cb = w_ref.shape[2]
    H, W = Hp - 2, Wp - 2
    P = H * W
    TR = row_chunk
    n_chunks = H // TR

    sum_ref[...] = jnp.zeros_like(sum_ref)
    ssq_ref[...] = jnp.zeros_like(ssq_ref)

    # ---- pass 1: 9 shifted MXU matmuls per row chunk (f32 acc, vreg-sized),
    #      IN statistics in f32, pre-norm result staged in bf16 VMEM scratch.
    @pl.loop(0, n_chunks)
    def _(c):
        r0 = pl.multiple_of(c * TR, TR)
        lo = pl.multiple_of(c * (TR * W), TR * W)
        acc = jnp.zeros((TR * W, Cb), jnp.float32)
        for ki in range(3):
            for kj in range(3):
                xt = x_ref[0, pl.ds(r0 + ki, TR), kj:kj + W, :]
                xt = xt.reshape(TR * W, Cin)
                acc = acc + jnp.dot(xt, w_ref[ki * 3 + kj],
                                    preferred_element_type=jnp.float32)
        sum_ref[...] += jnp.sum(acc, axis=0, keepdims=True)
        ssq_ref[...] += jnp.sum(acc * acc, axis=0, keepdims=True)
        y_buf[pl.ds(lo, TR * W), :] = acc.astype(y_buf.dtype)

    inv_p = 1.0 / P
    mean = sum_ref[...] * inv_p
    var = jnp.maximum(ssq_ref[...] * inv_p - mean * mean, 0.0)   # biased, as torch
    scale = lax.rsqrt(var + _EPS)

    # ---- pass 2: normalize + activation / residual, write output ----
    @pl.loop(0, n_chunks)
    def _(c):
        r0 = pl.multiple_of(c * TR, TR)
        lo = pl.multiple_of(c * (TR * W), TR * W)
        y = (y_buf[pl.ds(lo, TR * W), :].astype(jnp.float32) - mean) * scale
        if mode == "pad_relu":
            yr = jnp.maximum(y, 0.0).reshape(TR, W, Cb)
            # reflected left/right columns fused into the row-band store
            row = jnp.concatenate([yr[:, 1:2, :], yr, yr[:, W - 2:W - 1, :]],
                                  axis=1)
            o_ref[0, pl.ds(r0 + 1, TR), :, :] = row.astype(o_ref.dtype)
        else:
            y = y + r_ref[0, pl.ds(lo, TR * W), :]
            o_ref[0, pl.ds(lo, TR * W), :] = y.astype(o_ref.dtype)

    if mode == "pad_relu":
        # reflected top/bottom rows (columns already reflected in each band)
        o_ref[0, 0, :, :] = o_ref[0, 2, :, :]
        o_ref[0, Hp - 1, :, :] = o_ref[0, Hp - 3, :, :]


# ------------------------------------------------------------------ wrapper

def _pick_row_chunk(H, W, Cb, budget_bytes=64 * 1024):
    """Largest divisor of H whose f32 accumulator (TR*W, Cb) stays vreg-sized."""
    tr = max(1, min(H, budget_bytes // (W * Cb * 4)))
    while H % tr:
        tr -= 1
    return tr


def _vmem_limit_bytes(Hp, Wp, Cin, Cb, mode):
    """Raise the scoped-VMEM limit only when the per-step tiles need it.
    Double-count only the pipeline-buffered blocks (inputs/outputs/weights),
    count resident scratch once, and cap below v7x's 64 MiB physical VMEM."""
    H, W = Hp - 2, Wp - 2
    P = H * W
    x_t = Hp * Wp * Cin * 2                       # bf16 padded input tile
    w_t = 9 * Cin * Cb * 2                        # bf16 weight block
    if mode == "residual":
        io_t = 2 * P * Cb * 4                     # f32 residual + f32 output
    else:
        io_t = Hp * Wp * Cb * 2                   # bf16 padded output tile
    scratch = P * Cb * 2 + 2 * 4 * Cb             # bf16 y_buf + stat scratch
    need = 2 * (x_t + w_t + io_t) + scratch + (1 << 20)
    if need <= 12 * 1024 * 1024:
        return None                               # defaults fine (even on v5e)
    return min(need + (4 << 20), 48 * 1024 * 1024)


def fused_conv3x3_instnorm(x_pad, w9, *, mode, residual=None):
    """x_pad: (N, H+2, W+2, Cin) bf16 reflection-padded NHWC activations.
    w9: (9, Cin, Cout) bf16 with w9[ki*3+kj] == w[ki, kj].
    mode == "pad_relu": returns (N, H+2, W+2, Cout) bf16 = reflpad1(ReLU(IN(conv)))
    mode == "residual": returns (N, H*W, Cout) f32 = residual + IN(conv)."""
    N, Hp, Wp, Cin = x_pad.shape
    Cout = w9.shape[2]
    H, W = Hp - 2, Wp - 2
    P = H * W
    Cb = _LANE
    assert Cout % Cb == 0 and Cin % Cb == 0
    ncb = Cout // Cb
    TR = _pick_row_chunk(H, W, Cb)

    in_specs = [
        pl.BlockSpec((1, Hp, Wp, Cin), lambda n, cb: (n, 0, 0, 0)),
        pl.BlockSpec((9, Cin, Cb), lambda n, cb: (0, 0, cb)),
    ]
    args = [x_pad, w9]
    io_aliases = {}
    if mode == "residual":
        in_specs.append(pl.BlockSpec((1, P, Cb), lambda n, cb: (n, 0, cb)))
        args.append(residual)
        io_aliases = {2: 0}   # residual is dead after the add -> reuse its buffer
        out_shape = jax.ShapeDtypeStruct((N, P, Cout), jnp.float32)
        out_spec = pl.BlockSpec((1, P, Cb), lambda n, cb: (n, 0, cb))
    else:
        out_shape = jax.ShapeDtypeStruct((N, Hp, Wp, Cout), jnp.bfloat16)
        out_spec = pl.BlockSpec((1, Hp, Wp, Cb), lambda n, cb: (n, 0, 0, cb))

    kernel = functools.partial(_conv3x3_in_kernel, mode=mode, row_chunk=TR)
    return pl.pallas_call(
        kernel,
        out_shape=out_shape,
        grid=(N, ncb),
        in_specs=in_specs,
        out_specs=out_spec,
        scratch_shapes=[pltpu.VMEM((P, Cb), jnp.bfloat16),
                        pltpu.VMEM((1, Cb), jnp.float32),
                        pltpu.VMEM((1, Cb), jnp.float32)],
        input_output_aliases=io_aliases,
        compiler_params=pltpu.CompilerParams(
            dimension_semantics=("parallel", "parallel"),
            vmem_limit_bytes=_vmem_limit_bytes(Hp, Wp, Cin, Cb, mode)),
    )(*args)


# ------------------------------------------------------------------ host-side glue

def _round_up(x, m):
    return (x + m - 1) // m * m


def _pad_last(a, c_to):
    pad = c_to - a.shape[-1]
    if pad == 0:
        return a
    return jnp.pad(a, [(0, 0)] * (a.ndim - 1) + [(0, pad)])


def _pad_weight(w, c_to):
    # (3, 3, Cin, Cout) -> (3, 3, c_to, c_to); zero fill is exact (extra
    # channels contribute nothing and are sliced off at the end).
    return jnp.pad(w, ((0, 0), (0, 0),
                       (0, c_to - w.shape[2]), (0, c_to - w.shape[3])))


def resnet_block_forward(params, x_nchw):
    """CUT ResnetBlock forward: (N, C, H, W) f32 -> (N, C, H, W) f32.

    NOTE: nn.InstanceNorm2d(affine=False) exactly cancels any per-channel
    constant added before it, so the conv biases b1/b2 have no effect on the
    output; they are therefore not fed to the kernels (the f32 reference below
    keeps them and the results still match)."""
    x = jnp.transpose(x_nchw, (0, 2, 3, 1)).astype(jnp.float32)   # NCHW -> NHWC
    N, H, W, C = x.shape
    Cp = _round_up(C, _LANE)                                      # lane-dense channels

    xp = _pad_last(x, Cp)                                         # (N,H,W,Cp) f32
    w1 = _pad_weight(params["w1"], Cp).reshape(9, Cp, Cp).astype(jnp.bfloat16)
    w2 = _pad_weight(params["w2"], Cp).reshape(9, Cp, Cp).astype(jnp.bfloat16)

    # layer 1: reflpad -> conv3x3 -> IN -> ReLU.  The kernel also emits the
    # 1-pixel reflected border, so there is no host-side pad between layers.
    x1 = jnp.pad(xp, ((0, 0), (1, 1), (1, 1), (0, 0)),
                 mode="reflect").astype(jnp.bfloat16)             # (N,Hp,Wp,Cp)
    h_pad = fused_conv3x3_instnorm(x1, w1, mode="pad_relu")       # (N,Hp,Wp,Cp) bf16

    # layer 2: conv3x3 -> IN, then the skip connection
    out = fused_conv3x3_instnorm(h_pad, w2, mode="residual",
                                 residual=xp.reshape(N, H * W, Cp))
    out = out.reshape(N, H, W, Cp)[..., :C]
    return jnp.transpose(out, (0, 3, 1, 2))                       # NHWC -> NCHW


def init_resnet_block_params(key, dim):
    # Weights kept in HWIO.  (Importing real PyTorch Conv2d weights: OIHW ->
    # HWIO is transpose(2, 3, 1, 0); no spatial flip needed for Conv2d.)
    k1, k2, k3, k4 = jax.random.split(key, 4)
    s = 1.0 / math.sqrt(9 * dim)                  # ~Conv2d default init scale
    return {
        "w1": s * jax.random.normal(k1, (3, 3, dim, dim), jnp.float32),
        "b1": s * jax.random.normal(k2, (dim,), jnp.float32),
        "w2": s * jax.random.normal(k3, (3, 3, dim, dim), jnp.float32),
        "b2": s * jax.random.normal(k4, (dim,), jnp.float32),
    }


# ------------------------------------------------------------------ pure-JAX reference

def _reference_forward(params, x_nchw):
    x = jnp.transpose(x_nchw, (0, 2, 3, 1)).astype(jnp.float32)

    def conv_in(h, w, b):
        hp = jnp.pad(h, ((0, 0), (1, 1), (1, 1), (0, 0)), mode="reflect")
        y = jax.lax.conv_general_dilated(
            hp, w, window_strides=(1, 1), padding="VALID",
            dimension_numbers=("NHWC", "HWIO", "NHWC")) + b
        m = jnp.mean(y, axis=(1, 2), keepdims=True)
        v = jnp.var(y, axis=(1, 2), keepdims=True)
        return (y - m) * jax.lax.rsqrt(v + _EPS)

    h = jnp.maximum(conv_in(x, params["w1"], params["b1"]), 0.0)
    out = x + conv_in(h, params["w2"], params["b2"])
    return jnp.transpose(out, (0, 3, 1, 2))


# ------------------------------------------------------------------ main

if __name__ == "__main__":
    def run_case(dim, batch, hw, tol):
        key = jax.random.PRNGKey(0)
        pkey, xkey = jax.random.split(key)
        params = init_resnet_block_params(pkey, dim)
        x = jax.random.normal(xkey, (batch, dim, hw, hw), jnp.float32)

        fwd = jax.jit(resnet_block_forward)
        y = jax.block_until_ready(fwd(params, x))

        assert y.shape == x.shape, (y.shape, x.shape)
        assert bool(jnp.all(jnp.isfinite(y)))
        y_ref = _reference_forward(params, x)
        err = float(jnp.max(jnp.abs(y - y_ref)))
        assert err < tol, f"max abs err {err} (dim={dim})"

    run_case(dim=128, batch=2, hw=16, tol=0.15)   # lane-dense channels, 2 row chunks
    run_case(dim=64, batch=1, hw=16, tol=0.15)    # exercises channel padding to 128
    print("KERNEL_OK")
</pallas_src>

<mosaic_0001>
module attributes {stable_mosaic.version = 11 : i64} {
  func.func @_conv3x3_in_kernel(%arg0: i32, %arg1: i32, %arg2: memref<1x18x18x128xbf16, #tpu.memory_space<vmem>>, %arg3: memref<9x128x128xbf16, #tpu.memory_space<vmem>>, %arg4: memref<1x256x128xf32, #tpu.memory_space<vmem>>, %arg5: memref<1x256x128xf32, #tpu.memory_space<vmem>>, %arg6: memref<256x128xbf16, #tpu.memory_space<vmem>>, %arg7: memref<1x128xf32, #tpu.memory_space<vmem>>, %arg8: memref<1x128xf32, #tpu.memory_space<vmem>>) attributes {dimension_semantics = [#tpu.dimension_semantics<parallel>, #tpu.dimension_semantics<parallel>], iteration_bounds = array<i64: 2, 1>, scalar_prefetch = 0 : i64, scratch_operands = 3 : i64, tpu.core_type = #tpu.core_type<tc>, window_params = [{transform_indices = @transform_0, window_bounds = array<i64: 1, 18, 18, 128>}, {transform_indices = @transform_1, window_bounds = array<i64: 9, 128, 128>}, {transform_indices = @transform_2, window_bounds = array<i64: 1, 256, 128>}, {transform_indices = @transform_3, window_bounds = array<i64: 1, 256, 128>}]} {
    %cst = arith.constant 0.000000e+00 : f32
    %0 = vector.broadcast %cst : f32 to vector<1x128xf32>
    %c0 = arith.constant 0 : index
    %c0_0 = arith.constant 0 : index
    %1 = vector.load %arg7[%c0, %c0_0] : memref<1x128xf32, #tpu.memory_space<vmem>>, vector<1x128xf32>
    tpu.vector_store %arg7[%c0, %c0_0], %0 {strides = array<i32>} : memref<1x128xf32, #tpu.memory_space<vmem>>, vector<1x128xf32>,
    %cst_1 = arith.constant 0.000000e+00 : f32
    %2 = vector.broadcast %cst_1 : f32 to vector<1x128xf32>
    %c0_2 = arith.constant 0 : index
    %c0_3 = arith.constant 0 : index
    %3 = vector.load %arg8[%c0_2, %c0_3] : memref<1x128xf32, #tpu.memory_space<vmem>>, vector<1x128xf32>
    tpu.vector_store %arg8[%c0_2, %c0_3], %2 {strides = array<i32>} : memref<1x128xf32, #tpu.memory_space<vmem>>, vector<1x128xf32>,
    %c0_i32 = arith.constant 0 : i32
    %c2_i32 = arith.constant 2 : i32
    %4 = arith.addi %c0_i32, %c2_i32 : i32
    %c1_i32 = arith.constant 1 : i32
    scf.for %arg9 = %c0_i32 to %4 step %c1_i32  : i32 {
      %c1_i32_17 = arith.constant 1 : i32
      %19 = arith.muli %arg9, %c1_i32_17 : i32
      %c0_i32_18 = arith.constant 0 : i32
      %20 = arith.addi %c0_i32_18, %19 : i32
      %c8_i32 = arith.constant 8 : i32
      %21 = arith.muli %20, %c8_i32 : i32
      %22 = tpu.assume_multiple %21, 8 : i32
      %c128_i32 = arith.constant 128 : i32
      %23 = arith.muli %20, %c128_i32 : i32
      %24 = tpu.assume_multiple %23, 128 : i32
      %cst_19 = arith.constant 0.000000e+00 : f32
      %25 = vector.broadcast %cst_19 : f32 to vector<128x128xf32>
      %c0_i32_20 = arith.constant 0 : i32
      %26 = arith.addi %22, %c0_i32_20 : i32
      %c0_21 = arith.constant 0 : index
      %27 = arith.index_cast %26 : i32 to index
      %c0_22 = arith.constant 0 : index
      %c0_23 = arith.constant 0 : index
      %28 = vector.load %arg2[%c0_21, %27, %c0_22, %c0_23] : memref<1x18x18x128xbf16, #tpu.memory_space<vmem>>, vector<1x8x16x128xbf16>
      %29 = vector.shape_cast %28 : vector<1x8x16x128xbf16> to vector<8x16x128xbf16>
      %30 = vector.shape_cast %29 : vector<8x16x128xbf16> to vector<128x128xbf16>
      %c0_24 = arith.constant 0 : index
      %c0_25 = arith.constant 0 : index
      %c0_26 = arith.constant 0 : index
      %31 = vector.load %arg3[%c0_24, %c0_25, %c0_26] : memref<9x128x128xbf16, #tpu.memory_space<vmem>>, vector<1x128x128xbf16>
      %32 = vector.shape_cast %31 : vector<1x128x128xbf16> to vector<128x128xbf16>
      %cst_27 = arith.constant dense<0.000000e+00> : vector<128x128xf32>
      %33 = tpu.matmul %30, %32, %cst_27 {dimension_numbers = #tpu.dot_dimension_numbers<[1], [0], [0], [1], [0, 0, 1, 1], [], []>} : vector<128x128xbf16>, vector<128x128xbf16>, vector<128x128xf32> -> vector<128x128xf32>
      %34 = arith.addf %25, %33 : vector<128x128xf32>
      %c0_i32_28 = arith.constant 0 : i32
      %35 = arith.addi %22, %c0_i32_28 : i32
      %c0_29 = arith.constant 0 : index
      %36 = arith.index_cast %35 : i32 to index
      %c1 = arith.constant 1 : index
      %c0_30 = arith.constant 0 : index
      %37 = vector.load %arg2[%c0_29, %36, %c1, %c0_30] : memref<1x18x18x128xbf16, #tpu.memory_space<vmem>>, vector<1x8x16x128xbf16>
      %38 = vector.shape_cast %37 : vector<1x8x16x128xbf16> to vector<8x16x128xbf16>
      %39 = vector.shape_cast %38 : vector<8x16x128xbf16> to vector<128x128xbf16>
      %c1_31 = arith.constant 1 : index
      %c0_32 = arith.constant 0 : index
      %c0_33 = arith.constant 0 : index
      %40 = vector.load %arg3[%c1_31, %c0_32, %c0_33] : memref<9x128x128xbf16, #tpu.memory_space<vmem>>, vector<1x128x128xbf16>
      %41 = vector.shape_cast %40 : vector<1x128x128xbf16> to vector<128x128xbf16>
      %cst_34 = arith.constant dense<0.000000e+00> : vector<128x128xf32>
      %42 = tpu.matmul %39, %41, %cst_34 {dimension_numbers = #tpu.dot_dimension_numbers<[1], [0], [0], [1], [0, 0, 1, 1], [], []>} : vector<128x128xbf16>, vector<128x128xbf16>, vector<128x128xf32> -> vector<128x128xf32>
      %43 = arith.addf %34, %42 : vector<128x128xf32>
      %c0_i32_35 = arith.constant 0 : i32
      %44 = arith.addi %22, %c0_i32_35 : i32
      %c0_36 = arith.constant 0 : index
      %45 = arith.index_cast %44 : i32 to index
      %c2 = arith.constant 2 : index
      %c0_37 = arith.constant 0 : index
      %46 = vector.load %arg2[%c0_36, %45, %c2, %c0_37] : memref<1x18x18x128xbf16, #tpu.memory_space<vmem>>, vector<1x8x16x128xbf16>
      %47 = vector.shape_cast %46 : vector<1x8x16x128xbf16> to vector<8x16x128xbf16>
      %48 = vector.shape_cast %47 : vector<8x16x128xbf16> to vector<128x128xbf16>
      %c2_38 = arith.constant 2 : index
      %c0_39 = arith.constant 0 : index
      %c0_40 = arith.constant 0 : index
      %49 = vector.load %arg3[%c2_38, %c0_39, %c0_40] : memref<9x128x128xbf16, #tpu.memory_space<vmem>>, vector<1x128x128xbf16>
      %50 = vector.shape_cast %49 : vector<1x128x128xbf16> to vector<128x128xbf16>
      %cst_41 = arith.constant dense<0.000000e+00> : vector<128x128xf32>
      %51 = tpu.matmul %48, %50, %cst_41 {dimension_numbers = #tpu.dot_dimension_numbers<[1], [0], [0], [1], [0, 0, 1, 1], [], []>} : vector<128x128xbf16>, vector<128x128xbf16>, vector<128x128xf32> -> vector<128x128xf32>
      %52 = arith.addf %43, %51 : vector<128x128xf32>
      %c1_i32_42 = arith.constant 1 : i32
      %53 = arith.addi %22, %c1_i32_42 : i32
      %c0_43 = arith.constant 0 : index
      %54 = arith.index_cast %53 : i32 to index
      %c0_44 = arith.constant 0 : index
      %c0_45 = arith.constant 0 : index
      %55 = vector.load %arg2[%c0_43, %54, %c0_44, %c0_45] : memref<1x18x18x128xbf16, #tpu.memory_space<vmem>>, vector<1x8x16x128xbf16>
      %56 = vector.shape_cast %55 : vector<1x8x16x128xbf16> to vector<8x16x128xbf16>
      %57 = vector.shape_cast %56 : vector<8x16x128xbf16> to vector<128x128xbf16>
      %c3 = arith.constant 3 : index
      %c0_46 = arith.constant 0 : index
      %c0_47 = arith.constant 0 : index
      %58 = vector.load %arg3[%c3, %c0_46, %c0_47] : memref<9x128x128xbf16, #tpu.memory_space<vmem>>, vector<1x128x128xbf16>
      %59 = vector.shape_cast %58 : vector<1x128x128xbf16> to vector<128x128xbf16>
      %cst_48 = arith.constant dense<0.000000e+00> : vector<128x128xf32>
      %60 = tpu.matmul %57, %59, %cst_48 {dimension_numbers = #tpu.dot_dimension_numbers<[1], [0], [0], [1], [0, 0, 1, 1], [], []>} : vector<128x128xbf16>, vector<128x128xbf16>, vector<128x128xf32> -> vector<128x128xf32>
      %61 = arith.addf %52, %60 : vector<128x128xf32>
      %c1_i32_49 = arith.constant 1 : i32
      %62 = arith.addi %22, %c1_i32_49 : i32
      %c0_50 = arith.constant 0 : index
      %63 = arith.index_cast %62 : i32 to index
      %c1_51 = arith.constant 1 : index
      %c0_52 = arith.constant 0 : index
      %64 = vector.load %arg2[%c0_50, %63, %c1_51, %c0_52] : memref<1x18x18x128xbf16, #tpu.memory_space<vmem>>, vector<1x8x16x128xbf16>
      %65 = vector.shape_cast %64 : vector<1x8x16x128xbf16> to vector<8x16x128xbf16>
      %66 = vector.shape_cast %65 : vector<8x16x128xbf16> to vector<128x128xbf16>
      %c4 = arith.constant 4 : index
      %c0_53 = arith.constant 0 : index
      %c0_54 = arith.constant 0 : index
      %67 = vector.load %arg3[%c4, %c0_53, %c0_54] : memref<9x128x128xbf16, #tpu.memory_space<vmem>>, vector<1x128x128xbf16>
      %68 = vector.shape_cast %67 : vector<1x128x128xbf16> to vector<128x128xbf16>
      %cst_55 = arith.constant dense<0.000000e+00> : vector<128x128xf32>
      %69 = tpu.matmul %66, %68, %cst_55 {dimension_numbers = #tpu.dot_dimension_numbers<[1], [0], [0], [1], [0, 0, 1, 1], [], []>} : vector<128x128xbf16>, vector<128x128xbf16>, vector<128x128xf32> -> vector<128x128xf32>
      %70 = arith.addf %61, %69 : vector<128x128xf32>
      %c1_i32_56 = arith.constant 1 : i32
      %71 = arith.addi %22, %c1_i32_56 : i32
      %c0_57 = arith.constant 0 : index
      %72 = arith.index_cast %71 : i32 to index
      %c2_58 = arith.constant 2 : index
      %c0_59 = arith.constant 0 : index
      %73 = vector.load %arg2[%c0_57, %72, %c2_58, %c0_59] : memref<1x18x18x128xbf16, #tpu.memory_space<vmem>>, vector<1x8x16x128xbf16>
      %74 = vector.shape_cast %73 : vector<1x8x16x128xbf16> to vector<8x16x128xbf16>
      %75 = vector.shape_cast %74 : vector<8x16x128xbf16> to vector<128x128xbf16>
      %c5 = arith.constant 5 : index
      %c0_60 = arith.constant 0 : index
      %c0_61 = arith.constant 0 : index
      %76 = vector.load %arg3[%c5, %c0_60, %c0_61] : memref<9x128x128xbf16, #tpu.memory_space<vmem>>, vector<1x128x128xbf16>
      %77 = vector.shape_cast %76 : vector<1x128x128xbf16> to vector<128x128xbf16>
      %cst_62 = arith.constant dense<0.000000e+00> : vector<128x128xf32>
      %78 = tpu.matmul %75, %77, %cst_62 {dimension_numbers = #tpu.dot_dimension_numbers<[1], [0], [0], [1], [0, 0, 1, 1], [], []>} : vector<128x128xbf16>, vector<128x128xbf16>, vector<128x128xf32> -> vector<128x128xf32>
      %79 = arith.addf %70, %78 : vector<128x128xf32>
      %c2_i32_63 = arith.constant 2 : i32
      %80 = arith.addi %22, %c2_i32_63 : i32
      %c0_64 = arith.constant 0 : index
      %81 = arith.index_cast %80 : i32 to index
      %c0_65 = arith.constant 0 : index
      %c0_66 = arith.constant 0 : index
      %82 = vector.load %arg2[%c0_64, %81, %c0_65, %c0_66] : memref<1x18x18x128xbf16, #tpu.memory_space<vmem>>, vector<1x8x16x128xbf16>
      %83 = vector.shape_cast %82 : vector<1x8x16x128xbf16> to vector<8x16x128xbf16>
      %84 = vector.shape_cast %83 : vector<8x16x128xbf16> to vector<128x128xbf16>
      %c6 = arith.constant 6 : index
      %c0_67 = arith.constant 0 : index
      %c0_68 = arith.constant 0 : index
      %85 = vector.load %arg3[%c6, %c0_67, %c0_68] : memref<9x128x128xbf16, #tpu.memory_space<vmem>>, vector<1x128x128xbf16>
      %86 = vector.shape_cast %85 : vector<1x128x128xbf16> to vector<128x128xbf16>
      %cst_69 = arith.constant dense<0.000000e+00> : vector<128x128xf32>
      %87 = tpu.matmul %84, %86, %cst_69 {dimension_numbers = #tpu.dot_dimension_numbers<[1], [0], [0], [1], [0, 0, 1, 1], [], []>} : vector<128x128xbf16>, vector<128x128xbf16>, vector<128x128xf32> -> vector<128x128xf32>
      %88 = arith.addf %79, %87 : vector<128x128xf32>
      %c2_i32_70 = arith.constant 2 : i32
      %89 = arith.addi %22, %c2_i32_70 : i32
      %c0_71 = arith.constant 0 : index
      %90 = arith.index_cast %89 : i32 to index
      %c1_72 = arith.constant 1 : index
      %c0_73 = arith.constant 0 : index
      %91 = vector.load %arg2[%c0_71, %90, %c1_72, %c0_73] : memref<1x18x18x128xbf16, #tpu.memory_space<vmem>>, vector<1x8x16x128xbf16>
      %92 = vector.shape_cast %91 : vector<1x8x16x128xbf16> to vector<8x16x128xbf16>
      %93 = vector.shape_cast %92 : vector<8x16x128xbf16> to vector<128x128xbf16>
      %c7 = arith.constant 7 : index
      %c0_74 = arith.constant 0 : index
      %c0_75 = arith.constant 0 : index
      %94 = vector.load %arg3[%c7, %c0_74, %c0_75] : memref<9x128x128xbf16, #tpu.memory_space<vmem>>, vector<1x128x128xbf16>
      %95 = vector.shape_cast %94 : vector<1x128x128xbf16> to vector<128x128xbf16>
      %cst_76 = arith.constant dense<0.000000e+00> : vector<128x128xf32>
      %96 = tpu.matmul %93, %95, %cst_76 {dimension_numbers = #tpu.dot_dimension_numbers<[1], [0], [0], [1], [0, 0, 1, 1], [], []>} : vector<128x128xbf16>, vector<128x128xbf16>, vector<128x128xf32> -> vector<128x128xf32>
      %97 = arith.addf %88, %96 : vector<128x128xf32>
      %c2_i32_77 = arith.constant 2 : i32
      %98 = arith.addi %22, %c2_i32_77 : i32
      %c0_78 = arith.constant 0 : index
      %99 = arith.index_cast %98 : i32 to index
      %c2_79 = arith.constant 2 : index
      %c0_80 = arith.constant 0 : index
      %100 = vector.load %arg2[%c0_78, %99, %c2_79, %c0_80] : memref<1x18x18x128xbf16, #tpu.memory_space<vmem>>, vector<1x8x16x128xbf16>
      %101 = vector.shape_cast %100 : vector<1x8x16x128xbf16> to vector<8x16x128xbf16>
      %102 = vector.shape_cast %101 : vector<8x16x128xbf16> to vector<128x128xbf16>
      %c8 = arith.constant 8 : index
      %c0_81 = arith.constant 0 : index
      %c0_82 = arith.constant 0 : index
      %103 = vector.load %arg3[%c8, %c0_81, %c0_82] : memref<9x128x128xbf16, #tpu.memory_space<vmem>>, vector<1x128x128xbf16>
      %104 = vector.shape_cast %103 : vector<1x128x128xbf16> to vector<128x128xbf16>
      %cst_83 = arith.constant dense<0.000000e+00> : vector<128x128xf32>
      %105 = tpu.matmul %102, %104, %cst_83 {dimension_numbers = #tpu.dot_dimension_numbers<[1], [0], [0], [1], [0, 0, 1, 1], [], []>} : vector<128x128xbf16>, vector<128x128xbf16>, vector<128x128xf32> -> vector<128x128xf32>
      %106 = arith.addf %97, %105 : vector<128x128xf32>
      %c0_84 = arith.constant 0 : index
      %c0_85 = arith.constant 0 : index
      %107 = vector.load %arg7[%c0_84, %c0_85] : memref<1x128xf32, #tpu.memory_space<vmem>>, vector<1x128xf32>
      %cst_86 = arith.constant dense<0.000000e+00> : vector<128xf32>
      %108 = vector.multi_reduction <add>, %106, %cst_86 [0] : vector<128x128xf32> to vector<128xf32>
      %109 = vector.shape_cast %108 : vector<128xf32> to vector<1x128xf32>
      %110 = arith.addf %107, %109 : vector<1x128xf32>
      %c0_87 = arith.constant 0 : index
      %c0_88 = arith.constant 0 : index
      %111 = vector.load %arg7[%c0_87, %c0_88] : memref<1x128xf32, #tpu.memory_space<vmem>>, vector<1x128xf32>
      tpu.vector_store %arg7[%c0_87, %c0_88], %110 {strides = array<i32>} : memref<1x128xf32, #tpu.memory_space<vmem>>, vector<1x128xf32>,
      %c0_89 = arith.constant 0 : index
      %c0_90 = arith.constant 0 : index
      %112 = vector.load %arg8[%c0_89, %c0_90] : memref<1x128xf32, #tpu.memory_space<vmem>>, vector<1x128xf32>
      %113 = arith.mulf %106, %106 : vector<128x128xf32>
      %cst_91 = arith.constant dense<0.000000e+00> : vector<128xf32>
      %114 = vector.multi_reduction <add>, %113, %cst_91 [0] : vector<128x128xf32> to vector<128xf32>
      %115 = vector.shape_cast %114 : vector<128xf32> to vector<1x128xf32>
      %116 = arith.addf %112, %115 : vector<1x128xf32>
      %c0_92 = arith.constant 0 : index
      %c0_93 = arith.constant 0 : index
      %117 = vector.load %arg8[%c0_92, %c0_93] : memref<1x128xf32, #tpu.memory_space<vmem>>, vector<1x128xf32>
      tpu.vector_store %arg8[%c0_92, %c0_93], %116 {strides = array<i32>} : memref<1x128xf32, #tpu.memory_space<vmem>>, vector<1x128xf32>,
      %118 = arith.truncf %106 : vector<128x128xf32> to vector<128x128xbf16>
      %119 = arith.index_cast %24 : i32 to index
      %c0_94 = arith.constant 0 : index
      %120 = vector.load %arg6[%119, %c0_94] : memref<256x128xbf16, #tpu.memory_space<vmem>>, vector<128x128xbf16>
      tpu.vector_store %arg6[%119, %c0_94], %118 {strides = array<i32>} : memref<256x128xbf16, #tpu.memory_space<vmem>>, vector<128x128xbf16>,
    }
    %c2_i32_4 = arith.constant 2 : i32
    %c0_5 = arith.constant 0 : index
    %c0_6 = arith.constant 0 : index
    %5 = vector.load %arg7[%c0_5, %c0_6] : memref<1x128xf32, #tpu.memory_space<vmem>>, vector<1x128xf32>
    %cst_7 = arith.constant 3.906250e-03 : f32
    %6 = vector.broadcast %cst_7 : f32 to vector<1x128xf32>
    %7 = arith.mulf %5, %6 : vector<1x128xf32>
    %c0_8 = arith.constant 0 : index
    %c0_9 = arith.constant 0 : index
    %8 = vector.load %arg8[%c0_8, %c0_9] : memref<1x128xf32, #tpu.memory_space<vmem>>, vector<1x128xf32>
    %cst_10 = arith.constant 3.906250e-03 : f32
    %9 = vector.broadcast %cst_10 : f32 to vector<1x128xf32>
    %10 = arith.mulf %8, %9 : vector<1x128xf32>
    %11 = arith.mulf %7, %7 : vector<1x128xf32>
    %12 = arith.subf %10, %11 : vector<1x128xf32>
    %cst_11 = arith.constant 0.000000e+00 : f32
    %13 = vector.broadcast %cst_11 : f32 to vector<1x128xf32>
    %14 = arith.maximumf %12, %13 : vector<1x128xf32>
    %cst_12 = arith.constant 9.99999974E-6 : f32
    %15 = vector.broadcast %cst_12 : f32 to vector<1x128xf32>
    %16 = arith.addf %14, %15 : vector<1x128xf32>
    %17 = math.rsqrt %16 : vector<1x128xf32>
    %c0_i32_13 = arith.constant 0 : i32
    %c2_i32_14 = arith.constant 2 : i32
    %18 = arith.addi %c0_i32_13, %c2_i32_14 : i32
    %c1_i32_15 = arith.constant 1 : i32
    scf.for %arg9 = %c0_i32_13 to %18 step %c1_i32_15  : i32 {
      %c1_i32_17 = arith.constant 1 : i32
      %19 = arith.muli %arg9, %c1_i32_17 : i32
      %c0_i32_18 = arith.constant 0 : i32
      %20 = arith.addi %c0_i32_18, %19 : i32
      %c128_i32 = arith.constant 128 : i32
      %21 = arith.muli %20, %c128_i32 : i32
      %22 = tpu.assume_multiple %21, 128 : i32
      %23 = arith.index_cast %22 : i32 to index
      %c0_19 = arith.constant 0 : index
      %24 = vector.load %arg6[%23, %c0_19] : memref<256x128xbf16, #tpu.memory_space<vmem>>, vector<128x128xbf16>
      %25 = arith.extf %24 : vector<128x128xbf16> to vector<128x128xf32>
      %26 = vector.broadcast %7 : vector<1x128xf32> to vector<128x128xf32>
      %27 = arith.subf %25, %26 : vector<128x128xf32>
      %28 = vector.broadcast %17 : vector<1x128xf32> to vector<128x128xf32>
      %29 = arith.mulf %27, %28 : vector<128x128xf32>
      %c0_20 = arith.constant 0 : index
      %30 = arith.index_cast %22 : i32 to index
      %c0_21 = arith.constant 0 : index
      %31 = vector.load %arg4[%c0_20, %30, %c0_21] : memref<1x256x128xf32, #tpu.memory_space<vmem>>, vector<1x128x128xf32>
      %32 = vector.shape_cast %31 : vector<1x128x128xf32> to vector<128x128xf32>
      %33 = arith.addf %29, %32 : vector<128x128xf32>
      %c0_22 = arith.constant 0 : index
      %34 = arith.index_cast %22 : i32 to index
      %c0_23 = arith.constant 0 : index
      %35 = vector.load %arg5[%c0_22, %34, %c0_23] : memref<1x256x128xf32, #tpu.memory_space<vmem>>, vector<1x128x128xf32>
      %36 = vector.shape_cast %35 : vector<1x128x128xf32> to vector<128x128xf32>
      %37 = vector.shape_cast %33 : vector<128x128xf32> to vector<1x128x128xf32>
      tpu.vector_store %arg5[%c0_22, %34, %c0_23], %37 {strides = array<i32>} : memref<1x256x128xf32, #tpu.memory_space<vmem>>, vector<1x128x128xf32>,
    }
    %c2_i32_16 = arith.constant 2 : i32
    return
  }
  func.func @transform_0(%arg0: i32, %arg1: i32) -> (i32, i32, i32, i32) {
    %c0_i32 = arith.constant 0 : i32
    %c0_i32_0 = arith.constant 0 : i32
    %c0_i32_1 = arith.constant 0 : i32
    %c0_i32_2 = arith.constant 0 : i32
    return %arg0, %c0_i32, %c0_i32_0, %c0_i32_1 : i32, i32, i32, i32
  }
  func.func @transform_1(%arg0: i32, %arg1: i32) -> (i32, i32, i32) {
    %c0_i32 = arith.constant 0 : i32
    %c0_i32_0 = arith.constant 0 : i32
    %c0_i32_1 = arith.constant 0 : i32
    return %c0_i32, %c0_i32_0, %arg1 : i32, i32, i32
  }
  func.func @transform_2(%arg0: i32, %arg1: i32) -> (i32, i32, i32) {
    %c0_i32 = arith.constant 0 : i32
    %c0_i32_0 = arith.constant 0 : i32
    return %arg0, %c0_i32, %arg1 : i32, i32, i32
  }
  func.func @transform_3(%arg0: i32, %arg1: i32) -> (i32, i32, i32) {
    %c0_i32 = arith.constant 0 : i32
    %c0_i32_0 = arith.constant 0 : i32
    return %arg0, %c0_i32, %arg1 : i32, i32, i32
  }
}

module attributes {stable_mosaic.version = 11 : i64} {
  func.func @_conv3x3_in_kernel(%arg0: i32, %arg1: i32, %arg2: memref<1x18x18x128xbf16, #tpu.memory_space<vmem>>, %arg3: memref<9x128x128xbf16, #tpu.memory_space<vmem>>, %arg4: memref<1x18x18x128xbf16, #tpu.memory_space<vmem>>, %arg5: memref<256x128xbf16, #tpu.memory_space<vmem>>, %arg6: memref<1x128xf32, #tpu.memory_space<vmem>>, %arg7: memref<1x128xf32, #tpu.memory_space<vmem>>) attributes {dimension_semantics = [#tpu.dimension_semantics<parallel>, #tpu.dimension_semantics<parallel>], iteration_bounds = array<i64: 2, 1>, scalar_prefetch = 0 : i64, scratch_operands = 3 : i64, tpu.core_type = #tpu.core_type<tc>, window_params = [{transform_indices = @transform_0, window_bounds = array<i64: 1, 18, 18, 128>}, {transform_indices = @transform_1, window_bounds = array<i64: 9, 128, 128>}, {transform_indices = @transform_2, window_bounds = array<i64: 1, 18, 18, 128>}]} {
    %cst = arith.constant 0.000000e+00 : f32
    %0 = vector.broadcast %cst : f32 to vector<1x128xf32>
    %c0 = arith.constant 0 : index
    %c0_0 = arith.constant 0 : index
    %1 = vector.load %arg6[%c0, %c0_0] : memref<1x128xf32, #tpu.memory_space<vmem>>, vector<1x128xf32>
    tpu.vector_store %arg6[%c0, %c0_0], %0 {strides = array<i32>} : memref<1x128xf32, #tpu.memory_space<vmem>>, vector<1x128xf32>,
    %cst_1 = arith.constant 0.000000e+00 : f32
    %2 = vector.broadcast %cst_1 : f32 to vector<1x128xf32>
    %c0_2 = arith.constant 0 : index
    %c0_3 = arith.constant 0 : index
    %3 = vector.load %arg7[%c0_2, %c0_3] : memref<1x128xf32, #tpu.memory_space<vmem>>, vector<1x128xf32>
    tpu.vector_store %arg7[%c0_2, %c0_3], %2 {strides = array<i32>} : memref<1x128xf32, #tpu.memory_space<vmem>>, vector<1x128xf32>,
    %c0_i32 = arith.constant 0 : i32
    %c2_i32 = arith.constant 2 : i32
    %4 = arith.addi %c0_i32, %c2_i32 : i32
    %c1_i32 = arith.constant 1 : i32
    scf.for %arg8 = %c0_i32 to %4 step %c1_i32  : i32 {
      %c1_i32_30 = arith.constant 1 : i32
      %29 = arith.muli %arg8, %c1_i32_30 : i32
      %c0_i32_31 = arith.constant 0 : i32
      %30 = arith.addi %c0_i32_31, %29 : i32
      %c8_i32 = arith.constant 8 : i32
      %31 = arith.muli %30, %c8_i32 : i32
      %32 = tpu.assume_multiple %31, 8 : i32
      %c128_i32 = arith.constant 128 : i32
      %33 = arith.muli %30, %c128_i32 : i32
      %34 = tpu.assume_multiple %33, 128 : i32
      %cst_32 = arith.constant 0.000000e+00 : f32
      %35 = vector.broadcast %cst_32 : f32 to vector<128x128xf32>
      %c0_i32_33 = arith.constant 0 : i32
      %36 = arith.addi %32, %c0_i32_33 : i32
      %c0_34 = arith.constant 0 : index
      %37 = arith.index_cast %36 : i32 to index
      %c0_35 = arith.constant 0 : index
      %c0_36 = arith.constant 0 : index
      %38 = vector.load %arg2[%c0_34, %37, %c0_35, %c0_36] : memref<1x18x18x128xbf16, #tpu.memory_space<vmem>>, vector<1x8x16x128xbf16>
      %39 = vector.shape_cast %38 : vector<1x8x16x128xbf16> to vector<8x16x128xbf16>
      %40 = vector.shape_cast %39 : vector<8x16x128xbf16> to vector<128x128xbf16>
      %c0_37 = arith.constant 0 : index
      %c0_38 = arith.constant 0 : index
      %c0_39 = arith.constant 0 : index
      %41 = vector.load %arg3[%c0_37, %c0_38, %c0_39] : memref<9x128x128xbf16, #tpu.memory_space<vmem>>, vector<1x128x128xbf16>
      %42 = vector.shape_cast %41 : vector<1x128x128xbf16> to vector<128x128xbf16>
      %cst_40 = arith.constant dense<0.000000e+00> : vector<128x128xf32>
      %43 = tpu.matmul %40, %42, %cst_40 {dimension_numbers = #tpu.dot_dimension_numbers<[1], [0], [0], [1], [0, 0, 1, 1], [], []>} : vector<128x128xbf16>, vector<128x128xbf16>, vector<128x128xf32> -> vector<128x128xf32>
      %44 = arith.addf %35, %43 : vector<128x128xf32>
      %c0_i32_41 = arith.constant 0 : i32
      %45 = arith.addi %32, %c0_i32_41 : i32
      %c0_42 = arith.constant 0 : index
      %46 = arith.index_cast %45 : i32 to index
      %c1 = arith.constant 1 : index
      %c0_43 = arith.constant 0 : index
      %47 = vector.load %arg2[%c0_42, %46, %c1, %c0_43] : memref<1x18x18x128xbf16, #tpu.memory_space<vmem>>, vector<1x8x16x128xbf16>
      %48 = vector.shape_cast %47 : vector<1x8x16x128xbf16> to vector<8x16x128xbf16>
      %49 = vector.shape_cast %48 : vector<8x16x128xbf16> to vector<128x128xbf16>
      %c1_44 = arith.constant 1 : index
      %c0_45 = arith.constant 0 : index
      %c0_46 = arith.constant 0 : index
      %50 = vector.load %arg3[%c1_44, %c0_45, %c0_46] : memref<9x128x128xbf16, #tpu.memory_space<vmem>>, vector<1x128x128xbf16>
      %51 = vector.shape_cast %50 : vector<1x128x128xbf16> to vector<128x128xbf16>
      %cst_47 = arith.constant dense<0.000000e+00> : vector<128x128xf32>
      %52 = tpu.matmul %49, %51, %cst_47 {dimension_numbers = #tpu.dot_dimension_numbers<[1], [0], [0], [1], [0, 0, 1, 1], [], []>} : vector<128x128xbf16>, vector<128x128xbf16>, vector<128x128xf32> -> vector<128x128xf32>
      %53 = arith.addf %44, %52 : vector<128x128xf32>
      %c0_i32_48 = arith.constant 0 : i32
      %54 = arith.addi %32, %c0_i32_48 : i32
      %c0_49 = arith.constant 0 : index
      %55 = arith.index_cast %54 : i32 to index
      %c2_50 = arith.constant 2 : index
      %c0_51 = arith.constant 0 : index
      %56 = vector.load %arg2[%c0_49, %55, %c2_50, %c0_51] : memref<1x18x18x128xbf16, #tpu.memory_space<vmem>>, vector<1x8x16x128xbf16>
      %57 = vector.shape_cast %56 : vector<1x8x16x128xbf16> to vector<8x16x128xbf16>
      %58 = vector.shape_cast %57 : vector<8x16x128xbf16> to vector<128x128xbf16>
      %c2_52 = arith.constant 2 : index
      %c0_53 = arith.constant 0 : index
      %c0_54 = arith.constant 0 : index
      %59 = vector.load %arg3[%c2_52, %c0_53, %c0_54] : memref<9x128x128xbf16, #tpu.memory_space<vmem>>, vector<1x128x128xbf16>
      %60 = vector.shape_cast %59 : vector<1x128x128xbf16> to vector<128x128xbf16>
      %cst_55 = arith.constant dense<0.000000e+00> : vector<128x128xf32>
      %61 = tpu.matmul %58, %60, %cst_55 {dimension_numbers = #tpu.dot_dimension_numbers<[1], [0], [0], [1], [0, 0, 1, 1], [], []>} : vector<128x128xbf16>, vector<128x128xbf16>, vector<128x128xf32> -> vector<128x128xf32>
      %62 = arith.addf %53, %61 : vector<128x128xf32>
      %c1_i32_56 = arith.constant 1 : i32
      %63 = arith.addi %32, %c1_i32_56 : i32
      %c0_57 = arith.constant 0 : index
      %64 = arith.index_cast %63 : i32 to index
      %c0_58 = arith.constant 0 : index
      %c0_59 = arith.constant 0 : index
      %65 = vector.load %arg2[%c0_57, %64, %c0_58, %c0_59] : memref<1x18x18x128xbf16, #tpu.memory_space<vmem>>, vector<1x8x16x128xbf16>
      %66 = vector.shape_cast %65 : vector<1x8x16x128xbf16> to vector<8x16x128xbf16>
      %67 = vector.shape_cast %66 : vector<8x16x128xbf16> to vector<128x128xbf16>
      %c3 = arith.constant 3 : index
      %c0_60 = arith.constant 0 : index
      %c0_61 = arith.constant 0 : index
      %68 = vector.load %arg3[%c3, %c0_60, %c0_61] : memref<9x128x128xbf16, #tpu.memory_space<vmem>>, vector<1x128x128xbf16>
      %69 = vector.shape_cast %68 : vector<1x128x128xbf16> to vector<128x128xbf16>
      %cst_62 = arith.constant dense<0.000000e+00> : vector<128x128xf32>
      %70 = tpu.matmul %67, %69, %cst_62 {dimension_numbers = #tpu.dot_dimension_numbers<[1], [0], [0], [1], [0, 0, 1, 1], [], []>} : vector<128x128xbf16>, vector<128x128xbf16>, vector<128x128xf32> -> vector<128x128xf32>
      %71 = arith.addf %62, %70 : vector<128x128xf32>
      %c1_i32_63 = arith.constant 1 : i32
      %72 = arith.addi %32, %c1_i32_63 : i32
      %c0_64 = arith.constant 0 : index
      %73 = arith.index_cast %72 : i32 to index
      %c1_65 = arith.constant 1 : index
      %c0_66 = arith.constant 0 : index
      %74 = vector.load %arg2[%c0_64, %73, %c1_65, %c0_66] : memref<1x18x18x128xbf16, #tpu.memory_space<vmem>>, vector<1x8x16x128xbf16>
      %75 = vector.shape_cast %74 : vector<1x8x16x128xbf16> to vector<8x16x128xbf16>
      %76 = vector.shape_cast %75 : vector<8x16x128xbf16> to vector<128x128xbf16>
      %c4 = arith.constant 4 : index
      %c0_67 = arith.constant 0 : index
      %c0_68 = arith.constant 0 : index
      %77 = vector.load %arg3[%c4, %c0_67, %c0_68] : memref<9x128x128xbf16, #tpu.memory_space<vmem>>, vector<1x128x128xbf16>
      %78 = vector.shape_cast %77 : vector<1x128x128xbf16> to vector<128x128xbf16>
      %cst_69 = arith.constant dense<0.000000e+00> : vector<128x128xf32>
      %79 = tpu.matmul %76, %78, %cst_69 {dimension_numbers = #tpu.dot_dimension_numbers<[1], [0], [0], [1], [0, 0, 1, 1], [], []>} : vector<128x128xbf16>, vector<128x128xbf16>, vector<128x128xf32> -> vector<128x128xf32>
      %80 = arith.addf %71, %79 : vector<128x128xf32>
      %c1_i32_70 = arith.constant 1 : i32
      %81 = arith.addi %32, %c1_i32_70 : i32
      %c0_71 = arith.constant 0 : index
      %82 = arith.index_cast %81 : i32 to index
      %c2_72 = arith.constant 2 : index
      %c0_73 = arith.constant 0 : index
      %83 = vector.load %arg2[%c0_71, %82, %c2_72, %c0_73] : memref<1x18x18x128xbf16, #tpu.memory_space<vmem>>, vector<1x8x16x128xbf16>
      %84 = vector.shape_cast %83 : vector<1x8x16x128xbf16> to vector<8x16x128xbf16>
      %85 = vector.shape_cast %84 : vector<8x16x128xbf16> to vector<128x128xbf16>
      %c5 = arith.constant 5 : index
      %c0_74 = arith.constant 0 : index
      %c0_75 = arith.constant 0 : index
      %86 = vector.load %arg3[%c5, %c0_74, %c0_75] : memref<9x128x128xbf16, #tpu.memory_space<vmem>>, vector<1x128x128xbf16>
      %87 = vector.shape_cast %86 : vector<1x128x128xbf16> to vector<128x128xbf16>
      %cst_76 = arith.constant dense<0.000000e+00> : vector<128x128xf32>
      %88 = tpu.matmul %85, %87, %cst_76 {dimension_numbers = #tpu.dot_dimension_numbers<[1], [0], [0], [1], [0, 0, 1, 1], [], []>} : vector<128x128xbf16>, vector<128x128xbf16>, vector<128x128xf32> -> vector<128x128xf32>
      %89 = arith.addf %80, %88 : vector<128x128xf32>
      %c2_i32_77 = arith.constant 2 : i32
      %90 = arith.addi %32, %c2_i32_77 : i32
      %c0_78 = arith.constant 0 : index
      %91 = arith.index_cast %90 : i32 to index
      %c0_79 = arith.constant 0 : index
      %c0_80 = arith.constant 0 : index
      %92 = vector.load %arg2[%c0_78, %91, %c0_79, %c0_80] : memref<1x18x18x128xbf16, #tpu.memory_space<vmem>>, vector<1x8x16x128xbf16>
      %93 = vector.shape_cast %92 : vector<1x8x16x128xbf16> to vector<8x16x128xbf16>
      %94 = vector.shape_cast %93 : vector<8x16x128xbf16> to vector<128x128xbf16>
      %c6 = arith.constant 6 : index
      %c0_81 = arith.constant 0 : index
      %c0_82 = arith.constant 0 : index
      %95 = vector.load %arg3[%c6, %c0_81, %c0_82] : memref<9x128x128xbf16, #tpu.memory_space<vmem>>, vector<1x128x128xbf16>
      %96 = vector.shape_cast %95 : vector<1x128x128xbf16> to vector<128x128xbf16>
      %cst_83 = arith.constant dense<0.000000e+00> : vector<128x128xf32>
      %97 = tpu.matmul %94, %96, %cst_83 {dimension_numbers = #tpu.dot_dimension_numbers<[1], [0], [0], [1], [0, 0, 1, 1], [], []>} : vector<128x128xbf16>, vector<128x128xbf16>, vector<128x128xf32> -> vector<128x128xf32>
      %98 = arith.addf %89, %97 : vector<128x128xf32>
      %c2_i32_84 = arith.constant 2 : i32
      %99 = arith.addi %32, %c2_i32_84 : i32
      %c0_85 = arith.constant 0 : index
      %100 = arith.index_cast %99 : i32 to index
      %c1_86 = arith.constant 1 : index
      %c0_87 = arith.constant 0 : index
      %101 = vector.load %arg2[%c0_85, %100, %c1_86, %c0_87] : memref<1x18x18x128xbf16, #tpu.memory_space<vmem>>, vector<1x8x16x128xbf16>
      %102 = vector.shape_cast %101 : vector<1x8x16x128xbf16> to vector<8x16x128xbf16>
      %103 = vector.shape_cast %102 : vector<8x16x128xbf16> to vector<128x128xbf16>
      %c7 = arith.constant 7 : index
      %c0_88 = arith.constant 0 : index
      %c0_89 = arith.constant 0 : index
      %104 = vector.load %arg3[%c7, %c0_88, %c0_89] : memref<9x128x128xbf16, #tpu.memory_space<vmem>>, vector<1x128x128xbf16>
      %105 = vector.shape_cast %104 : vector<1x128x128xbf16> to vector<128x128xbf16>
      %cst_90 = arith.constant dense<0.000000e+00> : vector<128x128xf32>
      %106 = tpu.matmul %103, %105, %cst_90 {dimension_numbers = #tpu.dot_dimension_numbers<[1], [0], [0], [1], [0, 0, 1, 1], [], []>} : vector<128x128xbf16>, vector<128x128xbf16>, vector<128x128xf32> -> vector<128x128xf32>
      %107 = arith.addf %98, %106 : vector<128x128xf32>
      %c2_i32_91 = arith.constant 2 : i32
      %108 = arith.addi %32, %c2_i32_91 : i32
      %c0_92 = arith.constant 0 : index
      %109 = arith.index_cast %108 : i32 to index
      %c2_93 = arith.constant 2 : index
      %c0_94 = arith.constant 0 : index
      %110 = vector.load %arg2[%c0_92, %109, %c2_93, %c0_94] : memref<1x18x18x128xbf16, #tpu.memory_space<vmem>>, vector<1x8x16x128xbf16>
      %111 = vector.shape_cast %110 : vector<1x8x16x128xbf16> to vector<8x16x128xbf16>
      %112 = vector.shape_cast %111 : vector<8x16x128xbf16> to vector<128x128xbf16>
      %c8 = arith.constant 8 : index
      %c0_95 = arith.constant 0 : index
      %c0_96 = arith.constant 0 : index
      %113 = vector.load %arg3[%c8, %c0_95, %c0_96] : memref<9x128x128xbf16, #tpu.memory_space<vmem>>, vector<1x128x128xbf16>
      %114 = vector.shape_cast %113 : vector<1x128x128xbf16> to vector<128x128xbf16>
      %cst_97 = arith.constant dense<0.000000e+00> : vector<128x128xf32>
      %115 = tpu.matmul %112, %114, %cst_97 {dimension_numbers = #tpu.dot_dimension_numbers<[1], [0], [0], [1], [0, 0, 1, 1], [], []>} : vector<128x128xbf16>, vector<128x128xbf16>, vector<128x128xf32> -> vector<128x128xf32>
      %116 = arith.addf %107, %115 : vector<128x128xf32>
      %c0_98 = arith.constant 0 : index
      %c0_99 = arith.constant 0 : index
      %117 = vector.load %arg6[%c0_98, %c0_99] : memref<1x128xf32, #tpu.memory_space<vmem>>, vector<1x128xf32>
      %cst_100 = arith.constant dense<0.000000e+00> : vector<128xf32>
      %118 = vector.multi_reduction <add>, %116, %cst_100 [0] : vector<128x128xf32> to vector<128xf32>
      %119 = vector.shape_cast %118 : vector<128xf32> to vector<1x128xf32>
      %120 = arith.addf %117, %119 : vector<1x128xf32>
      %c0_101 = arith.constant 0 : index
      %c0_102 = arith.constant 0 : index
      %121 = vector.load %arg6[%c0_101, %c0_102] : memref<1x128xf32, #tpu.memory_space<vmem>>, vector<1x128xf32>
      tpu.vector_store %arg6[%c0_101, %c0_102], %120 {strides = array<i32>} : memref<1x128xf32, #tpu.memory_space<vmem>>, vector<1x128xf32>,
      %c0_103 = arith.constant 0 : index
      %c0_104 = arith.constant 0 : index
      %122 = vector.load %arg7[%c0_103, %c0_104] : memref<1x128xf32, #tpu.memory_space<vmem>>, vector<1x128xf32>
      %123 = arith.mulf %116, %116 : vector<128x128xf32>
      %cst_105 = arith.constant dense<0.000000e+00> : vector<128xf32>
      %124 = vector.multi_reduction <add>, %123, %cst_105 [0] : vector<128x128xf32> to vector<128xf32>
      %125 = vector.shape_cast %124 : vector<128xf32> to vector<1x128xf32>
      %126 = arith.addf %122, %125 : vector<1x128xf32>
      %c0_106 = arith.constant 0 : index
      %c0_107 = arith.constant 0 : index
      %127 = vector.load %arg7[%c0_106, %c0_107] : memref<1x128xf32, #tpu.memory_space<vmem>>, vector<1x128xf32>
      tpu.vector_store %arg7[%c0_106, %c0_107], %126 {strides = array<i32>} : memref<1x128xf32, #tpu.memory_space<vmem>>, vector<1x128xf32>,
      %128 = arith.truncf %116 : vector<128x128xf32> to vector<128x128xbf16>
      %129 = arith.index_cast %34 : i32 to index
      %c0_108 = arith.constant 0 : index
      %130 = vector.load %arg5[%129, %c0_108] : memref<256x128xbf16, #tpu.memory_space<vmem>>, vector<128x128xbf16>
      tpu.vector_store %arg5[%129, %c0_108], %128 {strides = array<i32>} : memref<256x128xbf16, #tpu.memory_space<vmem>>, vector<128x128xbf16>,
    }
    %c2_i32_4 = arith.constant 2 : i32
    %c0_5 = arith.constant 0 : index
    %c0_6 = arith.constant 0 : index
    %5 = vector.load %arg6[%c0_5, %c0_6] : memref<1x128xf32, #tpu.memory_space<vmem>>, vector<1x128xf32>
    %cst_7 = arith.constant 3.906250e-03 : f32
    %6 = vector.broadcast %cst_7 : f32 to vector<1x128xf32>
    %7 = arith.mulf %5, %6 : vector<1x128xf32>
    %c0_8 = arith.constant 0 : index
    %c0_9 = arith.constant 0 : index
    %8 = vector.load %arg7[%c0_8, %c0_9] : memref<1x128xf32, #tpu.memory_space<vmem>>, vector<1x128xf32>
    %cst_10 = arith.constant 3.906250e-03 : f32
    %9 = vector.broadcast %cst_10 : f32 to vector<1x128xf32>
    %10 = arith.mulf %8, %9 : vector<1x128xf32>
    %11 = arith.mulf %7, %7 : vector<1x128xf32>
    %12 = arith.subf %10, %11 : vector<1x128xf32>
    %cst_11 = arith.constant 0.000000e+00 : f32
    %13 = vector.broadcast %cst_11 : f32 to vector<1x128xf32>
    %14 = arith.maximumf %12, %13 : vector<1x128xf32>
    %cst_12 = arith.constant 9.99999974E-6 : f32
    %15 = vector.broadcast %cst_12 : f32 to vector<1x128xf32>
    %16 = arith.addf %14, %15 : vector<1x128xf32>
    %17 = math.rsqrt %16 : vector<1x128xf32>
    %c0_i32_13 = arith.constant 0 : i32
    %c2_i32_14 = arith.constant 2 : i32
    %18 = arith.addi %c0_i32_13, %c2_i32_14 : i32
    %c1_i32_15 = arith.constant 1 : i32
    scf.for %arg8 = %c0_i32_13 to %18 step %c1_i32_15  : i32 {
      %c1_i32_30 = arith.constant 1 : i32
      %29 = arith.muli %arg8, %c1_i32_30 : i32
      %c0_i32_31 = arith.constant 0 : i32
      %30 = arith.addi %c0_i32_31, %29 : i32
      %c8_i32 = arith.constant 8 : i32
      %31 = arith.muli %30, %c8_i32 : i32
      %32 = tpu.assume_multiple %31, 8 : i32
      %c128_i32 = arith.constant 128 : i32
      %33 = arith.muli %30, %c128_i32 : i32
      %34 = tpu.assume_multiple %33, 128 : i32
      %35 = arith.index_cast %34 : i32 to index
      %c0_32 = arith.constant 0 : index
      %36 = vector.load %arg5[%35, %c0_32] : memref<256x128xbf16, #tpu.memory_space<vmem>>, vector<128x128xbf16>
      %37 = arith.extf %36 : vector<128x128xbf16> to vector<128x128xf32>
      %38 = vector.broadcast %7 : vector<1x128xf32> to vector<128x128xf32>
      %39 = arith.subf %37, %38 : vector<128x128xf32>
      %40 = vector.broadcast %17 : vector<1x128xf32> to vector<128x128xf32>
      %41 = arith.mulf %39, %40 : vector<128x128xf32>
      %cst_33 = arith.constant 0.000000e+00 : f32
      %42 = vector.broadcast %cst_33 : f32 to vector<128x128xf32>
      %43 = arith.maximumf %41, %42 : vector<128x128xf32>
      %44 = vector.shape_cast %43 : vector<128x128xf32> to vector<8x16x128xf32>
      %45 = vector.extract_strided_slice %44 {offsets = [0, 1, 0], sizes = [8, 1, 128], strides = [1, 1, 1]} : vector<8x16x128xf32> to vector<8x1x128xf32>
      %46 = vector.extract_strided_slice %44 {offsets = [0, 14, 0], sizes = [8, 1, 128], strides = [1, 1, 1]} : vector<8x16x128xf32> to vector<8x1x128xf32>
      %47 = tpu.concatenate %45, %44, %46 in 1 : vector<8x1x128xf32>, vector<8x16x128xf32>, vector<8x1x128xf32> -> vector<8x18x128xf32>
      %48 = arith.truncf %47 : vector<8x18x128xf32> to vector<8x18x128xbf16>
      %c1_i32_34 = arith.constant 1 : i32
      %49 = arith.addi %32, %c1_i32_34 : i32
      %c0_35 = arith.constant 0 : index
      %50 = arith.index_cast %49 : i32 to index
      %c0_36 = arith.constant 0 : index
      %c0_37 = arith.constant 0 : index
      %51 = vector.load %arg4[%c0_35, %50, %c0_36, %c0_37] : memref<1x18x18x128xbf16, #tpu.memory_space<vmem>>, vector<1x8x18x128xbf16>
      %52 = vector.shape_cast %51 : vector<1x8x18x128xbf16> to vector<8x18x128xbf16>
      %53 = vector.shape_cast %48 : vector<8x18x128xbf16> to vector<1x8x18x128xbf16>
      tpu.vector_store %arg4[%c0_35, %50, %c0_36, %c0_37], %53 {strides = array<i32>} : memref<1x18x18x128xbf16, #tpu.memory_space<vmem>>, vector<1x8x18x128xbf16>,
    }
    %c2_i32_16 = arith.constant 2 : i32
    %c0_17 = arith.constant 0 : index
    %c2 = arith.constant 2 : index
    %c0_18 = arith.constant 0 : index
    %c0_19 = arith.constant 0 : index
    %19 = vector.load %arg4[%c0_17, %c2, %c0_18, %c0_19] : memref<1x18x18x128xbf16, #tpu.memory_space<vmem>>, vector<1x1x18x128xbf16>
    %20 = vector.shape_cast %19 : vector<1x1x18x128xbf16> to vector<18x128xbf16>
    %c0_20 = arith.constant 0 : index
    %c0_21 = arith.constant 0 : index
    %c0_22 = arith.constant 0 : index
    %c0_23 = arith.constant 0 : index
    %21 = vector.load %arg4[%c0_20, %c0_21, %c0_22, %c0_23] : memref<1x18x18x128xbf16, #tpu.memory_space<vmem>>, vector<1x1x18x128xbf16>
    %22 = vector.shape_cast %21 : vector<1x1x18x128xbf16> to vector<18x128xbf16>
    %23 = vector.shape_cast %20 : vector<18x128xbf16> to vector<1x1x18x128xbf16>
    tpu.vector_store %arg4[%c0_20, %c0_21, %c0_22, %c0_23], %23 {strides = array<i32>} : memref<1x18x18x128xbf16, #tpu.memory_space<vmem>>, vector<1x1x18x128xbf16>,
    %c0_24 = arith.constant 0 : index
    %c15 = arith.constant 15 : index
    %c0_25 = arith.constant 0 : index
    %c0_26 = arith.constant 0 : index
    %24 = vector.load %arg4[%c0_24, %c15, %c0_25, %c0_26] : memref<1x18x18x128xbf16, #tpu.memory_space<vmem>>, vector<1x1x18x128xbf16>
    %25 = vector.shape_cast %24 : vector<1x1x18x128xbf16> to vector<18x128xbf16>
    %c0_27 = arith.constant 0 : index
    %c17 = arith.constant 17 : index
    %c0_28 = arith.constant 0 : index
    %c0_29 = arith.constant 0 : index
    %26 = vector.load %arg4[%c0_27, %c17, %c0_28, %c0_29] : memref<1x18x18x128xbf16, #tpu.memory_space<vmem>>, vector<1x1x18x128xbf16>
    %27 = vector.shape_cast %26 : vector<1x1x18x128xbf16> to vector<18x128xbf16>
    %28 = vector.shape_cast %25 : vector<18x128xbf16> to vector<1x1x18x128xbf16>
    tpu.vector_store %arg4[%c0_27, %c17, %c0_28, %c0_29], %28 {strides = array<i32>} : memref<1x18x18x128xbf16, #tpu.memory_space<vmem>>, vector<1x1x18x128xbf16>,
    return
  }
  func.func @transform_0(%arg0: i32, %arg1: i32) -> (i32, i32, i32, i32) {
    %c0_i32 = arith.constant 0 : i32
    %c0_i32_0 = arith.constant 0 : i32
    %c0_i32_1 = arith.constant 0 : i32
    %c0_i32_2 = arith.constant 0 : i32
    return %arg0, %c0_i32, %c0_i32_0, %c0_i32_1 : i32, i32, i32, i32
  }
  func.func @transform_1(%arg0: i32, %arg1: i32) -> (i32, i32, i32) {
    %c0_i32 = arith.constant 0 : i32
    %c0_i32_0 = arith.constant 0 : i32
    %c0_i32_1 = arith.constant 0 : i32
    return %c0_i32, %c0_i32_0, %arg1 : i32, i32, i32
  }
  func.func @transform_2(%arg0: i32, %arg1: i32) -> (i32, i32, i32, i32) {
    %c0_i32 = arith.constant 0 : i32
    %c0_i32_0 = arith.constant 0 : i32
    %c0_i32_1 = arith.constant 0 : i32
    return %arg0, %c0_i32, %c0_i32_0, %arg1 : i32, i32, i32, i32
  }
}

</mosaic_0001>

<llo_original>
// kernel: resnet_block_forward.3
$region0: #{resnet_block_forward.3}
  #allocation0 [shape = 'u32[]', space=smem, size = 0x4, offset = 0x4, fixed_abs, tag = 'smem constant byte address 0x4 - core index']
  #allocation1 [shape = 'u32[144,128]{1,0:T(1,128)}', space=vmem, size = 0x12000, scoped, tag = 'internal scratch']
  #allocation2 [shape = 'bf16[256,128]{1,0:T(8,128)(2,1)}', space=vmem, size = 0x10000, scoped, tag = 'scratch operand']
  #allocation3 [shape = 'f32[1,128]{1,0:T(1,128)}', space=vmem, size = 0x200, scoped, tag = 'scratch operand']
  #allocation4 [shape = 'f32[1,128]{1,0:T(1,128)}', space=vmem, size = 0x200, scoped, tag = 'scratch operand']
  %s0 = inlined_call_operand.vmem [shape: bf16[2,18,18,128], index: 0, kind: input, shape index: {}]
  %s1 = inlined_call_operand.vmem [shape: bf16[9,128,128], index: 1, kind: input, shape index: {}]
  %s2 = inlined_call_operand.vmem [shape: f32[2,256,128], index: 2, kind: input, shape index: {}, may-alias: {2,3}]
  %s3 = inlined_call_operand.vmem [shape: f32[2,256,128], index: 3, kind: output, shape index: {}, may-alias: {2,3}]
  %s4 = sld [smem:[#allocation0]]
  $region59: #{resnet_block_forward.3} parent=0
    _
  %s6 = ssub.s32 1, %s4
  %s7 = scalar_select 0, %s6, %s4
  loop: start=0, step=1, limit=4
  $region2: #{resnet_block_forward.3} parent=0 // loop_pre_header
    _
  $region3: #{resnet_block_forward.3} parent=0 // loop_header
    %s9 = sphi 0, %s13
    %p10 = scmp.ge.s32.totalorder %s9, 4
    %s16 = sphi 0, %s28
    %s17 = sphi 0, %s24
    %s18 = sphi 0, %s16
    %s19 = sphi 0, %s17
    %s20 = sphi 0, %s18
    %s21 = sphi 0, %s19
    %s31 = sphi 0, %s33
    %s34 = sphi 0, %s31
    %s35 = sphi 0, %s34
    %s51 = sphi 0, %s35
    %s57 = sphi 0, %s59
    %s60 = sphi 0, %s57
    %s61 = sphi 0, %s60
    %s77 = sphi 0, %s61
    %s85 = sphi 0, %s87
    %s88 = sphi 0, %s85
    %s89 = sphi 0, %s88
    %s105 = sphi 0, %s89
    %s113 = sphi 0, %s115
    %s116 = sphi 0, %s113
    %s117 = sphi 0, %s116
    %s133 = sphi 0, %s117
  $region4: #{resnet_block_forward.3} parent=0 // loop_header_branch
    %12 = sbr.rel (%p10) target = $region8
  $region5: #{resnet_block_forward.3} parent=0 // loop_body
    %s14 = ssub.s32 %s9, 1
    %s15 = ssub.s32 %s9, 2
    %s22 = sadd.s32 1, %s17
    %p23 = scmp.ge.s32.totalorder %s22, 1
    %s24 = scalar_select %p23, 0, %s22
    %s25 = sadd.s32 1, %s16
    %s26 = scalar_select %p23, %s25, %s16
    %p27 = scmp.ge.s32.totalorder %s26, 2
    %s28 = scalar_select %p27, 0, %s26
    %s29 = ssub.s32 %s16, %s28
    %p30 = scmp.eq.s32.totalorder %s29, 0
    %s32 = sadd.s32 %s31, 1
    %s33 = scalar_select %p30, %s31, %s32
    %p36 = pneg %p30
    %p37 = scmp.eq.s32.totalorder %s9, 1
    %p38 = por %p36, %p37
    %p39 = scmp.ne.s32.totalorder %s31, %s34
    %p40 = scmp.eq.s32.totalorder %s9, 0
    %p41 = por %p39, %p40
    %p42 = scmp.ne.s32.totalorder %s31, %s34
    %p43 = scmp.eq.s32.totalorder %s14, 1
    %p44 = por %p42, %p43
    %p45 = scmp.ne.s32.totalorder %s34, %s35
    %p46 = scmp.eq.s32.totalorder %s14, 0
    %p47 = por %p45, %p46
    %p48 = scmp.ne.s32.totalorder %s34, %s35
    %p49 = scmp.eq.s32.totalorder %s15, 1
    %p50 = por %p48, %p49
    %p52 = scmp.ne.s32.totalorder %s35, %s51
    %p53 = scmp.eq.s32.totalorder %s15, 0
    %p54 = por %p52, %p53
    %s55 = ssub.s32 %s17, %s24
    %p56 = scmp.eq.s32.totalorder %s55, 0
    %s58 = sadd.s32 %s57, 1
    %s59 = scalar_select %p56, %s57, %s58
    %p62 = pneg %p56
    %p63 = scmp.eq.s32.totalorder %s9, 1
    %p64 = por %p62, %p63
    %p65 = scmp.ne.s32.totalorder %s57, %s60
    %p66 = scmp.eq.s32.totalorder %s9, 0
    %p67 = por %p65, %p66
    %p68 = scmp.ne.s32.totalorder %s57, %s60
    %p69 = scmp.eq.s32.totalorder %s14, 1
    %p70 = por %p68, %p69
    %p71 = scmp.ne.s32.totalorder %s60, %s61
    %p72 = scmp.eq.s32.totalorder %s14, 0
    %p73 = por %p71, %p72
    %p74 = scmp.ne.s32.totalorder %s60, %s61
    %p75 = scmp.eq.s32.totalorder %s15, 1
    %p76 = por %p74, %p75
    %p78 = scmp.ne.s32.totalorder %s61, %s77
    %p79 = scmp.eq.s32.totalorder %s15, 0
    %p80 = por %p78, %p79
    %s81 = ssub.s32 %s16, %s28
    %s82 = ssub.s32 %s17, %s24
    %s83 = sor.u32 %s81, %s82
    %p84 = scmp.eq.s32.totalorder %s83, 0
    %s86 = sadd.s32 %s85, 1
    %s87 = scalar_select %p84, %s85, %s86
    %p90 = pneg %p84
    %p91 = scmp.eq.s32.totalorder %s9, 1
    %p92 = por %p90, %p91
    %p93 = scmp.ne.s32.totalorder %s85, %s88
    %p94 = scmp.eq.s32.totalorder %s9, 0
    %p95 = por %p93, %p94
    %p96 = scmp.ne.s32.totalorder %s85, %s88
    %p97 = scmp.eq.s32.totalorder %s14, 1
    %p98 = por %p96, %p97
    %p99 = scmp.ne.s32.totalorder %s88, %s89
    %p100 = scmp.eq.s32.totalorder %s14, 0
    %p101 = por %p99, %p100
    %p102 = scmp.ne.s32.totalorder %s88, %s89
    %p103 = scmp.eq.s32.totalorder %s15, 1
    %p104 = por %p102, %p103
    %p106 = scmp.ne.s32.totalorder %s89, %s105
    %p107 = scmp.eq.s32.totalorder %s15, 0
    %p108 = por %p106, %p107
    %s109 = ssub.s32 %s16, %s28
    %s110 = ssub.s32 %s17, %s24
    %s111 = sor.u32 %s109, %s110
    %p112 = scmp.eq.s32.totalorder %s111, 0
    %s114 = sadd.s32 %s113, 1
    %s115 = scalar_select %p112, %s113, %s114
    %p118 = pneg %p112
    %p119 = scmp.eq.s32.totalorder %s9, 1
    %p120 = por %p118, %p119
    %p121 = scmp.ne.s32.totalorder %s113, %s116
    %p122 = scmp.eq.s32.totalorder %s9, 0
    %p123 = por %p121, %p122
    %p124 = scmp.ne.s32.totalorder %s113, %s116
    %p125 = scmp.eq.s32.totalorder %s14, 1
    %p126 = por %p124, %p125
    %p127 = scmp.ne.s32.totalorder %s116, %s117
    %p128 = scmp.eq.s32.totalorder %s14, 0
    %p129 = por %p127, %p128
    %p130 = scmp.ne.s32.totalorder %s116, %s117
    %p131 = scmp.eq.s32.totalorder %s15, 1
    %p132 = por %p130, %p131
    %p134 = scmp.ne.s32.totalorder %s117, %s133
    %p135 = scmp.eq.s32.totalorder %s15, 0
    %p136 = por %p134, %p135
    %p137 = scmp.le.s32.totalorder 1, %s9
    %p138 = scmp.lt.s32.totalorder %s9, 3
    %p139 = pnand %p137, %p138
    %p140 = pneg %p139
    // Predicated region
    $region9: #{resnet_block_forward.3} parent=5 // pred_check
      _
    $region10: #{resnet_block_forward.3} parent=5 // pred_check_branch
      %142 = sbr.rel (%p139) target = $region12
    $region11: #{resnet_block_forward.3} parent=5 // pred_region
      %s143 = ssub.s32 %s9, 1
      // Predicated region
      $region13: #{resnet_block_forward.3} parent=11 // pred_check
        %p144 = pneg %p73
      $region14: #{resnet_block_forward.3} parent=11 // pred_check_branch
        %146 = sbr.rel (%p144) target = $region16
      $region15: #{resnet_block_forward.3} parent=11 // pred_region
        %p147 = scmp.lt.s32.totalorder %s19, 0
        %s148 = scalar_select %p147, %s19, 0
        %s149 = smul.addr %s148, 4
        %s150 = scalar_lea.vmem %s1, %s149
      $region16: #{resnet_block_forward.3} parent=11 // pred_fallthru
        _
    $region12: #{resnet_block_forward.3} parent=5 // pred_fallthru
      _
    %p151 = scmp.lt.s32.totalorder %s9, 2
    // Predicated region
    $region17: #{resnet_block_forward.3} parent=5 // pred_check
      %p152 = pneg %p151
    $region18: #{resnet_block_forward.3} parent=5 // pred_check_branch
      %154 = sbr.rel (%p152) target = $region20
    $region19: #{resnet_block_forward.3} parent=5 // pred_region
      // Predicated region
      $region21: #{resnet_block_forward.3} parent=19 // pred_check
        %p155 = pneg %p41
      $region22: #{resnet_block_forward.3} parent=19 // pred_check_branch
        %157 = sbr.rel (%p155) target = $region24
      $region23: #{resnet_block_forward.3} parent=19 // pred_region
        %p158 = scmp.lt.s32.totalorder %s16, 1
        %s159 = scalar_select %p158, %s16, 1
        %s160 = smul.addr %s159, 54
        %s161 = smul.addr %s160, 4
        %s162 = scalar_lea.vmem %s0, %s161
      $region24: #{resnet_block_forward.3} parent=19 // pred_fallthru
        _
      // Predicated region
      $region25: #{resnet_block_forward.3} parent=19 // pred_check
        %p163 = pneg %p95
      $region26: #{resnet_block_forward.3} parent=19 // pred_check_branch
        %165 = sbr.rel (%p163) target = $region28
      $region27: #{resnet_block_forward.3} parent=19 // pred_region
        %p166 = scmp.lt.s32.totalorder %s16, 1
        %s167 = scalar_select %p166, %s16, 1
        %p168 = scmp.lt.s32.totalorder %s17, 0
        %s169 = scalar_select %p168, %s17, 0
        %s170 = smul.addr %s167, 32
        %s171 = sadd.s32 %s169, %s170
        %s172 = smul.addr %s171, 8
        %s173 = scalar_lea.vmem %s2, %s172
      $region28: #{resnet_block_forward.3} parent=19 // pred_fallthru
        _
    $region20: #{resnet_block_forward.3} parent=5 // pred_fallthru
      _
    %p174 = scmp.le.s32.totalorder 1, %s9
    %p175 = scmp.lt.s32.totalorder %s9, 3
    %p176 = pnand %p174, %p175
    %p177 = pneg %p176
    // Predicated region
    $region29: #{resnet_block_forward.3} parent=5 // pred_check
      _
    $region30: #{resnet_block_forward.3} parent=5 // pred_check_branch
      %179 = sbr.rel (%p176) target = $region32
    $region31: #{resnet_block_forward.3} parent=5 // pred_region
      %s180 = ssub.s32 %s9, 1
      %p181 = scmp.lt.s32.totalorder %s18, 1
      %s182 = scalar_select %p181, %s18, 1
      %s183 = smul.addr %s182, 54
      %s184 = smul.addr %s183, 4
      %s185 = scalar_lea.vmem %s0, %s184
      %p186 = pneg %p47
      %p187 = pneg %p44
      %p188 = scmp.lt.s32.totalorder %s19, 0
      %s189 = scalar_select %p188, %s19, 0
      %s190 = smul.addr %s189, 4
      %s191 = scalar_lea.vmem %s1, %s190
      %p192 = pneg %p73
      %p193 = pneg %p70
      %p194 = scmp.lt.s32.totalorder %s18, 1
      %s195 = scalar_select %p194, %s18, 1
      %p196 = scmp.lt.s32.totalorder %s19, 0
      %s197 = scalar_select %p196, %s19, 0
      %s198 = smul.addr %s195, 32
      %s199 = sadd.s32 %s197, %s198
      %s200 = smul.addr %s199, 8
      %s201 = scalar_lea.vmem %s2, %s200
      %p202 = pneg %p101
      %p203 = pneg %p98
      %p204 = pneg %p129
      %p205 = pneg %p126
      %p206 = scmp.lt.s32.totalorder %s18, 1
      %s207 = scalar_select %p206, %s18, 1
      %p208 = scmp.lt.s32.totalorder %s19, 0
      %s209 = scalar_select %p208, %s19, 0
      %s210 = smul.addr %s207, 32
      %s211 = sadd.s32 %s209, %s210
      %s212 = smul.addr %s211, 8
      %s213 = scalar_lea.vmem %s3, %s212
      %p214 = scmp.lt.s32.totalorder %s18, 1
      %s215 = scalar_select %p214, %s18, 1
      %s216 = smul.addr %s215, 54
      %s217 = smul.addr %s216, 4
      %s218 = scalar_lea.vmem %s0, %s217
      %p219 = scmp.lt.s32.totalorder %s19, 0
      %s220 = scalar_select %p219, %s19, 0
      %s221 = smul.addr %s220, 4
      %s222 = scalar_lea.vmem %s1, %s221
      %p223 = scmp.lt.s32.totalorder %s18, 1
      %s224 = scalar_select %p223, %s18, 1
      %p225 = scmp.lt.s32.totalorder %s19, 0
      %s226 = scalar_select %p225, %s19, 0
      %s227 = smul.addr %s224, 32
      %s228 = sadd.s32 %s226, %s227
      %s229 = smul.addr %s228, 8
      %s230 = scalar_lea.vmem %s2, %s229
      %p231 = scmp.lt.s32.totalorder %s18, 1
      %s232 = scalar_select %p231, %s18, 1
      %p233 = scmp.lt.s32.totalorder %s19, 0
      %s234 = scalar_select %p233, %s19, 0
      %s235 = smul.addr %s232, 32
      %s236 = sadd.s32 %s234, %s235
      %s237 = smul.addr %s236, 8
      %s238 = scalar_lea.vmem %s3, %s237
      %240 = vst [vmem:[#allocation3] sm:$0x1] 0.0
      %241 = vst [vmem:[#allocation4] sm:$0x1] 0.0
      loop: start=0, step=1, limit=2
      $region33: #{resnet_block_forward.3} parent=31 // loop_pre_header
        _
      $region34: #{resnet_block_forward.3} parent=31 // loop_header
        %s243 = sphi 0, %s247
        %p244 = scmp.ge.s32.totalorder %s243, 2
      $region35: #{resnet_block_forward.3} parent=31 // loop_header_branch
        %246 = sbr.rel (%p244) target = $region39
      $region36: #{resnet_block_forward.3} parent=31 // loop_body
        %s248 = smul.u32 %s243, 8
        %s249 = smul.u32 %s243, 128
        %s250 = smul.u32 %s248, 3
        %s251 = smul.addr %s250, 4
        %s252 = scalar_lea.vmem %s218, %s251
        %v253 = vld [vmem:[%s252] sm:$0xf]
        %v254 = vld [vmem:[%s252 + $0x4] sm:$0xf]
        %v255 = vld [vmem:[%s252 + $0xc] sm:$0xf]
        %v256 = vld [vmem:[%s252 + $0x10] sm:$0xf]
        %v257 = vld [vmem:[%s252 + $0x18] sm:$0xf]
        %v258 = vld [vmem:[%s252 + $0x1c] sm:$0xf]
        %v259 = vld [vmem:[%s252 + $0x24] sm:$0xf]
        %v260 = vld [vmem:[%s252 + $0x28] sm:$0xf]
        %v261 = vld [vmem:[%s252 + $0x30] sm:$0xf]
        %v262 = vld [vmem:[%s252 + $0x34] sm:$0xf]
        %v263 = vld [vmem:[%s252 + $0x3c] sm:$0xf]
        %v264 = vld [vmem:[%s252 + $0x40] sm:$0xf]
        %v265 = vld [vmem:[%s252 + $0x48] sm:$0xf]
        %v266 = vld [vmem:[%s252 + $0x4c] sm:$0xf]
        %v267 = vld [vmem:[%s252 + $0x54] sm:$0xf]
        %v268 = vld [vmem:[%s252 + $0x58] sm:$0xf]
        %v269 = vld [vmem:[%s222] sm:$0xf]
        %v270 = vld [vmem:[%s222 + $0x4] sm:$0xf]
        %v271 = vld [vmem:[%s222 + $0x8] sm:$0xf]
        %v272 = vld [vmem:[%s222 + $0xc] sm:$0xf]
        %v273 = vld [vmem:[%s222 + $0x10] sm:$0xf]
        %v274 = vld [vmem:[%s222 + $0x14] sm:$0xf]
        %v275 = vld [vmem:[%s222 + $0x18] sm:$0xf]
        %v276 = vld [vmem:[%s222 + $0x1c] sm:$0xf]
        %v277 = vld [vmem:[%s222 + $0x20] sm:$0xf]
        %v278 = vld [vmem:[%s222 + $0x24] sm:$0xf]
        %v279 = vld [vmem:[%s222 + $0x28] sm:$0xf]
        %v280 = vld [vmem:[%s222 + $0x2c] sm:$0xf]
        %v281 = vld [vmem:[%s222 + $0x30] sm:$0xf]
        %v282 = vld [vmem:[%s222 + $0x34] sm:$0xf]
        %v283 = vld [vmem:[%s222 + $0x38] sm:$0xf]
        %v284 = vld [vmem:[%s222 + $0x3c] sm:$0xf]
        %v285 = vld [vmem:[%s252 + $0x8] sm:$0x1]
        %v286 = vld [vmem:[%s252 + $0x14] sm:$0x1]
        %v287 = vld [vmem:[%s252 + $0x20] sm:$0x1]
        %v288 = vld [vmem:[%s252 + $0x2c] sm:$0x1]
        %v289 = vld [vmem:[%s252 + $0x38] sm:$0x1]
        %v290 = vld [vmem:[%s252 + $0x44] sm:$0x1]
        %v291 = vld [vmem:[%s252 + $0x50] sm:$0x1]
        %v292 = vld [vmem:[%s252 + $0x5c] sm:$0x1]
        %vm293 = vsmask.f32 3328
        %vm294 = vsmask.f32 7440
        %vm295 = vmor %vm293, %vm294
        %v297 = vshrl.u32 %v253, 16
        %v299 = vrot.slane %v297, 4
        %v300 = vshll.u32 %v253, 16
        %v302 = vrot.slane %v300, 5
        %v303 = vor.u32 %v299, %v302
        %v304 = vrot.slane %v303, 4
        %v306 = vshll.u32 %v254, 16
        %v308 = vrot.slane %v306, 5
        %v309 = vsel %vm295, %v304, %v308
        %v310 = vshrl.u32 %v254, 16
        %v312 = vrot.slane %v310, 4
        %v313 = vor.u32 %v312, %v308
        %v314 = vrot.slane %v313, 4
        %v316 = vshll.u32 %v285, 16
        %v318 = vrot.slane %v316, 5
        %v319 = vsel %vm295, %v314, %v318
        %v321 = vshrl.u32 %v255, 16
        %v323 = vrot.slane %v321, 4
        %v324 = vshll.u32 %v255, 16
        %v326 = vrot.slane %v324, 5
        %v327 = vor.u32 %v323, %v326
        %v328 = vrot.slane %v327, 4
        %v330 = vshll.u32 %v256, 16
        %v332 = vrot.slane %v330, 5
        %v333 = vsel %vm295, %v328, %v332
        %v334 = vshrl.u32 %v256, 16
        %v336 = vrot.slane %v334, 4
        %v337 = vor.u32 %v336, %v332
        %v338 = vrot.slane %v337, 4
        %v340 = vshll.u32 %v286, 16
        %v342 = vrot.slane %v340, 5
        %v343 = vsel %vm295, %v338, %v342
        %v345 = vshrl.u32 %v257, 16
        %v347 = vrot.slane %v345, 4
        %v348 = vshll.u32 %v257, 16
        %v350 = vrot.slane %v348, 5
        %v351 = vor.u32 %v347, %v350
        %v352 = vrot.slane %v351, 4
        %v354 = vshll.u32 %v258, 16
        %v356 = vrot.slane %v354, 5
        %v357 = vsel %vm295, %v352, %v356
        %v358 = vshrl.u32 %v258, 16
        %v360 = vrot.slane %v358, 4
        %v361 = vor.u32 %v360, %v356
        %v362 = vrot.slane %v361, 4
        %v364 = vshll.u32 %v287, 16
        %v366 = vrot.slane %v364, 5
        %v367 = vsel %vm295, %v362, %v366
        %v369 = vshrl.u32 %v259, 16
        %v371 = vrot.slane %v369, 4
        %v372 = vshll.u32 %v259, 16
        %v374 = vrot.slane %v372, 5
        %v375 = vor.u32 %v371, %v374
        %v376 = vrot.slane %v375, 4
        %v378 = vshll.u32 %v260, 16
        %v380 = vrot.slane %v378, 5
        %v381 = vsel %vm295, %v376, %v380
        %v382 = vshrl.u32 %v260, 16
        %v384 = vrot.slane %v382, 4
        %v385 = vor.u32 %v384, %v380
        %v386 = vrot.slane %v385, 4
        %v388 = vshll.u32 %v288, 16
        %v390 = vrot.slane %v388, 5
        %v391 = vsel %vm295, %v386, %v390
        %v393 = vshrl.u32 %v261, 16
        %v395 = vrot.slane %v393, 4
        %v396 = vshll.u32 %v261, 16
        %v398 = vrot.slane %v396, 5
        %v399 = vor.u32 %v395, %v398
        %v400 = vrot.slane %v399, 4
        %v402 = vshll.u32 %v262, 16
        %v404 = vrot.slane %v402, 5
        %v405 = vsel %vm295, %v400, %v404
        %v406 = vshrl.u32 %v262, 16
        %v408 = vrot.slane %v406, 4
        %v409 = vor.u32 %v408, %v404
        %v410 = vrot.slane %v409, 4
        %v412 = vshll.u32 %v289, 16
        %v414 = vrot.slane %v412, 5
        %v415 = vsel %vm295, %v410, %v414
        %v417 = vshrl.u32 %v263, 16
        %v419 = vrot.slane %v417, 4
        %v420 = vshll.u32 %v263, 16
        %v422 = vrot.slane %v420, 5
        %v423 = vor.u32 %v419, %v422
        %v424 = vrot.slane %v423, 4
        %v426 = vshll.u32 %v264, 16
        %v428 = vrot.slane %v426, 5
        %v429 = vsel %vm295, %v424, %v428
        %v430 = vshrl.u32 %v264, 16
        %v432 = vrot.slane %v430, 4
        %v433 = vor.u32 %v432, %v428
        %v434 = vrot.slane %v433, 4
        %v436 = vshll.u32 %v290, 16
        %v438 = vrot.slane %v436, 5
        %v439 = vsel %vm295, %v434, %v438
        %v441 = vshrl.u32 %v265, 16
        %v443 = vrot.slane %v441, 4
        %v444 = vshll.u32 %v265, 16
        %v446 = vrot.slane %v444, 5
        %v447 = vor.u32 %v443, %v446
        %v448 = vrot.slane %v447, 4
        %v450 = vshll.u32 %v266, 16
        %v452 = vrot.slane %v450, 5
        %v453 = vsel %vm295, %v448, %v452
        %v454 = vshrl.u32 %v266, 16
        %v456 = vrot.slane %v454, 4
        %v457 = vor.u32 %v456, %v452
        %v458 = vrot.slane %v457, 4
        %v460 = vshll.u32 %v291, 16
        %v462 = vrot.slane %v460, 5
        %v463 = vsel %vm295, %v458, %v462
        %v465 = vshrl.u32 %v267, 16
        %v467 = vrot.slane %v465, 4
        %v468 = vshll.u32 %v267, 16
        %v470 = vrot.slane %v468, 5
        %v471 = vor.u32 %v467, %v470
        %v472 = vrot.slane %v471, 4
        %v474 = vshll.u32 %v268, 16
        %v476 = vrot.slane %v474, 5
        %v477 = vsel %vm295, %v472, %v476
        %v478 = vshrl.u32 %v268, 16
        %v480 = vrot.slane %v478, 4
        %v481 = vor.u32 %v480, %v476
        %v482 = vrot.slane %v481, 4
        %v484 = vshll.u32 %v292, 16
        %v486 = vrot.slane %v484, 5
        %v487 = vsel %vm295, %v482, %v486
        %s488 = scalar_lea.vmem %s222, 64
        %v489 = vld [vmem:[%s488] sm:$0xf]
        %v490 = vld [vmem:[%s488 + $0x4] sm:$0xf]
        %v491 = vld [vmem:[%s488 + $0x8] sm:$0xf]
        %v492 = vld [vmem:[%s488 + $0xc] sm:$0xf]
        %v493 = vld [vmem:[%s488 + $0x10] sm:$0xf]
        %v494 = vld [vmem:[%s488 + $0x14] sm:$0xf]
        %v495 = vld [vmem:[%s488 + $0x18] sm:$0xf]
        %v496 = vld [vmem:[%s488 + $0x1c] sm:$0xf]
        %v497 = vld [vmem:[%s488 + $0x20] sm:$0xf]
        %v498 = vld [vmem:[%s488 + $0x24] sm:$0xf]
        %v499 = vld [vmem:[%s488 + $0x28] sm:$0xf]
        %v500 = vld [vmem:[%s488 + $0x2c] sm:$0xf]
        %v501 = vld [vmem:[%s488 + $0x30] sm:$0xf]
        %v502 = vld [vmem:[%s488 + $0x34] sm:$0xf]
        %v503 = vld [vmem:[%s488 + $0x38] sm:$0xf]
        %v504 = vld [vmem:[%s488 + $0x3c] sm:$0xf]
        %v505 = vunpack.c.l.b16 %v309
        %v506 = vunpack.c.l.b16 %v319
        %v507 = vunpack.c.l.b16 %v333
        %v508 = vunpack.c.l.b16 %v343
        %v509 = vunpack.c.l.b16 %v357
        %v510 = vunpack.c.l.b16 %v367
        %v511 = vunpack.c.l.b16 %v381
        %v512 = vunpack.c.l.b16 %v391
        %v513 = vunpack.c.l.b16 %v405
        %v514 = vunpack.c.l.b16 %v415
        %v515 = vunpack.c.l.b16 %v429
        %v516 = vunpack.c.l.b16 %v439
        %v517 = vunpack.c.l.b16 %v453
        %v518 = vunpack.c.l.b16 %v463
        %v519 = vunpack.c.l.b16 %v477
        %v520 = vunpack.c.l.b16 %v487
        %v521 = vpack.c.b16 %v506, %v505
        %v522 = vpack.c.b16 %v508, %v507
        %v523 = vpack.c.b16 %v510, %v509
        %v524 = vpack.c.b16 %v512, %v511
        %v525 = vpack.c.b16 %v514, %v513
        %v526 = vpack.c.b16 %v516, %v515
        %v527 = vpack.c.b16 %v518, %v517
        %v528 = vpack.c.b16 %v520, %v519
        %v553 = vunpack.c.l.b16 %v489
        %v554 = vunpack.c.l.b16 %v490
        %v555 = vunpack.c.l.b16 %v491
        %v556 = vunpack.c.l.b16 %v492
        %v557 = vunpack.c.l.b16 %v493
        %v558 = vunpack.c.l.b16 %v494
        %v559 = vunpack.c.l.b16 %v495
        %v560 = vunpack.c.l.b16 %v496
        %v561 = vunpack.c.l.b16 %v497
        %v562 = vunpack.c.l.b16 %v498
        %v563 = vunpack.c.l.b16 %v499
        %v564 = vunpack.c.l.b16 %v500
        %v565 = vunpack.c.l.b16 %v501
        %v566 = vunpack.c.l.b16 %v502
        %v567 = vunpack.c.l.b16 %v503
        %v568 = vunpack.c.l.b16 %v504
        %v569 = vpack.c.b16 %v554, %v553
        %v570 = vpack.c.b16 %v556, %v555
        %v571 = vpack.c.b16 %v558, %v557
        %v572 = vpack.c.b16 %v560, %v559
        %v573 = vpack.c.b16 %v562, %v561
        %v574 = vpack.c.b16 %v564, %v563
        %v575 = vpack.c.b16 %v566, %v565
        %v576 = vpack.c.b16 %v568, %v567
        %585 = vmatprep.subr.bf16.mxu0 0
        %586 = vmatpush1.bf16.msra.mxu0 %v576
        %587 = vmatprep.subr.bf16.mxu0 0
        %588 = vmatpush1.bf16.msra.mxu0 %v575
        %589 = vmatprep.subr.bf16.mxu0 0
        %590 = vmatpush1.bf16.msra.mxu0 %v574
        %591 = vmatprep.subr.bf16.mxu0 0
        %592 = vmatpush1.bf16.msra.mxu0 %v573
        %593 = vmatprep.subr.bf16.mxu0 0
        %594 = vmatpush1.bf16.msra.mxu0 %v572
        %595 = vmatprep.subr.bf16.mxu0 0
        %596 = vmatpush1.bf16.msra.mxu0 %v571
        %597 = vmatprep.subr.bf16.mxu0 0
        %598 = vmatpush1.bf16.msra.mxu0 %v570
        %599 = vmatprep.subr.bf16.mxu0 0
        %600 = vmatpush1.bf16.msra.mxu0 %v569
        %601 = vmatprep.subr.bf16.mxu0 0
        %602 = vmatpush2.bf16.msra.mxu0 0
        %603 = vmatprep.subr.bf16.mxu0 0
        %604 = vmatpush2.bf16.msra.mxu0 0
        %605 = vmatprep.subr.bf16.mxu0 0
        %606 = vmatpush2.bf16.msra.mxu0 0
        %607 = vmatprep.subr.bf16.mxu0 0
        %608 = vmatpush2.bf16.msra.mxu0 0
        %609 = vmatprep.subr.bf16.mxu0 0
        %610 = vmatpush2.bf16.msra.mxu0 0
        %611 = vmatprep.subr.bf16.mxu0 0
        %612 = vmatpush2.bf16.msra.mxu0 0
        %613 = vmatprep.subr.bf16.mxu0 0
        %614 = vmatpush2.bf16.msra.mxu0 0
        %615 = vmatprep.subr.bf16.mxu0 0
        %616 = vmatpush2.bf16.msra.mxu0 0
        %617 = vmatprep.mubr.bf16.mxu0 0
        %618 = vmatmul.mubr.bf16.gmra.mxu0 %v521
        %v619 = vpop.f32.mrf.mxu0
        %v620 = vadd.f32 0.0, %v619
        %v621 = vpop.f32.mrf.mxu0
        %v622 = vpop.f32.mrf.mxu0
        %v623 = vadd.f32 0.0, %v622
        %v624 = vpop.f32.mrf.mxu0
        %625 = vmatprep.mubr.bf16.mxu0 0
        %626 = vmatmul.mubr.bf16.gmra.mxu0 %v522
        %v627 = vpop.f32.mrf.mxu0
        %v628 = vadd.f32 0.0, %v627
        %v629 = vpop.f32.mrf.mxu0
        %v630 = vpop.f32.mrf.mxu0
        %v631 = vadd.f32 0.0, %v630
        %v632 = vpop.f32.mrf.mxu0
        %633 = vmatprep.mubr.bf16.mxu0 0
        %634 = vmatmul.mubr.bf16.gmra.mxu0 %v523
        %v635 = vpop.f32.mrf.mxu0
        %v636 = vadd.f32 0.0, %v635
        %v637 = vpop.f32.mrf.mxu0
        %v638 = vpop.f32.mrf.mxu0
        %v639 = vadd.f32 0.0, %v638
        %v640 = vpop.f32.mrf.mxu0
        %641 = vmatprep.mubr.bf16.mxu0 0
        %642 = vmatmul.mubr.bf16.gmra.mxu0 %v524
        %v643 = vpop.f32.mrf.mxu0
        %v644 = vadd.f32 0.0, %v643
        %v645 = vpop.f32.mrf.mxu0
        %v646 = vpop.f32.mrf.mxu0
        %v647 = vadd.f32 0.0, %v646
        %v648 = vpop.f32.mrf.mxu0
        %649 = vmatprep.mubr.bf16.mxu0 0
        %650 = vmatmul.mubr.bf16.gmra.mxu0 %v525
        %v651 = vpop.f32.mrf.mxu0
        %v652 = vadd.f32 0.0, %v651
        %v653 = vpop.f32.mrf.mxu0
        %v654 = vpop.f32.mrf.mxu0
        %v655 = vadd.f32 0.0, %v654
        %v656 = vpop.f32.mrf.mxu0
        %657 = vmatprep.mubr.bf16.mxu0 0
        %658 = vmatmul.mubr.bf16.gmra.mxu0 %v526
        %v659 = vpop.f32.mrf.mxu0
        %v660 = vadd.f32 0.0, %v659
        %v661 = vpop.f32.mrf.mxu0
        %v662 = vpop.f32.mrf.mxu0
        %v663 = vadd.f32 0.0, %v662
        %v664 = vpop.f32.mrf.mxu0
        %665 = vmatprep.mubr.bf16.mxu0 0
        %666 = vmatmul.mubr.bf16.gmra.mxu0 %v527
        %v667 = vpop.f32.mrf.mxu0
        %v668 = vadd.f32 0.0, %v667
        %v669 = vpop.f32.mrf.mxu0
        %v670 = vpop.f32.mrf.mxu0
        %v671 = vadd.f32 0.0, %v670
        %v672 = vpop.f32.mrf.mxu0
        %673 = vmatprep.mubr.bf16.mxu0 0
        %674 = vmatmul.mubr.bf16.gmra.mxu0 %v528
        %v675 = vpop.f32.mrf.mxu0
        %v676 = vadd.f32 0.0, %v675
        %v677 = vpop.f32.mrf.mxu0
        %v678 = vpop.f32.mrf.mxu0
        %v679 = vadd.f32 0.0, %v678
        %v680 = vpop.f32.mrf.mxu0
        %681 = vdwg.mxu0
        %v698 = vunpack.c.l.b16 %v253
        %v699 = vunpack.c.l.b16 %v254
        %v700 = vunpack.c.l.b16 %v255
        %v701 = vunpack.c.l.b16 %v256
        %v702 = vunpack.c.l.b16 %v257
        %v703 = vunpack.c.l.b16 %v258
        %v704 = vunpack.c.l.b16 %v259
        %v705 = vunpack.c.l.b16 %v260
        %v706 = vunpack.c.l.b16 %v261
        %v707 = vunpack.c.l.b16 %v262
        %v708 = vunpack.c.l.b16 %v263
        %v709 = vunpack.c.l.b16 %v264
        %v710 = vunpack.c.l.b16 %v265
        %v711 = vunpack.c.l.b16 %v266
        %v712 = vunpack.c.l.b16 %v267
        %v713 = vunpack.c.l.b16 %v268
        %v714 = vpack.c.b16 %v699, %v698
        %v715 = vpack.c.b16 %v701, %v700
        %v716 = vpack.c.b16 %v703, %v702
        %v717 = vpack.c.b16 %v705, %v704
        %v718 = vpack.c.b16 %v707, %v706
        %v719 = vpack.c.b16 %v709, %v708
        %v720 = vpack.c.b16 %v711, %v710
        %v721 = vpack.c.b16 %v713, %v712
        %v746 = vunpack.c.l.b16 %v269
        %v747 = vunpack.c.l.b16 %v270
        %v748 = vunpack.c.l.b16 %v271
        %v749 = vunpack.c.l.b16 %v272
        %v750 = vunpack.c.l.b16 %v273
        %v751 = vunpack.c.l.b16 %v274
        %v752 = vunpack.c.l.b16 %v275
        %v753 = vunpack.c.l.b16 %v276
        %v754 = vunpack.c.l.b16 %v277
        %v755 = vunpack.c.l.b16 %v278
        %v756 = vunpack.c.l.b16 %v279
        %v757 = vunpack.c.l.b16 %v280
        %v758 = vunpack.c.l.b16 %v281
        %v759 = vunpack.c.l.b16 %v282
        %v760 = vunpack.c.l.b16 %v283
        %v761 = vunpack.c.l.b16 %v284
        %v762 = vpack.c.b16 %v747, %v746
        %v763 = vpack.c.b16 %v749, %v748
        %v764 = vpack.c.b16 %v751, %v750
        %v765 = vpack.c.b16 %v753, %v752
        %v766 = vpack.c.b16 %v755, %v754
        %v767 = vpack.c.b16 %v757, %v756
        %v768 = vpack.c.b16 %v759, %v758
        %v769 = vpack.c.b16 %v761, %v760
        %778 = vmatprep.subr.bf16.mxu0 0
        %779 = vmatpush1.bf16.msra.mxu0 %v769
        %780 = vmatprep.subr.bf16.mxu0 0
        %781 = vmatpush1.bf16.msra.mxu0 %v768
        %782 = vmatprep.subr.bf16.mxu0 0
        %783 = vmatpush1.bf16.msra.mxu0 %v767
        %784 = vmatprep.subr.bf16.mxu0 0
        %785 = vmatpush1.bf16.msra.mxu0 %v766
        %786 = vmatprep.subr.bf16.mxu0 0
        %787 = vmatpush1.bf16.msra.mxu0 %v765
        %788 = vmatprep.subr.bf16.mxu0 0
        %789 = vmatpush1.bf16.msra.mxu0 %v764
        %790 = vmatprep.subr.bf16.mxu0 0
        %791 = vmatpush1.bf16.msra.mxu0 %v763
        %792 = vmatprep.subr.bf16.mxu0 0
        %793 = vmatpush1.bf16.msra.mxu0 %v762
        %794 = vmatprep.subr.bf16.mxu0 0
        %795 = vmatpush2.bf16.msra.mxu0 0
        %796 = vmatprep.subr.bf16.mxu0 0
        %797 = vmatpush2.bf16.msra.mxu0 0
        %798 = vmatprep.subr.bf16.mxu0 0
        %799 = vmatpush2.bf16.msra.mxu0 0
        %800 = vmatprep.subr.bf16.mxu0 0
        %801 = vmatpush2.bf16.msra.mxu0 0
        %802 = vmatprep.subr.bf16.mxu0 0
        %803 = vmatpush2.bf16.msra.mxu0 0
        %804 = vmatprep.subr.bf16.mxu0 0
        %805 = vmatpush2.bf16.msra.mxu0 0
        %806 = vmatprep.subr.bf16.mxu0 0
        %807 = vmatpush2.bf16.msra.mxu0 0
        %808 = vmatprep.subr.bf16.mxu0 0
        %809 = vmatpush2.bf16.msra.mxu0 0
        %810 = vmatprep.mubr.bf16.mxu0 0
        %811 = vmatmul.mubr.bf16.gmra.mxu0 %v714
        %v812 = vpop.f32.mrf.mxu0
        %v813 = vadd.f32 %v620, %v812
        %v814 = vpop.f32.mrf.mxu0
        %v815 = vpop.f32.mrf.mxu0
        %v816 = vadd.f32 %v623, %v815
        %v817 = vpop.f32.mrf.mxu0
        %818 = vmatprep.mubr.bf16.mxu0 0
        %819 = vmatmul.mubr.bf16.gmra.mxu0 %v715
        %v820 = vpop.f32.mrf.mxu0
        %v821 = vadd.f32 %v628, %v820
        %v822 = vpop.f32.mrf.mxu0
        %v823 = vpop.f32.mrf.mxu0
        %v824 = vadd.f32 %v631, %v823
        %v825 = vpop.f32.mrf.mxu0
        %826 = vmatprep.mubr.bf16.mxu0 0
        %827 = vmatmul.mubr.bf16.gmra.mxu0 %v716
        %v828 = vpop.f32.mrf.mxu0
        %v829 = vadd.f32 %v636, %v828
        %v830 = vpop.f32.mrf.mxu0
        %v831 = vpop.f32.mrf.mxu0
        %v832 = vadd.f32 %v639, %v831
        %v833 = vpop.f32.mrf.mxu0
        %834 = vmatprep.mubr.bf16.mxu0 0
        %835 = vmatmul.mubr.bf16.gmra.mxu0 %v717
        %v836 = vpop.f32.mrf.mxu0
        %v837 = vadd.f32 %v644, %v836
        %v838 = vpop.f32.mrf.mxu0
        %v839 = vpop.f32.mrf.mxu0
        %v840 = vadd.f32 %v647, %v839
        %v841 = vpop.f32.mrf.mxu0
        %842 = vmatprep.mubr.bf16.mxu0 0
        %843 = vmatmul.mubr.bf16.gmra.mxu0 %v718
        %v844 = vpop.f32.mrf.mxu0
        %v845 = vadd.f32 %v652, %v844
        %v846 = vpop.f32.mrf.mxu0
        %v847 = vpop.f32.mrf.mxu0
        %v848 = vadd.f32 %v655, %v847
        %v849 = vpop.f32.mrf.mxu0
        %850 = vmatprep.mubr.bf16.mxu0 0
        %851 = vmatmul.mubr.bf16.gmra.mxu0 %v719
        %v852 = vpop.f32.mrf.mxu0
        %v853 = vadd.f32 %v660, %v852
        %v854 = vpop.f32.mrf.mxu0
        %v855 = vpop.f32.mrf.mxu0
        %v856 = vadd.f32 %v663, %v855
        %v857 = vpop.f32.mrf.mxu0
        %858 = vmatprep.mubr.bf16.mxu0 0
        %859 = vmatmul.mubr.bf16.gmra.mxu0 %v720
        %v860 = vpop.f32.mrf.mxu0
        %v861 = vadd.f32 %v668, %v860
        %v862 = vpop.f32.mrf.mxu0
        %v863 = vpop.f32.mrf.mxu0
        %v864 = vadd.f32 %v671, %v863
        %v865 = vpop.f32.mrf.mxu0
        %866 = vmatprep.mubr.bf16.mxu0 0
        %867 = vmatmul.mubr.bf16.gmra.mxu0 %v721
        %v868 = vpop.f32.mrf.mxu0
        %v869 = vadd.f32 %v676, %v868
        %v870 = vpop.f32.mrf.mxu0
        %v871 = vpop.f32.mrf.mxu0
        %v872 = vadd.f32 %v679, %v871
        %v873 = vpop.f32.mrf.mxu0
        %874 = vdwg.mxu0
        %v875 = vld [vmem:[%s252] sm:$0xe]
        %v876 = vld [vmem:[%s252 + $0xc] sm:$0xe]
        %v877 = vld [vmem:[%s252 + $0x18] sm:$0xe]
        %v878 = vld [vmem:[%s252 + $0x24] sm:$0xe]
        %v879 = vld [vmem:[%s252 + $0x30] sm:$0xe]
        %v880 = vld [vmem:[%s252 + $0x3c] sm:$0xe]
        %v881 = vld [vmem:[%s252 + $0x48] sm:$0xe]
        %v882 = vld [vmem:[%s252 + $0x54] sm:$0xe]
        %vm899 = vcmask 1042432
        %vm900 = vcmask 1046532
        %vm901 = vmor %vm899, %vm900
        %v902 = vrot.slane %v875, 5
        %v903 = vrot.slane %v902, 4
        %v904 = vrot.slane %v254, 5
        %v905 = vsel %vm901, %v903, %v904
        %v906 = vrot.slane %v904, 4
        %v907 = vrot.slane %v285, 5
        %v908 = vsel %vm901, %v906, %v907
        %v909 = vrot.slane %v876, 5
        %v910 = vrot.slane %v909, 4
        %v911 = vrot.slane %v256, 5
        %v912 = vsel %vm901, %v910, %v911
        %v913 = vrot.slane %v911, 4
        %v914 = vrot.slane %v286, 5
        %v915 = vsel %vm901, %v913, %v914
        %v916 = vrot.slane %v877, 5
        %v917 = vrot.slane %v916, 4
        %v918 = vrot.slane %v258, 5
        %v919 = vsel %vm901, %v917, %v918
        %v920 = vrot.slane %v918, 4
        %v921 = vrot.slane %v287, 5
        %v922 = vsel %vm901, %v920, %v921
        %v923 = vrot.slane %v878, 5
        %v924 = vrot.slane %v923, 4
        %v925 = vrot.slane %v260, 5
        %v926 = vsel %vm901, %v924, %v925
        %v927 = vrot.slane %v925, 4
        %v928 = vrot.slane %v288, 5
        %v929 = vsel %vm901, %v927, %v928
        %v930 = vrot.slane %v879, 5
        %v931 = vrot.slane %v930, 4
        %v932 = vrot.slane %v262, 5
        %v933 = vsel %vm901, %v931, %v932
        %v934 = vrot.slane %v932, 4
        %v935 = vrot.slane %v289, 5
        %v936 = vsel %vm901, %v934, %v935
        %v937 = vrot.slane %v880, 5
        %v938 = vrot.slane %v937, 4
        %v939 = vrot.slane %v264, 5
        %v940 = vsel %vm901, %v938, %v939
        %v941 = vrot.slane %v939, 4
        %v942 = vrot.slane %v290, 5
        %v943 = vsel %vm901, %v941, %v942
        %v944 = vrot.slane %v881, 5
        %v945 = vrot.slane %v944, 4
        %v946 = vrot.slane %v266, 5
        %v947 = vsel %vm901, %v945, %v946
        %v948 = vrot.slane %v946, 4
        %v949 = vrot.slane %v291, 5
        %v950 = vsel %vm901, %v948, %v949
        %v951 = vrot.slane %v882, 5
        %v952 = vrot.slane %v951, 4
        %v953 = vrot.slane %v268, 5
        %v954 = vsel %vm901, %v952, %v953
        %v955 = vrot.slane %v953, 4
        %v956 = vrot.slane %v292, 5
        %v957 = vsel %vm901, %v955, %v956
        %s958 = scalar_lea.vmem %s222, 128
        %v959 = vld [vmem:[%s958] sm:$0xf]
        %v960 = vld [vmem:[%s958 + $0x4] sm:$0xf]
        %v961 = vld [vmem:[%s958 + $0x8] sm:$0xf]
        %v962 = vld [vmem:[%s958 + $0xc] sm:$0xf]
        %v963 = vld [vmem:[%s958 + $0x10] sm:$0xf]
        %v964 = vld [vmem:[%s958 + $0x14] sm:$0xf]
        %v965 = vld [vmem:[%s958 + $0x18] sm:$0xf]
        %v966 = vld [vmem:[%s958 + $0x1c] sm:$0xf]
        %v967 = vld [vmem:[%s958 + $0x20] sm:$0xf]
        %v968 = vld [vmem:[%s958 + $0x24] sm:$0xf]
        %v969 = vld [vmem:[%s958 + $0x28] sm:$0xf]
        %v970 = vld [vmem:[%s958 + $0x2c] sm:$0xf]
        %v971 = vld [vmem:[%s958 + $0x30] sm:$0xf]
        %v972 = vld [vmem:[%s958 + $0x34] sm:$0xf]
        %v973 = vld [vmem:[%s958 + $0x38] sm:$0xf]
        %v974 = vld [vmem:[%s958 + $0x3c] sm:$0xf]
        %v975 = vunpack.c.l.b16 %v905
        %v976 = vunpack.c.l.b16 %v908
        %v977 = vunpack.c.l.b16 %v912
        %v978 = vunpack.c.l.b16 %v915
        %v979 = vunpack.c.l.b16 %v919
        %v980 = vunpack.c.l.b16 %v922
        %v981 = vunpack.c.l.b16 %v926
        %v982 = vunpack.c.l.b16 %v929
        %v983 = vunpack.c.l.b16 %v933
        %v984 = vunpack.c.l.b16 %v936
        %v985 = vunpack.c.l.b16 %v940
        %v986 = vunpack.c.l.b16 %v943
        %v987 = vunpack.c.l.b16 %v947
        %v988 = vunpack.c.l.b16 %v950
        %v989 = vunpack.c.l.b16 %v954
        %v990 = vunpack.c.l.b16 %v957
        %v991 = vpack.c.b16 %v976, %v975
        %v992 = vpack.c.b16 %v978, %v977
        %v993 = vpack.c.b16 %v980, %v979
        %v994 = vpack.c.b16 %v982, %v981
        %v995 = vpack.c.b16 %v984, %v983
        %v996 = vpack.c.b16 %v986, %v985
        %v997 = vpack.c.b16 %v988, %v987
        %v998 = vpack.c.b16 %v990, %v989
        %v1023 = vunpack.c.l.b16 %v959
        %v1024 = vunpack.c.l.b16 %v960
        %v1025 = vunpack.c.l.b16 %v961
        %v1026 = vunpack.c.l.b16 %v962
        %v1027 = vunpack.c.l.b16 %v963
        %v1028 = vunpack.c.l.b16 %v964
        %v1029 = vunpack.c.l.b16 %v965
        %v1030 = vunpack.c.l.b16 %v966
        %v1031 = vunpack.c.l.b16 %v967
        %v1032 = vunpack.c.l.b16 %v968
        %v1033 = vunpack.c.l.b16 %v969
        %v1034 = vunpack.c.l.b16 %v970
        %v1035 = vunpack.c.l.b16 %v971
        %v1036 = vunpack.c.l.b16 %v972
        %v1037 = vunpack.c.l.b16 %v973
        %v1038 = vunpack.c.l.b16 %v974
        %v1039 = vpack.c.b16 %v1024, %v1023
        %v1040 = vpack.c.b16 %v1026, %v1025
        %v1041 = vpack.c.b16 %v1028, %v1027
        %v1042 = vpack.c.b16 %v1030, %v1029
        %v1043 = vpack.c.b16 %v1032, %v1031
        %v1044 = vpack.c.b16 %v1034, %v1033
        %v1045 = vpack.c.b16 %v1036, %v1035
        %v1046 = vpack.c.b16 %v1038, %v1037
        %1055 = vmatprep.subr.bf16.mxu0 0
        %1056 = vmatpush1.bf16.msra.mxu0 %v1046
        %1057 = vmatprep.subr.bf16.mxu0 0
        %1058 = vmatpush1.bf16.msra.mxu0 %v1045
        %1059 = vmatprep.subr.bf16.mxu0 0
        %1060 = vmatpush1.bf16.msra.mxu0 %v1044
        %1061 = vmatprep.subr.bf16.mxu0 0
        %1062 = vmatpush1.bf16.msra.mxu0 %v1043
        %1063 = vmatprep.subr.bf16.mxu0 0
        %1064 = vmatpush1.bf16.msra.mxu0 %v1042
        %1065 = vmatprep.subr.bf16.mxu0 0
        %1066 = vmatpush1.bf16.msra.mxu0 %v1041
        %1067 = vmatprep.subr.bf16.mxu0 0
        %1068 = vmatpush1.bf16.msra.mxu0 %v1040
        %1069 = vmatprep.subr.bf16.mxu0 0
        %1070 = vmatpush1.bf16.msra.mxu0 %v1039
        %1071 = vmatprep.subr.bf16.mxu0 0
        %1072 = vmatpush2.bf16.msra.mxu0 0
        %1073 = vmatprep.subr.bf16.mxu0 0
        %1074 = vmatpush2.bf16.msra.mxu0 0
        %1075 = vmatprep.subr.bf16.mxu0 0
        %1076 = vmatpush2.bf16.msra.mxu0 0
        %1077 = vmatprep.subr.bf16.mxu0 0
        %1078 = vmatpush2.bf16.msra.mxu0 0
        %1079 = vmatprep.subr.bf16.mxu0 0
        %1080 = vmatpush2.bf16.msra.mxu0 0
        %1081 = vmatprep.subr.bf16.mxu0 0
        %1082 = vmatpush2.bf16.msra.mxu0 0
        %1083 = vmatprep.subr.bf16.mxu0 0
        %1084 = vmatpush2.bf16.msra.mxu0 0
        %1085 = vmatprep.subr.bf16.mxu0 0
        %1086 = vmatpush2.bf16.msra.mxu0 0
        %1087 = vmatprep.mubr.bf16.mxu0 0
        %1088 = vmatmul.mubr.bf16.gmra.mxu0 %v991
        %v1089 = vpop.f32.mrf.mxu0
        %v1090 = vadd.f32 0.0, %v1089
        %v1091 = vpop.f32.mrf.mxu0
        %v1092 = vpop.f32.mrf.mxu0
        %v1093 = vadd.f32 0.0, %v1092
        %v1094 = vpop.f32.mrf.mxu0
        %1095 = vmatprep.mubr.bf16.mxu0 0
        %1096 = vmatmul.mubr.bf16.gmra.mxu0 %v992
        %v1097 = vpop.f32.mrf.mxu0
        %v1098 = vadd.f32 0.0, %v1097
        %v1099 = vpop.f32.mrf.mxu0
        %v1100 = vpop.f32.mrf.mxu0
        %v1101 = vadd.f32 0.0, %v1100
        %v1102 = vpop.f32.mrf.mxu0
        %1103 = vmatprep.mubr.bf16.mxu0 0
        %1104 = vmatmul.mubr.bf16.gmra.mxu0 %v993
        %v1105 = vpop.f32.mrf.mxu0
        %v1106 = vadd.f32 0.0, %v1105
        %v1107 = vpop.f32.mrf.mxu0
        %v1108 = vpop.f32.mrf.mxu0
        %v1109 = vadd.f32 0.0, %v1108
        %v1110 = vpop.f32.mrf.mxu0
        %1111 = vmatprep.mubr.bf16.mxu0 0
        %1112 = vmatmul.mubr.bf16.gmra.mxu0 %v994
        %v1113 = vpop.f32.mrf.mxu0
        %v1114 = vadd.f32 0.0, %v1113
        %v1115 = vpop.f32.mrf.mxu0
        %v1116 = vpop.f32.mrf.mxu0
        %v1117 = vadd.f32 0.0, %v1116
        %v1118 = vpop.f32.mrf.mxu0
        %1119 = vmatprep.mubr.bf16.mxu0 0
        %1120 = vmatmul.mubr.bf16.gmra.mxu0 %v995
        %v1121 = vpop.f32.mrf.mxu0
        %v1122 = vadd.f32 0.0, %v1121
        %v1123 = vpop.f32.mrf.mxu0
        %v1124 = vpop.f32.mrf.mxu0
        %v1125 = vadd.f32 0.0, %v1124
        %v1126 = vpop.f32.mrf.mxu0
        %1127 = vmatprep.mubr.bf16.mxu0 0
        %1128 = vmatmul.mubr.bf16.gmra.mxu0 %v996
        %v1129 = vpop.f32.mrf.mxu0
        %v1130 = vadd.f32 0.0, %v1129
        %v1131 = vpop.f32.mrf.mxu0
        %v1132 = vpop.f32.mrf.mxu0
        %v1133 = vadd.f32 0.0, %v1132
        %v1134 = vpop.f32.mrf.mxu0
        %1135 = vmatprep.mubr.bf16.mxu0 0
        %1136 = vmatmul.mubr.bf16.gmra.mxu0 %v997
        %v1137 = vpop.f32.mrf.mxu0
        %v1138 = vadd.f32 0.0, %v1137
        %v1139 = vpop.f32.mrf.mxu0
        %v1140 = vpop.f32.mrf.mxu0
        %v1141 = vadd.f32 0.0, %v1140
        %v1142 = vpop.f32.mrf.mxu0
        %1143 = vmatprep.mubr.bf16.mxu0 0
        %1144 = vmatmul.mubr.bf16.gmra.mxu0 %v998
        %v1145 = vpop.f32.mrf.mxu0
        %v1146 = vadd.f32 0.0, %v1145
        %v1147 = vpop.f32.mrf.mxu0
        %v1148 = vpop.f32.mrf.mxu0
        %v1149 = vadd.f32 0.0, %v1148
        %v1150 = vpop.f32.mrf.mxu0
        %1151 = vdwg.mxu0
        %v1152 = vadd.f32 %v813, %v1090
        %v1153 = vadd.f32 %v816, %v1093
        %v1154 = vadd.f32 %v821, %v1098
        %v1155 = vadd.f32 %v824, %v1101
        %v1156 = vadd.f32 %v829, %v1106
        %v1157 = vadd.f32 %v832, %v1109
        %v1158 = vadd.f32 %v837, %v1114
        %v1159 = vadd.f32 %v840, %v1117
        %v1160 = vadd.f32 %v845, %v1122
        %v1161 = vadd.f32 %v848, %v1125
        %v1162 = vadd.f32 %v853, %v1130
        %v1163 = vadd.f32 %v856, %v1133
        %v1164 = vadd.f32 %v861, %v1138
        %v1165 = vadd.f32 %v864, %v1141
        %v1166 = vadd.f32 %v869, %v1146
        %v1167 = vadd.f32 %v872, %v1149
        %s1168 = sadd.s32 %s248, 1
        %s1169 = smul.u32 %s1168, 3
        %s1170 = smul.addr %s1169, 4
        %s1171 = scalar_lea.vmem %s218, %s1170
        %v1172 = vld [vmem:[%s1171] sm:$0xf]
        %v1173 = vld [vmem:[%s1171 + $0x4] sm:$0xf]
        %v1174 = vld [vmem:[%s1171 + $0xc] sm:$0xf]
        %v1175 = vld [vmem:[%s1171 + $0x10] sm:$0xf]
        %v1176 = vld [vmem:[%s1171 + $0x18] sm:$0xf]
        %v1177 = vld [vmem:[%s1171 + $0x1c] sm:$0xf]
        %v1178 = vld [vmem:[%s1171 + $0x24] sm:$0xf]
        %v1179 = vld [vmem:[%s1171 + $0x28] sm:$0xf]
        %v1180 = vld [vmem:[%s1171 + $0x30] sm:$0xf]
        %v1181 = vld [vmem:[%s1171 + $0x34] sm:$0xf]
        %v1182 = vld [vmem:[%s1171 + $0x3c] sm:$0xf]
        %v1183 = vld [vmem:[%s1171 + $0x40] sm:$0xf]
        %v1184 = vld [vmem:[%s1171 + $0x48] sm:$0xf]
        %v1185 = vld [vmem:[%s1171 + $0x4c] sm:$0xf]
        %v1186 = vld [vmem:[%s1171 + $0x54] sm:$0xf]
        %v1187 = vld [vmem:[%s1171 + $0x58] sm:$0xf]
        %s1188 = scalar_lea.vmem %s222, 192
        %v1189 = vld [vmem:[%s1188] sm:$0xf]
        %v1190 = vld [vmem:[%s1188 + $0x4] sm:$0xf]
        %v1191 = vld [vmem:[%s1188 + $0x8] sm:$0xf]
        %v1192 = vld [vmem:[%s1188 + $0xc] sm:$0xf]
        %v1193 = vld [vmem:[%s1188 + $0x10] sm:$0xf]
        %v1194 = vld [vmem:[%s1188 + $0x14] sm:$0xf]
        %v1195 = vld [vmem:[%s1188 + $0x18] sm:$0xf]
        %v1196 = vld [vmem:[%s1188 + $0x1c] sm:$0xf]
        %v1197 = vld [vmem:[%s1188 + $0x20] sm:$0xf]
        %v1198 = vld [vmem:[%s1188 + $0x24] sm:$0xf]
        %v1199 = vld [vmem:[%s1188 + $0x28] sm:$0xf]
        %v1200 = vld [vmem:[%s1188 + $0x2c] sm:$0xf]
        %v1201 = vld [vmem:[%s1188 + $0x30] sm:$0xf]
        %v1202 = vld [vmem:[%s1188 + $0x34] sm:$0xf]
        %v1203 = vld [vmem:[%s1188 + $0x38] sm:$0xf]
        %v1204 = vld [vmem:[%s1188 + $0x3c] sm:$0xf]
        %v1221 = vunpack.c.l.b16 %v1172
        %v1222 = vunpack.c.l.b16 %v1173
        %v1223 = vunpack.c.l.b16 %v1174
        %v1224 = vunpack.c.l.b16 %v1175
        %v1225 = vunpack.c.l.b16 %v1176
        %v1226 = vunpack.c.l.b16 %v1177
        %v1227 = vunpack.c.l.b16 %v1178
        %v1228 = vunpack.c.l.b16 %v1179
        %v1229 = vunpack.c.l.b16 %v1180
        %v1230 = vunpack.c.l.b16 %v1181
        %v1231 = vunpack.c.l.b16 %v1182
        %v1232 = vunpack.c.l.b16 %v1183
        %v1233 = vunpack.c.l.b16 %v1184
        %v1234 = vunpack.c.l.b16 %v1185
        %v1235 = vunpack.c.l.b16 %v1186
        %v1236 = vunpack.c.l.b16 %v1187
        %v1237 = vpack.c.b16 %v1222, %v1221
        %v1238 = vpack.c.b16 %v1224, %v1223
        %v1239 = vpack.c.b16 %v1226, %v1225
        %v1240 = vpack.c.b16 %v1228, %v1227
        %v1241 = vpack.c.b16 %v1230, %v1229
        %v1242 = vpack.c.b16 %v1232, %v1231
        %v1243 = vpack.c.b16 %v1234, %v1233
        %v1244 = vpack.c.b16 %v1236, %v1235
        %v1269 = vunpack.c.l.b16 %v1189
        %v1270 = vunpack.c.l.b16 %v1190
        %v1271 = vunpack.c.l.b16 %v1191
        %v1272 = vunpack.c.l.b16 %v1192
        %v1273 = vunpack.c.l.b16 %v1193
        %v1274 = vunpack.c.l.b16 %v1194
        %v1275 = vunpack.c.l.b16 %v1195
        %v1276 = vunpack.c.l.b16 %v1196
        %v1277 = vunpack.c.l.b16 %v1197
        %v1278 = vunpack.c.l.b16 %v1198
        %v1279 = vunpack.c.l.b16 %v1199
        %v1280 = vunpack.c.l.b16 %v1200
        %v1281 = vunpack.c.l.b16 %v1201
        %v1282 = vunpack.c.l.b16 %v1202
        %v1283 = vunpack.c.l.b16 %v1203
        %v1284 = vunpack.c.l.b16 %v1204
        %v1285 = vpack.c.b16 %v1270, %v1269
        %v1286 = vpack.c.b16 %v1272, %v1271
        %v1287 = vpack.c.b16 %v1274, %v1273
        %v1288 = vpack.c.b16 %v1276, %v1275
        %v1289 = vpack.c.b16 %v1278, %v1277
        %v1290 = vpack.c.b16 %v1280, %v1279
        %v1291 = vpack.c.b16 %v1282, %v1281
        %v1292 = vpack.c.b16 %v1284, %v1283
        %1301 = vmatprep.subr.bf16.mxu0 0
        %1302 = vmatpush1.bf16.msra.mxu0 %v1292
        %1303 = vmatprep.subr.bf16.mxu0 0
        %1304 = vmatpush1.bf16.msra.mxu0 %v1291
        %1305 = vmatprep.subr.bf16.mxu0 0
        %1306 = vmatpush1.bf16.msra.mxu0 %v1290
        %1307 = vmatprep.subr.bf16.mxu0 0
        %1308 = vmatpush1.bf16.msra.mxu0 %v1289
        %1309 = vmatprep.subr.bf16.mxu0 0
        %1310 = vmatpush1.bf16.msra.mxu0 %v1288
        %1311 = vmatprep.subr.bf16.mxu0 0
        %1312 = vmatpush1.bf16.msra.mxu0 %v1287
        %1313 = vmatprep.subr.bf16.mxu0 0
        %1314 = vmatpush1.bf16.msra.mxu0 %v1286
        %1315 = vmatprep.subr.bf16.mxu0 0
        %1316 = vmatpush1.bf16.msra.mxu0 %v1285
        %1317 = vmatprep.subr.bf16.mxu0 0
        %1318 = vmatpush2.bf16.msra.mxu0 0
        %1319 = vmatprep.subr.bf16.mxu0 0
        %1320 = vmatpush2.bf16.msra.mxu0 0
        %1321 = vmatprep.subr.bf16.mxu0 0
        %1322 = vmatpush2.bf16.msra.mxu0 0
        %1323 = vmatprep.subr.bf16.mxu0 0
        %1324 = vmatpush2.bf16.msra.mxu0 0
        %1325 = vmatprep.subr.bf16.mxu0 0
        %1326 = vmatpush2.bf16.msra.mxu0 0
        %1327 = vmatprep.subr.bf16.mxu0 0
        %1328 = vmatpush2.bf16.msra.mxu0 0
        %1329 = vmatprep.subr.bf16.mxu0 0
        %1330 = vmatpush2.bf16.msra.mxu0 0
        %1331 = vmatprep.subr.bf16.mxu0 0
        %1332 = vmatpush2.bf16.msra.mxu0 0
        %1333 = vmatprep.mubr.bf16.mxu0 0
        %1334 = vmatmul.mubr.bf16.gmra.mxu0 %v1237
        %v1335 = vpop.f32.mrf.mxu0
        %v1336 = vadd.f32 0.0, %v1335
        %v1337 = vpop.f32.mrf.mxu0
        %v1338 = vpop.f32.mrf.mxu0
        %v1339 = vadd.f32 0.0, %v1338
        %v1340 = vpop.f32.mrf.mxu0
        %1341 = vmatprep.mubr.bf16.mxu0 0
        %1342 = vmatmul.mubr.bf16.gmra.mxu0 %v1238
        %v1343 = vpop.f32.mrf.mxu0
        %v1344 = vadd.f32 0.0, %v1343
        %v1345 = vpop.f32.mrf.mxu0
        %v1346 = vpop.f32.mrf.mxu0
        %v1347 = vadd.f32 0.0, %v1346
        %v1348 = vpop.f32.mrf.mxu0
        %1349 = vmatprep.mubr.bf16.mxu0 0
        %1350 = vmatmul.mubr.bf16.gmra.mxu0 %v1239
        %v1351 = vpop.f32.mrf.mxu0
        %v1352 = vadd.f32 0.0, %v1351
        %v1353 = vpop.f32.mrf.mxu0
        %v1354 = vpop.f32.mrf.mxu0
        %v1355 = vadd.f32 0.0, %v1354
        %v1356 = vpop.f32.mrf.mxu0
        %1357 = vmatprep.mubr.bf16.mxu0 0
        %1358 = vmatmul.mubr.bf16.gmra.mxu0 %v1240
        %v1359 = vpop.f32.mrf.mxu0
        %v1360 = vadd.f32 0.0, %v1359
        %v1361 = vpop.f32.mrf.mxu0
        %v1362 = vpop.f32.mrf.mxu0
        %v1363 = vadd.f32 0.0, %v1362
        %v1364 = vpop.f32.mrf.mxu0
        %1365 = vmatprep.mubr.bf16.mxu0 0
        %1366 = vmatmul.mubr.bf16.gmra.mxu0 %v1241
        %v1367 = vpop.f32.mrf.mxu0
        %v1368 = vadd.f32 0.0, %v1367
        %v1369 = vpop.f32.mrf.mxu0
        %v1370 = vpop.f32.mrf.mxu0
        %v1371 = vadd.f32 0.0, %v1370
        %v1372 = vpop.f32.mrf.mxu0
        %1373 = vmatprep.mubr.bf16.mxu0 0
        %1374 = vmatmul.mubr.bf16.gmra.mxu0 %v1242
        %v1375 = vpop.f32.mrf.mxu0
        %v1376 = vadd.f32 0.0, %v1375
        %v1377 = vpop.f32.mrf.mxu0
        %v1378 = vpop.f32.mrf.mxu0
        %v1379 = vadd.f32 0.0, %v1378
        %v1380 = vpop.f32.mrf.mxu0
        %1381 = vmatprep.mubr.bf16.mxu0 0
        %1382 = vmatmul.mubr.bf16.gmra.mxu0 %v1243
        %v1383 = vpop.f32.mrf.mxu0
        %v1384 = vadd.f32 0.0, %v1383
        %v1385 = vpop.f32.mrf.mxu0
        %v1386 = vpop.f32.mrf.mxu0
        %v1387 = vadd.f32 0.0, %v1386
        %v1388 = vpop.f32.mrf.mxu0
        %1389 = vmatprep.mubr.bf16.mxu0 0
        %1390 = vmatmul.mubr.bf16.gmra.mxu0 %v1244
        %v1391 = vpop.f32.mrf.mxu0
        %v1392 = vadd.f32 0.0, %v1391
        %v1393 = vpop.f32.mrf.mxu0
        %v1394 = vpop.f32.mrf.mxu0
        %v1395 = vadd.f32 0.0, %v1394
        %v1396 = vpop.f32.mrf.mxu0
        %1397 = vdwg.mxu0
        %v1398 = vadd.f32 %v1152, %v1336
        %v1399 = vadd.f32 %v1153, %v1339
        %v1400 = vadd.f32 %v1154, %v1344
        %v1401 = vadd.f32 %v1155, %v1347
        %v1402 = vadd.f32 %v1156, %v1352
        %v1403 = vadd.f32 %v1157, %v1355
        %v1404 = vadd.f32 %v1158, %v1360
        %v1405 = vadd.f32 %v1159, %v1363
        %v1406 = vadd.f32 %v1160, %v1368
        %v1407 = vadd.f32 %v1161, %v1371
        %v1408 = vadd.f32 %v1162, %v1376
        %v1409 = vadd.f32 %v1163, %v1379
        %v1410 = vadd.f32 %v1164, %v1384
        %v1411 = vadd.f32 %v1165, %v1387
        %v1412 = vadd.f32 %v1166, %v1392
        %v1413 = vadd.f32 %v1167, %v1395
        %v1414 = vld [vmem:[%s1171] sm:$0xf]
        %v1415 = vld [vmem:[%s1171 + $0x4] sm:$0xf]
        %v1416 = vld [vmem:[%s1171 + $0x8] sm:$0x1]
        %v1417 = vld [vmem:[%s1171 + $0xc] sm:$0xf]
        %v1418 = vld [vmem:[%s1171 + $0x10] sm:$0xf]
        %v1419 = vld [vmem:[%s1171 + $0x14] sm:$0x1]
        %v1420 = vld [vmem:[%s1171 + $0x18] sm:$0xf]
        %v1421 = vld [vmem:[%s1171 + $0x1c] sm:$0xf]
        %v1422 = vld [vmem:[%s1171 + $0x20] sm:$0x1]
        %v1423 = vld [vmem:[%s1171 + $0x24] sm:$0xf]
        %v1424 = vld [vmem:[%s1171 + $0x28] sm:$0xf]
        %v1425 = vld [vmem:[%s1171 + $0x2c] sm:$0x1]
        %v1426 = vld [vmem:[%s1171 + $0x30] sm:$0xf]
        %v1427 = vld [vmem:[%s1171 + $0x34] sm:$0xf]
        %v1428 = vld [vmem:[%s1171 + $0x38] sm:$0x1]
        %v1429 = vld [vmem:[%s1171 + $0x3c] sm:$0xf]
        %v1430 = vld [vmem:[%s1171 + $0x40] sm:$0xf]
        %v1431 = vld [vmem:[%s1171 + $0x44] sm:$0x1]
        %v1432 = vld [vmem:[%s1171 + $0x48] sm:$0xf]
        %v1433 = vld [vmem:[%s1171 + $0x4c] sm:$0xf]
        %v1434 = vld [vmem:[%s1171 + $0x50] sm:$0x1]
        %v1435 = vld [vmem:[%s1171 + $0x54] sm:$0xf]
        %v1436 = vld [vmem:[%s1171 + $0x58] sm:$0xf]
        %v1437 = vld [vmem:[%s1171 + $0x5c] sm:$0x1]
        %v1439 = vshrl.u32 %v1414, 16
        %v1441 = vrot.slane %v1439, 4
        %v1442 = vshll.u32 %v1414, 16
        %v1444 = vrot.slane %v1442, 5
        %v1445 = vor.u32 %v1441, %v1444
        %v1446 = vrot.slane %v1445, 4
        %v1448 = vshll.u32 %v1415, 16
        %v1450 = vrot.slane %v1448, 5
        %v1451 = vsel %vm295, %v1446, %v1450
        %v1452 = vshrl.u32 %v1415, 16
        %v1454 = vrot.slane %v1452, 4
        %v1455 = vor.u32 %v1454, %v1450
        %v1456 = vrot.slane %v1455, 4
        %v1458 = vshll.u32 %v1416, 16
        %v1460 = vrot.slane %v1458, 5
        %v1461 = vsel %vm295, %v1456, %v1460
        %v1463 = vshrl.u32 %v1417, 16
        %v1465 = vrot.slane %v1463, 4
        %v1466 = vshll.u32 %v1417, 16
        %v1468 = vrot.slane %v1466, 5
        %v1469 = vor.u32 %v1465, %v1468
        %v1470 = vrot.slane %v1469, 4
        %v1472 = vshll.u32 %v1418, 16
        %v1474 = vrot.slane %v1472, 5
        %v1475 = vsel %vm295, %v1470, %v1474
        %v1476 = vshrl.u32 %v1418, 16
        %v1478 = vrot.slane %v1476, 4
        %v1479 = vor.u32 %v1478, %v1474
        %v1480 = vrot.slane %v1479, 4
        %v1482 = vshll.u32 %v1419, 16
        %v1484 = vrot.slane %v1482, 5
        %v1485 = vsel %vm295, %v1480, %v1484
        %v1487 = vshrl.u32 %v1420, 16
        %v1489 = vrot.slane %v1487, 4
        %v1490 = vshll.u32 %v1420, 16
        %v1492 = vrot.slane %v1490, 5
        %v1493 = vor.u32 %v1489, %v1492
        %v1494 = vrot.slane %v1493, 4
        %v1496 = vshll.u32 %v1421, 16
        %v1498 = vrot.slane %v1496, 5
        %v1499 = vsel %vm295, %v1494, %v1498
        %v1500 = vshrl.u32 %v1421, 16
        %v1502 = vrot.slane %v1500, 4
        %v1503 = vor.u32 %v1502, %v1498
        %v1504 = vrot.slane %v1503, 4
        %v1506 = vshll.u32 %v1422, 16
        %v1508 = vrot.slane %v1506, 5
        %v1509 = vsel %vm295, %v1504, %v1508
        %v1511 = vshrl.u32 %v1423, 16
        %v1513 = vrot.slane %v1511, 4
        %v1514 = vshll.u32 %v1423, 16
        %v1516 = vrot.slane %v1514, 5
        %v1517 = vor.u32 %v1513, %v1516
        %v1518 = vrot.slane %v1517, 4
        %v1520 = vshll.u32 %v1424, 16
        %v1522 = vrot.slane %v1520, 5
        %v1523 = vsel %vm295, %v1518, %v1522
        %v1524 = vshrl.u32 %v1424, 16
        %v1526 = vrot.slane %v1524, 4
        %v1527 = vor.u32 %v1526, %v1522
        %v1528 = vrot.slane %v1527, 4
        %v1530 = vshll.u32 %v1425, 16
        %v1532 = vrot.slane %v1530, 5
        %v1533 = vsel %vm295, %v1528, %v1532
        %v1535 = vshrl.u32 %v1426, 16
        %v1537 = vrot.slane %v1535, 4
        %v1538 = vshll.u32 %v1426, 16
        %v1540 = vrot.slane %v1538, 5
        %v1541 = vor.u32 %v1537, %v1540
        %v1542 = vrot.slane %v1541, 4
        %v1544 = vshll.u32 %v1427, 16
        %v1546 = vrot.slane %v1544, 5
        %v1547 = vsel %vm295, %v1542, %v1546
        %v1548 = vshrl.u32 %v1427, 16
        %v1550 = vrot.slane %v1548, 4
        %v1551 = vor.u32 %v1550, %v1546
        %v1552 = vrot.slane %v1551, 4
        %v1554 = vshll.u32 %v1428, 16
        %v1556 = vrot.slane %v1554, 5
        %v1557 = vsel %vm295, %v1552, %v1556
        %v1559 = vshrl.u32 %v1429, 16
        %v1561 = vrot.slane %v1559, 4
        %v1562 = vshll.u32 %v1429, 16
        %v1564 = vrot.slane %v1562, 5
        %v1565 = vor.u32 %v1561, %v1564
        %v1566 = vrot.slane %v1565, 4
        %v1568 = vshll.u32 %v1430, 16
        %v1570 = vrot.slane %v1568, 5
        %v1571 = vsel %vm295, %v1566, %v1570
        %v1572 = vshrl.u32 %v1430, 16
        %v1574 = vrot.slane %v1572, 4
        %v1575 = vor.u32 %v1574, %v1570
        %v1576 = vrot.slane %v1575, 4
        %v1578 = vshll.u32 %v1431, 16
        %v1580 = vrot.slane %v1578, 5
        %v1581 = vsel %vm295, %v1576, %v1580
        %v1583 = vshrl.u32 %v1432, 16
        %v1585 = vrot.slane %v1583, 4
        %v1586 = vshll.u32 %v1432, 16
        %v1588 = vrot.slane %v1586, 5
        %v1589 = vor.u32 %v1585, %v1588
        %v1590 = vrot.slane %v1589, 4
        %v1592 = vshll.u32 %v1433, 16
        %v1594 = vrot.slane %v1592, 5
        %v1595 = vsel %vm295, %v1590, %v1594
        %v1596 = vshrl.u32 %v1433, 16
        %v1598 = vrot.slane %v1596, 4
        %v1599 = vor.u32 %v1598, %v1594
        %v1600 = vrot.slane %v1599, 4
        %v1602 = vshll.u32 %v1434, 16
        %v1604 = vrot.slane %v1602, 5
        %v1605 = vsel %vm295, %v1600, %v1604
        %v1607 = vshrl.u32 %v1435, 16
        %v1609 = vrot.slane %v1607, 4
        %v1610 = vshll.u32 %v1435, 16
        %v1612 = vrot.slane %v1610, 5
        %v1613 = vor.u32 %v1609, %v1612
        %v1614 = vrot.slane %v1613, 4
        %v1616 = vshll.u32 %v1436, 16
        %v1618 = vrot.slane %v1616, 5
        %v1619 = vsel %vm295, %v1614, %v1618
        %v1620 = vshrl.u32 %v1436, 16
        %v1622 = vrot.slane %v1620, 4
        %v1623 = vor.u32 %v1622, %v1618
        %v1624 = vrot.slane %v1623, 4
        %v1626 = vshll.u32 %v1437, 16
        %v1628 = vrot.slane %v1626, 5
        %v1629 = vsel %vm295, %v1624, %v1628
        %s1630 = scalar_lea.vmem %s222, 256
        %v1631 = vld [vmem:[%s1630] sm:$0xf]
        %v1632 = vld [vmem:[%s1630 + $0x4] sm:$0xf]
        %v1633 = vld [vmem:[%s1630 + $0x8] sm:$0xf]
        %v1634 = vld [vmem:[%s1630 + $0xc] sm:$0xf]
        %v1635 = vld [vmem:[%s1630 + $0x10] sm:$0xf]
        %v1636 = vld [vmem:[%s1630 + $0x14] sm:$0xf]
        %v1637 = vld [vmem:[%s1630 + $0x18] sm:$0xf]
        %v1638 = vld [vmem:[%s1630 + $0x1c] sm:$0xf]
        %v1639 = vld [vmem:[%s1630 + $0x20] sm:$0xf]
        %v1640 = vld [vmem:[%s1630 + $0x24] sm:$0xf]
        %v1641 = vld [vmem:[%s1630 + $0x28] sm:$0xf]
        %v1642 = vld [vmem:[%s1630 + $0x2c] sm:$0xf]
        %v1643 = vld [vmem:[%s1630 + $0x30] sm:$0xf]
        %v1644 = vld [vmem:[%s1630 + $0x34] sm:$0xf]
        %v1645 = vld [vmem:[%s1630 + $0x38] sm:$0xf]
        %v1646 = vld [vmem:[%s1630 + $0x3c] sm:$0xf]
        %v1647 = vunpack.c.l.b16 %v1451
        %v1648 = vunpack.c.l.b16 %v1461
        %v1649 = vunpack.c.l.b16 %v1475
        %v1650 = vunpack.c.l.b16 %v1485
        %v1651 = vunpack.c.l.b16 %v1499
        %v1652 = vunpack.c.l.b16 %v1509
        %v1653 = vunpack.c.l.b16 %v1523
        %v1654 = vunpack.c.l.b16 %v1533
        %v1655 = vunpack.c.l.b16 %v1547
        %v1656 = vunpack.c.l.b16 %v1557
        %v1657 = vunpack.c.l.b16 %v1571
        %v1658 = vunpack.c.l.b16 %v1581
        %v1659 = vunpack.c.l.b16 %v1595
        %v1660 = vunpack.c.l.b16 %v1605
        %v1661 = vunpack.c.l.b16 %v1619
        %v1662 = vunpack.c.l.b16 %v1629
        %v1663 = vpack.c.b16 %v1648, %v1647
        %v1664 = vpack.c.b16 %v1650, %v1649
        %v1665 = vpack.c.b16 %v1652, %v1651
        %v1666 = vpack.c.b16 %v1654, %v1653
        %v1667 = vpack.c.b16 %v1656, %v1655
        %v1668 = vpack.c.b16 %v1658, %v1657
        %v1669 = vpack.c.b16 %v1660, %v1659
        %v1670 = vpack.c.b16 %v1662, %v1661
        %v1695 = vunpack.c.l.b16 %v1631
        %v1696 = vunpack.c.l.b16 %v1632
        %v1697 = vunpack.c.l.b16 %v1633
        %v1698 = vunpack.c.l.b16 %v1634
        %v1699 = vunpack.c.l.b16 %v1635
        %v1700 = vunpack.c.l.b16 %v1636
        %v1701 = vunpack.c.l.b16 %v1637
        %v1702 = vunpack.c.l.b16 %v1638
        %v1703 = vunpack.c.l.b16 %v1639
        %v1704 = vunpack.c.l.b16 %v1640
        %v1705 = vunpack.c.l.b16 %v1641
        %v1706 = vunpack.c.l.b16 %v1642
        %v1707 = vunpack.c.l.b16 %v1643
        %v1708 = vunpack.c.l.b16 %v1644
        %v1709 = vunpack.c.l.b16 %v1645
        %v1710 = vunpack.c.l.b16 %v1646
        %v1711 = vpack.c.b16 %v1696, %v1695
        %v1712 = vpack.c.b16 %v1698, %v1697
        %v1713 = vpack.c.b16 %v1700, %v1699
        %v1714 = vpack.c.b16 %v1702, %v1701
        %v1715 = vpack.c.b16 %v1704, %v1703
        %v1716 = vpack.c.b16 %v1706, %v1705
        %v1717 = vpack.c.b16 %v1708, %v1707
        %v1718 = vpack.c.b16 %v1710, %v1709
        %1727 = vmatprep.subr.bf16.mxu0 0
        %1728 = vmatpush1.bf16.msra.mxu0 %v1718
        %1729 = vmatprep.subr.bf16.mxu0 0
        %1730 = vmatpush1.bf16.msra.mxu0 %v1717
        %1731 = vmatprep.subr.bf16.mxu0 0
        %1732 = vmatpush1.bf16.msra.mxu0 %v1716
        %1733 = vmatprep.subr.bf16.mxu0 0
        %1734 = vmatpush1.bf16.msra.mxu0 %v1715
        %1735 = vmatprep.subr.bf16.mxu0 0
        %1736 = vmatpush1.bf16.msra.mxu0 %v1714
        %1737 = vmatprep.subr.bf16.mxu0 0
        %1738 = vmatpush1.bf16.msra.mxu0 %v1713
        %1739 = vmatprep.subr.bf16.mxu0 0
        %1740 = vmatpush1.bf16.msra.mxu0 %v1712
        %1741 = vmatprep.subr.bf16.mxu0 0
        %1742 = vmatpush1.bf16.msra.mxu0 %v1711
        %1743 = vmatprep.subr.bf16.mxu0 0
        %1744 = vmatpush2.bf16.msra.mxu0 0
        %1745 = vmatprep.subr.bf16.mxu0 0
        %1746 = vmatpush2.bf16.msra.mxu0 0
        %1747 = vmatprep.subr.bf16.mxu0 0
        %1748 = vmatpush2.bf16.msra.mxu0 0
        %1749 = vmatprep.subr.bf16.mxu0 0
        %1750 = vmatpush2.bf16.msra.mxu0 0
        %1751 = vmatprep.subr.bf16.mxu0 0
        %1752 = vmatpush2.bf16.msra.mxu0 0
        %1753 = vmatprep.subr.bf16.mxu0 0
        %1754 = vmatpush2.bf16.msra.mxu0 0
        %1755 = vmatprep.subr.bf16.mxu0 0
        %1756 = vmatpush2.bf16.msra.mxu0 0
        %1757 = vmatprep.subr.bf16.mxu0 0
        %1758 = vmatpush2.bf16.msra.mxu0 0
        %1759 = vmatprep.mubr.bf16.mxu0 0
        %1760 = vmatmul.mubr.bf16.gmra.mxu0 %v1663
        %v1761 = vpop.f32.mrf.mxu0
        %v1762 = vadd.f32 0.0, %v1761
        %v1763 = vpop.f32.mrf.mxu0
        %v1764 = vpop.f32.mrf.mxu0
        %v1765 = vadd.f32 0.0, %v1764
        %v1766 = vpop.f32.mrf.mxu0
        %1767 = vmatprep.mubr.bf16.mxu0 0
        %1768 = vmatmul.mubr.bf16.gmra.mxu0 %v1664
        %v1769 = vpop.f32.mrf.mxu0
        %v1770 = vadd.f32 0.0, %v1769
        %v1771 = vpop.f32.mrf.mxu0
        %v1772 = vpop.f32.mrf.mxu0
        %v1773 = vadd.f32 0.0, %v1772
        %v1774 = vpop.f32.mrf.mxu0
        %1775 = vmatprep.mubr.bf16.mxu0 0
        %1776 = vmatmul.mubr.bf16.gmra.mxu0 %v1665
        %v1777 = vpop.f32.mrf.mxu0
        %v1778 = vadd.f32 0.0, %v1777
        %v1779 = vpop.f32.mrf.mxu0
        %v1780 = vpop.f32.mrf.mxu0
        %v1781 = vadd.f32 0.0, %v1780
        %v1782 = vpop.f32.mrf.mxu0
        %1783 = vmatprep.mubr.bf16.mxu0 0
        %1784 = vmatmul.mubr.bf16.gmra.mxu0 %v1666
        %v1785 = vpop.f32.mrf.mxu0
        %v1786 = vadd.f32 0.0, %v1785
        %v1787 = vpop.f32.mrf.mxu0
        %v1788 = vpop.f32.mrf.mxu0
        %v1789 = vadd.f32 0.0, %v1788
        %v1790 = vpop.f32.mrf.mxu0
        %1791 = vmatprep.mubr.bf16.mxu0 0
        %1792 = vmatmul.mubr.bf16.gmra.mxu0 %v1667
        %v1793 = vpop.f32.mrf.mxu0
        %v1794 = vadd.f32 0.0, %v1793
        %v1795 = vpop.f32.mrf.mxu0
        %v1796 = vpop.f32.mrf.mxu0
        %v1797 = vadd.f32 0.0, %v1796
        %v1798 = vpop.f32.mrf.mxu0
        %1799 = vmatprep.mubr.bf16.mxu0 0
        %1800 = vmatmul.mubr.bf16.gmra.mxu0 %v1668
        %v1801 = vpop.f32.mrf.mxu0
        %v1802 = vadd.f32 0.0, %v1801
        %v1803 = vpop.f32.mrf.mxu0
        %v1804 = vpop.f32.mrf.mxu0
        %v1805 = vadd.f32 0.0, %v1804
        %v1806 = vpop.f32.mrf.mxu0
        %1807 = vmatprep.mubr.bf16.mxu0 0
        %1808 = vmatmul.mubr.bf16.gmra.mxu0 %v1669
        %v1809 = vpop.f32.mrf.mxu0
        %v1810 = vadd.f32 0.0, %v1809
        %v1811 = vpop.f32.mrf.mxu0
        %v1812 = vpop.f32.mrf.mxu0
        %v1813 = vadd.f32 0.0, %v1812
        %v1814 = vpop.f32.mrf.mxu0
        %1815 = vmatprep.mubr.bf16.mxu0 0
        %1816 = vmatmul.mubr.bf16.gmra.mxu0 %v1670
        %v1817 = vpop.f32.mrf.mxu0
        %v1818 = vadd.f32 0.0, %v1817
        %v1819 = vpop.f32.mrf.mxu0
        %v1820 = vpop.f32.mrf.mxu0
        %v1821 = vadd.f32 0.0, %v1820
        %v1822 = vpop.f32.mrf.mxu0
        %1823 = vdwg.mxu0
        %v1824 = vadd.f32 %v1398, %v1762
        %v1825 = vadd.f32 %v1399, %v1765
        %v1826 = vadd.f32 %v1400, %v1770
        %v1827 = vadd.f32 %v1401, %v1773
        %v1828 = vadd.f32 %v1402, %v1778
        %v1829 = vadd.f32 %v1403, %v1781
        %v1830 = vadd.f32 %v1404, %v1786
        %v1831 = vadd.f32 %v1405, %v1789
        %v1832 = vadd.f32 %v1406, %v1794
        %v1833 = vadd.f32 %v1407, %v1797
        %v1834 = vadd.f32 %v1408, %v1802
        %v1835 = vadd.f32 %v1409, %v1805
        %v1836 = vadd.f32 %v1410, %v1810
        %v1837 = vadd.f32 %v1411, %v1813
        %v1838 = vadd.f32 %v1412, %v1818
        %v1839 = vadd.f32 %v1413, %v1821
        %v1840 = vld [vmem:[%s1171] sm:$0xe]
        %v1841 = vld [vmem:[%s1171 + $0xc] sm:$0xe]
        %v1842 = vld [vmem:[%s1171 + $0x18] sm:$0xe]
        %v1843 = vld [vmem:[%s1171 + $0x24] sm:$0xe]
        %v1844 = vld [vmem:[%s1171 + $0x30] sm:$0xe]
        %v1845 = vld [vmem:[%s1171 + $0x3c] sm:$0xe]
        %v1846 = vld [vmem:[%s1171 + $0x48] sm:$0xe]
        %v1847 = vld [vmem:[%s1171 + $0x54] sm:$0xe]
        %v1872 = vrot.slane %v1840, 5
        %v1873 = vrot.slane %v1872, 4
        %v1874 = vrot.slane %v1415, 5
        %v1875 = vsel %vm901, %v1873, %v1874
        %v1876 = vrot.slane %v1874, 4
        %v1877 = vrot.slane %v1416, 5
        %v1878 = vsel %vm901, %v1876, %v1877
        %v1879 = vrot.slane %v1841, 5
        %v1880 = vrot.slane %v1879, 4
        %v1881 = vrot.slane %v1418, 5
        %v1882 = vsel %vm901, %v1880, %v1881
        %v1883 = vrot.slane %v1881, 4
        %v1884 = vrot.slane %v1419, 5
        %v1885 = vsel %vm901, %v1883, %v1884
        %v1886 = vrot.slane %v1842, 5
        %v1887 = vrot.slane %v1886, 4
        %v1888 = vrot.slane %v1421, 5
        %v1889 = vsel %vm901, %v1887, %v1888
        %v1890 = vrot.slane %v1888, 4
        %v1891 = vrot.slane %v1422, 5
        %v1892 = vsel %vm901, %v1890, %v1891
        %v1893 = vrot.slane %v1843, 5
        %v1894 = vrot.slane %v1893, 4
        %v1895 = vrot.slane %v1424, 5
        %v1896 = vsel %vm901, %v1894, %v1895
        %v1897 = vrot.slane %v1895, 4
        %v1898 = vrot.slane %v1425, 5
        %v1899 = vsel %vm901, %v1897, %v1898
        %v1900 = vrot.slane %v1844, 5
        %v1901 = vrot.slane %v1900, 4
        %v1902 = vrot.slane %v1427, 5
        %v1903 = vsel %vm901, %v1901, %v1902
        %v1904 = vrot.slane %v1902, 4
        %v1905 = vrot.slane %v1428, 5
        %v1906 = vsel %vm901, %v1904, %v1905
        %v1907 = vrot.slane %v1845, 5
        %v1908 = vrot.slane %v1907, 4
        %v1909 = vrot.slane %v1430, 5
        %v1910 = vsel %vm901, %v1908, %v1909
        %v1911 = vrot.slane %v1909, 4
        %v1912 = vrot.slane %v1431, 5
        %v1913 = vsel %vm901, %v1911, %v1912
        %v1914 = vrot.slane %v1846, 5
        %v1915 = vrot.slane %v1914, 4
        %v1916 = vrot.slane %v1433, 5
        %v1917 = vsel %vm901, %v1915, %v1916
        %v1918 = vrot.slane %v1916, 4
        %v1919 = vrot.slane %v1434, 5
        %v1920 = vsel %vm901, %v1918, %v1919
        %v1921 = vrot.slane %v1847, 5
        %v1922 = vrot.slane %v1921, 4
        %v1923 = vrot.slane %v1436, 5
        %v1924 = vsel %vm901, %v1922, %v1923
        %v1925 = vrot.slane %v1923, 4
        %v1926 = vrot.slane %v1437, 5
        %v1927 = vsel %vm901, %v1925, %v1926
        %s1928 = scalar_lea.vmem %s222, 320
        %v1929 = vld [vmem:[%s1928] sm:$0xf]
        %v1930 = vld [vmem:[%s1928 + $0x4] sm:$0xf]
        %v1931 = vld [vmem:[%s1928 + $0x8] sm:$0xf]
        %v1932 = vld [vmem:[%s1928 + $0xc] sm:$0xf]
        %v1933 = vld [vmem:[%s1928 + $0x10] sm:$0xf]
        %v1934 = vld [vmem:[%s1928 + $0x14] sm:$0xf]
        %v1935 = vld [vmem:[%s1928 + $0x18] sm:$0xf]
        %v1936 = vld [vmem:[%s1928 + $0x1c] sm:$0xf]
        %v1937 = vld [vmem:[%s1928 + $0x20] sm:$0xf]
        %v1938 = vld [vmem:[%s1928 + $0x24] sm:$0xf]
        %v1939 = vld [vmem:[%s1928 + $0x28] sm:$0xf]
        %v1940 = vld [vmem:[%s1928 + $0x2c] sm:$0xf]
        %v1941 = vld [vmem:[%s1928 + $0x30] sm:$0xf]
        %v1942 = vld [vmem:[%s1928 + $0x34] sm:$0xf]
        %v1943 = vld [vmem:[%s1928 + $0x38] sm:$0xf]
        %v1944 = vld [vmem:[%s1928 + $0x3c] sm:$0xf]
        %v1945 = vunpack.c.l.b16 %v1875
        %v1946 = vunpack.c.l.b16 %v1878
        %v1947 = vunpack.c.l.b16 %v1882
        %v1948 = vunpack.c.l.b16 %v1885
        %v1949 = vunpack.c.l.b16 %v1889
        %v1950 = vunpack.c.l.b16 %v1892
        %v1951 = vunpack.c.l.b16 %v1896
        %v1952 = vunpack.c.l.b16 %v1899
        %v1953 = vunpack.c.l.b16 %v1903
        %v1954 = vunpack.c.l.b16 %v1906
        %v1955 = vunpack.c.l.b16 %v1910
        %v1956 = vunpack.c.l.b16 %v1913
        %v1957 = vunpack.c.l.b16 %v1917
        %v1958 = vunpack.c.l.b16 %v1920
        %v1959 = vunpack.c.l.b16 %v1924
        %v1960 = vunpack.c.l.b16 %v1927
        %v1961 = vpack.c.b16 %v1946, %v1945
        %v1962 = vpack.c.b16 %v1948, %v1947
        %v1963 = vpack.c.b16 %v1950, %v1949
        %v1964 = vpack.c.b16 %v1952, %v1951
        %v1965 = vpack.c.b16 %v1954, %v1953
        %v1966 = vpack.c.b16 %v1956, %v1955
        %v1967 = vpack.c.b16 %v1958, %v1957
        %v1968 = vpack.c.b16 %v1960, %v1959
        %v1993 = vunpack.c.l.b16 %v1929
        %v1994 = vunpack.c.l.b16 %v1930
        %v1995 = vunpack.c.l.b16 %v1931
        %v1996 = vunpack.c.l.b16 %v1932
        %v1997 = vunpack.c.l.b16 %v1933
        %v1998 = vunpack.c.l.b16 %v1934
        %v1999 = vunpack.c.l.b16 %v1935
        %v2000 = vunpack.c.l.b16 %v1936
        %v2001 = vunpack.c.l.b16 %v1937
        %v2002 = vunpack.c.l.b16 %v1938
        %v2003 = vunpack.c.l.b16 %v1939
        %v2004 = vunpack.c.l.b16 %v1940
        %v2005 = vunpack.c.l.b16 %v1941
        %v2006 = vunpack.c.l.b16 %v1942
        %v2007 = vunpack.c.l.b16 %v1943
        %v2008 = vunpack.c.l.b16 %v1944
        %v2009 = vpack.c.b16 %v1994, %v1993
        %v2010 = vpack.c.b16 %v1996, %v1995
        %v2011 = vpack.c.b16 %v1998, %v1997
        %v2012 = vpack.c.b16 %v2000, %v1999
        %v2013 = vpack.c.b16 %v2002, %v2001
        %v2014 = vpack.c.b16 %v2004, %v2003
        %v2015 = vpack.c.b16 %v2006, %v2005
        %v2016 = vpack.c.b16 %v2008, %v2007
        %2025 = vmatprep.subr.bf16.mxu0 0
        %2026 = vmatpush1.bf16.msra.mxu0 %v2016
        %2027 = vmatprep.subr.bf16.mxu0 0
        %2028 = vmatpush1.bf16.msra.mxu0 %v2015
        %2029 = vmatprep.subr.bf16.mxu0 0
        %2030 = vmatpush1.bf16.msra.mxu0 %v2014
        %2031 = vmatprep.subr.bf16.mxu0 0
        %2032 = vmatpush1.bf16.msra.mxu0 %v2013
        %2033 = vmatprep.subr.bf16.mxu0 0
        %2034 = vmatpush1.bf16.msra.mxu0 %v2012
        %2035 = vmatprep.subr.bf16.mxu0 0
        %2036 = vmatpush1.bf16.msra.mxu0 %v2011
        %2037 = vmatprep.subr.bf16.mxu0 0
        %2038 = vmatpush1.bf16.msra.mxu0 %v2010
        %2039 = vmatprep.subr.bf16.mxu0 0
        %2040 = vmatpush1.bf16.msra.mxu0 %v2009
        %2041 = vmatprep.subr.bf16.mxu0 0
        %2042 = vmatpush2.bf16.msra.mxu0 0
        %2043 = vmatprep.subr.bf16.mxu0 0
        %2044 = vmatpush2.bf16.msra.mxu0 0
        %2045 = vmatprep.subr.bf16.mxu0 0
        %2046 = vmatpush2.bf16.msra.mxu0 0
        %2047 = vmatprep.subr.bf16.mxu0 0
        %2048 = vmatpush2.bf16.msra.mxu0 0
        %2049 = vmatprep.subr.bf16.mxu0 0
        %2050 = vmatpush2.bf16.msra.mxu0 0
        %2051 = vmatprep.subr.bf16.mxu0 0
        %2052 = vmatpush2.bf16.msra.mxu0 0
        %2053 = vmatprep.subr.bf16.mxu0 0
        %2054 = vmatpush2.bf16.msra.mxu0 0
        %2055 = vmatprep.subr.bf16.mxu0 0
        %2056 = vmatpush2.bf16.msra.mxu0 0
        %2057 = vmatprep.mubr.bf16.mxu0 0
        %2058 = vmatmul.mubr.bf16.gmra.mxu0 %v1961
        %v2059 = vpop.f32.mrf.mxu0
        %v2060 = vadd.f32 0.0, %v2059
        %v2061 = vpop.f32.mrf.mxu0
        %v2062 = vpop.f32.mrf.mxu0
        %v2063 = vadd.f32 0.0, %v2062
        %v2064 = vpop.f32.mrf.mxu0
        %2065 = vmatprep.mubr.bf16.mxu0 0
        %2066 = vmatmul.mubr.bf16.gmra.mxu0 %v1962
        %v2067 = vpop.f32.mrf.mxu0
        %v2068 = vadd.f32 0.0, %v2067
        %v2069 = vpop.f32.mrf.mxu0
        %v2070 = vpop.f32.mrf.mxu0
        %v2071 = vadd.f32 0.0, %v2070
        %v2072 = vpop.f32.mrf.mxu0
        %2073 = vmatprep.mubr.bf16.mxu0 0
        %2074 = vmatmul.mubr.bf16.gmra.mxu0 %v1963
        %v2075 = vpop.f32.mrf.mxu0
        %v2076 = vadd.f32 0.0, %v2075
        %v2077 = vpop.f32.mrf.mxu0
        %v2078 = vpop.f32.mrf.mxu0
        %v2079 = vadd.f32 0.0, %v2078
        %v2080 = vpop.f32.mrf.mxu0
        %2081 = vmatprep.mubr.bf16.mxu0 0
        %2082 = vmatmul.mubr.bf16.gmra.mxu0 %v1964
        %v2083 = vpop.f32.mrf.mxu0
        %v2084 = vadd.f32 0.0, %v2083
        %v2085 = vpop.f32.mrf.mxu0
        %v2086 = vpop.f32.mrf.mxu0
        %v2087 = vadd.f32 0.0, %v2086
        %v2088 = vpop.f32.mrf.mxu0
        %2089 = vmatprep.mubr.bf16.mxu0 0
        %2090 = vmatmul.mubr.bf16.gmra.mxu0 %v1965
        %v2091 = vpop.f32.mrf.mxu0
        %v2092 = vadd.f32 0.0, %v2091
        %v2093 = vpop.f32.mrf.mxu0
        %v2094 = vpop.f32.mrf.mxu0
        %v2095 = vadd.f32 0.0, %v2094
        %v2096 = vpop.f32.mrf.mxu0
        %2097 = vmatprep.mubr.bf16.mxu0 0
        %2098 = vmatmul.mubr.bf16.gmra.mxu0 %v1966
        %v2099 = vpop.f32.mrf.mxu0
        %v2100 = vadd.f32 0.0, %v2099
        %v2101 = vpop.f32.mrf.mxu0
        %v2102 = vpop.f32.mrf.mxu0
        %v2103 = vadd.f32 0.0, %v2102
        %v2104 = vpop.f32.mrf.mxu0
        %2105 = vmatprep.mubr.bf16.mxu0 0
        %2106 = vmatmul.mubr.bf16.gmra.mxu0 %v1967
        %v2107 = vpop.f32.mrf.mxu0
        %v2108 = vadd.f32 0.0, %v2107
        %v2109 = vpop.f32.mrf.mxu0
        %v2110 = vpop.f32.mrf.mxu0
        %v2111 = vadd.f32 0.0, %v2110
        %v2112 = vpop.f32.mrf.mxu0
        %2113 = vmatprep.mubr.bf16.mxu0 0
        %2114 = vmatmul.mubr.bf16.gmra.mxu0 %v1968
        %v2115 = vpop.f32.mrf.mxu0
        %v2116 = vadd.f32 0.0, %v2115
        %v2117 = vpop.f32.mrf.mxu0
        %v2118 = vpop.f32.mrf.mxu0
        %v2119 = vadd.f32 0.0, %v2118
        %v2120 = vpop.f32.mrf.mxu0
        %2121 = vdwg.mxu0
        %v2122 = vadd.f32 %v1824, %v2060
        %v2123 = vadd.f32 %v1825, %v2063
        %v2124 = vadd.f32 %v1826, %v2068
        %v2125 = vadd.f32 %v1827, %v2071
        %v2126 = vadd.f32 %v1828, %v2076
        %v2127 = vadd.f32 %v1829, %v2079
        %v2128 = vadd.f32 %v1830, %v2084
        %v2129 = vadd.f32 %v1831, %v2087
        %v2130 = vadd.f32 %v1832, %v2092
        %v2131 = vadd.f32 %v1833, %v2095
        %v2132 = vadd.f32 %v1834, %v2100
        %v2133 = vadd.f32 %v1835, %v2103
        %v2134 = vadd.f32 %v1836, %v2108
        %v2135 = vadd.f32 %v1837, %v2111
        %v2136 = vadd.f32 %v1838, %v2116
        %v2137 = vadd.f32 %v1839, %v2119
        %s2138 = sadd.s32 %s248, 2
        %s2139 = smul.u32 %s2138, 3
        %s2140 = smul.addr %s2139, 4
        %s2141 = scalar_lea.vmem %s218, %s2140
        %v2142 = vld [vmem:[%s2141] sm:$0xf]
        %v2143 = vld [vmem:[%s2141 + $0x4] sm:$0xf]
        %v2144 = vld [vmem:[%s2141 + $0xc] sm:$0xf]
        %v2145 = vld [vmem:[%s2141 + $0x10] sm:$0xf]
        %v2146 = vld [vmem:[%s2141 + $0x18] sm:$0xf]
        %v2147 = vld [vmem:[%s2141 + $0x1c] sm:$0xf]
        %v2148 = vld [vmem:[%s2141 + $0x24] sm:$0xf]
        %v2149 = vld [vmem:[%s2141 + $0x28] sm:$0xf]
        %v2150 = vld [vmem:[%s2141 + $0x30] sm:$0xf]
        %v2151 = vld [vmem:[%s2141 + $0x34] sm:$0xf]
        %v2152 = vld [vmem:[%s2141 + $0x3c] sm:$0xf]
        %v2153 = vld [vmem:[%s2141 + $0x40] sm:$0xf]
        %v2154 = vld [vmem:[%s2141 + $0x48] sm:$0xf]
        %v2155 = vld [vmem:[%s2141 + $0x4c] sm:$0xf]
        %v2156 = vld [vmem:[%s2141 + $0x54] sm:$0xf]
        %v2157 = vld [vmem:[%s2141 + $0x58] sm:$0xf]
        %s2158 = scalar_lea.vmem %s222, 384
        %v2159 = vld [vmem:[%s2158] sm:$0xf]
        %v2160 = vld [vmem:[%s2158 + $0x4] sm:$0xf]
        %v2161 = vld [vmem:[%s2158 + $0x8] sm:$0xf]
        %v2162 = vld [vmem:[%s2158 + $0xc] sm:$0xf]
        %v2163 = vld [vmem:[%s2158 + $0x10] sm:$0xf]
        %v2164 = vld [vmem:[%s2158 + $0x14] sm:$0xf]
        %v2165 = vld [vmem:[%s2158 + $0x18] sm:$0xf]
        %v2166 = vld [vmem:[%s2158 + $0x1c] sm:$0xf]
        %v2167 = vld [vmem:[%s2158 + $0x20] sm:$0xf]
        %v2168 = vld [vmem:[%s2158 + $0x24] sm:$0xf]
        %v2169 = vld [vmem:[%s2158 + $0x28] sm:$0xf]
        %v2170 = vld [vmem:[%s2158 + $0x2c] sm:$0xf]
        %v2171 = vld [vmem:[%s2158 + $0x30] sm:$0xf]
        %v2172 = vld [vmem:[%s2158 + $0x34] sm:$0xf]
        %v2173 = vld [vmem:[%s2158 + $0x38] sm:$0xf]
        %v2174 = vld [vmem:[%s2158 + $0x3c] sm:$0xf]
        %v2191 = vunpack.c.l.b16 %v2142
        %v2192 = vunpack.c.l.b16 %v2143
        %v2193 = vunpack.c.l.b16 %v2144
        %v2194 = vunpack.c.l.b16 %v2145
        %v2195 = vunpack.c.l.b16 %v2146
        %v2196 = vunpack.c.l.b16 %v2147
        %v2197 = vunpack.c.l.b16 %v2148
        %v2198 = vunpack.c.l.b16 %v2149
        %v2199 = vunpack.c.l.b16 %v2150
        %v2200 = vunpack.c.l.b16 %v2151
        %v2201 = vunpack.c.l.b16 %v2152
        %v2202 = vunpack.c.l.b16 %v2153
        %v2203 = vunpack.c.l.b16 %v2154
        %v2204 = vunpack.c.l.b16 %v2155
        %v2205 = vunpack.c.l.b16 %v2156
        %v2206 = vunpack.c.l.b16 %v2157
        %v2207 = vpack.c.b16 %v2192, %v2191
        %v2208 = vpack.c.b16 %v2194, %v2193
        %v2209 = vpack.c.b16 %v2196, %v2195
        %v2210 = vpack.c.b16 %v2198, %v2197
        %v2211 = vpack.c.b16 %v2200, %v2199
        %v2212 = vpack.c.b16 %v2202, %v2201
        %v2213 = vpack.c.b16 %v2204, %v2203
        %v2214 = vpack.c.b16 %v2206, %v2205
        %v2239 = vunpack.c.l.b16 %v2159
        %v2240 = vunpack.c.l.b16 %v2160
        %v2241 = vunpack.c.l.b16 %v2161
        %v2242 = vunpack.c.l.b16 %v2162
        %v2243 = vunpack.c.l.b16 %v2163
        %v2244 = vunpack.c.l.b16 %v2164
        %v2245 = vunpack.c.l.b16 %v2165
        %v2246 = vunpack.c.l.b16 %v2166
        %v2247 = vunpack.c.l.b16 %v2167
        %v2248 = vunpack.c.l.b16 %v2168
        %v2249 = vunpack.c.l.b16 %v2169
        %v2250 = vunpack.c.l.b16 %v2170
        %v2251 = vunpack.c.l.b16 %v2171
        %v2252 = vunpack.c.l.b16 %v2172
        %v2253 = vunpack.c.l.b16 %v2173
        %v2254 = vunpack.c.l.b16 %v2174
        %v2255 = vpack.c.b16 %v2240, %v2239
        %v2256 = vpack.c.b16 %v2242, %v2241
        %v2257 = vpack.c.b16 %v2244, %v2243
        %v2258 = vpack.c.b16 %v2246, %v2245
        %v2259 = vpack.c.b16 %v2248, %v2247
        %v2260 = vpack.c.b16 %v2250, %v2249
        %v2261 = vpack.c.b16 %v2252, %v2251
        %v2262 = vpack.c.b16 %v2254, %v2253
        %2271 = vmatprep.subr.bf16.mxu0 0
        %2272 = vmatpush1.bf16.msra.mxu0 %v2262
        %2273 = vmatprep.subr.bf16.mxu0 0
        %2274 = vmatpush1.bf16.msra.mxu0 %v2261
        %2275 = vmatprep.subr.bf16.mxu0 0
        %2276 = vmatpush1.bf16.msra.mxu0 %v2260
        %2277 = vmatprep.subr.bf16.mxu0 0
        %2278 = vmatpush1.bf16.msra.mxu0 %v2259
        %2279 = vmatprep.subr.bf16.mxu0 0
        %2280 = vmatpush1.bf16.msra.mxu0 %v2258
        %2281 = vmatprep.subr.bf16.mxu0 0
        %2282 = vmatpush1.bf16.msra.mxu0 %v2257
        %2283 = vmatprep.subr.bf16.mxu0 0
        %2284 = vmatpush1.bf16.msra.mxu0 %v2256
        %2285 = vmatprep.subr.bf16.mxu0 0
        %2286 = vmatpush1.bf16.msra.mxu0 %v2255
        %2287 = vmatprep.subr.bf16.mxu0 0
        %2288 = vmatpush2.bf16.msra.mxu0 0
        %2289 = vmatprep.subr.bf16.mxu0 0
        %2290 = vmatpush2.bf16.msra.mxu0 0
        %2291 = vmatprep.subr.bf16.mxu0 0
        %2292 = vmatpush2.bf16.msra.mxu0 0
        %2293 = vmatprep.subr.bf16.mxu0 0
        %2294 = vmatpush2.bf16.msra.mxu0 0
        %2295 = vmatprep.subr.bf16.mxu0 0
        %2296 = vmatpush2.bf16.msra.mxu0 0
        %2297 = vmatprep.subr.bf16.mxu0 0
        %2298 = vmatpush2.bf16.msra.mxu0 0
        %2299 = vmatprep.subr.bf16.mxu0 0
        %2300 = vmatpush2.bf16.msra.mxu0 0
        %2301 = vmatprep.subr.bf16.mxu0 0
        %2302 = vmatpush2.bf16.msra.mxu0 0
        %2303 = vmatprep.mubr.bf16.mxu0 0
        %2304 = vmatmul.mubr.bf16.gmra.mxu0 %v2207
        %v2305 = vpop.f32.mrf.mxu0
        %v2306 = vadd.f32 0.0, %v2305
        %v2307 = vpop.f32.mrf.mxu0
        %v2308 = vpop.f32.mrf.mxu0
        %v2309 = vadd.f32 0.0, %v2308
        %v2310 = vpop.f32.mrf.mxu0
        %2311 = vmatprep.mubr.bf16.mxu0 0
        %2312 = vmatmul.mubr.bf16.gmra.mxu0 %v2208
        %v2313 = vpop.f32.mrf.mxu0
        %v2314 = vadd.f32 0.0, %v2313
        %v2315 = vpop.f32.mrf.mxu0
        %v2316 = vpop.f32.mrf.mxu0
        %v2317 = vadd.f32 0.0, %v2316
        %v2318 = vpop.f32.mrf.mxu0
        %2319 = vmatprep.mubr.bf16.mxu0 0
        %2320 = vmatmul.mubr.bf16.gmra.mxu0 %v2209
        %v2321 = vpop.f32.mrf.mxu0
        %v2322 = vadd.f32 0.0, %v2321
        %v2323 = vpop.f32.mrf.mxu0
        %v2324 = vpop.f32.mrf.mxu0
        %v2325 = vadd.f32 0.0, %v2324
        %v2326 = vpop.f32.mrf.mxu0
        %2327 = vmatprep.mubr.bf16.mxu0 0
        %2328 = vmatmul.mubr.bf16.gmra.mxu0 %v2210
        %v2329 = vpop.f32.mrf.mxu0
        %v2330 = vadd.f32 0.0, %v2329
        %v2331 = vpop.f32.mrf.mxu0
        %v2332 = vpop.f32.mrf.mxu0
        %v2333 = vadd.f32 0.0, %v2332
        %v2334 = vpop.f32.mrf.mxu0
        %2335 = vmatprep.mubr.bf16.mxu0 0
        %2336 = vmatmul.mubr.bf16.gmra.mxu0 %v2211
        %v2337 = vpop.f32.mrf.mxu0
        %v2338 = vadd.f32 0.0, %v2337
        %v2339 = vpop.f32.mrf.mxu0
        %v2340 = vpop.f32.mrf.mxu0
        %v2341 = vadd.f32 0.0, %v2340
        %v2342 = vpop.f32.mrf.mxu0
        %2343 = vmatprep.mubr.bf16.mxu0 0
        %2344 = vmatmul.mubr.bf16.gmra.mxu0 %v2212
        %v2345 = vpop.f32.mrf.mxu0
        %v2346 = vadd.f32 0.0, %v2345
        %v2347 = vpop.f32.mrf.mxu0
        %v2348 = vpop.f32.mrf.mxu0
        %v2349 = vadd.f32 0.0, %v2348
        %v2350 = vpop.f32.mrf.mxu0
        %2351 = vmatprep.mubr.bf16.mxu0 0
        %2352 = vmatmul.mubr.bf16.gmra.mxu0 %v2213
        %v2353 = vpop.f32.mrf.mxu0
        %v2354 = vadd.f32 0.0, %v2353
        %v2355 = vpop.f32.mrf.mxu0
        %v2356 = vpop.f32.mrf.mxu0
        %v2357 = vadd.f32 0.0, %v2356
        %v2358 = vpop.f32.mrf.mxu0
        %2359 = vmatprep.mubr.bf16.mxu0 0
        %2360 = vmatmul.mubr.bf16.gmra.mxu0 %v2214
        %v2361 = vpop.f32.mrf.mxu0
        %v2362 = vadd.f32 0.0, %v2361
        %v2363 = vpop.f32.mrf.mxu0
        %v2364 = vpop.f32.mrf.mxu0
        %v2365 = vadd.f32 0.0, %v2364
        %v2366 = vpop.f32.mrf.mxu0
        %2367 = vdwg.mxu0
        %v2368 = vadd.f32 %v2122, %v2306
        %v2369 = vadd.f32 %v2123, %v2309
        %v2370 = vadd.f32 %v2124, %v2314
        %v2371 = vadd.f32 %v2125, %v2317
        %v2372 = vadd.f32 %v2126, %v2322
        %v2373 = vadd.f32 %v2127, %v2325
        %v2374 = vadd.f32 %v2128, %v2330
        %v2375 = vadd.f32 %v2129, %v2333
        %v2376 = vadd.f32 %v2130, %v2338
        %v2377 = vadd.f32 %v2131, %v2341
        %v2378 = vadd.f32 %v2132, %v2346
        %v2379 = vadd.f32 %v2133, %v2349
        %v2380 = vadd.f32 %v2134, %v2354
        %v2381 = vadd.f32 %v2135, %v2357
        %v2382 = vadd.f32 %v2136, %v2362
        %v2383 = vadd.f32 %v2137, %v2365
        %v2384 = vld [vmem:[%s2141] sm:$0xf]
        %v2385 = vld [vmem:[%s2141 + $0x4] sm:$0xf]
        %v2386 = vld [vmem:[%s2141 + $0x8] sm:$0x1]
        %v2387 = vld [vmem:[%s2141 + $0xc] sm:$0xf]
        %v2388 = vld [vmem:[%s2141 + $0x10] sm:$0xf]
        %v2389 = vld [vmem:[%s2141 + $0x14] sm:$0x1]
        %v2390 = vld [vmem:[%s2141 + $0x18] sm:$0xf]
        %v2391 = vld [vmem:[%s2141 + $0x1c] sm:$0xf]
        %v2392 = vld [vmem:[%s2141 + $0x20] sm:$0x1]
        %v2393 = vld [vmem:[%s2141 + $0x24] sm:$0xf]
        %v2394 = vld [vmem:[%s2141 + $0x28] sm:$0xf]
        %v2395 = vld [vmem:[%s2141 + $0x2c] sm:$0x1]
        %v2396 = vld [vmem:[%s2141 + $0x30] sm:$0xf]
        %v2397 = vld [vmem:[%s2141 + $0x34] sm:$0xf]
        %v2398 = vld [vmem:[%s2141 + $0x38] sm:$0x1]
        %v2399 = vld [vmem:[%s2141 + $0x3c] sm:$0xf]
        %v2400 = vld [vmem:[%s2141 + $0x40] sm:$0xf]
        %v2401 = vld [vmem:[%s2141 + $0x44] sm:$0x1]
        %v2402 = vld [vmem:[%s2141 + $0x48] sm:$0xf]
        %v2403 = vld [vmem:[%s2141 + $0x4c] sm:$0xf]
        %v2404 = vld [vmem:[%s2141 + $0x50] sm:$0x1]
        %v2405 = vld [vmem:[%s2141 + $0x54] sm:$0xf]
        %v2406 = vld [vmem:[%s2141 + $0x58] sm:$0xf]
        %v2407 = vld [vmem:[%s2141 + $0x5c] sm:$0x1]
        %v2409 = vshrl.u32 %v2384, 16
        %v2411 = vrot.slane %v2409, 4
        %v2412 = vshll.u32 %v2384, 16
        %v2414 = vrot.slane %v2412, 5
        %v2415 = vor.u32 %v2411, %v2414
        %v2416 = vrot.slane %v2415, 4
        %v2418 = vshll.u32 %v2385, 16
        %v2420 = vrot.slane %v2418, 5
        %v2421 = vsel %vm295, %v2416, %v2420
        %v2422 = vshrl.u32 %v2385, 16
        %v2424 = vrot.slane %v2422, 4
        %v2425 = vor.u32 %v2424, %v2420
        %v2426 = vrot.slane %v2425, 4
        %v2428 = vshll.u32 %v2386, 16
        %v2430 = vrot.slane %v2428, 5
        %v2431 = vsel %vm295, %v2426, %v2430
        %v2433 = vshrl.u32 %v2387, 16
        %v2435 = vrot.slane %v2433, 4
        %v2436 = vshll.u32 %v2387, 16
        %v2438 = vrot.slane %v2436, 5
        %v2439 = vor.u32 %v2435, %v2438
        %v2440 = vrot.slane %v2439, 4
        %v2442 = vshll.u32 %v2388, 16
        %v2444 = vrot.slane %v2442, 5
        %v2445 = vsel %vm295, %v2440, %v2444
        %v2446 = vshrl.u32 %v2388, 16
        %v2448 = vrot.slane %v2446, 4
        %v2449 = vor.u32 %v2448, %v2444
        %v2450 = vrot.slane %v2449, 4
        %v2452 = vshll.u32 %v2389, 16
        %v2454 = vrot.slane %v2452, 5
        %v2455 = vsel %vm295, %v2450, %v2454
        %v2457 = vshrl.u32 %v2390, 16
        %v2459 = vrot.slane %v2457, 4
        %v2460 = vshll.u32 %v2390, 16
        %v2462 = vrot.slane %v2460, 5
        %v2463 = vor.u32 %v2459, %v2462
        %v2464 = vrot.slane %v2463, 4
        %v2466 = vshll.u32 %v2391, 16
        %v2468 = vrot.slane %v2466, 5
        %v2469 = vsel %vm295, %v2464, %v2468
        %v2470 = vshrl.u32 %v2391, 16
        %v2472 = vrot.slane %v2470, 4
        %v2473 = vor.u32 %v2472, %v2468
        %v2474 = vrot.slane %v2473, 4
        %v2476 = vshll.u32 %v2392, 16
        %v2478 = vrot.slane %v2476, 5
        %v2479 = vsel %vm295, %v2474, %v2478
        %v2481 = vshrl.u32 %v2393, 16
        %v2483 = vrot.slane %v2481, 4
        %v2484 = vshll.u32 %v2393, 16
        %v2486 = vrot.slane %v2484, 5
        %v2487 = vor.u32 %v2483, %v2486
        %v2488 = vrot.slane %v2487, 4
        %v2490 = vshll.u32 %v2394, 16
        %v2492 = vrot.slane %v2490, 5
        %v2493 = vsel %vm295, %v2488, %v2492
        %v2494 = vshrl.u32 %v2394, 16
        %v2496 = vrot.slane %v2494, 4
        %v2497 = vor.u32 %v2496, %v2492
        %v2498 = vrot.slane %v2497, 4
        %v2500 = vshll.u32 %v2395, 16
        %v2502 = vrot.slane %v2500, 5
        %v2503 = vsel %vm295, %v2498, %v2502
        %v2505 = vshrl.u32 %v2396, 16
        %v2507 = vrot.slane %v2505, 4
        %v2508 = vshll.u32 %v2396, 16
        %v2510 = vrot.slane %v2508, 5
        %v2511 = vor.u32 %v2507, %v2510
        %v2512 = vrot.slane %v2511, 4
        %v2514 = vshll.u32 %v2397, 16
        %v2516 = vrot.slane %v2514, 5
        %v2517 = vsel %vm295, %v2512, %v2516
        %v2518 = vshrl.u32 %v2397, 16
        %v2520 = vrot.slane %v2518, 4
        %v2521 = vor.u32 %v2520, %v2516
        %v2522 = vrot.slane %v2521, 4
        %v2524 = vshll.u32 %v2398, 16
        %v2526 = vrot.slane %v2524, 5
        %v2527 = vsel %vm295, %v2522, %v2526
        %v2529 = vshrl.u32 %v2399, 16
        %v2531 = vrot.slane %v2529, 4
        %v2532 = vshll.u32 %v2399, 16
        %v2534 = vrot.slane %v2532, 5
        %v2535 = vor.u32 %v2531, %v2534
        %v2536 = vrot.slane %v2535, 4
        %v2538 = vshll.u32 %v2400, 16
        %v2540 = vrot.slane %v2538, 5
        %v2541 = vsel %vm295, %v2536, %v2540
        %v2542 = vshrl.u32 %v2400, 16
        %v2544 = vrot.slane %v2542, 4
        %v2545 = vor.u32 %v2544, %v2540
        %v2546 = vrot.slane %v2545, 4
        %v2548 = vshll.u32 %v2401, 16
        %v2550 = vrot.slane %v2548, 5
        %v2551 = vsel %vm295, %v2546, %v2550
        %v2553 = vshrl.u32 %v2402, 16
        %v2555 = vrot.slane %v2553, 4
        %v2556 = vshll.u32 %v2402, 16
        %v2558 = vrot.slane %v2556, 5
        %v2559 = vor.u32 %v2555, %v2558
        %v2560 = vrot.slane %v2559, 4
        %v2562 = vshll.u32 %v2403, 16
        %v2564 = vrot.slane %v2562, 5
        %v2565 = vsel %vm295, %v2560, %v2564
        %v2566 = vshrl.u32 %v2403, 16
        %v2568 = vrot.slane %v2566, 4
        %v2569 = vor.u32 %v2568, %v2564
        %v2570 = vrot.slane %v2569, 4
        %v2572 = vshll.u32 %v2404, 16
        %v2574 = vrot.slane %v2572, 5
        %v2575 = vsel %vm295, %v2570, %v2574
        %v2577 = vshrl.u32 %v2405, 16
        %v2579 = vrot.slane %v2577, 4
        %v2580 = vshll.u32 %v2405, 16
        %v2582 = vrot.slane %v2580, 5
        %v2583 = vor.u32 %v2579, %v2582
        %v2584 = vrot.slane %v2583, 4
        %v2586 = vshll.u32 %v2406, 16
        %v2588 = vrot.slane %v2586, 5
        %v2589 = vsel %vm295, %v2584, %v2588
        %v2590 = vshrl.u32 %v2406, 16
        %v2592 = vrot.slane %v2590, 4
        %v2593 = vor.u32 %v2592, %v2588
        %v2594 = vrot.slane %v2593, 4
        %v2596 = vshll.u32 %v2407, 16
        %v2598 = vrot.slane %v2596, 5
        %v2599 = vsel %vm295, %v2594, %v2598
        %s2600 = scalar_lea.vmem %s222, 448
        %v2601 = vld [vmem:[%s2600] sm:$0xf]
        %v2602 = vld [vmem:[%s2600 + $0x4] sm:$0xf]
        %v2603 = vld [vmem:[%s2600 + $0x8] sm:$0xf]
        %v2604 = vld [vmem:[%s2600 + $0xc] sm:$0xf]
        %v2605 = vld [vmem:[%s2600 + $0x10] sm:$0xf]
        %v2606 = vld [vmem:[%s2600 + $0x14] sm:$0xf]
        %v2607 = vld [vmem:[%s2600 + $0x18] sm:$0xf]
        %v2608 = vld [vmem:[%s2600 + $0x1c] sm:$0xf]
        %v2609 = vld [vmem:[%s2600 + $0x20] sm:$0xf]
        %v2610 = vld [vmem:[%s2600 + $0x24] sm:$0xf]
        %v2611 = vld [vmem:[%s2600 + $0x28] sm:$0xf]
        %v2612 = vld [vmem:[%s2600 + $0x2c] sm:$0xf]
        %v2613 = vld [vmem:[%s2600 + $0x30] sm:$0xf]
        %v2614 = vld [vmem:[%s2600 + $0x34] sm:$0xf]
        %v2615 = vld [vmem:[%s2600 + $0x38] sm:$0xf]
        %v2616 = vld [vmem:[%s2600 + $0x3c] sm:$0xf]
        %v2617 = vunpack.c.l.b16 %v2421
        %v2618 = vunpack.c.l.b16 %v2431
        %v2619 = vunpack.c.l.b16 %v2445
        %v2620 = vunpack.c.l.b16 %v2455
        %v2621 = vunpack.c.l.b16 %v2469
        %v2622 = vunpack.c.l.b16 %v2479
        %v2623 = vunpack.c.l.b16 %v2493
        %v2624 = vunpack.c.l.b16 %v2503
        %v2625 = vunpack.c.l.b16 %v2517
        %v2626 = vunpack.c.l.b16 %v2527
        %v2627 = vunpack.c.l.b16 %v2541
        %v2628 = vunpack.c.l.b16 %v2551
        %v2629 = vunpack.c.l.b16 %v2565
        %v2630 = vunpack.c.l.b16 %v2575
        %v2631 = vunpack.c.l.b16 %v2589
        %v2632 = vunpack.c.l.b16 %v2599
        %v2633 = vpack.c.b16 %v2618, %v2617
        %v2634 = vpack.c.b16 %v2620, %v2619
        %v2635 = vpack.c.b16 %v2622, %v2621
        %v2636 = vpack.c.b16 %v2624, %v2623
        %v2637 = vpack.c.b16 %v2626, %v2625
        %v2638 = vpack.c.b16 %v2628, %v2627
        %v2639 = vpack.c.b16 %v2630, %v2629
        %v2640 = vpack.c.b16 %v2632, %v2631
        %v2665 = vunpack.c.l.b16 %v2601
        %v2666 = vunpack.c.l.b16 %v2602
        %v2667 = vunpack.c.l.b16 %v2603
        %v2668 = vunpack.c.l.b16 %v2604
        %v2669 = vunpack.c.l.b16 %v2605
        %v2670 = vunpack.c.l.b16 %v2606
        %v2671 = vunpack.c.l.b16 %v2607
        %v2672 = vunpack.c.l.b16 %v2608
        %v2673 = vunpack.c.l.b16 %v2609
        %v2674 = vunpack.c.l.b16 %v2610
        %v2675 = vunpack.c.l.b16 %v2611
        %v2676 = vunpack.c.l.b16 %v2612
        %v2677 = vunpack.c.l.b16 %v2613
        %v2678 = vunpack.c.l.b16 %v2614
        %v2679 = vunpack.c.l.b16 %v2615
        %v2680 = vunpack.c.l.b16 %v2616
        %v2681 = vpack.c.b16 %v2666, %v2665
        %v2682 = vpack.c.b16 %v2668, %v2667
        %v2683 = vpack.c.b16 %v2670, %v2669
        %v2684 = vpack.c.b16 %v2672, %v2671
        %v2685 = vpack.c.b16 %v2674, %v2673
        %v2686 = vpack.c.b16 %v2676, %v2675
        %v2687 = vpack.c.b16 %v2678, %v2677
        %v2688 = vpack.c.b16 %v2680, %v2679
        %2697 = vmatprep.subr.bf16.mxu0 0
        %2698 = vmatpush1.bf16.msra.mxu0 %v2688
        %2699 = vmatprep.subr.bf16.mxu0 0
        %2700 = vmatpush1.bf16.msra.mxu0 %v2687
        %2701 = vmatprep.subr.bf16.mxu0 0
        %2702 = vmatpush1.bf16.msra.mxu0 %v2686
        %2703 = vmatprep.subr.bf16.mxu0 0
        %2704 = vmatpush1.bf16.msra.mxu0 %v2685
        %2705 = vmatprep.subr.bf16.mxu0 0
        %2706 = vmatpush1.bf16.msra.mxu0 %v2684
        %2707 = vmatprep.subr.bf16.mxu0 0
        %2708 = vmatpush1.bf16.msra.mxu0 %v2683
        %2709 = vmatprep.subr.bf16.mxu0 0
        %2710 = vmatpush1.bf16.msra.mxu0 %v2682
        %2711 = vmatprep.subr.bf16.mxu0 0
        %2712 = vmatpush1.bf16.msra.mxu0 %v2681
        %2713 = vmatprep.subr.bf16.mxu0 0
        %2714 = vmatpush2.bf16.msra.mxu0 0
        %2715 = vmatprep.subr.bf16.mxu0 0
        %2716 = vmatpush2.bf16.msra.mxu0 0
        %2717 = vmatprep.subr.bf16.mxu0 0
        %2718 = vmatpush2.bf16.msra.mxu0 0
        %2719 = vmatprep.subr.bf16.mxu0 0
        %2720 = vmatpush2.bf16.msra.mxu0 0
        %2721 = vmatprep.subr.bf16.mxu0 0
        %2722 = vmatpush2.bf16.msra.mxu0 0
        %2723 = vmatprep.subr.bf16.mxu0 0
        %2724 = vmatpush2.bf16.msra.mxu0 0
        %2725 = vmatprep.subr.bf16.mxu0 0
        %2726 = vmatpush2.bf16.msra.mxu0 0
        %2727 = vmatprep.subr.bf16.mxu0 0
        %2728 = vmatpush2.bf16.msra.mxu0 0
        %2729 = vmatprep.mubr.bf16.mxu0 0
        %2730 = vmatmul.mubr.bf16.gmra.mxu0 %v2633
        %v2731 = vpop.f32.mrf.mxu0
        %v2732 = vadd.f32 0.0, %v2731
        %v2733 = vpop.f32.mrf.mxu0
        %v2734 = vpop.f32.mrf.mxu0
        %v2735 = vadd.f32 0.0, %v2734
        %v2736 = vpop.f32.mrf.mxu0
        %2737 = vmatprep.mubr.bf16.mxu0 0
        %2738 = vmatmul.mubr.bf16.gmra.mxu0 %v2634
        %v2739 = vpop.f32.mrf.mxu0
        %v2740 = vadd.f32 0.0, %v2739
        %v2741 = vpop.f32.mrf.mxu0
        %v2742 = vpop.f32.mrf.mxu0
        %v2743 = vadd.f32 0.0, %v2742
        %v2744 = vpop.f32.mrf.mxu0
        %2745 = vmatprep.mubr.bf16.mxu0 0
        %2746 = vmatmul.mubr.bf16.gmra.mxu0 %v2635
        %v2747 = vpop.f32.mrf.mxu0
        %v2748 = vadd.f32 0.0, %v2747
        %v2749 = vpop.f32.mrf.mxu0
        %v2750 = vpop.f32.mrf.mxu0
        %v2751 = vadd.f32 0.0, %v2750
        %v2752 = vpop.f32.mrf.mxu0
        %2753 = vmatprep.mubr.bf16.mxu0 0
        %2754 = vmatmul.mubr.bf16.gmra.mxu0 %v2636
        %v2755 = vpop.f32.mrf.mxu0
        %v2756 = vadd.f32 0.0, %v2755
        %v2757 = vpop.f32.mrf.mxu0
        %v2758 = vpop.f32.mrf.mxu0
        %v2759 = vadd.f32 0.0, %v2758
        %v2760 = vpop.f32.mrf.mxu0
        %2761 = vmatprep.mubr.bf16.mxu0 0
        %2762 = vmatmul.mubr.bf16.gmra.mxu0 %v2637
        %v2763 = vpop.f32.mrf.mxu0
        %v2764 = vadd.f32 0.0, %v2763
        %v2765 = vpop.f32.mrf.mxu0
        %v2766 = vpop.f32.mrf.mxu0
        %v2767 = vadd.f32 0.0, %v2766
        %v2768 = vpop.f32.mrf.mxu0
        %2769 = vmatprep.mubr.bf16.mxu0 0
        %2770 = vmatmul.mubr.bf16.gmra.mxu0 %v2638
        %v2771 = vpop.f32.mrf.mxu0
        %v2772 = vadd.f32 0.0, %v2771
        %v2773 = vpop.f32.mrf.mxu0
        %v2774 = vpop.f32.mrf.mxu0
        %v2775 = vadd.f32 0.0, %v2774
        %v2776 = vpop.f32.mrf.mxu0
        %2777 = vmatprep.mubr.bf16.mxu0 0
        %2778 = vmatmul.mubr.bf16.gmra.mxu0 %v2639
        %v2779 = vpop.f32.mrf.mxu0
        %v2780 = vadd.f32 0.0, %v2779
        %v2781 = vpop.f32.mrf.mxu0
        %v2782 = vpop.f32.mrf.mxu0
        %v2783 = vadd.f32 0.0, %v2782
        %v2784 = vpop.f32.mrf.mxu0
        %2785 = vmatprep.mubr.bf16.mxu0 0
        %2786 = vmatmul.mubr.bf16.gmra.mxu0 %v2640
        %v2787 = vpop.f32.mrf.mxu0
        %v2788 = vadd.f32 0.0, %v2787
        %v2789 = vpop.f32.mrf.mxu0
        %v2790 = vpop.f32.mrf.mxu0
        %v2791 = vadd.f32 0.0, %v2790
        %v2792 = vpop.f32.mrf.mxu0
        %2793 = vdwg.mxu0
        %v2794 = vadd.f32 %v2368, %v2732
        %v2795 = vadd.f32 %v2369, %v2735
        %v2796 = vadd.f32 %v2370, %v2740
        %v2797 = vadd.f32 %v2371, %v2743
        %v2798 = vadd.f32 %v2372, %v2748
        %v2799 = vadd.f32 %v2373, %v2751
        %v2800 = vadd.f32 %v2374, %v2756
        %v2801 = vadd.f32 %v2375, %v2759
        %v2802 = vadd.f32 %v2376, %v2764
        %v2803 = vadd.f32 %v2377, %v2767
        %v2804 = vadd.f32 %v2378, %v2772
        %v2805 = vadd.f32 %v2379, %v2775
        %v2806 = vadd.f32 %v2380, %v2780
        %v2807 = vadd.f32 %v2381, %v2783
        %v2808 = vadd.f32 %v2382, %v2788
        %v2809 = vadd.f32 %v2383, %v2791
        %v2810 = vld [vmem:[%s2141] sm:$0xe]
        %v2811 = vld [vmem:[%s2141 + $0xc] sm:$0xe]
        %v2812 = vld [vmem:[%s2141 + $0x18] sm:$0xe]
        %v2813 = vld [vmem:[%s2141 + $0x24] sm:$0xe]
        %v2814 = vld [vmem:[%s2141 + $0x30] sm:$0xe]
        %v2815 = vld [vmem:[%s2141 + $0x3c] sm:$0xe]
        %v2816 = vld [vmem:[%s2141 + $0x48] sm:$0xe]
        %v2817 = vld [vmem:[%s2141 + $0x54] sm:$0xe]
        %v2842 = vrot.slane %v2810, 5
        %v2843 = vrot.slane %v2842, 4
        %v2844 = vrot.slane %v2385, 5
        %v2845 = vsel %vm901, %v2843, %v2844
        %v2846 = vrot.slane %v2844, 4
        %v2847 = vrot.slane %v2386, 5
        %v2848 = vsel %vm901, %v2846, %v2847
        %v2849 = vrot.slane %v2811, 5
        %v2850 = vrot.slane %v2849, 4
        %v2851 = vrot.slane %v2388, 5
        %v2852 = vsel %vm901, %v2850, %v2851
        %v2853 = vrot.slane %v2851, 4
        %v2854 = vrot.slane %v2389, 5
        %v2855 = vsel %vm901, %v2853, %v2854
        %v2856 = vrot.slane %v2812, 5
        %v2857 = vrot.slane %v2856, 4
        %v2858 = vrot.slane %v2391, 5
        %v2859 = vsel %vm901, %v2857, %v2858
        %v2860 = vrot.slane %v2858, 4
        %v2861 = vrot.slane %v2392, 5
        %v2862 = vsel %vm901, %v2860, %v2861
        %v2863 = vrot.slane %v2813, 5
        %v2864 = vrot.slane %v2863, 4
        %v2865 = vrot.slane %v2394, 5
        %v2866 = vsel %vm901, %v2864, %v2865
        %v2867 = vrot.slane %v2865, 4
        %v2868 = vrot.slane %v2395, 5
        %v2869 = vsel %vm901, %v2867, %v2868
        %v2870 = vrot.slane %v2814, 5
        %v2871 = vrot.slane %v2870, 4
        %v2872 = vrot.slane %v2397, 5
        %v2873 = vsel %vm901, %v2871, %v2872
        %v2874 = vrot.slane %v2872, 4
        %v2875 = vrot.slane %v2398, 5
        %v2876 = vsel %vm901, %v2874, %v2875
        %v2877 = vrot.slane %v2815, 5
        %v2878 = vrot.slane %v2877, 4
        %v2879 = vrot.slane %v2400, 5
        %v2880 = vsel %vm901, %v2878, %v2879
        %v2881 = vrot.slane %v2879, 4
        %v2882 = vrot.slane %v2401, 5
        %v2883 = vsel %vm901, %v2881, %v2882
        %v2884 = vrot.slane %v2816, 5
        %v2885 = vrot.slane %v2884, 4
        %v2886 = vrot.slane %v2403, 5
        %v2887 = vsel %vm901, %v2885, %v2886
        %v2888 = vrot.slane %v2886, 4
        %v2889 = vrot.slane %v2404, 5
        %v2890 = vsel %vm901, %v2888, %v2889
        %v2891 = vrot.slane %v2817, 5
        %v2892 = vrot.slane %v2891, 4
        %v2893 = vrot.slane %v2406, 5
        %v2894 = vsel %vm901, %v2892, %v2893
        %v2895 = vrot.slane %v2893, 4
        %v2896 = vrot.slane %v2407, 5
        %v2897 = vsel %vm901, %v2895, %v2896
        %s2898 = scalar_lea.vmem %s222, 512
        %v2899 = vld [vmem:[%s2898] sm:$0xf]
        %v2900 = vld [vmem:[%s2898 + $0x4] sm:$0xf]
        %v2901 = vld [vmem:[%s2898 + $0x8] sm:$0xf]
        %v2902 = vld [vmem:[%s2898 + $0xc] sm:$0xf]
        %v2903 = vld [vmem:[%s2898 + $0x10] sm:$0xf]
        %v2904 = vld [vmem:[%s2898 + $0x14] sm:$0xf]
        %v2905 = vld [vmem:[%s2898 + $0x18] sm:$0xf]
        %v2906 = vld [vmem:[%s2898 + $0x1c] sm:$0xf]
        %v2907 = vld [vmem:[%s2898 + $0x20] sm:$0xf]
        %v2908 = vld [vmem:[%s2898 + $0x24] sm:$0xf]
        %v2909 = vld [vmem:[%s2898 + $0x28] sm:$0xf]
        %v2910 = vld [vmem:[%s2898 + $0x2c] sm:$0xf]
        %v2911 = vld [vmem:[%s2898 + $0x30] sm:$0xf]
        %v2912 = vld [vmem:[%s2898 + $0x34] sm:$0xf]
        %v2913 = vld [vmem:[%s2898 + $0x38] sm:$0xf]
        %v2914 = vld [vmem:[%s2898 + $0x3c] sm:$0xf]
        %v2915 = vunpack.c.l.b16 %v2845
        %v2916 = vunpack.c.l.b16 %v2848
        %v2917 = vunpack.c.l.b16 %v2852
        %v2918 = vunpack.c.l.b16 %v2855
        %v2919 = vunpack.c.l.b16 %v2859
        %v2920 = vunpack.c.l.b16 %v2862
        %v2921 = vunpack.c.l.b16 %v2866
        %v2922 = vunpack.c.l.b16 %v2869
        %v2923 = vunpack.c.l.b16 %v2873
        %v2924 = vunpack.c.l.b16 %v2876
        %v2925 = vunpack.c.l.b16 %v2880
        %v2926 = vunpack.c.l.b16 %v2883
        %v2927 = vunpack.c.l.b16 %v2887
        %v2928 = vunpack.c.l.b16 %v2890
        %v2929 = vunpack.c.l.b16 %v2894
        %v2930 = vunpack.c.l.b16 %v2897
        %v2931 = vpack.c.b16 %v2916, %v2915
        %v2932 = vpack.c.b16 %v2918, %v2917
        %v2933 = vpack.c.b16 %v2920, %v2919
        %v2934 = vpack.c.b16 %v2922, %v2921
        %v2935 = vpack.c.b16 %v2924, %v2923
        %v2936 = vpack.c.b16 %v2926, %v2925
        %v2937 = vpack.c.b16 %v2928, %v2927
        %v2938 = vpack.c.b16 %v2930, %v2929
        %v2963 = vunpack.c.l.b16 %v2899
        %v2964 = vunpack.c.l.b16 %v2900
        %v2965 = vunpack.c.l.b16 %v2901
        %v2966 = vunpack.c.l.b16 %v2902
        %v2967 = vunpack.c.l.b16 %v2903
        %v2968 = vunpack.c.l.b16 %v2904
        %v2969 = vunpack.c.l.b16 %v2905
        %v2970 = vunpack.c.l.b16 %v2906
        %v2971 = vunpack.c.l.b16 %v2907
        %v2972 = vunpack.c.l.b16 %v2908
        %v2973 = vunpack.c.l.b16 %v2909
        %v2974 = vunpack.c.l.b16 %v2910
        %v2975 = vunpack.c.l.b16 %v2911
        %v2976 = vunpack.c.l.b16 %v2912
        %v2977 = vunpack.c.l.b16 %v2913
        %v2978 = vunpack.c.l.b16 %v2914
        %v2979 = vpack.c.b16 %v2964, %v2963
        %v2980 = vpack.c.b16 %v2966, %v2965
        %v2981 = vpack.c.b16 %v2968, %v2967
        %v2982 = vpack.c.b16 %v2970, %v2969
        %v2983 = vpack.c.b16 %v2972, %v2971
        %v2984 = vpack.c.b16 %v2974, %v2973
        %v2985 = vpack.c.b16 %v2976, %v2975
        %v2986 = vpack.c.b16 %v2978, %v2977
        %2995 = vmatprep.subr.bf16.mxu0 0
        %2996 = vmatpush1.bf16.msra.mxu0 %v2986
        %2997 = vmatprep.subr.bf16.mxu0 0
        %2998 = vmatpush1.bf16.msra.mxu0 %v2985
        %2999 = vmatprep.subr.bf16.mxu0 0
        %3000 = vmatpush1.bf16.msra.mxu0 %v2984
        %3001 = vmatprep.subr.bf16.mxu0 0
        %3002 = vmatpush1.bf16.msra.mxu0 %v2983
        %3003 = vmatprep.subr.bf16.mxu0 0
        %3004 = vmatpush1.bf16.msra.mxu0 %v2982
        %3005 = vmatprep.subr.bf16.mxu0 0
        %3006 = vmatpush1.bf16.msra.mxu0 %v2981
        %3007 = vmatprep.subr.bf16.mxu0 0
        %3008 = vmatpush1.bf16.msra.mxu0 %v2980
        %3009 = vmatprep.subr.bf16.mxu0 0
        %3010 = vmatpush1.bf16.msra.mxu0 %v2979
        %3011 = vmatprep.subr.bf16.mxu0 0
        %3012 = vmatpush2.bf16.msra.mxu0 0
        %3013 = vmatprep.subr.bf16.mxu0 0
        %3014 = vmatpush2.bf16.msra.mxu0 0
        %3015 = vmatprep.subr.bf16.mxu0 0
        %3016 = vmatpush2.bf16.msra.mxu0 0
        %3017 = vmatprep.subr.bf16.mxu0 0
        %3018 = vmatpush2.bf16.msra.mxu0 0
        %3019 = vmatprep.subr.bf16.mxu0 0
        %3020 = vmatpush2.bf16.msra.mxu0 0
        %3021 = vmatprep.subr.bf16.mxu0 0
        %3022 = vmatpush2.bf16.msra.mxu0 0
        %3023 = vmatprep.subr.bf16.mxu0 0
        %3024 = vmatpush2.bf16.msra.mxu0 0
        %3025 = vmatprep.subr.bf16.mxu0 0
        %3026 = vmatpush2.bf16.msra.mxu0 0
        %3027 = vmatprep.mubr.bf16.mxu0 0
        %3028 = vmatmul.mubr.bf16.gmra.mxu0 %v2931
        %v3029 = vpop.f32.mrf.mxu0
        %v3030 = vadd.f32 0.0, %v3029
        %v3031 = vpop.f32.mrf.mxu0
        %v3032 = vpop.f32.mrf.mxu0
        %v3033 = vadd.f32 0.0, %v3032
        %v3034 = vpop.f32.mrf.mxu0
        %3035 = vmatprep.mubr.bf16.mxu0 0
        %3036 = vmatmul.mubr.bf16.gmra.mxu0 %v2932
        %v3037 = vpop.f32.mrf.mxu0
        %v3038 = vadd.f32 0.0, %v3037
        %v3039 = vpop.f32.mrf.mxu0
        %v3040 = vpop.f32.mrf.mxu0
        %v3041 = vadd.f32 0.0, %v3040
        %v3042 = vpop.f32.mrf.mxu0
        %3043 = vmatprep.mubr.bf16.mxu0 0
        %3044 = vmatmul.mubr.bf16.gmra.mxu0 %v2933
        %v3045 = vpop.f32.mrf.mxu0
        %v3046 = vadd.f32 0.0, %v3045
        %v3047 = vpop.f32.mrf.mxu0
        %v3048 = vpop.f32.mrf.mxu0
        %v3049 = vadd.f32 0.0, %v3048
        %v3050 = vpop.f32.mrf.mxu0
        %3051 = vmatprep.mubr.bf16.mxu0 0
        %3052 = vmatmul.mubr.bf16.gmra.mxu0 %v2934
        %v3053 = vpop.f32.mrf.mxu0
        %v3054 = vadd.f32 0.0, %v3053
        %v3055 = vpop.f32.mrf.mxu0
        %v3056 = vpop.f32.mrf.mxu0
        %v3057 = vadd.f32 0.0, %v3056
        %v3058 = vpop.f32.mrf.mxu0
        %3059 = vmatprep.mubr.bf16.mxu0 0
        %3060 = vmatmul.mubr.bf16.gmra.mxu0 %v2935
        %v3061 = vpop.f32.mrf.mxu0
        %v3062 = vadd.f32 0.0, %v3061
        %v3063 = vpop.f32.mrf.mxu0
        %v3064 = vpop.f32.mrf.mxu0
        %v3065 = vadd.f32 0.0, %v3064
        %v3066 = vpop.f32.mrf.mxu0
        %3067 = vmatprep.mubr.bf16.mxu0 0
        %3068 = vmatmul.mubr.bf16.gmra.mxu0 %v2936
        %v3069 = vpop.f32.mrf.mxu0
        %v3070 = vadd.f32 0.0, %v3069
        %v3071 = vpop.f32.mrf.mxu0
        %v3072 = vpop.f32.mrf.mxu0
        %v3073 = vadd.f32 0.0, %v3072
        %v3074 = vpop.f32.mrf.mxu0
        %3075 = vmatprep.mubr.bf16.mxu0 0
        %3076 = vmatmul.mubr.bf16.gmra.mxu0 %v2937
        %v3077 = vpop.f32.mrf.mxu0
        %v3078 = vadd.f32 0.0, %v3077
        %v3079 = vpop.f32.mrf.mxu0
        %v3080 = vpop.f32.mrf.mxu0
        %v3081 = vadd.f32 0.0, %v3080
        %v3082 = vpop.f32.mrf.mxu0
        %3083 = vmatprep.mubr.bf16.mxu0 0
        %3084 = vmatmul.mubr.bf16.gmra.mxu0 %v2938
        %v3085 = vpop.f32.mrf.mxu0
        %v3086 = vadd.f32 0.0, %v3085
        %v3087 = vpop.f32.mrf.mxu0
        %v3088 = vpop.f32.mrf.mxu0
        %v3089 = vadd.f32 0.0, %v3088
        %v3090 = vpop.f32.mrf.mxu0
        %3091 = vdwg.mxu0
        %v3092 = vadd.f32 %v2794, %v3030
        %v3093 = vadd.f32 %v2795, %v3033
        %v3094 = vadd.f32 %v2796, %v3038
        %v3095 = vadd.f32 %v2797, %v3041
        %v3096 = vadd.f32 %v2798, %v3046
        %v3097 = vadd.f32 %v2799, %v3049
        %v3098 = vadd.f32 %v2800, %v3054
        %v3099 = vadd.f32 %v2801, %v3057
        %v3100 = vadd.f32 %v2802, %v3062
        %v3101 = vadd.f32 %v2803, %v3065
        %v3102 = vadd.f32 %v2804, %v3070
        %v3103 = vadd.f32 %v2805, %v3073
        %v3104 = vadd.f32 %v2806, %v3078
        %v3105 = vadd.f32 %v2807, %v3081
        %v3106 = vadd.f32 %v2808, %v3086
        %v3107 = vadd.f32 %v2809, %v3089
        %v3108 = vld [vmem:[#allocation3] sm:$0x1]
        %v3109 = vadd.f32 %v3092, %v3093
        %v3110 = vadd.f32 %v3109, %v3094
        %v3111 = vadd.f32 %v3110, %v3095
        %v3112 = vadd.f32 %v3111, %v3096
        %v3113 = vadd.f32 %v3112, %v3097
        %v3114 = vadd.f32 %v3113, %v3098
        %v3115 = vadd.f32 %v3114, %v3099
        %v3116 = vadd.f32 %v3115, %v3100
        %v3117 = vadd.f32 %v3116, %v3101
        %v3118 = vadd.f32 %v3117, %v3102
        %v3119 = vadd.f32 %v3118, %v3103
        %v3120 = vadd.f32 %v3119, %v3104
        %v3121 = vadd.f32 %v3120, %v3105
        %v3122 = vadd.f32 %v3121, %v3106
        %v3123 = vadd.f32 %v3122, %v3107
        %v3124 = vrot.slane %v3123, 4
        %v3125 = vadd.f32 %v3123, %v3124
        %v3126 = vrot.slane %v3125, 2
        %v3127 = vadd.f32 %v3125, %v3126
        %v3128 = vrot.slane %v3127, 1
        %v3129 = vadd.f32 %v3127, %v3128
        %v3130 = vadd.f32 %v3108, %v3129
        %3131 = vst [vmem:[#allocation3] sm:$0x1] %v3130
        %v3132 = vld [vmem:[#allocation4] sm:$0x1]
        %v3133 = vmul.f32 %v3092, %v3092
        %v3134 = vmul.f32 %v3093, %v3093
        %v3135 = vmul.f32 %v3094, %v3094
        %v3136 = vmul.f32 %v3095, %v3095
        %v3137 = vmul.f32 %v3096, %v3096
        %v3138 = vmul.f32 %v3097, %v3097
        %v3139 = vmul.f32 %v3098, %v3098
        %v3140 = vmul.f32 %v3099, %v3099
        %v3141 = vmul.f32 %v3100, %v3100
        %v3142 = vmul.f32 %v3101, %v3101
        %v3143 = vmul.f32 %v3102, %v3102
        %v3144 = vmul.f32 %v3103, %v3103
        %v3145 = vmul.f32 %v3104, %v3104
        %v3146 = vmul.f32 %v3105, %v3105
        %v3147 = vmul.f32 %v3106, %v3106
        %v3148 = vmul.f32 %v3107, %v3107
        %v3149 = vadd.f32 %v3133, %v3134
        %v3150 = vadd.f32 %v3149, %v3135
        %v3151 = vadd.f32 %v3150, %v3136
        %v3152 = vadd.f32 %v3151, %v3137
        %v3153 = vadd.f32 %v3152, %v3138
        %v3154 = vadd.f32 %v3153, %v3139
        %v3155 = vadd.f32 %v3154, %v3140
        %v3156 = vadd.f32 %v3155, %v3141
        %v3157 = vadd.f32 %v3156, %v3142
        %v3158 = vadd.f32 %v3157, %v3143
        %v3159 = vadd.f32 %v3158, %v3144
        %v3160 = vadd.f32 %v3159, %v3145
        %v3161 = vadd.f32 %v3160, %v3146
        %v3162 = vadd.f32 %v3161, %v3147
        %v3163 = vadd.f32 %v3162, %v3148
        %v3164 = vrot.slane %v3163, 4
        %v3165 = vadd.f32 %v3163, %v3164
        %v3166 = vrot.slane %v3165, 2
        %v3167 = vadd.f32 %v3165, %v3166
        %v3168 = vrot.slane %v3167, 1
        %v3169 = vadd.f32 %v3167, %v3168
        %v3170 = vadd.f32 %v3132, %v3169
        %3171 = vst [vmem:[#allocation4] sm:$0x1] %v3170
        %v3172 = vpack.c.bf16 %v3093, %v3092
        %v3173 = vpack.c.bf16 %v3095, %v3094
        %v3174 = vpack.c.bf16 %v3097, %v3096
        %v3175 = vpack.c.bf16 %v3099, %v3098
        %v3176 = vpack.c.bf16 %v3101, %v3100
        %v3177 = vpack.c.bf16 %v3103, %v3102
        %v3178 = vpack.c.bf16 %v3105, %v3104
        %v3179 = vpack.c.bf16 %v3107, %v3106
        %v3188 = vunpack.c.l.b16 %v3172
        %v3189 = vunpack.c.h.b16 %v3172
        %v3190 = vunpack.c.l.b16 %v3173
        %v3191 = vunpack.c.h.b16 %v3173
        %v3192 = vunpack.c.l.b16 %v3174
        %v3193 = vunpack.c.h.b16 %v3174
        %v3194 = vunpack.c.l.b16 %v3175
        %v3195 = vunpack.c.h.b16 %v3175
        %v3196 = vunpack.c.l.b16 %v3176
        %v3197 = vunpack.c.h.b16 %v3176
        %v3198 = vunpack.c.l.b16 %v3177
        %v3199 = vunpack.c.h.b16 %v3177
        %v3200 = vunpack.c.l.b16 %v3178
        %v3201 = vunpack.c.h.b16 %v3178
        %v3202 = vunpack.c.l.b16 %v3179
        %v3203 = vunpack.c.h.b16 %v3179
        %v3204 = vpack.c.b16 %v3188, %v3188
        %v3205 = vpack.c.b16 %v3189, %v3189
        %v3206 = vpack.c.b16 %v3190, %v3190
        %v3207 = vpack.c.b16 %v3191, %v3191
        %v3208 = vpack.c.b16 %v3192, %v3192
        %v3209 = vpack.c.b16 %v3193, %v3193
        %v3210 = vpack.c.b16 %v3194, %v3194
        %v3211 = vpack.c.b16 %v3195, %v3195
        %v3212 = vpack.c.b16 %v3196, %v3196
        %v3213 = vpack.c.b16 %v3197, %v3197
        %v3214 = vpack.c.b16 %v3198, %v3198
        %v3215 = vpack.c.b16 %v3199, %v3199
        %v3216 = vpack.c.b16 %v3200, %v3200
        %v3217 = vpack.c.b16 %v3201, %v3201
        %v3218 = vpack.c.b16 %v3202, %v3202
        %v3219 = vpack.c.b16 %v3203, %v3203
        %s3236 = sshra.s32 %s249, 3
        %s3237 = sand.u32 %s249, 7
        %s3238 = smul.addr %s3236, 4
        %s3239 = scalar_lea.vmem [#allocation2], %s3238
        %3240 = vst [vmem:[%s3239] sm:$0xf] %v3204
        %3241 = vst [vmem:[%s3239 + $0x4] sm:$0xf] %v3205
        %3242 = vst [vmem:[%s3239 + $0x8] sm:$0xf] %v3206
        %3243 = vst [vmem:[%s3239 + $0xc] sm:$0xf] %v3207
        %3244 = vst [vmem:[%s3239 + $0x10] sm:$0xf] %v3208
        %3245 = vst [vmem:[%s3239 + $0x14] sm:$0xf] %v3209
        %3246 = vst [vmem:[%s3239 + $0x18] sm:$0xf] %v3210
        %3247 = vst [vmem:[%s3239 + $0x1c] sm:$0xf] %v3211
        %3248 = vst [vmem:[%s3239 + $0x20] sm:$0xf] %v3212
        %3249 = vst [vmem:[%s3239 + $0x24] sm:$0xf] %v3213
        %3250 = vst [vmem:[%s3239 + $0x28] sm:$0xf] %v3214
        %3251 = vst [vmem:[%s3239 + $0x2c] sm:$0xf] %v3215
        %3252 = vst [vmem:[%s3239 + $0x30] sm:$0xf] %v3216
        %3253 = vst [vmem:[%s3239 + $0x34] sm:$0xf] %v3217
        %3254 = vst [vmem:[%s3239 + $0x38] sm:$0xf] %v3218
        %3255 = vst [vmem:[%s3239 + $0x3c] sm:$0xf] %v3219
      $region37: #{resnet_block_forward.3} parent=31 // loop_footer
        %s247 = sadd.s32 1, %s243
      $region38: #{resnet_block_forward.3} parent=31 // loop_footer_branch
        %242 = sbr.rel target = $region34
      $region39: #{resnet_block_forward.3} parent=31 // loop_exit
        _
      %v3256 = vld [vmem:[#allocation3] sm:$0x1]
      %v3257 = vmul.f32 %v3256, 0.00390625
      %v3258 = vld [vmem:[#allocation4] sm:$0x1]
      %v3259 = vmul.f32 %v3258, 0.00390625
      %v3260 = vmul.f32 %v3257, %v3257
      %v3261 = vsub.f32 %v3259, %v3260
      %v3262 = vmax.f32 %v3261, 0.0
      %v3263 = vadd.f32 %v3262, 1e-05
      %v3264 = vrsqrt.pop %v3263
      loop: start=0, step=1, limit=2
      $region40: #{resnet_block_forward.3} parent=31 // loop_pre_header
        _
      $region41: #{resnet_block_forward.3} parent=31 // loop_header
        %s3266 = sphi 0, %s3270
        %p3267 = scmp.ge.s32.totalorder %s3266, 2
      $region42: #{resnet_block_forward.3} parent=31 // loop_header_branch
        %3269 = sbr.rel (%p3267) target = $region46
      $region43: #{resnet_block_forward.3} parent=31 // loop_body
        %s3271 = smul.u32 %s3266, 128
        %s3272 = sshra.s32 %s3271, 3
        %s3273 = sand.u32 %s3271, 7
        %s3274 = smul.addr %s3272, 4
        %s3275 = scalar_lea.vmem [#allocation2], %s3274
        %v3276 = vld [vmem:[%s3275] sm:$0xf]
        %v3277 = vld [vmem:[%s3275 + $0x4] sm:$0xf]
        %v3278 = vld [vmem:[%s3275 + $0x8] sm:$0xf]
        %v3279 = vld [vmem:[%s3275 + $0xc] sm:$0xf]
        %v3280 = vld [vmem:[%s3275 + $0x10] sm:$0xf]
        %v3281 = vld [vmem:[%s3275 + $0x14] sm:$0xf]
        %v3282 = vld [vmem:[%s3275 + $0x18] sm:$0xf]
        %v3283 = vld [vmem:[%s3275 + $0x1c] sm:$0xf]
        %v3284 = vld [vmem:[%s3275 + $0x20] sm:$0xf]
        %v3285 = vld [vmem:[%s3275 + $0x24] sm:$0xf]
        %v3286 = vld [vmem:[%s3275 + $0x28] sm:$0xf]
        %v3287 = vld [vmem:[%s3275 + $0x2c] sm:$0xf]
        %v3288 = vld [vmem:[%s3275 + $0x30] sm:$0xf]
        %v3289 = vld [vmem:[%s3275 + $0x34] sm:$0xf]
        %v3290 = vld [vmem:[%s3275 + $0x38] sm:$0xf]
        %v3291 = vld [vmem:[%s3275 + $0x3c] sm:$0xf]
        %v3292 = vunpack.c.l.bf16 %v3276
        %v3293 = vunpack.c.l.bf16 %v3277
        %v3294 = vunpack.c.l.bf16 %v3278
        %v3295 = vunpack.c.l.bf16 %v3279
        %v3296 = vunpack.c.l.bf16 %v3280
        %v3297 = vunpack.c.l.bf16 %v3281
        %v3298 = vunpack.c.l.bf16 %v3282
        %v3299 = vunpack.c.l.bf16 %v3283
        %v3300 = vunpack.c.l.bf16 %v3284
        %v3301 = vunpack.c.l.bf16 %v3285
        %v3302 = vunpack.c.l.bf16 %v3286
        %v3303 = vunpack.c.l.bf16 %v3287
        %v3304 = vunpack.c.l.bf16 %v3288
        %v3305 = vunpack.c.l.bf16 %v3289
        %v3306 = vunpack.c.l.bf16 %v3290
        %v3307 = vunpack.c.l.bf16 %v3291
        %v3309 = vlaneseq
        %v3310 = vshrl.u32 %v3309, 7
        %v3311 = vsub.s32 0, %v3310
        %v3312 = vrot.slane %v3257, %v3311
        %v3314 = vsub.f32 %v3292, %v3312
        %v3315 = vsub.f32 %v3293, %v3312
        %v3316 = vsub.f32 %v3294, %v3312
        %v3317 = vsub.f32 %v3295, %v3312
        %v3318 = vsub.f32 %v3296, %v3312
        %v3319 = vsub.f32 %v3297, %v3312
        %v3320 = vsub.f32 %v3298, %v3312
        %v3321 = vsub.f32 %v3299, %v3312
        %v3322 = vsub.f32 %v3300, %v3312
        %v3323 = vsub.f32 %v3301, %v3312
        %v3324 = vsub.f32 %v3302, %v3312
        %v3325 = vsub.f32 %v3303, %v3312
        %v3326 = vsub.f32 %v3304, %v3312
        %v3327 = vsub.f32 %v3305, %v3312
        %v3328 = vsub.f32 %v3306, %v3312
        %v3329 = vsub.f32 %v3307, %v3312
        %v3331 = vlaneseq
        %v3332 = vshrl.u32 %v3331, 7
        %v3333 = vsub.s32 0, %v3332
        %v3334 = vrot.slane %v3264, %v3333
        %v3336 = vmul.f32 %v3314, %v3334
        %v3337 = vmul.f32 %v3315, %v3334
        %v3338 = vmul.f32 %v3316, %v3334
        %v3339 = vmul.f32 %v3317, %v3334
        %v3340 = vmul.f32 %v3318, %v3334
        %v3341 = vmul.f32 %v3319, %v3334
        %v3342 = vmul.f32 %v3320, %v3334
        %v3343 = vmul.f32 %v3321, %v3334
        %v3344 = vmul.f32 %v3322, %v3334
        %v3345 = vmul.f32 %v3323, %v3334
        %v3346 = vmul.f32 %v3324, %v3334
        %v3347 = vmul.f32 %v3325, %v3334
        %v3348 = vmul.f32 %v3326, %v3334
        %v3349 = vmul.f32 %v3327, %v3334
        %v3350 = vmul.f32 %v3328, %v3334
        %v3351 = vmul.f32 %v3329, %v3334
        %s3352 = scalar_lea.vmem %s230, %s3271
        %v3353 = vld [vmem:[%s3352] sm:$0xff]
        %v3354 = vld [vmem:[%s3352 + $0x8] sm:$0xff]
        %v3355 = vld [vmem:[%s3352 + $0x10] sm:$0xff]
        %v3356 = vld [vmem:[%s3352 + $0x18] sm:$0xff]
        %v3357 = vld [vmem:[%s3352 + $0x20] sm:$0xff]
        %v3358 = vld [vmem:[%s3352 + $0x28] sm:$0xff]
        %v3359 = vld [vmem:[%s3352 + $0x30] sm:$0xff]
        %v3360 = vld [vmem:[%s3352 + $0x38] sm:$0xff]
        %v3361 = vld [vmem:[%s3352 + $0x40] sm:$0xff]
        %v3362 = vld [vmem:[%s3352 + $0x48] sm:$0xff]
        %v3363 = vld [vmem:[%s3352 + $0x50] sm:$0xff]
        %v3364 = vld [vmem:[%s3352 + $0x58] sm:$0xff]
        %v3365 = vld [vmem:[%s3352 + $0x60] sm:$0xff]
        %v3366 = vld [vmem:[%s3352 + $0x68] sm:$0xff]
        %v3367 = vld [vmem:[%s3352 + $0x70] sm:$0xff]
        %v3368 = vld [vmem:[%s3352 + $0x78] sm:$0xff]
        %v3369 = vadd.f32 %v3336, %v3353
        %v3370 = vadd.f32 %v3337, %v3354
        %v3371 = vadd.f32 %v3338, %v3355
        %v3372 = vadd.f32 %v3339, %v3356
        %v3373 = vadd.f32 %v3340, %v3357
        %v3374 = vadd.f32 %v3341, %v3358
        %v3375 = vadd.f32 %v3342, %v3359
        %v3376 = vadd.f32 %v3343, %v3360
        %v3377 = vadd.f32 %v3344, %v3361
        %v3378 = vadd.f32 %v3345, %v3362
        %v3379 = vadd.f32 %v3346, %v3363
        %v3380 = vadd.f32 %v3347, %v3364
        %v3381 = vadd.f32 %v3348, %v3365
        %v3382 = vadd.f32 %v3349, %v3366
        %v3383 = vadd.f32 %v3350, %v3367
        %v3384 = vadd.f32 %v3351, %v3368
        %s3385 = scalar_lea.vmem %s238, %s3271
        %3386 = vst [vmem:[%s3385] sm:$0xff] %v3369
        %3387 = vst [vmem:[%s3385 + $0x8] sm:$0xff] %v3370
        %3388 = vst [vmem:[%s3385 + $0x10] sm:$0xff] %v3371
        %3389 = vst [vmem:[%s3385 + $0x18] sm:$0xff] %v3372
        %3390 = vst [vmem:[%s3385 + $0x20] sm:$0xff] %v3373
        %3391 = vst [vmem:[%s3385 + $0x28] sm:$0xff] %v3374
        %3392 = vst [vmem:[%s3385 + $0x30] sm:$0xff] %v3375
        %3393 = vst [vmem:[%s3385 + $0x38] sm:$0xff] %v3376
        %3394 = vst [vmem:[%s3385 + $0x40] sm:$0xff] %v3377
        %3395 = vst [vmem:[%s3385 + $0x48] sm:$0xff] %v3378
        %3396 = vst [vmem:[%s3385 + $0x50] sm:$0xff] %v3379
        %3397 = vst [vmem:[%s3385 + $0x58] sm:$0xff] %v3380
        %3398 = vst [vmem:[%s3385 + $0x60] sm:$0xff] %v3381
        %3399 = vst [vmem:[%s3385 + $0x68] sm:$0xff] %v3382
        %3400 = vst [vmem:[%s3385 + $0x70] sm:$0xff] %v3383
        %3401 = vst [vmem:[%s3385 + $0x78] sm:$0xff] %v3384
      $region44: #{resnet_block_forward.3} parent=31 // loop_footer
        %s3270 = sadd.s32 1, %s3266
      $region45: #{resnet_block_forward.3} parent=31 // loop_footer_branch
        %3265 = sbr.rel target = $region41
      $region46: #{resnet_block_forward.3} parent=31 // loop_exit
        _
      %p3402 = scmp.lt.s32.totalorder %s18, 1
      %s3403 = scalar_select %p3402, %s18, 1
      %p3404 = scmp.lt.s32.totalorder %s19, 0
      %s3405 = scalar_select %p3404, %s19, 0
      %s3406 = smul.addr %s3403, 32
      %s3407 = sadd.s32 %s3405, %s3406
      %s3408 = smul.addr %s3407, 8
      %s3409 = scalar_lea.vmem %s3, %s3408
      // Predicated region
      $region47: #{resnet_block_forward.3} parent=31 // pred_check
        %p3410 = pneg %p126
      $region48: #{resnet_block_forward.3} parent=31 // pred_check_branch
        %3412 = sbr.rel (%p3410) target = $region50
      $region49: #{resnet_block_forward.3} parent=31 // pred_region
        _
      $region50: #{resnet_block_forward.3} parent=31 // pred_fallthru
        _
    $region32: #{resnet_block_forward.3} parent=5 // pred_fallthru
      _
    %p3413 = scmp.le.s32.totalorder 2, %s9
    // Predicated region
    $region51: #{resnet_block_forward.3} parent=5 // pred_check
      %p3414 = pneg %p3413
    $region52: #{resnet_block_forward.3} parent=5 // pred_check_branch
      %3416 = sbr.rel (%p3414) target = $region54
    $region53: #{resnet_block_forward.3} parent=5 // pred_region
      %s3417 = ssub.s32 %s9, 2
      // Predicated region
      $region55: #{resnet_block_forward.3} parent=53 // pred_check
        %p3418 = pneg %p132
      $region56: #{resnet_block_forward.3} parent=53 // pred_check_branch
        %3420 = sbr.rel (%p3418) target = $region58
      $region57: #{resnet_block_forward.3} parent=53 // pred_region
        %p3421 = scmp.lt.s32.totalorder %s20, 1
        %s3422 = scalar_select %p3421, %s20, 1
        %p3423 = scmp.lt.s32.totalorder %s21, 0
        %s3424 = scalar_select %p3423, %s21, 0
        %s3425 = smul.addr %s3422, 32
        %s3426 = sadd.s32 %s3424, %s3425
        %s3427 = smul.addr %s3426, 8
        %s3428 = scalar_lea.vmem %s3, %s3427
      $region58: #{resnet_block_forward.3} parent=53 // pred_fallthru
        _
    $region54: #{resnet_block_forward.3} parent=5 // pred_fallthru
      _
  $region6: #{resnet_block_forward.3} parent=0 // loop_footer
    %s13 = sadd.s32 1, %s9
  $region7: #{resnet_block_forward.3} parent=0 // loop_footer_branch
    %8 = sbr.rel target = $region3
  $region8: #{resnet_block_forward.3} parent=0 // loop_exit
    _

// kernel: resnet_block_forward.2
$region0: #{resnet_block_forward.2}
  #allocation0 [shape = 'u32[]', space=smem, size = 0x4, offset = 0x4, fixed_abs, tag = 'smem constant byte address 0x4 - core index']
  #allocation1 [shape = 'u32[144,128]{1,0:T(1,128)}', space=vmem, size = 0x12000, scoped, tag = 'internal scratch']
  #allocation2 [shape = 'bf16[256,128]{1,0:T(8,128)(2,1)}', space=vmem, size = 0x10000, scoped, tag = 'scratch operand']
  #allocation3 [shape = 'f32[1,128]{1,0:T(1,128)}', space=vmem, size = 0x200, scoped, tag = 'scratch operand']
  #allocation4 [shape = 'f32[1,128]{1,0:T(1,128)}', space=vmem, size = 0x200, scoped, tag = 'scratch operand']
  %s0 = inlined_call_operand.vmem [shape: bf16[2,18,18,128], index: 0, kind: input, shape index: {}]
  %s1 = inlined_call_operand.vmem [shape: bf16[9,128,128], index: 1, kind: input, shape index: {}]
  %s2 = inlined_call_operand.vmem [shape: bf16[2,18,18,128], index: 2, kind: output, shape index: {}]
  %s3 = sld [smem:[#allocation0]]
  $region55: #{resnet_block_forward.2} parent=0
    _
  %s5 = ssub.s32 1, %s3
  %s6 = scalar_select 0, %s5, %s3
  loop: start=0, step=1, limit=4
  $region2: #{resnet_block_forward.2} parent=0 // loop_pre_header
    _
  $region3: #{resnet_block_forward.2} parent=0 // loop_header
    %s8 = sphi 0, %s12
    %p9 = scmp.ge.s32.totalorder %s8, 4
    %s15 = sphi 0, %s27
    %s16 = sphi 0, %s23
    %s17 = sphi 0, %s15
    %s18 = sphi 0, %s16
    %s19 = sphi 0, %s17
    %s20 = sphi 0, %s18
    %s30 = sphi 0, %s32
    %s33 = sphi 0, %s30
    %s34 = sphi 0, %s33
    %s50 = sphi 0, %s34
    %s56 = sphi 0, %s58
    %s59 = sphi 0, %s56
    %s60 = sphi 0, %s59
    %s76 = sphi 0, %s60
    %s84 = sphi 0, %s86
    %s87 = sphi 0, %s84
    %s88 = sphi 0, %s87
    %s104 = sphi 0, %s88
  $region4: #{resnet_block_forward.2} parent=0 // loop_header_branch
    %11 = sbr.rel (%p9) target = $region8
  $region5: #{resnet_block_forward.2} parent=0 // loop_body
    %s13 = ssub.s32 %s8, 1
    %s14 = ssub.s32 %s8, 2
    %s21 = sadd.s32 1, %s16
    %p22 = scmp.ge.s32.totalorder %s21, 1
    %s23 = scalar_select %p22, 0, %s21
    %s24 = sadd.s32 1, %s15
    %s25 = scalar_select %p22, %s24, %s15
    %p26 = scmp.ge.s32.totalorder %s25, 2
    %s27 = scalar_select %p26, 0, %s25
    %s28 = ssub.s32 %s15, %s27
    %p29 = scmp.eq.s32.totalorder %s28, 0
    %s31 = sadd.s32 %s30, 1
    %s32 = scalar_select %p29, %s30, %s31
    %p35 = pneg %p29
    %p36 = scmp.eq.s32.totalorder %s8, 1
    %p37 = por %p35, %p36
    %p38 = scmp.ne.s32.totalorder %s30, %s33
    %p39 = scmp.eq.s32.totalorder %s8, 0
    %p40 = por %p38, %p39
    %p41 = scmp.ne.s32.totalorder %s30, %s33
    %p42 = scmp.eq.s32.totalorder %s13, 1
    %p43 = por %p41, %p42
    %p44 = scmp.ne.s32.totalorder %s33, %s34
    %p45 = scmp.eq.s32.totalorder %s13, 0
    %p46 = por %p44, %p45
    %p47 = scmp.ne.s32.totalorder %s33, %s34
    %p48 = scmp.eq.s32.totalorder %s14, 1
    %p49 = por %p47, %p48
    %p51 = scmp.ne.s32.totalorder %s34, %s50
    %p52 = scmp.eq.s32.totalorder %s14, 0
    %p53 = por %p51, %p52
    %s54 = ssub.s32 %s16, %s23
    %p55 = scmp.eq.s32.totalorder %s54, 0
    %s57 = sadd.s32 %s56, 1
    %s58 = scalar_select %p55, %s56, %s57
    %p61 = pneg %p55
    %p62 = scmp.eq.s32.totalorder %s8, 1
    %p63 = por %p61, %p62
    %p64 = scmp.ne.s32.totalorder %s56, %s59
    %p65 = scmp.eq.s32.totalorder %s8, 0
    %p66 = por %p64, %p65
    %p67 = scmp.ne.s32.totalorder %s56, %s59
    %p68 = scmp.eq.s32.totalorder %s13, 1
    %p69 = por %p67, %p68
    %p70 = scmp.ne.s32.totalorder %s59, %s60
    %p71 = scmp.eq.s32.totalorder %s13, 0
    %p72 = por %p70, %p71
    %p73 = scmp.ne.s32.totalorder %s59, %s60
    %p74 = scmp.eq.s32.totalorder %s14, 1
    %p75 = por %p73, %p74
    %p77 = scmp.ne.s32.totalorder %s60, %s76
    %p78 = scmp.eq.s32.totalorder %s14, 0
    %p79 = por %p77, %p78
    %s80 = ssub.s32 %s15, %s27
    %s81 = ssub.s32 %s16, %s23
    %s82 = sor.u32 %s80, %s81
    %p83 = scmp.eq.s32.totalorder %s82, 0
    %s85 = sadd.s32 %s84, 1
    %s86 = scalar_select %p83, %s84, %s85
    %p89 = pneg %p83
    %p90 = scmp.eq.s32.totalorder %s8, 1
    %p91 = por %p89, %p90
    %p92 = scmp.ne.s32.totalorder %s84, %s87
    %p93 = scmp.eq.s32.totalorder %s8, 0
    %p94 = por %p92, %p93
    %p95 = scmp.ne.s32.totalorder %s84, %s87
    %p96 = scmp.eq.s32.totalorder %s13, 1
    %p97 = por %p95, %p96
    %p98 = scmp.ne.s32.totalorder %s87, %s88
    %p99 = scmp.eq.s32.totalorder %s13, 0
    %p100 = por %p98, %p99
    %p101 = scmp.ne.s32.totalorder %s87, %s88
    %p102 = scmp.eq.s32.totalorder %s14, 1
    %p103 = por %p101, %p102
    %p105 = scmp.ne.s32.totalorder %s88, %s104
    %p106 = scmp.eq.s32.totalorder %s14, 0
    %p107 = por %p105, %p106
    %p108 = scmp.le.s32.totalorder 1, %s8
    %p109 = scmp.lt.s32.totalorder %s8, 3
    %p110 = pnand %p108, %p109
    %p111 = pneg %p110
    // Predicated region
    $region9: #{resnet_block_forward.2} parent=5 // pred_check
      _
    $region10: #{resnet_block_forward.2} parent=5 // pred_check_branch
      %113 = sbr.rel (%p110) target = $region12
    $region11: #{resnet_block_forward.2} parent=5 // pred_region
      %s114 = ssub.s32 %s8, 1
      // Predicated region
      $region13: #{resnet_block_forward.2} parent=11 // pred_check
        %p115 = pneg %p72
      $region14: #{resnet_block_forward.2} parent=11 // pred_check_branch
        %117 = sbr.rel (%p115) target = $region16
      $region15: #{resnet_block_forward.2} parent=11 // pred_region
        %p118 = scmp.lt.s32.totalorder %s18, 0
        %s119 = scalar_select %p118, %s18, 0
        %s120 = smul.addr %s119, 4
        %s121 = scalar_lea.vmem %s1, %s120
      $region16: #{resnet_block_forward.2} parent=11 // pred_fallthru
        _
    $region12: #{resnet_block_forward.2} parent=5 // pred_fallthru
      _
    %p122 = scmp.lt.s32.totalorder %s8, 2
    // Predicated region
    $region17: #{resnet_block_forward.2} parent=5 // pred_check
      %p123 = pneg %p122
    $region18: #{resnet_block_forward.2} parent=5 // pred_check_branch
      %125 = sbr.rel (%p123) target = $region20
    $region19: #{resnet_block_forward.2} parent=5 // pred_region
      // Predicated region
      $region21: #{resnet_block_forward.2} parent=19 // pred_check
        %p126 = pneg %p40
      $region22: #{resnet_block_forward.2} parent=19 // pred_check_branch
        %128 = sbr.rel (%p126) target = $region24
      $region23: #{resnet_block_forward.2} parent=19 // pred_region
        %p129 = scmp.lt.s32.totalorder %s15, 1
        %s130 = scalar_select %p129, %s15, 1
        %s131 = smul.addr %s130, 54
        %s132 = smul.addr %s131, 4
        %s133 = scalar_lea.vmem %s0, %s132
      $region24: #{resnet_block_forward.2} parent=19 // pred_fallthru
        _
    $region20: #{resnet_block_forward.2} parent=5 // pred_fallthru
      _
    %p134 = scmp.le.s32.totalorder 1, %s8
    %p135 = scmp.lt.s32.totalorder %s8, 3
    %p136 = pnand %p134, %p135
    %p137 = pneg %p136
    // Predicated region
    $region25: #{resnet_block_forward.2} parent=5 // pred_check
      _
    $region26: #{resnet_block_forward.2} parent=5 // pred_check_branch
      %139 = sbr.rel (%p136) target = $region28
    $region27: #{resnet_block_forward.2} parent=5 // pred_region
      %s140 = ssub.s32 %s8, 1
      %p141 = scmp.lt.s32.totalorder %s17, 1
      %s142 = scalar_select %p141, %s17, 1
      %s143 = smul.addr %s142, 54
      %s144 = smul.addr %s143, 4
      %s145 = scalar_lea.vmem %s0, %s144
      %p146 = pneg %p46
      %p147 = pneg %p43
      %p148 = scmp.lt.s32.totalorder %s18, 0
      %s149 = scalar_select %p148, %s18, 0
      %s150 = smul.addr %s149, 4
      %s151 = scalar_lea.vmem %s1, %s150
      %p152 = pneg %p72
      %p153 = pneg %p69
      %p154 = pneg %p100
      %p155 = pneg %p97
      %p156 = scmp.lt.s32.totalorder %s17, 1
      %s157 = scalar_select %p156, %s17, 1
      %p158 = scmp.lt.s32.totalorder %s18, 0
      %s159 = scalar_select %p158, %s18, 0
      %s160 = smul.addr %s157, 54
      %s161 = sadd.s32 %s159, %s160
      %s162 = smul.addr %s161, 4
      %s163 = scalar_lea.vmem %s2, %s162
      %p164 = scmp.lt.s32.totalorder %s17, 1
      %s165 = scalar_select %p164, %s17, 1
      %s166 = smul.addr %s165, 54
      %s167 = smul.addr %s166, 4
      %s168 = scalar_lea.vmem %s0, %s167
      %p169 = scmp.lt.s32.totalorder %s18, 0
      %s170 = scalar_select %p169, %s18, 0
      %s171 = smul.addr %s170, 4
      %s172 = scalar_lea.vmem %s1, %s171
      %p173 = scmp.lt.s32.totalorder %s17, 1
      %s174 = scalar_select %p173, %s17, 1
      %p175 = scmp.lt.s32.totalorder %s18, 0
      %s176 = scalar_select %p175, %s18, 0
      %s177 = smul.addr %s174, 54
      %s178 = sadd.s32 %s176, %s177
      %s179 = smul.addr %s178, 4
      %s180 = scalar_lea.vmem %s2, %s179
      %182 = vst [vmem:[#allocation3] sm:$0x1] 0.0
      %183 = vst [vmem:[#allocation4] sm:$0x1] 0.0
      loop: start=0, step=1, limit=2
      $region29: #{resnet_block_forward.2} parent=27 // loop_pre_header
        _
      $region30: #{resnet_block_forward.2} parent=27 // loop_header
        %s185 = sphi 0, %s189
        %p186 = scmp.ge.s32.totalorder %s185, 2
      $region31: #{resnet_block_forward.2} parent=27 // loop_header_branch
        %188 = sbr.rel (%p186) target = $region35
      $region32: #{resnet_block_forward.2} parent=27 // loop_body
        %s190 = smul.u32 %s185, 8
        %s191 = smul.u32 %s185, 128
        %s192 = smul.u32 %s190, 3
        %s193 = smul.addr %s192, 4
        %s194 = scalar_lea.vmem %s168, %s193
        %v195 = vld [vmem:[%s194] sm:$0xf]
        %v196 = vld [vmem:[%s194 + $0x4] sm:$0xf]
        %v197 = vld [vmem:[%s194 + $0xc] sm:$0xf]
        %v198 = vld [vmem:[%s194 + $0x10] sm:$0xf]
        %v199 = vld [vmem:[%s194 + $0x18] sm:$0xf]
        %v200 = vld [vmem:[%s194 + $0x1c] sm:$0xf]
        %v201 = vld [vmem:[%s194 + $0x24] sm:$0xf]
        %v202 = vld [vmem:[%s194 + $0x28] sm:$0xf]
        %v203 = vld [vmem:[%s194 + $0x30] sm:$0xf]
        %v204 = vld [vmem:[%s194 + $0x34] sm:$0xf]
        %v205 = vld [vmem:[%s194 + $0x3c] sm:$0xf]
        %v206 = vld [vmem:[%s194 + $0x40] sm:$0xf]
        %v207 = vld [vmem:[%s194 + $0x48] sm:$0xf]
        %v208 = vld [vmem:[%s194 + $0x4c] sm:$0xf]
        %v209 = vld [vmem:[%s194 + $0x54] sm:$0xf]
        %v210 = vld [vmem:[%s194 + $0x58] sm:$0xf]
        %v211 = vld [vmem:[%s172] sm:$0xf]
        %v212 = vld [vmem:[%s172 + $0x4] sm:$0xf]
        %v213 = vld [vmem:[%s172 + $0x8] sm:$0xf]
        %v214 = vld [vmem:[%s172 + $0xc] sm:$0xf]
        %v215 = vld [vmem:[%s172 + $0x10] sm:$0xf]
        %v216 = vld [vmem:[%s172 + $0x14] sm:$0xf]
        %v217 = vld [vmem:[%s172 + $0x18] sm:$0xf]
        %v218 = vld [vmem:[%s172 + $0x1c] sm:$0xf]
        %v219 = vld [vmem:[%s172 + $0x20] sm:$0xf]
        %v220 = vld [vmem:[%s172 + $0x24] sm:$0xf]
        %v221 = vld [vmem:[%s172 + $0x28] sm:$0xf]
        %v222 = vld [vmem:[%s172 + $0x2c] sm:$0xf]
        %v223 = vld [vmem:[%s172 + $0x30] sm:$0xf]
        %v224 = vld [vmem:[%s172 + $0x34] sm:$0xf]
        %v225 = vld [vmem:[%s172 + $0x38] sm:$0xf]
        %v226 = vld [vmem:[%s172 + $0x3c] sm:$0xf]
        %v227 = vld [vmem:[%s194 + $0x8] sm:$0x1]
        %v228 = vld [vmem:[%s194 + $0x14] sm:$0x1]
        %v229 = vld [vmem:[%s194 + $0x20] sm:$0x1]
        %v230 = vld [vmem:[%s194 + $0x2c] sm:$0x1]
        %v231 = vld [vmem:[%s194 + $0x38] sm:$0x1]
        %v232 = vld [vmem:[%s194 + $0x44] sm:$0x1]
        %v233 = vld [vmem:[%s194 + $0x50] sm:$0x1]
        %v234 = vld [vmem:[%s194 + $0x5c] sm:$0x1]
        %vm235 = vsmask.f32 3328
        %vm236 = vsmask.f32 7440
        %vm237 = vmor %vm235, %vm236
        %v239 = vshrl.u32 %v195, 16
        %v241 = vrot.slane %v239, 4
        %v242 = vshll.u32 %v195, 16
        %v244 = vrot.slane %v242, 5
        %v245 = vor.u32 %v241, %v244
        %v246 = vrot.slane %v245, 4
        %v248 = vshll.u32 %v196, 16
        %v250 = vrot.slane %v248, 5
        %v251 = vsel %vm237, %v246, %v250
        %v252 = vshrl.u32 %v196, 16
        %v254 = vrot.slane %v252, 4
        %v255 = vor.u32 %v254, %v250
        %v256 = vrot.slane %v255, 4
        %v258 = vshll.u32 %v227, 16
        %v260 = vrot.slane %v258, 5
        %v261 = vsel %vm237, %v256, %v260
        %v263 = vshrl.u32 %v197, 16
        %v265 = vrot.slane %v263, 4
        %v266 = vshll.u32 %v197, 16
        %v268 = vrot.slane %v266, 5
        %v269 = vor.u32 %v265, %v268
        %v270 = vrot.slane %v269, 4
        %v272 = vshll.u32 %v198, 16
        %v274 = vrot.slane %v272, 5
        %v275 = vsel %vm237, %v270, %v274
        %v276 = vshrl.u32 %v198, 16
        %v278 = vrot.slane %v276, 4
        %v279 = vor.u32 %v278, %v274
        %v280 = vrot.slane %v279, 4
        %v282 = vshll.u32 %v228, 16
        %v284 = vrot.slane %v282, 5
        %v285 = vsel %vm237, %v280, %v284
        %v287 = vshrl.u32 %v199, 16
        %v289 = vrot.slane %v287, 4
        %v290 = vshll.u32 %v199, 16
        %v292 = vrot.slane %v290, 5
        %v293 = vor.u32 %v289, %v292
        %v294 = vrot.slane %v293, 4
        %v296 = vshll.u32 %v200, 16
        %v298 = vrot.slane %v296, 5
        %v299 = vsel %vm237, %v294, %v298
        %v300 = vshrl.u32 %v200, 16
        %v302 = vrot.slane %v300, 4
        %v303 = vor.u32 %v302, %v298
        %v304 = vrot.slane %v303, 4
        %v306 = vshll.u32 %v229, 16
        %v308 = vrot.slane %v306, 5
        %v309 = vsel %vm237, %v304, %v308
        %v311 = vshrl.u32 %v201, 16
        %v313 = vrot.slane %v311, 4
        %v314 = vshll.u32 %v201, 16
        %v316 = vrot.slane %v314, 5
        %v317 = vor.u32 %v313, %v316
        %v318 = vrot.slane %v317, 4
        %v320 = vshll.u32 %v202, 16
        %v322 = vrot.slane %v320, 5
        %v323 = vsel %vm237, %v318, %v322
        %v324 = vshrl.u32 %v202, 16
        %v326 = vrot.slane %v324, 4
        %v327 = vor.u32 %v326, %v322
        %v328 = vrot.slane %v327, 4
        %v330 = vshll.u32 %v230, 16
        %v332 = vrot.slane %v330, 5
        %v333 = vsel %vm237, %v328, %v332
        %v335 = vshrl.u32 %v203, 16
        %v337 = vrot.slane %v335, 4
        %v338 = vshll.u32 %v203, 16
        %v340 = vrot.slane %v338, 5
        %v341 = vor.u32 %v337, %v340
        %v342 = vrot.slane %v341, 4
        %v344 = vshll.u32 %v204, 16
        %v346 = vrot.slane %v344, 5
        %v347 = vsel %vm237, %v342, %v346
        %v348 = vshrl.u32 %v204, 16
        %v350 = vrot.slane %v348, 4
        %v351 = vor.u32 %v350, %v346
        %v352 = vrot.slane %v351, 4
        %v354 = vshll.u32 %v231, 16
        %v356 = vrot.slane %v354, 5
        %v357 = vsel %vm237, %v352, %v356
        %v359 = vshrl.u32 %v205, 16
        %v361 = vrot.slane %v359, 4
        %v362 = vshll.u32 %v205, 16
        %v364 = vrot.slane %v362, 5
        %v365 = vor.u32 %v361, %v364
        %v366 = vrot.slane %v365, 4
        %v368 = vshll.u32 %v206, 16
        %v370 = vrot.slane %v368, 5
        %v371 = vsel %vm237, %v366, %v370
        %v372 = vshrl.u32 %v206, 16
        %v374 = vrot.slane %v372, 4
        %v375 = vor.u32 %v374, %v370
        %v376 = vrot.slane %v375, 4
        %v378 = vshll.u32 %v232, 16
        %v380 = vrot.slane %v378, 5
        %v381 = vsel %vm237, %v376, %v380
        %v383 = vshrl.u32 %v207, 16
        %v385 = vrot.slane %v383, 4
        %v386 = vshll.u32 %v207, 16
        %v388 = vrot.slane %v386, 5
        %v389 = vor.u32 %v385, %v388
        %v390 = vrot.slane %v389, 4
        %v392 = vshll.u32 %v208, 16
        %v394 = vrot.slane %v392, 5
        %v395 = vsel %vm237, %v390, %v394
        %v396 = vshrl.u32 %v208, 16
        %v398 = vrot.slane %v396, 4
        %v399 = vor.u32 %v398, %v394
        %v400 = vrot.slane %v399, 4
        %v402 = vshll.u32 %v233, 16
        %v404 = vrot.slane %v402, 5
        %v405 = vsel %vm237, %v400, %v404
        %v407 = vshrl.u32 %v209, 16
        %v409 = vrot.slane %v407, 4
        %v410 = vshll.u32 %v209, 16
        %v412 = vrot.slane %v410, 5
        %v413 = vor.u32 %v409, %v412
        %v414 = vrot.slane %v413, 4
        %v416 = vshll.u32 %v210, 16
        %v418 = vrot.slane %v416, 5
        %v419 = vsel %vm237, %v414, %v418
        %v420 = vshrl.u32 %v210, 16
        %v422 = vrot.slane %v420, 4
        %v423 = vor.u32 %v422, %v418
        %v424 = vrot.slane %v423, 4
        %v426 = vshll.u32 %v234, 16
        %v428 = vrot.slane %v426, 5
        %v429 = vsel %vm237, %v424, %v428
        %s430 = scalar_lea.vmem %s172, 64
        %v431 = vld [vmem:[%s430] sm:$0xf]
        %v432 = vld [vmem:[%s430 + $0x4] sm:$0xf]
        %v433 = vld [vmem:[%s430 + $0x8] sm:$0xf]
        %v434 = vld [vmem:[%s430 + $0xc] sm:$0xf]
        %v435 = vld [vmem:[%s430 + $0x10] sm:$0xf]
        %v436 = vld [vmem:[%s430 + $0x14] sm:$0xf]
        %v437 = vld [vmem:[%s430 + $0x18] sm:$0xf]
        %v438 = vld [vmem:[%s430 + $0x1c] sm:$0xf]
        %v439 = vld [vmem:[%s430 + $0x20] sm:$0xf]
        %v440 = vld [vmem:[%s430 + $0x24] sm:$0xf]
        %v441 = vld [vmem:[%s430 + $0x28] sm:$0xf]
        %v442 = vld [vmem:[%s430 + $0x2c] sm:$0xf]
        %v443 = vld [vmem:[%s430 + $0x30] sm:$0xf]
        %v444 = vld [vmem:[%s430 + $0x34] sm:$0xf]
        %v445 = vld [vmem:[%s430 + $0x38] sm:$0xf]
        %v446 = vld [vmem:[%s430 + $0x3c] sm:$0xf]
        %v447 = vunpack.c.l.b16 %v251
        %v448 = vunpack.c.l.b16 %v261
        %v449 = vunpack.c.l.b16 %v275
        %v450 = vunpack.c.l.b16 %v285
        %v451 = vunpack.c.l.b16 %v299
        %v452 = vunpack.c.l.b16 %v309
        %v453 = vunpack.c.l.b16 %v323
        %v454 = vunpack.c.l.b16 %v333
        %v455 = vunpack.c.l.b16 %v347
        %v456 = vunpack.c.l.b16 %v357
        %v457 = vunpack.c.l.b16 %v371
        %v458 = vunpack.c.l.b16 %v381
        %v459 = vunpack.c.l.b16 %v395
        %v460 = vunpack.c.l.b16 %v405
        %v461 = vunpack.c.l.b16 %v419
        %v462 = vunpack.c.l.b16 %v429
        %v463 = vpack.c.b16 %v448, %v447
        %v464 = vpack.c.b16 %v450, %v449
        %v465 = vpack.c.b16 %v452, %v451
        %v466 = vpack.c.b16 %v454, %v453
        %v467 = vpack.c.b16 %v456, %v455
        %v468 = vpack.c.b16 %v458, %v457
        %v469 = vpack.c.b16 %v460, %v459
        %v470 = vpack.c.b16 %v462, %v461
        %v495 = vunpack.c.l.b16 %v431
        %v496 = vunpack.c.l.b16 %v432
        %v497 = vunpack.c.l.b16 %v433
        %v498 = vunpack.c.l.b16 %v434
        %v499 = vunpack.c.l.b16 %v435
        %v500 = vunpack.c.l.b16 %v436
        %v501 = vunpack.c.l.b16 %v437
        %v502 = vunpack.c.l.b16 %v438
        %v503 = vunpack.c.l.b16 %v439
        %v504 = vunpack.c.l.b16 %v440
        %v505 = vunpack.c.l.b16 %v441
        %v506 = vunpack.c.l.b16 %v442
        %v507 = vunpack.c.l.b16 %v443
        %v508 = vunpack.c.l.b16 %v444
        %v509 = vunpack.c.l.b16 %v445
        %v510 = vunpack.c.l.b16 %v446
        %v511 = vpack.c.b16 %v496, %v495
        %v512 = vpack.c.b16 %v498, %v497
        %v513 = vpack.c.b16 %v500, %v499
        %v514 = vpack.c.b16 %v502, %v501
        %v515 = vpack.c.b16 %v504, %v503
        %v516 = vpack.c.b16 %v506, %v505
        %v517 = vpack.c.b16 %v508, %v507
        %v518 = vpack.c.b16 %v510, %v509
        %527 = vmatprep.subr.bf16.mxu0 0
        %528 = vmatpush1.bf16.msra.mxu0 %v518
        %529 = vmatprep.subr.bf16.mxu0 0
        %530 = vmatpush1.bf16.msra.mxu0 %v517
        %531 = vmatprep.subr.bf16.mxu0 0
        %532 = vmatpush1.bf16.msra.mxu0 %v516
        %533 = vmatprep.subr.bf16.mxu0 0
        %534 = vmatpush1.bf16.msra.mxu0 %v515
        %535 = vmatprep.subr.bf16.mxu0 0
        %536 = vmatpush1.bf16.msra.mxu0 %v514
        %537 = vmatprep.subr.bf16.mxu0 0
        %538 = vmatpush1.bf16.msra.mxu0 %v513
        %539 = vmatprep.subr.bf16.mxu0 0
        %540 = vmatpush1.bf16.msra.mxu0 %v512
        %541 = vmatprep.subr.bf16.mxu0 0
        %542 = vmatpush1.bf16.msra.mxu0 %v511
        %543 = vmatprep.subr.bf16.mxu0 0
        %544 = vmatpush2.bf16.msra.mxu0 0
        %545 = vmatprep.subr.bf16.mxu0 0
        %546 = vmatpush2.bf16.msra.mxu0 0
        %547 = vmatprep.subr.bf16.mxu0 0
        %548 = vmatpush2.bf16.msra.mxu0 0
        %549 = vmatprep.subr.bf16.mxu0 0
        %550 = vmatpush2.bf16.msra.mxu0 0
        %551 = vmatprep.subr.bf16.mxu0 0
        %552 = vmatpush2.bf16.msra.mxu0 0
        %553 = vmatprep.subr.bf16.mxu0 0
        %554 = vmatpush2.bf16.msra.mxu0 0
        %555 = vmatprep.subr.bf16.mxu0 0
        %556 = vmatpush2.bf16.msra.mxu0 0
        %557 = vmatprep.subr.bf16.mxu0 0
        %558 = vmatpush2.bf16.msra.mxu0 0
        %559 = vmatprep.mubr.bf16.mxu0 0
        %560 = vmatmul.mubr.bf16.gmra.mxu0 %v463
        %v561 = vpop.f32.mrf.mxu0
        %v562 = vadd.f32 0.0, %v561
        %v563 = vpop.f32.mrf.mxu0
        %v564 = vpop.f32.mrf.mxu0
        %v565 = vadd.f32 0.0, %v564
        %v566 = vpop.f32.mrf.mxu0
        %567 = vmatprep.mubr.bf16.mxu0 0
        %568 = vmatmul.mubr.bf16.gmra.mxu0 %v464
        %v569 = vpop.f32.mrf.mxu0
        %v570 = vadd.f32 0.0, %v569
        %v571 = vpop.f32.mrf.mxu0
        %v572 = vpop.f32.mrf.mxu0
        %v573 = vadd.f32 0.0, %v572
        %v574 = vpop.f32.mrf.mxu0
        %575 = vmatprep.mubr.bf16.mxu0 0
        %576 = vmatmul.mubr.bf16.gmra.mxu0 %v465
        %v577 = vpop.f32.mrf.mxu0
        %v578 = vadd.f32 0.0, %v577
        %v579 = vpop.f32.mrf.mxu0
        %v580 = vpop.f32.mrf.mxu0
        %v581 = vadd.f32 0.0, %v580
        %v582 = vpop.f32.mrf.mxu0
        %583 = vmatprep.mubr.bf16.mxu0 0
        %584 = vmatmul.mubr.bf16.gmra.mxu0 %v466
        %v585 = vpop.f32.mrf.mxu0
        %v586 = vadd.f32 0.0, %v585
        %v587 = vpop.f32.mrf.mxu0
        %v588 = vpop.f32.mrf.mxu0
        %v589 = vadd.f32 0.0, %v588
        %v590 = vpop.f32.mrf.mxu0
        %591 = vmatprep.mubr.bf16.mxu0 0
        %592 = vmatmul.mubr.bf16.gmra.mxu0 %v467
        %v593 = vpop.f32.mrf.mxu0
        %v594 = vadd.f32 0.0, %v593
        %v595 = vpop.f32.mrf.mxu0
        %v596 = vpop.f32.mrf.mxu0
        %v597 = vadd.f32 0.0, %v596
        %v598 = vpop.f32.mrf.mxu0
        %599 = vmatprep.mubr.bf16.mxu0 0
        %600 = vmatmul.mubr.bf16.gmra.mxu0 %v468
        %v601 = vpop.f32.mrf.mxu0
        %v602 = vadd.f32 0.0, %v601
        %v603 = vpop.f32.mrf.mxu0
        %v604 = vpop.f32.mrf.mxu0
        %v605 = vadd.f32 0.0, %v604
        %v606 = vpop.f32.mrf.mxu0
        %607 = vmatprep.mubr.bf16.mxu0 0
        %608 = vmatmul.mubr.bf16.gmra.mxu0 %v469
        %v609 = vpop.f32.mrf.mxu0
        %v610 = vadd.f32 0.0, %v609
        %v611 = vpop.f32.mrf.mxu0
        %v612 = vpop.f32.mrf.mxu0
        %v613 = vadd.f32 0.0, %v612
        %v614 = vpop.f32.mrf.mxu0
        %615 = vmatprep.mubr.bf16.mxu0 0
        %616 = vmatmul.mubr.bf16.gmra.mxu0 %v470
        %v617 = vpop.f32.mrf.mxu0
        %v618 = vadd.f32 0.0, %v617
        %v619 = vpop.f32.mrf.mxu0
        %v620 = vpop.f32.mrf.mxu0
        %v621 = vadd.f32 0.0, %v620
        %v622 = vpop.f32.mrf.mxu0
        %623 = vdwg.mxu0
        %v640 = vunpack.c.l.b16 %v195
        %v641 = vunpack.c.l.b16 %v196
        %v642 = vunpack.c.l.b16 %v197
        %v643 = vunpack.c.l.b16 %v198
        %v644 = vunpack.c.l.b16 %v199
        %v645 = vunpack.c.l.b16 %v200
        %v646 = vunpack.c.l.b16 %v201
        %v647 = vunpack.c.l.b16 %v202
        %v648 = vunpack.c.l.b16 %v203
        %v649 = vunpack.c.l.b16 %v204
        %v650 = vunpack.c.l.b16 %v205
        %v651 = vunpack.c.l.b16 %v206
        %v652 = vunpack.c.l.b16 %v207
        %v653 = vunpack.c.l.b16 %v208
        %v654 = vunpack.c.l.b16 %v209
        %v655 = vunpack.c.l.b16 %v210
        %v656 = vpack.c.b16 %v641, %v640
        %v657 = vpack.c.b16 %v643, %v642
        %v658 = vpack.c.b16 %v645, %v644
        %v659 = vpack.c.b16 %v647, %v646
        %v660 = vpack.c.b16 %v649, %v648
        %v661 = vpack.c.b16 %v651, %v650
        %v662 = vpack.c.b16 %v653, %v652
        %v663 = vpack.c.b16 %v655, %v654
        %v688 = vunpack.c.l.b16 %v211
        %v689 = vunpack.c.l.b16 %v212
        %v690 = vunpack.c.l.b16 %v213
        %v691 = vunpack.c.l.b16 %v214
        %v692 = vunpack.c.l.b16 %v215
        %v693 = vunpack.c.l.b16 %v216
        %v694 = vunpack.c.l.b16 %v217
        %v695 = vunpack.c.l.b16 %v218
        %v696 = vunpack.c.l.b16 %v219
        %v697 = vunpack.c.l.b16 %v220
        %v698 = vunpack.c.l.b16 %v221
        %v699 = vunpack.c.l.b16 %v222
        %v700 = vunpack.c.l.b16 %v223
        %v701 = vunpack.c.l.b16 %v224
        %v702 = vunpack.c.l.b16 %v225
        %v703 = vunpack.c.l.b16 %v226
        %v704 = vpack.c.b16 %v689, %v688
        %v705 = vpack.c.b16 %v691, %v690
        %v706 = vpack.c.b16 %v693, %v692
        %v707 = vpack.c.b16 %v695, %v694
        %v708 = vpack.c.b16 %v697, %v696
        %v709 = vpack.c.b16 %v699, %v698
        %v710 = vpack.c.b16 %v701, %v700
        %v711 = vpack.c.b16 %v703, %v702
        %720 = vmatprep.subr.bf16.mxu0 0
        %721 = vmatpush1.bf16.msra.mxu0 %v711
        %722 = vmatprep.subr.bf16.mxu0 0
        %723 = vmatpush1.bf16.msra.mxu0 %v710
        %724 = vmatprep.subr.bf16.mxu0 0
        %725 = vmatpush1.bf16.msra.mxu0 %v709
        %726 = vmatprep.subr.bf16.mxu0 0
        %727 = vmatpush1.bf16.msra.mxu0 %v708
        %728 = vmatprep.subr.bf16.mxu0 0
        %729 = vmatpush1.bf16.msra.mxu0 %v707
        %730 = vmatprep.subr.bf16.mxu0 0
        %731 = vmatpush1.bf16.msra.mxu0 %v706
        %732 = vmatprep.subr.bf16.mxu0 0
        %733 = vmatpush1.bf16.msra.mxu0 %v705
        %734 = vmatprep.subr.bf16.mxu0 0
        %735 = vmatpush1.bf16.msra.mxu0 %v704
        %736 = vmatprep.subr.bf16.mxu0 0
        %737 = vmatpush2.bf16.msra.mxu0 0
        %738 = vmatprep.subr.bf16.mxu0 0
        %739 = vmatpush2.bf16.msra.mxu0 0
        %740 = vmatprep.subr.bf16.mxu0 0
        %741 = vmatpush2.bf16.msra.mxu0 0
        %742 = vmatprep.subr.bf16.mxu0 0
        %743 = vmatpush2.bf16.msra.mxu0 0
        %744 = vmatprep.subr.bf16.mxu0 0
        %745 = vmatpush2.bf16.msra.mxu0 0
        %746 = vmatprep.subr.bf16.mxu0 0
        %747 = vmatpush2.bf16.msra.mxu0 0
        %748 = vmatprep.subr.bf16.mxu0 0
        %749 = vmatpush2.bf16.msra.mxu0 0
        %750 = vmatprep.subr.bf16.mxu0 0
        %751 = vmatpush2.bf16.msra.mxu0 0
        %752 = vmatprep.mubr.bf16.mxu0 0
        %753 = vmatmul.mubr.bf16.gmra.mxu0 %v656
        %v754 = vpop.f32.mrf.mxu0
        %v755 = vadd.f32 %v562, %v754
        %v756 = vpop.f32.mrf.mxu0
        %v757 = vpop.f32.mrf.mxu0
        %v758 = vadd.f32 %v565, %v757
        %v759 = vpop.f32.mrf.mxu0
        %760 = vmatprep.mubr.bf16.mxu0 0
        %761 = vmatmul.mubr.bf16.gmra.mxu0 %v657
        %v762 = vpop.f32.mrf.mxu0
        %v763 = vadd.f32 %v570, %v762
        %v764 = vpop.f32.mrf.mxu0
        %v765 = vpop.f32.mrf.mxu0
        %v766 = vadd.f32 %v573, %v765
        %v767 = vpop.f32.mrf.mxu0
        %768 = vmatprep.mubr.bf16.mxu0 0
        %769 = vmatmul.mubr.bf16.gmra.mxu0 %v658
        %v770 = vpop.f32.mrf.mxu0
        %v771 = vadd.f32 %v578, %v770
        %v772 = vpop.f32.mrf.mxu0
        %v773 = vpop.f32.mrf.mxu0
        %v774 = vadd.f32 %v581, %v773
        %v775 = vpop.f32.mrf.mxu0
        %776 = vmatprep.mubr.bf16.mxu0 0
        %777 = vmatmul.mubr.bf16.gmra.mxu0 %v659
        %v778 = vpop.f32.mrf.mxu0
        %v779 = vadd.f32 %v586, %v778
        %v780 = vpop.f32.mrf.mxu0
        %v781 = vpop.f32.mrf.mxu0
        %v782 = vadd.f32 %v589, %v781
        %v783 = vpop.f32.mrf.mxu0
        %784 = vmatprep.mubr.bf16.mxu0 0
        %785 = vmatmul.mubr.bf16.gmra.mxu0 %v660
        %v786 = vpop.f32.mrf.mxu0
        %v787 = vadd.f32 %v594, %v786
        %v788 = vpop.f32.mrf.mxu0
        %v789 = vpop.f32.mrf.mxu0
        %v790 = vadd.f32 %v597, %v789
        %v791 = vpop.f32.mrf.mxu0
        %792 = vmatprep.mubr.bf16.mxu0 0
        %793 = vmatmul.mubr.bf16.gmra.mxu0 %v661
        %v794 = vpop.f32.mrf.mxu0
        %v795 = vadd.f32 %v602, %v794
        %v796 = vpop.f32.mrf.mxu0
        %v797 = vpop.f32.mrf.mxu0
        %v798 = vadd.f32 %v605, %v797
        %v799 = vpop.f32.mrf.mxu0
        %800 = vmatprep.mubr.bf16.mxu0 0
        %801 = vmatmul.mubr.bf16.gmra.mxu0 %v662
        %v802 = vpop.f32.mrf.mxu0
        %v803 = vadd.f32 %v610, %v802
        %v804 = vpop.f32.mrf.mxu0
        %v805 = vpop.f32.mrf.mxu0
        %v806 = vadd.f32 %v613, %v805
        %v807 = vpop.f32.mrf.mxu0
        %808 = vmatprep.mubr.bf16.mxu0 0
        %809 = vmatmul.mubr.bf16.gmra.mxu0 %v663
        %v810 = vpop.f32.mrf.mxu0
        %v811 = vadd.f32 %v618, %v810
        %v812 = vpop.f32.mrf.mxu0
        %v813 = vpop.f32.mrf.mxu0
        %v814 = vadd.f32 %v621, %v813
        %v815 = vpop.f32.mrf.mxu0
        %816 = vdwg.mxu0
        %v817 = vld [vmem:[%s194] sm:$0xe]
        %v818 = vld [vmem:[%s194 + $0xc] sm:$0xe]
        %v819 = vld [vmem:[%s194 + $0x18] sm:$0xe]
        %v820 = vld [vmem:[%s194 + $0x24] sm:$0xe]
        %v821 = vld [vmem:[%s194 + $0x30] sm:$0xe]
        %v822 = vld [vmem:[%s194 + $0x3c] sm:$0xe]
        %v823 = vld [vmem:[%s194 + $0x48] sm:$0xe]
        %v824 = vld [vmem:[%s194 + $0x54] sm:$0xe]
        %vm841 = vcmask 1042432
        %vm842 = vcmask 1046532
        %vm843 = vmor %vm841, %vm842
        %v844 = vrot.slane %v817, 5
        %v845 = vrot.slane %v844, 4
        %v846 = vrot.slane %v196, 5
        %v847 = vsel %vm843, %v845, %v846
        %v848 = vrot.slane %v846, 4
        %v849 = vrot.slane %v227, 5
        %v850 = vsel %vm843, %v848, %v849
        %v851 = vrot.slane %v818, 5
        %v852 = vrot.slane %v851, 4
        %v853 = vrot.slane %v198, 5
        %v854 = vsel %vm843, %v852, %v853
        %v855 = vrot.slane %v853, 4
        %v856 = vrot.slane %v228, 5
        %v857 = vsel %vm843, %v855, %v856
        %v858 = vrot.slane %v819, 5
        %v859 = vrot.slane %v858, 4
        %v860 = vrot.slane %v200, 5
        %v861 = vsel %vm843, %v859, %v860
        %v862 = vrot.slane %v860, 4
        %v863 = vrot.slane %v229, 5
        %v864 = vsel %vm843, %v862, %v863
        %v865 = vrot.slane %v820, 5
        %v866 = vrot.slane %v865, 4
        %v867 = vrot.slane %v202, 5
        %v868 = vsel %vm843, %v866, %v867
        %v869 = vrot.slane %v867, 4
        %v870 = vrot.slane %v230, 5
        %v871 = vsel %vm843, %v869, %v870
        %v872 = vrot.slane %v821, 5
        %v873 = vrot.slane %v872, 4
        %v874 = vrot.slane %v204, 5
        %v875 = vsel %vm843, %v873, %v874
        %v876 = vrot.slane %v874, 4
        %v877 = vrot.slane %v231, 5
        %v878 = vsel %vm843, %v876, %v877
        %v879 = vrot.slane %v822, 5
        %v880 = vrot.slane %v879, 4
        %v881 = vrot.slane %v206, 5
        %v882 = vsel %vm843, %v880, %v881
        %v883 = vrot.slane %v881, 4
        %v884 = vrot.slane %v232, 5
        %v885 = vsel %vm843, %v883, %v884
        %v886 = vrot.slane %v823, 5
        %v887 = vrot.slane %v886, 4
        %v888 = vrot.slane %v208, 5
        %v889 = vsel %vm843, %v887, %v888
        %v890 = vrot.slane %v888, 4
        %v891 = vrot.slane %v233, 5
        %v892 = vsel %vm843, %v890, %v891
        %v893 = vrot.slane %v824, 5
        %v894 = vrot.slane %v893, 4
        %v895 = vrot.slane %v210, 5
        %v896 = vsel %vm843, %v894, %v895
        %v897 = vrot.slane %v895, 4
        %v898 = vrot.slane %v234, 5
        %v899 = vsel %vm843, %v897, %v898
        %s900 = scalar_lea.vmem %s172, 128
        %v901 = vld [vmem:[%s900] sm:$0xf]
        %v902 = vld [vmem:[%s900 + $0x4] sm:$0xf]
        %v903 = vld [vmem:[%s900 + $0x8] sm:$0xf]
        %v904 = vld [vmem:[%s900 + $0xc] sm:$0xf]
        %v905 = vld [vmem:[%s900 + $0x10] sm:$0xf]
        %v906 = vld [vmem:[%s900 + $0x14] sm:$0xf]
        %v907 = vld [vmem:[%s900 + $0x18] sm:$0xf]
        %v908 = vld [vmem:[%s900 + $0x1c] sm:$0xf]
        %v909 = vld [vmem:[%s900 + $0x20] sm:$0xf]
        %v910 = vld [vmem:[%s900 + $0x24] sm:$0xf]
        %v911 = vld [vmem:[%s900 + $0x28] sm:$0xf]
        %v912 = vld [vmem:[%s900 + $0x2c] sm:$0xf]
        %v913 = vld [vmem:[%s900 + $0x30] sm:$0xf]
        %v914 = vld [vmem:[%s900 + $0x34] sm:$0xf]
        %v915 = vld [vmem:[%s900 + $0x38] sm:$0xf]
        %v916 = vld [vmem:[%s900 + $0x3c] sm:$0xf]
        %v917 = vunpack.c.l.b16 %v847
        %v918 = vunpack.c.l.b16 %v850
        %v919 = vunpack.c.l.b16 %v854
        %v920 = vunpack.c.l.b16 %v857
        %v921 = vunpack.c.l.b16 %v861
        %v922 = vunpack.c.l.b16 %v864
        %v923 = vunpack.c.l.b16 %v868
        %v924 = vunpack.c.l.b16 %v871
        %v925 = vunpack.c.l.b16 %v875
        %v926 = vunpack.c.l.b16 %v878
        %v927 = vunpack.c.l.b16 %v882
        %v928 = vunpack.c.l.b16 %v885
        %v929 = vunpack.c.l.b16 %v889
        %v930 = vunpack.c.l.b16 %v892
        %v931 = vunpack.c.l.b16 %v896
        %v932 = vunpack.c.l.b16 %v899
        %v933 = vpack.c.b16 %v918, %v917
        %v934 = vpack.c.b16 %v920, %v919
        %v935 = vpack.c.b16 %v922, %v921
        %v936 = vpack.c.b16 %v924, %v923
        %v937 = vpack.c.b16 %v926, %v925
        %v938 = vpack.c.b16 %v928, %v927
        %v939 = vpack.c.b16 %v930, %v929
        %v940 = vpack.c.b16 %v932, %v931
        %v965 = vunpack.c.l.b16 %v901
        %v966 = vunpack.c.l.b16 %v902
        %v967 = vunpack.c.l.b16 %v903
        %v968 = vunpack.c.l.b16 %v904
        %v969 = vunpack.c.l.b16 %v905
        %v970 = vunpack.c.l.b16 %v906
        %v971 = vunpack.c.l.b16 %v907
        %v972 = vunpack.c.l.b16 %v908
        %v973 = vunpack.c.l.b16 %v909
        %v974 = vunpack.c.l.b16 %v910
        %v975 = vunpack.c.l.b16 %v911
        %v976 = vunpack.c.l.b16 %v912
        %v977 = vunpack.c.l.b16 %v913
        %v978 = vunpack.c.l.b16 %v914
        %v979 = vunpack.c.l.b16 %v915
        %v980 = vunpack.c.l.b16 %v916
        %v981 = vpack.c.b16 %v966, %v965
        %v982 = vpack.c.b16 %v968, %v967
        %v983 = vpack.c.b16 %v970, %v969
        %v984 = vpack.c.b16 %v972, %v971
        %v985 = vpack.c.b16 %v974, %v973
        %v986 = vpack.c.b16 %v976, %v975
        %v987 = vpack.c.b16 %v978, %v977
        %v988 = vpack.c.b16 %v980, %v979
        %997 = vmatprep.subr.bf16.mxu0 0
        %998 = vmatpush1.bf16.msra.mxu0 %v988
        %999 = vmatprep.subr.bf16.mxu0 0
        %1000 = vmatpush1.bf16.msra.mxu0 %v987
        %1001 = vmatprep.subr.bf16.mxu0 0
        %1002 = vmatpush1.bf16.msra.mxu0 %v986
        %1003 = vmatprep.subr.bf16.mxu0 0
        %1004 = vmatpush1.bf16.msra.mxu0 %v985
        %1005 = vmatprep.subr.bf16.mxu0 0
        %1006 = vmatpush1.bf16.msra.mxu0 %v984
        %1007 = vmatprep.subr.bf16.mxu0 0
        %1008 = vmatpush1.bf16.msra.mxu0 %v983
        %1009 = vmatprep.subr.bf16.mxu0 0
        %1010 = vmatpush1.bf16.msra.mxu0 %v982
        %1011 = vmatprep.subr.bf16.mxu0 0
        %1012 = vmatpush1.bf16.msra.mxu0 %v981
        %1013 = vmatprep.subr.bf16.mxu0 0
        %1014 = vmatpush2.bf16.msra.mxu0 0
        %1015 = vmatprep.subr.bf16.mxu0 0
        %1016 = vmatpush2.bf16.msra.mxu0 0
        %1017 = vmatprep.subr.bf16.mxu0 0
        %1018 = vmatpush2.bf16.msra.mxu0 0
        %1019 = vmatprep.subr.bf16.mxu0 0
        %1020 = vmatpush2.bf16.msra.mxu0 0
        %1021 = vmatprep.subr.bf16.mxu0 0
        %1022 = vmatpush2.bf16.msra.mxu0 0
        %1023 = vmatprep.subr.bf16.mxu0 0
        %1024 = vmatpush2.bf16.msra.mxu0 0
        %1025 = vmatprep.subr.bf16.mxu0 0
        %1026 = vmatpush2.bf16.msra.mxu0 0
        %1027 = vmatprep.subr.bf16.mxu0 0
        %1028 = vmatpush2.bf16.msra.mxu0 0
        %1029 = vmatprep.mubr.bf16.mxu0 0
        %1030 = vmatmul.mubr.bf16.gmra.mxu0 %v933
        %v1031 = vpop.f32.mrf.mxu0
        %v1032 = vadd.f32 0.0, %v1031
        %v1033 = vpop.f32.mrf.mxu0
        %v1034 = vpop.f32.mrf.mxu0
        %v1035 = vadd.f32 0.0, %v1034
        %v1036 = vpop.f32.mrf.mxu0
        %1037 = vmatprep.mubr.bf16.mxu0 0
        %1038 = vmatmul.mubr.bf16.gmra.mxu0 %v934
        %v1039 = vpop.f32.mrf.mxu0
        %v1040 = vadd.f32 0.0, %v1039
        %v1041 = vpop.f32.mrf.mxu0
        %v1042 = vpop.f32.mrf.mxu0
        %v1043 = vadd.f32 0.0, %v1042
        %v1044 = vpop.f32.mrf.mxu0
        %1045 = vmatprep.mubr.bf16.mxu0 0
        %1046 = vmatmul.mubr.bf16.gmra.mxu0 %v935
        %v1047 = vpop.f32.mrf.mxu0
        %v1048 = vadd.f32 0.0, %v1047
        %v1049 = vpop.f32.mrf.mxu0
        %v1050 = vpop.f32.mrf.mxu0
        %v1051 = vadd.f32 0.0, %v1050
        %v1052 = vpop.f32.mrf.mxu0
        %1053 = vmatprep.mubr.bf16.mxu0 0
        %1054 = vmatmul.mubr.bf16.gmra.mxu0 %v936
        %v1055 = vpop.f32.mrf.mxu0
        %v1056 = vadd.f32 0.0, %v1055
        %v1057 = vpop.f32.mrf.mxu0
        %v1058 = vpop.f32.mrf.mxu0
        %v1059 = vadd.f32 0.0, %v1058
        %v1060 = vpop.f32.mrf.mxu0
        %1061 = vmatprep.mubr.bf16.mxu0 0
        %1062 = vmatmul.mubr.bf16.gmra.mxu0 %v937
        %v1063 = vpop.f32.mrf.mxu0
        %v1064 = vadd.f32 0.0, %v1063
        %v1065 = vpop.f32.mrf.mxu0
        %v1066 = vpop.f32.mrf.mxu0
        %v1067 = vadd.f32 0.0, %v1066
        %v1068 = vpop.f32.mrf.mxu0
        %1069 = vmatprep.mubr.bf16.mxu0 0
        %1070 = vmatmul.mubr.bf16.gmra.mxu0 %v938
        %v1071 = vpop.f32.mrf.mxu0
        %v1072 = vadd.f32 0.0, %v1071
        %v1073 = vpop.f32.mrf.mxu0
        %v1074 = vpop.f32.mrf.mxu0
        %v1075 = vadd.f32 0.0, %v1074
        %v1076 = vpop.f32.mrf.mxu0
        %1077 = vmatprep.mubr.bf16.mxu0 0
        %1078 = vmatmul.mubr.bf16.gmra.mxu0 %v939
        %v1079 = vpop.f32.mrf.mxu0
        %v1080 = vadd.f32 0.0, %v1079
        %v1081 = vpop.f32.mrf.mxu0
        %v1082 = vpop.f32.mrf.mxu0
        %v1083 = vadd.f32 0.0, %v1082
        %v1084 = vpop.f32.mrf.mxu0
        %1085 = vmatprep.mubr.bf16.mxu0 0
        %1086 = vmatmul.mubr.bf16.gmra.mxu0 %v940
        %v1087 = vpop.f32.mrf.mxu0
        %v1088 = vadd.f32 0.0, %v1087
        %v1089 = vpop.f32.mrf.mxu0
        %v1090 = vpop.f32.mrf.mxu0
        %v1091 = vadd.f32 0.0, %v1090
        %v1092 = vpop.f32.mrf.mxu0
        %1093 = vdwg.mxu0
        %v1094 = vadd.f32 %v755, %v1032
        %v1095 = vadd.f32 %v758, %v1035
        %v1096 = vadd.f32 %v763, %v1040
        %v1097 = vadd.f32 %v766, %v1043
        %v1098 = vadd.f32 %v771, %v1048
        %v1099 = vadd.f32 %v774, %v1051
        %v1100 = vadd.f32 %v779, %v1056
        %v1101 = vadd.f32 %v782, %v1059
        %v1102 = vadd.f32 %v787, %v1064
        %v1103 = vadd.f32 %v790, %v1067
        %v1104 = vadd.f32 %v795, %v1072
        %v1105 = vadd.f32 %v798, %v1075
        %v1106 = vadd.f32 %v803, %v1080
        %v1107 = vadd.f32 %v806, %v1083
        %v1108 = vadd.f32 %v811, %v1088
        %v1109 = vadd.f32 %v814, %v1091
        %s1110 = sadd.s32 %s190, 1
        %s1111 = smul.u32 %s1110, 3
        %s1112 = smul.addr %s1111, 4
        %s1113 = scalar_lea.vmem %s168, %s1112
        %v1114 = vld [vmem:[%s1113] sm:$0xf]
        %v1115 = vld [vmem:[%s1113 + $0x4] sm:$0xf]
        %v1116 = vld [vmem:[%s1113 + $0xc] sm:$0xf]
        %v1117 = vld [vmem:[%s1113 + $0x10] sm:$0xf]
        %v1118 = vld [vmem:[%s1113 + $0x18] sm:$0xf]
        %v1119 = vld [vmem:[%s1113 + $0x1c] sm:$0xf]
        %v1120 = vld [vmem:[%s1113 + $0x24] sm:$0xf]
        %v1121 = vld [vmem:[%s1113 + $0x28] sm:$0xf]
        %v1122 = vld [vmem:[%s1113 + $0x30] sm:$0xf]
        %v1123 = vld [vmem:[%s1113 + $0x34] sm:$0xf]
        %v1124 = vld [vmem:[%s1113 + $0x3c] sm:$0xf]
        %v1125 = vld [vmem:[%s1113 + $0x40] sm:$0xf]
        %v1126 = vld [vmem:[%s1113 + $0x48] sm:$0xf]
        %v1127 = vld [vmem:[%s1113 + $0x4c] sm:$0xf]
        %v1128 = vld [vmem:[%s1113 + $0x54] sm:$0xf]
        %v1129 = vld [vmem:[%s1113 + $0x58] sm:$0xf]
        %s1130 = scalar_lea.vmem %s172, 192
        %v1131 = vld [vmem:[%s1130] sm:$0xf]
        %v1132 = vld [vmem:[%s1130 + $0x4] sm:$0xf]
        %v1133 = vld [vmem:[%s1130 + $0x8] sm:$0xf]
        %v1134 = vld [vmem:[%s1130 + $0xc] sm:$0xf]
        %v1135 = vld [vmem:[%s1130 + $0x10] sm:$0xf]
        %v1136 = vld [vmem:[%s1130 + $0x14] sm:$0xf]
        %v1137 = vld [vmem:[%s1130 + $0x18] sm:$0xf]
        %v1138 = vld [vmem:[%s1130 + $0x1c] sm:$0xf]
        %v1139 = vld [vmem:[%s1130 + $0x20] sm:$0xf]
        %v1140 = vld [vmem:[%s1130 + $0x24] sm:$0xf]
        %v1141 = vld [vmem:[%s1130 + $0x28] sm:$0xf]
        %v1142 = vld [vmem:[%s1130 + $0x2c] sm:$0xf]
        %v1143 = vld [vmem:[%s1130 + $0x30] sm:$0xf]
        %v1144 = vld [vmem:[%s1130 + $0x34] sm:$0xf]
        %v1145 = vld [vmem:[%s1130 + $0x38] sm:$0xf]
        %v1146 = vld [vmem:[%s1130 + $0x3c] sm:$0xf]
        %v1163 = vunpack.c.l.b16 %v1114
        %v1164 = vunpack.c.l.b16 %v1115
        %v1165 = vunpack.c.l.b16 %v1116
        %v1166 = vunpack.c.l.b16 %v1117
        %v1167 = vunpack.c.l.b16 %v1118
        %v1168 = vunpack.c.l.b16 %v1119
        %v1169 = vunpack.c.l.b16 %v1120
        %v1170 = vunpack.c.l.b16 %v1121
        %v1171 = vunpack.c.l.b16 %v1122
        %v1172 = vunpack.c.l.b16 %v1123
        %v1173 = vunpack.c.l.b16 %v1124
        %v1174 = vunpack.c.l.b16 %v1125
        %v1175 = vunpack.c.l.b16 %v1126
        %v1176 = vunpack.c.l.b16 %v1127
        %v1177 = vunpack.c.l.b16 %v1128
        %v1178 = vunpack.c.l.b16 %v1129
        %v1179 = vpack.c.b16 %v1164, %v1163
        %v1180 = vpack.c.b16 %v1166, %v1165
        %v1181 = vpack.c.b16 %v1168, %v1167
        %v1182 = vpack.c.b16 %v1170, %v1169
        %v1183 = vpack.c.b16 %v1172, %v1171
        %v1184 = vpack.c.b16 %v1174, %v1173
        %v1185 = vpack.c.b16 %v1176, %v1175
        %v1186 = vpack.c.b16 %v1178, %v1177
        %v1211 = vunpack.c.l.b16 %v1131
        %v1212 = vunpack.c.l.b16 %v1132
        %v1213 = vunpack.c.l.b16 %v1133
        %v1214 = vunpack.c.l.b16 %v1134
        %v1215 = vunpack.c.l.b16 %v1135
        %v1216 = vunpack.c.l.b16 %v1136
        %v1217 = vunpack.c.l.b16 %v1137
        %v1218 = vunpack.c.l.b16 %v1138
        %v1219 = vunpack.c.l.b16 %v1139
        %v1220 = vunpack.c.l.b16 %v1140
        %v1221 = vunpack.c.l.b16 %v1141
        %v1222 = vunpack.c.l.b16 %v1142
        %v1223 = vunpack.c.l.b16 %v1143
        %v1224 = vunpack.c.l.b16 %v1144
        %v1225 = vunpack.c.l.b16 %v1145
        %v1226 = vunpack.c.l.b16 %v1146
        %v1227 = vpack.c.b16 %v1212, %v1211
        %v1228 = vpack.c.b16 %v1214, %v1213
        %v1229 = vpack.c.b16 %v1216, %v1215
        %v1230 = vpack.c.b16 %v1218, %v1217
        %v1231 = vpack.c.b16 %v1220, %v1219
        %v1232 = vpack.c.b16 %v1222, %v1221
        %v1233 = vpack.c.b16 %v1224, %v1223
        %v1234 = vpack.c.b16 %v1226, %v1225
        %1243 = vmatprep.subr.bf16.mxu0 0
        %1244 = vmatpush1.bf16.msra.mxu0 %v1234
        %1245 = vmatprep.subr.bf16.mxu0 0
        %1246 = vmatpush1.bf16.msra.mxu0 %v1233
        %1247 = vmatprep.subr.bf16.mxu0 0
        %1248 = vmatpush1.bf16.msra.mxu0 %v1232
        %1249 = vmatprep.subr.bf16.mxu0 0
        %1250 = vmatpush1.bf16.msra.mxu0 %v1231
        %1251 = vmatprep.subr.bf16.mxu0 0
        %1252 = vmatpush1.bf16.msra.mxu0 %v1230
        %1253 = vmatprep.subr.bf16.mxu0 0
        %1254 = vmatpush1.bf16.msra.mxu0 %v1229
        %1255 = vmatprep.subr.bf16.mxu0 0
        %1256 = vmatpush1.bf16.msra.mxu0 %v1228
        %1257 = vmatprep.subr.bf16.mxu0 0
        %1258 = vmatpush1.bf16.msra.mxu0 %v1227
        %1259 = vmatprep.subr.bf16.mxu0 0
        %1260 = vmatpush2.bf16.msra.mxu0 0
        %1261 = vmatprep.subr.bf16.mxu0 0
        %1262 = vmatpush2.bf16.msra.mxu0 0
        %1263 = vmatprep.subr.bf16.mxu0 0
        %1264 = vmatpush2.bf16.msra.mxu0 0
        %1265 = vmatprep.subr.bf16.mxu0 0
        %1266 = vmatpush2.bf16.msra.mxu0 0
        %1267 = vmatprep.subr.bf16.mxu0 0
        %1268 = vmatpush2.bf16.msra.mxu0 0
        %1269 = vmatprep.subr.bf16.mxu0 0
        %1270 = vmatpush2.bf16.msra.mxu0 0
        %1271 = vmatprep.subr.bf16.mxu0 0
        %1272 = vmatpush2.bf16.msra.mxu0 0
        %1273 = vmatprep.subr.bf16.mxu0 0
        %1274 = vmatpush2.bf16.msra.mxu0 0
        %1275 = vmatprep.mubr.bf16.mxu0 0
        %1276 = vmatmul.mubr.bf16.gmra.mxu0 %v1179
        %v1277 = vpop.f32.mrf.mxu0
        %v1278 = vadd.f32 0.0, %v1277
        %v1279 = vpop.f32.mrf.mxu0
        %v1280 = vpop.f32.mrf.mxu0
        %v1281 = vadd.f32 0.0, %v1280
        %v1282 = vpop.f32.mrf.mxu0
        %1283 = vmatprep.mubr.bf16.mxu0 0
        %1284 = vmatmul.mubr.bf16.gmra.mxu0 %v1180
        %v1285 = vpop.f32.mrf.mxu0
        %v1286 = vadd.f32 0.0, %v1285
        %v1287 = vpop.f32.mrf.mxu0
        %v1288 = vpop.f32.mrf.mxu0
        %v1289 = vadd.f32 0.0, %v1288
        %v1290 = vpop.f32.mrf.mxu0
        %1291 = vmatprep.mubr.bf16.mxu0 0
        %1292 = vmatmul.mubr.bf16.gmra.mxu0 %v1181
        %v1293 = vpop.f32.mrf.mxu0
        %v1294 = vadd.f32 0.0, %v1293
        %v1295 = vpop.f32.mrf.mxu0
        %v1296 = vpop.f32.mrf.mxu0
        %v1297 = vadd.f32 0.0, %v1296
        %v1298 = vpop.f32.mrf.mxu0
        %1299 = vmatprep.mubr.bf16.mxu0 0
        %1300 = vmatmul.mubr.bf16.gmra.mxu0 %v1182
        %v1301 = vpop.f32.mrf.mxu0
        %v1302 = vadd.f32 0.0, %v1301
        %v1303 = vpop.f32.mrf.mxu0
        %v1304 = vpop.f32.mrf.mxu0
        %v1305 = vadd.f32 0.0, %v1304
        %v1306 = vpop.f32.mrf.mxu0
        %1307 = vmatprep.mubr.bf16.mxu0 0
        %1308 = vmatmul.mubr.bf16.gmra.mxu0 %v1183
        %v1309 = vpop.f32.mrf.mxu0
        %v1310 = vadd.f32 0.0, %v1309
        %v1311 = vpop.f32.mrf.mxu0
        %v1312 = vpop.f32.mrf.mxu0
        %v1313 = vadd.f32 0.0, %v1312
        %v1314 = vpop.f32.mrf.mxu0
        %1315 = vmatprep.mubr.bf16.mxu0 0
        %1316 = vmatmul.mubr.bf16.gmra.mxu0 %v1184
        %v1317 = vpop.f32.mrf.mxu0
        %v1318 = vadd.f32 0.0, %v1317
        %v1319 = vpop.f32.mrf.mxu0
        %v1320 = vpop.f32.mrf.mxu0
        %v1321 = vadd.f32 0.0, %v1320
        %v1322 = vpop.f32.mrf.mxu0
        %1323 = vmatprep.mubr.bf16.mxu0 0
        %1324 = vmatmul.mubr.bf16.gmra.mxu0 %v1185
        %v1325 = vpop.f32.mrf.mxu0
        %v1326 = vadd.f32 0.0, %v1325
        %v1327 = vpop.f32.mrf.mxu0
        %v1328 = vpop.f32.mrf.mxu0
        %v1329 = vadd.f32 0.0, %v1328
        %v1330 = vpop.f32.mrf.mxu0
        %1331 = vmatprep.mubr.bf16.mxu0 0
        %1332 = vmatmul.mubr.bf16.gmra.mxu0 %v1186
        %v1333 = vpop.f32.mrf.mxu0
        %v1334 = vadd.f32 0.0, %v1333
        %v1335 = vpop.f32.mrf.mxu0
        %v1336 = vpop.f32.mrf.mxu0
        %v1337 = vadd.f32 0.0, %v1336
        %v1338 = vpop.f32.mrf.mxu0
        %1339 = vdwg.mxu0
        %v1340 = vadd.f32 %v1094, %v1278
        %v1341 = vadd.f32 %v1095, %v1281
        %v1342 = vadd.f32 %v1096, %v1286
        %v1343 = vadd.f32 %v1097, %v1289
        %v1344 = vadd.f32 %v1098, %v1294
        %v1345 = vadd.f32 %v1099, %v1297
        %v1346 = vadd.f32 %v1100, %v1302
        %v1347 = vadd.f32 %v1101, %v1305
        %v1348 = vadd.f32 %v1102, %v1310
        %v1349 = vadd.f32 %v1103, %v1313
        %v1350 = vadd.f32 %v1104, %v1318
        %v1351 = vadd.f32 %v1105, %v1321
        %v1352 = vadd.f32 %v1106, %v1326
        %v1353 = vadd.f32 %v1107, %v1329
        %v1354 = vadd.f32 %v1108, %v1334
        %v1355 = vadd.f32 %v1109, %v1337
        %v1356 = vld [vmem:[%s1113] sm:$0xf]
        %v1357 = vld [vmem:[%s1113 + $0x4] sm:$0xf]
        %v1358 = vld [vmem:[%s1113 + $0x8] sm:$0x1]
        %v1359 = vld [vmem:[%s1113 + $0xc] sm:$0xf]
        %v1360 = vld [vmem:[%s1113 + $0x10] sm:$0xf]
        %v1361 = vld [vmem:[%s1113 + $0x14] sm:$0x1]
        %v1362 = vld [vmem:[%s1113 + $0x18] sm:$0xf]
        %v1363 = vld [vmem:[%s1113 + $0x1c] sm:$0xf]
        %v1364 = vld [vmem:[%s1113 + $0x20] sm:$0x1]
        %v1365 = vld [vmem:[%s1113 + $0x24] sm:$0xf]
        %v1366 = vld [vmem:[%s1113 + $0x28] sm:$0xf]
        %v1367 = vld [vmem:[%s1113 + $0x2c] sm:$0x1]
        %v1368 = vld [vmem:[%s1113 + $0x30] sm:$0xf]
        %v1369 = vld [vmem:[%s1113 + $0x34] sm:$0xf]
        %v1370 = vld [vmem:[%s1113 + $0x38] sm:$0x1]
        %v1371 = vld [vmem:[%s1113 + $0x3c] sm:$0xf]
        %v1372 = vld [vmem:[%s1113 + $0x40] sm:$0xf]
        %v1373 = vld [vmem:[%s1113 + $0x44] sm:$0x1]
        %v1374 = vld [vmem:[%s1113 + $0x48] sm:$0xf]
        %v1375 = vld [vmem:[%s1113 + $0x4c] sm:$0xf]
        %v1376 = vld [vmem:[%s1113 + $0x50] sm:$0x1]
        %v1377 = vld [vmem:[%s1113 + $0x54] sm:$0xf]
        %v1378 = vld [vmem:[%s1113 + $0x58] sm:$0xf]
        %v1379 = vld [vmem:[%s1113 + $0x5c] sm:$0x1]
        %v1381 = vshrl.u32 %v1356, 16
        %v1383 = vrot.slane %v1381, 4
        %v1384 = vshll.u32 %v1356, 16
        %v1386 = vrot.slane %v1384, 5
        %v1387 = vor.u32 %v1383, %v1386
        %v1388 = vrot.slane %v1387, 4
        %v1390 = vshll.u32 %v1357, 16
        %v1392 = vrot.slane %v1390, 5
        %v1393 = vsel %vm237, %v1388, %v1392
        %v1394 = vshrl.u32 %v1357, 16
        %v1396 = vrot.slane %v1394, 4
        %v1397 = vor.u32 %v1396, %v1392
        %v1398 = vrot.slane %v1397, 4
        %v1400 = vshll.u32 %v1358, 16
        %v1402 = vrot.slane %v1400, 5
        %v1403 = vsel %vm237, %v1398, %v1402
        %v1405 = vshrl.u32 %v1359, 16
        %v1407 = vrot.slane %v1405, 4
        %v1408 = vshll.u32 %v1359, 16
        %v1410 = vrot.slane %v1408, 5
        %v1411 = vor.u32 %v1407, %v1410
        %v1412 = vrot.slane %v1411, 4
        %v1414 = vshll.u32 %v1360, 16
        %v1416 = vrot.slane %v1414, 5
        %v1417 = vsel %vm237, %v1412, %v1416
        %v1418 = vshrl.u32 %v1360, 16
        %v1420 = vrot.slane %v1418, 4
        %v1421 = vor.u32 %v1420, %v1416
        %v1422 = vrot.slane %v1421, 4
        %v1424 = vshll.u32 %v1361, 16
        %v1426 = vrot.slane %v1424, 5
        %v1427 = vsel %vm237, %v1422, %v1426
        %v1429 = vshrl.u32 %v1362, 16
        %v1431 = vrot.slane %v1429, 4
        %v1432 = vshll.u32 %v1362, 16
        %v1434 = vrot.slane %v1432, 5
        %v1435 = vor.u32 %v1431, %v1434
        %v1436 = vrot.slane %v1435, 4
        %v1438 = vshll.u32 %v1363, 16
        %v1440 = vrot.slane %v1438, 5
        %v1441 = vsel %vm237, %v1436, %v1440
        %v1442 = vshrl.u32 %v1363, 16
        %v1444 = vrot.slane %v1442, 4
        %v1445 = vor.u32 %v1444, %v1440
        %v1446 = vrot.slane %v1445, 4
        %v1448 = vshll.u32 %v1364, 16
        %v1450 = vrot.slane %v1448, 5
        %v1451 = vsel %vm237, %v1446, %v1450
        %v1453 = vshrl.u32 %v1365, 16
        %v1455 = vrot.slane %v1453, 4
        %v1456 = vshll.u32 %v1365, 16
        %v1458 = vrot.slane %v1456, 5
        %v1459 = vor.u32 %v1455, %v1458
        %v1460 = vrot.slane %v1459, 4
        %v1462 = vshll.u32 %v1366, 16
        %v1464 = vrot.slane %v1462, 5
        %v1465 = vsel %vm237, %v1460, %v1464
        %v1466 = vshrl.u32 %v1366, 16
        %v1468 = vrot.slane %v1466, 4
        %v1469 = vor.u32 %v1468, %v1464
        %v1470 = vrot.slane %v1469, 4
        %v1472 = vshll.u32 %v1367, 16
        %v1474 = vrot.slane %v1472, 5
        %v1475 = vsel %vm237, %v1470, %v1474
        %v1477 = vshrl.u32 %v1368, 16
        %v1479 = vrot.slane %v1477, 4
        %v1480 = vshll.u32 %v1368, 16
        %v1482 = vrot.slane %v1480, 5
        %v1483 = vor.u32 %v1479, %v1482
        %v1484 = vrot.slane %v1483, 4
        %v1486 = vshll.u32 %v1369, 16
        %v1488 = vrot.slane %v1486, 5
        %v1489 = vsel %vm237, %v1484, %v1488
        %v1490 = vshrl.u32 %v1369, 16
        %v1492 = vrot.slane %v1490, 4
        %v1493 = vor.u32 %v1492, %v1488
        %v1494 = vrot.slane %v1493, 4
        %v1496 = vshll.u32 %v1370, 16
        %v1498 = vrot.slane %v1496, 5
        %v1499 = vsel %vm237, %v1494, %v1498
        %v1501 = vshrl.u32 %v1371, 16
        %v1503 = vrot.slane %v1501, 4
        %v1504 = vshll.u32 %v1371, 16
        %v1506 = vrot.slane %v1504, 5
        %v1507 = vor.u32 %v1503, %v1506
        %v1508 = vrot.slane %v1507, 4
        %v1510 = vshll.u32 %v1372, 16
        %v1512 = vrot.slane %v1510, 5
        %v1513 = vsel %vm237, %v1508, %v1512
        %v1514 = vshrl.u32 %v1372, 16
        %v1516 = vrot.slane %v1514, 4
        %v1517 = vor.u32 %v1516, %v1512
        %v1518 = vrot.slane %v1517, 4
        %v1520 = vshll.u32 %v1373, 16
        %v1522 = vrot.slane %v1520, 5
        %v1523 = vsel %vm237, %v1518, %v1522
        %v1525 = vshrl.u32 %v1374, 16
        %v1527 = vrot.slane %v1525, 4
        %v1528 = vshll.u32 %v1374, 16
        %v1530 = vrot.slane %v1528, 5
        %v1531 = vor.u32 %v1527, %v1530
        %v1532 = vrot.slane %v1531, 4
        %v1534 = vshll.u32 %v1375, 16
        %v1536 = vrot.slane %v1534, 5
        %v1537 = vsel %vm237, %v1532, %v1536
        %v1538 = vshrl.u32 %v1375, 16
        %v1540 = vrot.slane %v1538, 4
        %v1541 = vor.u32 %v1540, %v1536
        %v1542 = vrot.slane %v1541, 4
        %v1544 = vshll.u32 %v1376, 16
        %v1546 = vrot.slane %v1544, 5
        %v1547 = vsel %vm237, %v1542, %v1546
        %v1549 = vshrl.u32 %v1377, 16
        %v1551 = vrot.slane %v1549, 4
        %v1552 = vshll.u32 %v1377, 16
        %v1554 = vrot.slane %v1552, 5
        %v1555 = vor.u32 %v1551, %v1554
        %v1556 = vrot.slane %v1555, 4
        %v1558 = vshll.u32 %v1378, 16
        %v1560 = vrot.slane %v1558, 5
        %v1561 = vsel %vm237, %v1556, %v1560
        %v1562 = vshrl.u32 %v1378, 16
        %v1564 = vrot.slane %v1562, 4
        %v1565 = vor.u32 %v1564, %v1560
        %v1566 = vrot.slane %v1565, 4
        %v1568 = vshll.u32 %v1379, 16
        %v1570 = vrot.slane %v1568, 5
        %v1571 = vsel %vm237, %v1566, %v1570
        %s1572 = scalar_lea.vmem %s172, 256
        %v1573 = vld [vmem:[%s1572] sm:$0xf]
        %v1574 = vld [vmem:[%s1572 + $0x4] sm:$0xf]
        %v1575 = vld [vmem:[%s1572 + $0x8] sm:$0xf]
        %v1576 = vld [vmem:[%s1572 + $0xc] sm:$0xf]
        %v1577 = vld [vmem:[%s1572 + $0x10] sm:$0xf]
        %v1578 = vld [vmem:[%s1572 + $0x14] sm:$0xf]
        %v1579 = vld [vmem:[%s1572 + $0x18] sm:$0xf]
        %v1580 = vld [vmem:[%s1572 + $0x1c] sm:$0xf]
        %v1581 = vld [vmem:[%s1572 + $0x20] sm:$0xf]
        %v1582 = vld [vmem:[%s1572 + $0x24] sm:$0xf]
        %v1583 = vld [vmem:[%s1572 + $0x28] sm:$0xf]
        %v1584 = vld [vmem:[%s1572 + $0x2c] sm:$0xf]
        %v1585 = vld [vmem:[%s1572 + $0x30] sm:$0xf]
        %v1586 = vld [vmem:[%s1572 + $0x34] sm:$0xf]
        %v1587 = vld [vmem:[%s1572 + $0x38] sm:$0xf]
        %v1588 = vld [vmem:[%s1572 + $0x3c] sm:$0xf]
        %v1589 = vunpack.c.l.b16 %v1393
        %v1590 = vunpack.c.l.b16 %v1403
        %v1591 = vunpack.c.l.b16 %v1417
        %v1592 = vunpack.c.l.b16 %v1427
        %v1593 = vunpack.c.l.b16 %v1441
        %v1594 = vunpack.c.l.b16 %v1451
        %v1595 = vunpack.c.l.b16 %v1465
        %v1596 = vunpack.c.l.b16 %v1475
        %v1597 = vunpack.c.l.b16 %v1489
        %v1598 = vunpack.c.l.b16 %v1499
        %v1599 = vunpack.c.l.b16 %v1513
        %v1600 = vunpack.c.l.b16 %v1523
        %v1601 = vunpack.c.l.b16 %v1537
        %v1602 = vunpack.c.l.b16 %v1547
        %v1603 = vunpack.c.l.b16 %v1561
        %v1604 = vunpack.c.l.b16 %v1571
        %v1605 = vpack.c.b16 %v1590, %v1589
        %v1606 = vpack.c.b16 %v1592, %v1591
        %v1607 = vpack.c.b16 %v1594, %v1593
        %v1608 = vpack.c.b16 %v1596, %v1595
        %v1609 = vpack.c.b16 %v1598, %v1597
        %v1610 = vpack.c.b16 %v1600, %v1599
        %v1611 = vpack.c.b16 %v1602, %v1601
        %v1612 = vpack.c.b16 %v1604, %v1603
        %v1637 = vunpack.c.l.b16 %v1573
        %v1638 = vunpack.c.l.b16 %v1574
        %v1639 = vunpack.c.l.b16 %v1575
        %v1640 = vunpack.c.l.b16 %v1576
        %v1641 = vunpack.c.l.b16 %v1577
        %v1642 = vunpack.c.l.b16 %v1578
        %v1643 = vunpack.c.l.b16 %v1579
        %v1644 = vunpack.c.l.b16 %v1580
        %v1645 = vunpack.c.l.b16 %v1581
        %v1646 = vunpack.c.l.b16 %v1582
        %v1647 = vunpack.c.l.b16 %v1583
        %v1648 = vunpack.c.l.b16 %v1584
        %v1649 = vunpack.c.l.b16 %v1585
        %v1650 = vunpack.c.l.b16 %v1586
        %v1651 = vunpack.c.l.b16 %v1587
        %v1652 = vunpack.c.l.b16 %v1588
        %v1653 = vpack.c.b16 %v1638, %v1637
        %v1654 = vpack.c.b16 %v1640, %v1639
        %v1655 = vpack.c.b16 %v1642, %v1641
        %v1656 = vpack.c.b16 %v1644, %v1643
        %v1657 = vpack.c.b16 %v1646, %v1645
        %v1658 = vpack.c.b16 %v1648, %v1647
        %v1659 = vpack.c.b16 %v1650, %v1649
        %v1660 = vpack.c.b16 %v1652, %v1651
        %1669 = vmatprep.subr.bf16.mxu0 0
        %1670 = vmatpush1.bf16.msra.mxu0 %v1660
        %1671 = vmatprep.subr.bf16.mxu0 0
        %1672 = vmatpush1.bf16.msra.mxu0 %v1659
        %1673 = vmatprep.subr.bf16.mxu0 0
        %1674 = vmatpush1.bf16.msra.mxu0 %v1658
        %1675 = vmatprep.subr.bf16.mxu0 0
        %1676 = vmatpush1.bf16.msra.mxu0 %v1657
        %1677 = vmatprep.subr.bf16.mxu0 0
        %1678 = vmatpush1.bf16.msra.mxu0 %v1656
        %1679 = vmatprep.subr.bf16.mxu0 0
        %1680 = vmatpush1.bf16.msra.mxu0 %v1655
        %1681 = vmatprep.subr.bf16.mxu0 0
        %1682 = vmatpush1.bf16.msra.mxu0 %v1654
        %1683 = vmatprep.subr.bf16.mxu0 0
        %1684 = vmatpush1.bf16.msra.mxu0 %v1653
        %1685 = vmatprep.subr.bf16.mxu0 0
        %1686 = vmatpush2.bf16.msra.mxu0 0
        %1687 = vmatprep.subr.bf16.mxu0 0
        %1688 = vmatpush2.bf16.msra.mxu0 0
        %1689 = vmatprep.subr.bf16.mxu0 0
        %1690 = vmatpush2.bf16.msra.mxu0 0
        %1691 = vmatprep.subr.bf16.mxu0 0
        %1692 = vmatpush2.bf16.msra.mxu0 0
        %1693 = vmatprep.subr.bf16.mxu0 0
        %1694 = vmatpush2.bf16.msra.mxu0 0
        %1695 = vmatprep.subr.bf16.mxu0 0
        %1696 = vmatpush2.bf16.msra.mxu0 0
        %1697 = vmatprep.subr.bf16.mxu0 0
        %1698 = vmatpush2.bf16.msra.mxu0 0
        %1699 = vmatprep.subr.bf16.mxu0 0
        %1700 = vmatpush2.bf16.msra.mxu0 0
        %1701 = vmatprep.mubr.bf16.mxu0 0
        %1702 = vmatmul.mubr.bf16.gmra.mxu0 %v1605
        %v1703 = vpop.f32.mrf.mxu0
        %v1704 = vadd.f32 0.0, %v1703
        %v1705 = vpop.f32.mrf.mxu0
        %v1706 = vpop.f32.mrf.mxu0
        %v1707 = vadd.f32 0.0, %v1706
        %v1708 = vpop.f32.mrf.mxu0
        %1709 = vmatprep.mubr.bf16.mxu0 0
        %1710 = vmatmul.mubr.bf16.gmra.mxu0 %v1606
        %v1711 = vpop.f32.mrf.mxu0
        %v1712 = vadd.f32 0.0, %v1711
        %v1713 = vpop.f32.mrf.mxu0
        %v1714 = vpop.f32.mrf.mxu0
        %v1715 = vadd.f32 0.0, %v1714
        %v1716 = vpop.f32.mrf.mxu0
        %1717 = vmatprep.mubr.bf16.mxu0 0
        %1718 = vmatmul.mubr.bf16.gmra.mxu0 %v1607
        %v1719 = vpop.f32.mrf.mxu0
        %v1720 = vadd.f32 0.0, %v1719
        %v1721 = vpop.f32.mrf.mxu0
        %v1722 = vpop.f32.mrf.mxu0
        %v1723 = vadd.f32 0.0, %v1722
        %v1724 = vpop.f32.mrf.mxu0
        %1725 = vmatprep.mubr.bf16.mxu0 0
        %1726 = vmatmul.mubr.bf16.gmra.mxu0 %v1608
        %v1727 = vpop.f32.mrf.mxu0
        %v1728 = vadd.f32 0.0, %v1727
        %v1729 = vpop.f32.mrf.mxu0
        %v1730 = vpop.f32.mrf.mxu0
        %v1731 = vadd.f32 0.0, %v1730
        %v1732 = vpop.f32.mrf.mxu0
        %1733 = vmatprep.mubr.bf16.mxu0 0
        %1734 = vmatmul.mubr.bf16.gmra.mxu0 %v1609
        %v1735 = vpop.f32.mrf.mxu0
        %v1736 = vadd.f32 0.0, %v1735
        %v1737 = vpop.f32.mrf.mxu0
        %v1738 = vpop.f32.mrf.mxu0
        %v1739 = vadd.f32 0.0, %v1738
        %v1740 = vpop.f32.mrf.mxu0
        %1741 = vmatprep.mubr.bf16.mxu0 0
        %1742 = vmatmul.mubr.bf16.gmra.mxu0 %v1610
        %v1743 = vpop.f32.mrf.mxu0
        %v1744 = vadd.f32 0.0, %v1743
        %v1745 = vpop.f32.mrf.mxu0
        %v1746 = vpop.f32.mrf.mxu0
        %v1747 = vadd.f32 0.0, %v1746
        %v1748 = vpop.f32.mrf.mxu0
        %1749 = vmatprep.mubr.bf16.mxu0 0
        %1750 = vmatmul.mubr.bf16.gmra.mxu0 %v1611
        %v1751 = vpop.f32.mrf.mxu0
        %v1752 = vadd.f32 0.0, %v1751
        %v1753 = vpop.f32.mrf.mxu0
        %v1754 = vpop.f32.mrf.mxu0
        %v1755 = vadd.f32 0.0, %v1754
        %v1756 = vpop.f32.mrf.mxu0
        %1757 = vmatprep.mubr.bf16.mxu0 0
        %1758 = vmatmul.mubr.bf16.gmra.mxu0 %v1612
        %v1759 = vpop.f32.mrf.mxu0
        %v1760 = vadd.f32 0.0, %v1759
        %v1761 = vpop.f32.mrf.mxu0
        %v1762 = vpop.f32.mrf.mxu0
        %v1763 = vadd.f32 0.0, %v1762
        %v1764 = vpop.f32.mrf.mxu0
        %1765 = vdwg.mxu0
        %v1766 = vadd.f32 %v1340, %v1704
        %v1767 = vadd.f32 %v1341, %v1707
        %v1768 = vadd.f32 %v1342, %v1712
        %v1769 = vadd.f32 %v1343, %v1715
        %v1770 = vadd.f32 %v1344, %v1720
        %v1771 = vadd.f32 %v1345, %v1723
        %v1772 = vadd.f32 %v1346, %v1728
        %v1773 = vadd.f32 %v1347, %v1731
        %v1774 = vadd.f32 %v1348, %v1736
        %v1775 = vadd.f32 %v1349, %v1739
        %v1776 = vadd.f32 %v1350, %v1744
        %v1777 = vadd.f32 %v1351, %v1747
        %v1778 = vadd.f32 %v1352, %v1752
        %v1779 = vadd.f32 %v1353, %v1755
        %v1780 = vadd.f32 %v1354, %v1760
        %v1781 = vadd.f32 %v1355, %v1763
        %v1782 = vld [vmem:[%s1113] sm:$0xe]
        %v1783 = vld [vmem:[%s1113 + $0xc] sm:$0xe]
        %v1784 = vld [vmem:[%s1113 + $0x18] sm:$0xe]
        %v1785 = vld [vmem:[%s1113 + $0x24] sm:$0xe]
        %v1786 = vld [vmem:[%s1113 + $0x30] sm:$0xe]
        %v1787 = vld [vmem:[%s1113 + $0x3c] sm:$0xe]
        %v1788 = vld [vmem:[%s1113 + $0x48] sm:$0xe]
        %v1789 = vld [vmem:[%s1113 + $0x54] sm:$0xe]
        %v1814 = vrot.slane %v1782, 5
        %v1815 = vrot.slane %v1814, 4
        %v1816 = vrot.slane %v1357, 5
        %v1817 = vsel %vm843, %v1815, %v1816
        %v1818 = vrot.slane %v1816, 4
        %v1819 = vrot.slane %v1358, 5
        %v1820 = vsel %vm843, %v1818, %v1819
        %v1821 = vrot.slane %v1783, 5
        %v1822 = vrot.slane %v1821, 4
        %v1823 = vrot.slane %v1360, 5
        %v1824 = vsel %vm843, %v1822, %v1823
        %v1825 = vrot.slane %v1823, 4
        %v1826 = vrot.slane %v1361, 5
        %v1827 = vsel %vm843, %v1825, %v1826
        %v1828 = vrot.slane %v1784, 5
        %v1829 = vrot.slane %v1828, 4
        %v1830 = vrot.slane %v1363, 5
        %v1831 = vsel %vm843, %v1829, %v1830
        %v1832 = vrot.slane %v1830, 4
        %v1833 = vrot.slane %v1364, 5
        %v1834 = vsel %vm843, %v1832, %v1833
        %v1835 = vrot.slane %v1785, 5
        %v1836 = vrot.slane %v1835, 4
        %v1837 = vrot.slane %v1366, 5
        %v1838 = vsel %vm843, %v1836, %v1837
        %v1839 = vrot.slane %v1837, 4
        %v1840 = vrot.slane %v1367, 5
        %v1841 = vsel %vm843, %v1839, %v1840
        %v1842 = vrot.slane %v1786, 5
        %v1843 = vrot.slane %v1842, 4
        %v1844 = vrot.slane %v1369, 5
        %v1845 = vsel %vm843, %v1843, %v1844
        %v1846 = vrot.slane %v1844, 4
        %v1847 = vrot.slane %v1370, 5
        %v1848 = vsel %vm843, %v1846, %v1847
        %v1849 = vrot.slane %v1787, 5
        %v1850 = vrot.slane %v1849, 4
        %v1851 = vrot.slane %v1372, 5
        %v1852 = vsel %vm843, %v1850, %v1851
        %v1853 = vrot.slane %v1851, 4
        %v1854 = vrot.slane %v1373, 5
        %v1855 = vsel %vm843, %v1853, %v1854
        %v1856 = vrot.slane %v1788, 5
        %v1857 = vrot.slane %v1856, 4
        %v1858 = vrot.slane %v1375, 5
        %v1859 = vsel %vm843, %v1857, %v1858
        %v1860 = vrot.slane %v1858, 4
        %v1861 = vrot.slane %v1376, 5
        %v1862 = vsel %vm843, %v1860, %v1861
        %v1863 = vrot.slane %v1789, 5
        %v1864 = vrot.slane %v1863, 4
        %v1865 = vrot.slane %v1378, 5
        %v1866 = vsel %vm843, %v1864, %v1865
        %v1867 = vrot.slane %v1865, 4
        %v1868 = vrot.slane %v1379, 5
        %v1869 = vsel %vm843, %v1867, %v1868
        %s1870 = scalar_lea.vmem %s172, 320
        %v1871 = vld [vmem:[%s1870] sm:$0xf]
        %v1872 = vld [vmem:[%s1870 + $0x4] sm:$0xf]
        %v1873 = vld [vmem:[%s1870 + $0x8] sm:$0xf]
        %v1874 = vld [vmem:[%s1870 + $0xc] sm:$0xf]
        %v1875 = vld [vmem:[%s1870 + $0x10] sm:$0xf]
        %v1876 = vld [vmem:[%s1870 + $0x14] sm:$0xf]
        %v1877 = vld [vmem:[%s1870 + $0x18] sm:$0xf]
        %v1878 = vld [vmem:[%s1870 + $0x1c] sm:$0xf]
        %v1879 = vld [vmem:[%s1870 + $0x20] sm:$0xf]
        %v1880 = vld [vmem:[%s1870 + $0x24] sm:$0xf]
        %v1881 = vld [vmem:[%s1870 + $0x28] sm:$0xf]
        %v1882 = vld [vmem:[%s1870 + $0x2c] sm:$0xf]
        %v1883 = vld [vmem:[%s1870 + $0x30] sm:$0xf]
        %v1884 = vld [vmem:[%s1870 + $0x34] sm:$0xf]
        %v1885 = vld [vmem:[%s1870 + $0x38] sm:$0xf]
        %v1886 = vld [vmem:[%s1870 + $0x3c] sm:$0xf]
        %v1887 = vunpack.c.l.b16 %v1817
        %v1888 = vunpack.c.l.b16 %v1820
        %v1889 = vunpack.c.l.b16 %v1824
        %v1890 = vunpack.c.l.b16 %v1827
        %v1891 = vunpack.c.l.b16 %v1831
        %v1892 = vunpack.c.l.b16 %v1834
        %v1893 = vunpack.c.l.b16 %v1838
        %v1894 = vunpack.c.l.b16 %v1841
        %v1895 = vunpack.c.l.b16 %v1845
        %v1896 = vunpack.c.l.b16 %v1848
        %v1897 = vunpack.c.l.b16 %v1852
        %v1898 = vunpack.c.l.b16 %v1855
        %v1899 = vunpack.c.l.b16 %v1859
        %v1900 = vunpack.c.l.b16 %v1862
        %v1901 = vunpack.c.l.b16 %v1866
        %v1902 = vunpack.c.l.b16 %v1869
        %v1903 = vpack.c.b16 %v1888, %v1887
        %v1904 = vpack.c.b16 %v1890, %v1889
        %v1905 = vpack.c.b16 %v1892, %v1891
        %v1906 = vpack.c.b16 %v1894, %v1893
        %v1907 = vpack.c.b16 %v1896, %v1895
        %v1908 = vpack.c.b16 %v1898, %v1897
        %v1909 = vpack.c.b16 %v1900, %v1899
        %v1910 = vpack.c.b16 %v1902, %v1901
        %v1935 = vunpack.c.l.b16 %v1871
        %v1936 = vunpack.c.l.b16 %v1872
        %v1937 = vunpack.c.l.b16 %v1873
        %v1938 = vunpack.c.l.b16 %v1874
        %v1939 = vunpack.c.l.b16 %v1875
        %v1940 = vunpack.c.l.b16 %v1876
        %v1941 = vunpack.c.l.b16 %v1877
        %v1942 = vunpack.c.l.b16 %v1878
        %v1943 = vunpack.c.l.b16 %v1879
        %v1944 = vunpack.c.l.b16 %v1880
        %v1945 = vunpack.c.l.b16 %v1881
        %v1946 = vunpack.c.l.b16 %v1882
        %v1947 = vunpack.c.l.b16 %v1883
        %v1948 = vunpack.c.l.b16 %v1884
        %v1949 = vunpack.c.l.b16 %v1885
        %v1950 = vunpack.c.l.b16 %v1886
        %v1951 = vpack.c.b16 %v1936, %v1935
        %v1952 = vpack.c.b16 %v1938, %v1937
        %v1953 = vpack.c.b16 %v1940, %v1939
        %v1954 = vpack.c.b16 %v1942, %v1941
        %v1955 = vpack.c.b16 %v1944, %v1943
        %v1956 = vpack.c.b16 %v1946, %v1945
        %v1957 = vpack.c.b16 %v1948, %v1947
        %v1958 = vpack.c.b16 %v1950, %v1949
        %1967 = vmatprep.subr.bf16.mxu0 0
        %1968 = vmatpush1.bf16.msra.mxu0 %v1958
        %1969 = vmatprep.subr.bf16.mxu0 0
        %1970 = vmatpush1.bf16.msra.mxu0 %v1957
        %1971 = vmatprep.subr.bf16.mxu0 0
        %1972 = vmatpush1.bf16.msra.mxu0 %v1956
        %1973 = vmatprep.subr.bf16.mxu0 0
        %1974 = vmatpush1.bf16.msra.mxu0 %v1955
        %1975 = vmatprep.subr.bf16.mxu0 0
        %1976 = vmatpush1.bf16.msra.mxu0 %v1954
        %1977 = vmatprep.subr.bf16.mxu0 0
        %1978 = vmatpush1.bf16.msra.mxu0 %v1953
        %1979 = vmatprep.subr.bf16.mxu0 0
        %1980 = vmatpush1.bf16.msra.mxu0 %v1952
        %1981 = vmatprep.subr.bf16.mxu0 0
        %1982 = vmatpush1.bf16.msra.mxu0 %v1951
        %1983 = vmatprep.subr.bf16.mxu0 0
        %1984 = vmatpush2.bf16.msra.mxu0 0
        %1985 = vmatprep.subr.bf16.mxu0 0
        %1986 = vmatpush2.bf16.msra.mxu0 0
        %1987 = vmatprep.subr.bf16.mxu0 0
        %1988 = vmatpush2.bf16.msra.mxu0 0
        %1989 = vmatprep.subr.bf16.mxu0 0
        %1990 = vmatpush2.bf16.msra.mxu0 0
        %1991 = vmatprep.subr.bf16.mxu0 0
        %1992 = vmatpush2.bf16.msra.mxu0 0
        %1993 = vmatprep.subr.bf16.mxu0 0
        %1994 = vmatpush2.bf16.msra.mxu0 0
        %1995 = vmatprep.subr.bf16.mxu0 0
        %1996 = vmatpush2.bf16.msra.mxu0 0
        %1997 = vmatprep.subr.bf16.mxu0 0
        %1998 = vmatpush2.bf16.msra.mxu0 0
        %1999 = vmatprep.mubr.bf16.mxu0 0
        %2000 = vmatmul.mubr.bf16.gmra.mxu0 %v1903
        %v2001 = vpop.f32.mrf.mxu0
        %v2002 = vadd.f32 0.0, %v2001
        %v2003 = vpop.f32.mrf.mxu0
        %v2004 = vpop.f32.mrf.mxu0
        %v2005 = vadd.f32 0.0, %v2004
        %v2006 = vpop.f32.mrf.mxu0
        %2007 = vmatprep.mubr.bf16.mxu0 0
        %2008 = vmatmul.mubr.bf16.gmra.mxu0 %v1904
        %v2009 = vpop.f32.mrf.mxu0
        %v2010 = vadd.f32 0.0, %v2009
        %v2011 = vpop.f32.mrf.mxu0
        %v2012 = vpop.f32.mrf.mxu0
        %v2013 = vadd.f32 0.0, %v2012
        %v2014 = vpop.f32.mrf.mxu0
        %2015 = vmatprep.mubr.bf16.mxu0 0
        %2016 = vmatmul.mubr.bf16.gmra.mxu0 %v1905
        %v2017 = vpop.f32.mrf.mxu0
        %v2018 = vadd.f32 0.0, %v2017
        %v2019 = vpop.f32.mrf.mxu0
        %v2020 = vpop.f32.mrf.mxu0
        %v2021 = vadd.f32 0.0, %v2020
        %v2022 = vpop.f32.mrf.mxu0
        %2023 = vmatprep.mubr.bf16.mxu0 0
        %2024 = vmatmul.mubr.bf16.gmra.mxu0 %v1906
        %v2025 = vpop.f32.mrf.mxu0
        %v2026 = vadd.f32 0.0, %v2025
        %v2027 = vpop.f32.mrf.mxu0
        %v2028 = vpop.f32.mrf.mxu0
        %v2029 = vadd.f32 0.0, %v2028
        %v2030 = vpop.f32.mrf.mxu0
        %2031 = vmatprep.mubr.bf16.mxu0 0
        %2032 = vmatmul.mubr.bf16.gmra.mxu0 %v1907
        %v2033 = vpop.f32.mrf.mxu0
        %v2034 = vadd.f32 0.0, %v2033
        %v2035 = vpop.f32.mrf.mxu0
        %v2036 = vpop.f32.mrf.mxu0
        %v2037 = vadd.f32 0.0, %v2036
        %v2038 = vpop.f32.mrf.mxu0
        %2039 = vmatprep.mubr.bf16.mxu0 0
        %2040 = vmatmul.mubr.bf16.gmra.mxu0 %v1908
        %v2041 = vpop.f32.mrf.mxu0
        %v2042 = vadd.f32 0.0, %v2041
        %v2043 = vpop.f32.mrf.mxu0
        %v2044 = vpop.f32.mrf.mxu0
        %v2045 = vadd.f32 0.0, %v2044
        %v2046 = vpop.f32.mrf.mxu0
        %2047 = vmatprep.mubr.bf16.mxu0 0
        %2048 = vmatmul.mubr.bf16.gmra.mxu0 %v1909
        %v2049 = vpop.f32.mrf.mxu0
        %v2050 = vadd.f32 0.0, %v2049
        %v2051 = vpop.f32.mrf.mxu0
        %v2052 = vpop.f32.mrf.mxu0
        %v2053 = vadd.f32 0.0, %v2052
        %v2054 = vpop.f32.mrf.mxu0
        %2055 = vmatprep.mubr.bf16.mxu0 0
        %2056 = vmatmul.mubr.bf16.gmra.mxu0 %v1910
        %v2057 = vpop.f32.mrf.mxu0
        %v2058 = vadd.f32 0.0, %v2057
        %v2059 = vpop.f32.mrf.mxu0
        %v2060 = vpop.f32.mrf.mxu0
        %v2061 = vadd.f32 0.0, %v2060
        %v2062 = vpop.f32.mrf.mxu0
        %2063 = vdwg.mxu0
        %v2064 = vadd.f32 %v1766, %v2002
        %v2065 = vadd.f32 %v1767, %v2005
        %v2066 = vadd.f32 %v1768, %v2010
        %v2067 = vadd.f32 %v1769, %v2013
        %v2068 = vadd.f32 %v1770, %v2018
        %v2069 = vadd.f32 %v1771, %v2021
        %v2070 = vadd.f32 %v1772, %v2026
        %v2071 = vadd.f32 %v1773, %v2029
        %v2072 = vadd.f32 %v1774, %v2034
        %v2073 = vadd.f32 %v1775, %v2037
        %v2074 = vadd.f32 %v1776, %v2042
        %v2075 = vadd.f32 %v1777, %v2045
        %v2076 = vadd.f32 %v1778, %v2050
        %v2077 = vadd.f32 %v1779, %v2053
        %v2078 = vadd.f32 %v1780, %v2058
        %v2079 = vadd.f32 %v1781, %v2061
        %s2080 = sadd.s32 %s190, 2
        %s2081 = smul.u32 %s2080, 3
        %s2082 = smul.addr %s2081, 4
        %s2083 = scalar_lea.vmem %s168, %s2082
        %v2084 = vld [vmem:[%s2083] sm:$0xf]
        %v2085 = vld [vmem:[%s2083 + $0x4] sm:$0xf]
        %v2086 = vld [vmem:[%s2083 + $0xc] sm:$0xf]
        %v2087 = vld [vmem:[%s2083 + $0x10] sm:$0xf]
        %v2088 = vld [vmem:[%s2083 + $0x18] sm:$0xf]
        %v2089 = vld [vmem:[%s2083 + $0x1c] sm:$0xf]
        %v2090 = vld [vmem:[%s2083 + $0x24] sm:$0xf]
        %v2091 = vld [vmem:[%s2083 + $0x28] sm:$0xf]
        %v2092 = vld [vmem:[%s2083 + $0x30] sm:$0xf]
        %v2093 = vld [vmem:[%s2083 + $0x34] sm:$0xf]
        %v2094 = vld [vmem:[%s2083 + $0x3c] sm:$0xf]
        %v2095 = vld [vmem:[%s2083 + $0x40] sm:$0xf]
        %v2096 = vld [vmem:[%s2083 + $0x48] sm:$0xf]
        %v2097 = vld [vmem:[%s2083 + $0x4c] sm:$0xf]
        %v2098 = vld [vmem:[%s2083 + $0x54] sm:$0xf]
        %v2099 = vld [vmem:[%s2083 + $0x58] sm:$0xf]
        %s2100 = scalar_lea.vmem %s172, 384
        %v2101 = vld [vmem:[%s2100] sm:$0xf]
        %v2102 = vld [vmem:[%s2100 + $0x4] sm:$0xf]
        %v2103 = vld [vmem:[%s2100 + $0x8] sm:$0xf]
        %v2104 = vld [vmem:[%s2100 + $0xc] sm:$0xf]
        %v2105 = vld [vmem:[%s2100 + $0x10] sm:$0xf]
        %v2106 = vld [vmem:[%s2100 + $0x14] sm:$0xf]
        %v2107 = vld [vmem:[%s2100 + $0x18] sm:$0xf]
        %v2108 = vld [vmem:[%s2100 + $0x1c] sm:$0xf]
        %v2109 = vld [vmem:[%s2100 + $0x20] sm:$0xf]
        %v2110 = vld [vmem:[%s2100 + $0x24] sm:$0xf]
        %v2111 = vld [vmem:[%s2100 + $0x28] sm:$0xf]
        %v2112 = vld [vmem:[%s2100 + $0x2c] sm:$0xf]
        %v2113 = vld [vmem:[%s2100 + $0x30] sm:$0xf]
        %v2114 = vld [vmem:[%s2100 + $0x34] sm:$0xf]
        %v2115 = vld [vmem:[%s2100 + $0x38] sm:$0xf]
        %v2116 = vld [vmem:[%s2100 + $0x3c] sm:$0xf]
        %v2133 = vunpack.c.l.b16 %v2084
        %v2134 = vunpack.c.l.b16 %v2085
        %v2135 = vunpack.c.l.b16 %v2086
        %v2136 = vunpack.c.l.b16 %v2087
        %v2137 = vunpack.c.l.b16 %v2088
        %v2138 = vunpack.c.l.b16 %v2089
        %v2139 = vunpack.c.l.b16 %v2090
        %v2140 = vunpack.c.l.b16 %v2091
        %v2141 = vunpack.c.l.b16 %v2092
        %v2142 = vunpack.c.l.b16 %v2093
        %v2143 = vunpack.c.l.b16 %v2094
        %v2144 = vunpack.c.l.b16 %v2095
        %v2145 = vunpack.c.l.b16 %v2096
        %v2146 = vunpack.c.l.b16 %v2097
        %v2147 = vunpack.c.l.b16 %v2098
        %v2148 = vunpack.c.l.b16 %v2099
        %v2149 = vpack.c.b16 %v2134, %v2133
        %v2150 = vpack.c.b16 %v2136, %v2135
        %v2151 = vpack.c.b16 %v2138, %v2137
        %v2152 = vpack.c.b16 %v2140, %v2139
        %v2153 = vpack.c.b16 %v2142, %v2141
        %v2154 = vpack.c.b16 %v2144, %v2143
        %v2155 = vpack.c.b16 %v2146, %v2145
        %v2156 = vpack.c.b16 %v2148, %v2147
        %v2181 = vunpack.c.l.b16 %v2101
        %v2182 = vunpack.c.l.b16 %v2102
        %v2183 = vunpack.c.l.b16 %v2103
        %v2184 = vunpack.c.l.b16 %v2104
        %v2185 = vunpack.c.l.b16 %v2105
        %v2186 = vunpack.c.l.b16 %v2106
        %v2187 = vunpack.c.l.b16 %v2107
        %v2188 = vunpack.c.l.b16 %v2108
        %v2189 = vunpack.c.l.b16 %v2109
        %v2190 = vunpack.c.l.b16 %v2110
        %v2191 = vunpack.c.l.b16 %v2111
        %v2192 = vunpack.c.l.b16 %v2112
        %v2193 = vunpack.c.l.b16 %v2113
        %v2194 = vunpack.c.l.b16 %v2114
        %v2195 = vunpack.c.l.b16 %v2115
        %v2196 = vunpack.c.l.b16 %v2116
        %v2197 = vpack.c.b16 %v2182, %v2181
        %v2198 = vpack.c.b16 %v2184, %v2183
        %v2199 = vpack.c.b16 %v2186, %v2185
        %v2200 = vpack.c.b16 %v2188, %v2187
        %v2201 = vpack.c.b16 %v2190, %v2189
        %v2202 = vpack.c.b16 %v2192, %v2191
        %v2203 = vpack.c.b16 %v2194, %v2193
        %v2204 = vpack.c.b16 %v2196, %v2195
        %2213 = vmatprep.subr.bf16.mxu0 0
        %2214 = vmatpush1.bf16.msra.mxu0 %v2204
        %2215 = vmatprep.subr.bf16.mxu0 0
        %2216 = vmatpush1.bf16.msra.mxu0 %v2203
        %2217 = vmatprep.subr.bf16.mxu0 0
        %2218 = vmatpush1.bf16.msra.mxu0 %v2202
        %2219 = vmatprep.subr.bf16.mxu0 0
        %2220 = vmatpush1.bf16.msra.mxu0 %v2201
        %2221 = vmatprep.subr.bf16.mxu0 0
        %2222 = vmatpush1.bf16.msra.mxu0 %v2200
        %2223 = vmatprep.subr.bf16.mxu0 0
        %2224 = vmatpush1.bf16.msra.mxu0 %v2199
        %2225 = vmatprep.subr.bf16.mxu0 0
        %2226 = vmatpush1.bf16.msra.mxu0 %v2198
        %2227 = vmatprep.subr.bf16.mxu0 0
        %2228 = vmatpush1.bf16.msra.mxu0 %v2197
        %2229 = vmatprep.subr.bf16.mxu0 0
        %2230 = vmatpush2.bf16.msra.mxu0 0
        %2231 = vmatprep.subr.bf16.mxu0 0
        %2232 = vmatpush2.bf16.msra.mxu0 0
        %2233 = vmatprep.subr.bf16.mxu0 0
        %2234 = vmatpush2.bf16.msra.mxu0 0
        %2235 = vmatprep.subr.bf16.mxu0 0
        %2236 = vmatpush2.bf16.msra.mxu0 0
        %2237 = vmatprep.subr.bf16.mxu0 0
        %2238 = vmatpush2.bf16.msra.mxu0 0
        %2239 = vmatprep.subr.bf16.mxu0 0
        %2240 = vmatpush2.bf16.msra.mxu0 0
        %2241 = vmatprep.subr.bf16.mxu0 0
        %2242 = vmatpush2.bf16.msra.mxu0 0
        %2243 = vmatprep.subr.bf16.mxu0 0
        %2244 = vmatpush2.bf16.msra.mxu0 0
        %2245 = vmatprep.mubr.bf16.mxu0 0
        %2246 = vmatmul.mubr.bf16.gmra.mxu0 %v2149
        %v2247 = vpop.f32.mrf.mxu0
        %v2248 = vadd.f32 0.0, %v2247
        %v2249 = vpop.f32.mrf.mxu0
        %v2250 = vpop.f32.mrf.mxu0
        %v2251 = vadd.f32 0.0, %v2250
        %v2252 = vpop.f32.mrf.mxu0
        %2253 = vmatprep.mubr.bf16.mxu0 0
        %2254 = vmatmul.mubr.bf16.gmra.mxu0 %v2150
        %v2255 = vpop.f32.mrf.mxu0
        %v2256 = vadd.f32 0.0, %v2255
        %v2257 = vpop.f32.mrf.mxu0
        %v2258 = vpop.f32.mrf.mxu0
        %v2259 = vadd.f32 0.0, %v2258
        %v2260 = vpop.f32.mrf.mxu0
        %2261 = vmatprep.mubr.bf16.mxu0 0
        %2262 = vmatmul.mubr.bf16.gmra.mxu0 %v2151
        %v2263 = vpop.f32.mrf.mxu0
        %v2264 = vadd.f32 0.0, %v2263
        %v2265 = vpop.f32.mrf.mxu0
        %v2266 = vpop.f32.mrf.mxu0
        %v2267 = vadd.f32 0.0, %v2266
        %v2268 = vpop.f32.mrf.mxu0
        %2269 = vmatprep.mubr.bf16.mxu0 0
        %2270 = vmatmul.mubr.bf16.gmra.mxu0 %v2152
        %v2271 = vpop.f32.mrf.mxu0
        %v2272 = vadd.f32 0.0, %v2271
        %v2273 = vpop.f32.mrf.mxu0
        %v2274 = vpop.f32.mrf.mxu0
        %v2275 = vadd.f32 0.0, %v2274
        %v2276 = vpop.f32.mrf.mxu0
        %2277 = vmatprep.mubr.bf16.mxu0 0
        %2278 = vmatmul.mubr.bf16.gmra.mxu0 %v2153
        %v2279 = vpop.f32.mrf.mxu0
        %v2280 = vadd.f32 0.0, %v2279
        %v2281 = vpop.f32.mrf.mxu0
        %v2282 = vpop.f32.mrf.mxu0
        %v2283 = vadd.f32 0.0, %v2282
        %v2284 = vpop.f32.mrf.mxu0
        %2285 = vmatprep.mubr.bf16.mxu0 0
        %2286 = vmatmul.mubr.bf16.gmra.mxu0 %v2154
        %v2287 = vpop.f32.mrf.mxu0
        %v2288 = vadd.f32 0.0, %v2287
        %v2289 = vpop.f32.mrf.mxu0
        %v2290 = vpop.f32.mrf.mxu0
        %v2291 = vadd.f32 0.0, %v2290
        %v2292 = vpop.f32.mrf.mxu0
        %2293 = vmatprep.mubr.bf16.mxu0 0
        %2294 = vmatmul.mubr.bf16.gmra.mxu0 %v2155
        %v2295 = vpop.f32.mrf.mxu0
        %v2296 = vadd.f32 0.0, %v2295
        %v2297 = vpop.f32.mrf.mxu0
        %v2298 = vpop.f32.mrf.mxu0
        %v2299 = vadd.f32 0.0, %v2298
        %v2300 = vpop.f32.mrf.mxu0
        %2301 = vmatprep.mubr.bf16.mxu0 0
        %2302 = vmatmul.mubr.bf16.gmra.mxu0 %v2156
        %v2303 = vpop.f32.mrf.mxu0
        %v2304 = vadd.f32 0.0, %v2303
        %v2305 = vpop.f32.mrf.mxu0
        %v2306 = vpop.f32.mrf.mxu0
        %v2307 = vadd.f32 0.0, %v2306
        %v2308 = vpop.f32.mrf.mxu0
        %2309 = vdwg.mxu0
        %v2310 = vadd.f32 %v2064, %v2248
        %v2311 = vadd.f32 %v2065, %v2251
        %v2312 = vadd.f32 %v2066, %v2256
        %v2313 = vadd.f32 %v2067, %v2259
        %v2314 = vadd.f32 %v2068, %v2264
        %v2315 = vadd.f32 %v2069, %v2267
        %v2316 = vadd.f32 %v2070, %v2272
        %v2317 = vadd.f32 %v2071, %v2275
        %v2318 = vadd.f32 %v2072, %v2280
        %v2319 = vadd.f32 %v2073, %v2283
        %v2320 = vadd.f32 %v2074, %v2288
        %v2321 = vadd.f32 %v2075, %v2291
        %v2322 = vadd.f32 %v2076, %v2296
        %v2323 = vadd.f32 %v2077, %v2299
        %v2324 = vadd.f32 %v2078, %v2304
        %v2325 = vadd.f32 %v2079, %v2307
        %v2326 = vld [vmem:[%s2083] sm:$0xf]
        %v2327 = vld [vmem:[%s2083 + $0x4] sm:$0xf]
        %v2328 = vld [vmem:[%s2083 + $0x8] sm:$0x1]
        %v2329 = vld [vmem:[%s2083 + $0xc] sm:$0xf]
        %v2330 = vld [vmem:[%s2083 + $0x10] sm:$0xf]
        %v2331 = vld [vmem:[%s2083 + $0x14] sm:$0x1]
        %v2332 = vld [vmem:[%s2083 + $0x18] sm:$0xf]
        %v2333 = vld [vmem:[%s2083 + $0x1c] sm:$0xf]
        %v2334 = vld [vmem:[%s2083 + $0x20] sm:$0x1]
        %v2335 = vld [vmem:[%s2083 + $0x24] sm:$0xf]
        %v2336 = vld [vmem:[%s2083 + $0x28] sm:$0xf]
        %v2337 = vld [vmem:[%s2083 + $0x2c] sm:$0x1]
        %v2338 = vld [vmem:[%s2083 + $0x30] sm:$0xf]
        %v2339 = vld [vmem:[%s2083 + $0x34] sm:$0xf]
        %v2340 = vld [vmem:[%s2083 + $0x38] sm:$0x1]
        %v2341 = vld [vmem:[%s2083 + $0x3c] sm:$0xf]
        %v2342 = vld [vmem:[%s2083 + $0x40] sm:$0xf]
        %v2343 = vld [vmem:[%s2083 + $0x44] sm:$0x1]
        %v2344 = vld [vmem:[%s2083 + $0x48] sm:$0xf]
        %v2345 = vld [vmem:[%s2083 + $0x4c] sm:$0xf]
        %v2346 = vld [vmem:[%s2083 + $0x50] sm:$0x1]
        %v2347 = vld [vmem:[%s2083 + $0x54] sm:$0xf]
        %v2348 = vld [vmem:[%s2083 + $0x58] sm:$0xf]
        %v2349 = vld [vmem:[%s2083 + $0x5c] sm:$0x1]
        %v2351 = vshrl.u32 %v2326, 16
        %v2353 = vrot.slane %v2351, 4
        %v2354 = vshll.u32 %v2326, 16
        %v2356 = vrot.slane %v2354, 5
        %v2357 = vor.u32 %v2353, %v2356
        %v2358 = vrot.slane %v2357, 4
        %v2360 = vshll.u32 %v2327, 16
        %v2362 = vrot.slane %v2360, 5
        %v2363 = vsel %vm237, %v2358, %v2362
        %v2364 = vshrl.u32 %v2327, 16
        %v2366 = vrot.slane %v2364, 4
        %v2367 = vor.u32 %v2366, %v2362
        %v2368 = vrot.slane %v2367, 4
        %v2370 = vshll.u32 %v2328, 16
        %v2372 = vrot.slane %v2370, 5
        %v2373 = vsel %vm237, %v2368, %v2372
        %v2375 = vshrl.u32 %v2329, 16
        %v2377 = vrot.slane %v2375, 4
        %v2378 = vshll.u32 %v2329, 16
        %v2380 = vrot.slane %v2378, 5
        %v2381 = vor.u32 %v2377, %v2380
        %v2382 = vrot.slane %v2381, 4
        %v2384 = vshll.u32 %v2330, 16
        %v2386 = vrot.slane %v2384, 5
        %v2387 = vsel %vm237, %v2382, %v2386
        %v2388 = vshrl.u32 %v2330, 16
        %v2390 = vrot.slane %v2388, 4
        %v2391 = vor.u32 %v2390, %v2386
        %v2392 = vrot.slane %v2391, 4
        %v2394 = vshll.u32 %v2331, 16
        %v2396 = vrot.slane %v2394, 5
        %v2397 = vsel %vm237, %v2392, %v2396
        %v2399 = vshrl.u32 %v2332, 16
        %v2401 = vrot.slane %v2399, 4
        %v2402 = vshll.u32 %v2332, 16
        %v2404 = vrot.slane %v2402, 5
        %v2405 = vor.u32 %v2401, %v2404
        %v2406 = vrot.slane %v2405, 4
        %v2408 = vshll.u32 %v2333, 16
        %v2410 = vrot.slane %v2408, 5
        %v2411 = vsel %vm237, %v2406, %v2410
        %v2412 = vshrl.u32 %v2333, 16
        %v2414 = vrot.slane %v2412, 4
        %v2415 = vor.u32 %v2414, %v2410
        %v2416 = vrot.slane %v2415, 4
        %v2418 = vshll.u32 %v2334, 16
        %v2420 = vrot.slane %v2418, 5
        %v2421 = vsel %vm237, %v2416, %v2420
        %v2423 = vshrl.u32 %v2335, 16
        %v2425 = vrot.slane %v2423, 4
        %v2426 = vshll.u32 %v2335, 16
        %v2428 = vrot.slane %v2426, 5
        %v2429 = vor.u32 %v2425, %v2428
        %v2430 = vrot.slane %v2429, 4
        %v2432 = vshll.u32 %v2336, 16
        %v2434 = vrot.slane %v2432, 5
        %v2435 = vsel %vm237, %v2430, %v2434
        %v2436 = vshrl.u32 %v2336, 16
        %v2438 = vrot.slane %v2436, 4
        %v2439 = vor.u32 %v2438, %v2434
        %v2440 = vrot.slane %v2439, 4
        %v2442 = vshll.u32 %v2337, 16
        %v2444 = vrot.slane %v2442, 5
        %v2445 = vsel %vm237, %v2440, %v2444
        %v2447 = vshrl.u32 %v2338, 16
        %v2449 = vrot.slane %v2447, 4
        %v2450 = vshll.u32 %v2338, 16
        %v2452 = vrot.slane %v2450, 5
        %v2453 = vor.u32 %v2449, %v2452
        %v2454 = vrot.slane %v2453, 4
        %v2456 = vshll.u32 %v2339, 16
        %v2458 = vrot.slane %v2456, 5
        %v2459 = vsel %vm237, %v2454, %v2458
        %v2460 = vshrl.u32 %v2339, 16
        %v2462 = vrot.slane %v2460, 4
        %v2463 = vor.u32 %v2462, %v2458
        %v2464 = vrot.slane %v2463, 4
        %v2466 = vshll.u32 %v2340, 16
        %v2468 = vrot.slane %v2466, 5
        %v2469 = vsel %vm237, %v2464, %v2468
        %v2471 = vshrl.u32 %v2341, 16
        %v2473 = vrot.slane %v2471, 4
        %v2474 = vshll.u32 %v2341, 16
        %v2476 = vrot.slane %v2474, 5
        %v2477 = vor.u32 %v2473, %v2476
        %v2478 = vrot.slane %v2477, 4
        %v2480 = vshll.u32 %v2342, 16
        %v2482 = vrot.slane %v2480, 5
        %v2483 = vsel %vm237, %v2478, %v2482
        %v2484 = vshrl.u32 %v2342, 16
        %v2486 = vrot.slane %v2484, 4
        %v2487 = vor.u32 %v2486, %v2482
        %v2488 = vrot.slane %v2487, 4
        %v2490 = vshll.u32 %v2343, 16
        %v2492 = vrot.slane %v2490, 5
        %v2493 = vsel %vm237, %v2488, %v2492
        %v2495 = vshrl.u32 %v2344, 16
        %v2497 = vrot.slane %v2495, 4
        %v2498 = vshll.u32 %v2344, 16
        %v2500 = vrot.slane %v2498, 5
        %v2501 = vor.u32 %v2497, %v2500
        %v2502 = vrot.slane %v2501, 4
        %v2504 = vshll.u32 %v2345, 16
        %v2506 = vrot.slane %v2504, 5
        %v2507 = vsel %vm237, %v2502, %v2506
        %v2508 = vshrl.u32 %v2345, 16
        %v2510 = vrot.slane %v2508, 4
        %v2511 = vor.u32 %v2510, %v2506
        %v2512 = vrot.slane %v2511, 4
        %v2514 = vshll.u32 %v2346, 16
        %v2516 = vrot.slane %v2514, 5
        %v2517 = vsel %vm237, %v2512, %v2516
        %v2519 = vshrl.u32 %v2347, 16
        %v2521 = vrot.slane %v2519, 4
        %v2522 = vshll.u32 %v2347, 16
        %v2524 = vrot.slane %v2522, 5
        %v2525 = vor.u32 %v2521, %v2524
        %v2526 = vrot.slane %v2525, 4
        %v2528 = vshll.u32 %v2348, 16
        %v2530 = vrot.slane %v2528, 5
        %v2531 = vsel %vm237, %v2526, %v2530
        %v2532 = vshrl.u32 %v2348, 16
        %v2534 = vrot.slane %v2532, 4
        %v2535 = vor.u32 %v2534, %v2530
        %v2536 = vrot.slane %v2535, 4
        %v2538 = vshll.u32 %v2349, 16
        %v2540 = vrot.slane %v2538, 5
        %v2541 = vsel %vm237, %v2536, %v2540
        %s2542 = scalar_lea.vmem %s172, 448
        %v2543 = vld [vmem:[%s2542] sm:$0xf]
        %v2544 = vld [vmem:[%s2542 + $0x4] sm:$0xf]
        %v2545 = vld [vmem:[%s2542 + $0x8] sm:$0xf]
        %v2546 = vld [vmem:[%s2542 + $0xc] sm:$0xf]
        %v2547 = vld [vmem:[%s2542 + $0x10] sm:$0xf]
        %v2548 = vld [vmem:[%s2542 + $0x14] sm:$0xf]
        %v2549 = vld [vmem:[%s2542 + $0x18] sm:$0xf]
        %v2550 = vld [vmem:[%s2542 + $0x1c] sm:$0xf]
        %v2551 = vld [vmem:[%s2542 + $0x20] sm:$0xf]
        %v2552 = vld [vmem:[%s2542 + $0x24] sm:$0xf]
        %v2553 = vld [vmem:[%s2542 + $0x28] sm:$0xf]
        %v2554 = vld [vmem:[%s2542 + $0x2c] sm:$0xf]
        %v2555 = vld [vmem:[%s2542 + $0x30] sm:$0xf]
        %v2556 = vld [vmem:[%s2542 + $0x34] sm:$0xf]
        %v2557 = vld [vmem:[%s2542 + $0x38] sm:$0xf]
        %v2558 = vld [vmem:[%s2542 + $0x3c] sm:$0xf]
        %v2559 = vunpack.c.l.b16 %v2363
        %v2560 = vunpack.c.l.b16 %v2373
        %v2561 = vunpack.c.l.b16 %v2387
        %v2562 = vunpack.c.l.b16 %v2397
        %v2563 = vunpack.c.l.b16 %v2411
        %v2564 = vunpack.c.l.b16 %v2421
        %v2565 = vunpack.c.l.b16 %v2435
        %v2566 = vunpack.c.l.b16 %v2445
        %v2567 = vunpack.c.l.b16 %v2459
        %v2568 = vunpack.c.l.b16 %v2469
        %v2569 = vunpack.c.l.b16 %v2483
        %v2570 = vunpack.c.l.b16 %v2493
        %v2571 = vunpack.c.l.b16 %v2507
        %v2572 = vunpack.c.l.b16 %v2517
        %v2573 = vunpack.c.l.b16 %v2531
        %v2574 = vunpack.c.l.b16 %v2541
        %v2575 = vpack.c.b16 %v2560, %v2559
        %v2576 = vpack.c.b16 %v2562, %v2561
        %v2577 = vpack.c.b16 %v2564, %v2563
        %v2578 = vpack.c.b16 %v2566, %v2565
        %v2579 = vpack.c.b16 %v2568, %v2567
        %v2580 = vpack.c.b16 %v2570, %v2569
        %v2581 = vpack.c.b16 %v2572, %v2571
        %v2582 = vpack.c.b16 %v2574, %v2573
        %v2607 = vunpack.c.l.b16 %v2543
        %v2608 = vunpack.c.l.b16 %v2544
        %v2609 = vunpack.c.l.b16 %v2545
        %v2610 = vunpack.c.l.b16 %v2546
        %v2611 = vunpack.c.l.b16 %v2547
        %v2612 = vunpack.c.l.b16 %v2548
        %v2613 = vunpack.c.l.b16 %v2549
        %v2614 = vunpack.c.l.b16 %v2550
        %v2615 = vunpack.c.l.b16 %v2551
        %v2616 = vunpack.c.l.b16 %v2552
        %v2617 = vunpack.c.l.b16 %v2553
        %v2618 = vunpack.c.l.b16 %v2554
        %v2619 = vunpack.c.l.b16 %v2555
        %v2620 = vunpack.c.l.b16 %v2556
        %v2621 = vunpack.c.l.b16 %v2557
        %v2622 = vunpack.c.l.b16 %v2558
        %v2623 = vpack.c.b16 %v2608, %v2607
        %v2624 = vpack.c.b16 %v2610, %v2609
        %v2625 = vpack.c.b16 %v2612, %v2611
        %v2626 = vpack.c.b16 %v2614, %v2613
        %v2627 = vpack.c.b16 %v2616, %v2615
        %v2628 = vpack.c.b16 %v2618, %v2617
        %v2629 = vpack.c.b16 %v2620, %v2619
        %v2630 = vpack.c.b16 %v2622, %v2621
        %2639 = vmatprep.subr.bf16.mxu0 0
        %2640 = vmatpush1.bf16.msra.mxu0 %v2630
        %2641 = vmatprep.subr.bf16.mxu0 0
        %2642 = vmatpush1.bf16.msra.mxu0 %v2629
        %2643 = vmatprep.subr.bf16.mxu0 0
        %2644 = vmatpush1.bf16.msra.mxu0 %v2628
        %2645 = vmatprep.subr.bf16.mxu0 0
        %2646 = vmatpush1.bf16.msra.mxu0 %v2627
        %2647 = vmatprep.subr.bf16.mxu0 0
        %2648 = vmatpush1.bf16.msra.mxu0 %v2626
        %2649 = vmatprep.subr.bf16.mxu0 0
        %2650 = vmatpush1.bf16.msra.mxu0 %v2625
        %2651 = vmatprep.subr.bf16.mxu0 0
        %2652 = vmatpush1.bf16.msra.mxu0 %v2624
        %2653 = vmatprep.subr.bf16.mxu0 0
        %2654 = vmatpush1.bf16.msra.mxu0 %v2623
        %2655 = vmatprep.subr.bf16.mxu0 0
        %2656 = vmatpush2.bf16.msra.mxu0 0
        %2657 = vmatprep.subr.bf16.mxu0 0
        %2658 = vmatpush2.bf16.msra.mxu0 0
        %2659 = vmatprep.subr.bf16.mxu0 0
        %2660 = vmatpush2.bf16.msra.mxu0 0
        %2661 = vmatprep.subr.bf16.mxu0 0
        %2662 = vmatpush2.bf16.msra.mxu0 0
        %2663 = vmatprep.subr.bf16.mxu0 0
        %2664 = vmatpush2.bf16.msra.mxu0 0
        %2665 = vmatprep.subr.bf16.mxu0 0
        %2666 = vmatpush2.bf16.msra.mxu0 0
        %2667 = vmatprep.subr.bf16.mxu0 0
        %2668 = vmatpush2.bf16.msra.mxu0 0
        %2669 = vmatprep.subr.bf16.mxu0 0
        %2670 = vmatpush2.bf16.msra.mxu0 0
        %2671 = vmatprep.mubr.bf16.mxu0 0
        %2672 = vmatmul.mubr.bf16.gmra.mxu0 %v2575
        %v2673 = vpop.f32.mrf.mxu0
        %v2674 = vadd.f32 0.0, %v2673
        %v2675 = vpop.f32.mrf.mxu0
        %v2676 = vpop.f32.mrf.mxu0
        %v2677 = vadd.f32 0.0, %v2676
        %v2678 = vpop.f32.mrf.mxu0
        %2679 = vmatprep.mubr.bf16.mxu0 0
        %2680 = vmatmul.mubr.bf16.gmra.mxu0 %v2576
        %v2681 = vpop.f32.mrf.mxu0
        %v2682 = vadd.f32 0.0, %v2681
        %v2683 = vpop.f32.mrf.mxu0
        %v2684 = vpop.f32.mrf.mxu0
        %v2685 = vadd.f32 0.0, %v2684
        %v2686 = vpop.f32.mrf.mxu0
        %2687 = vmatprep.mubr.bf16.mxu0 0
        %2688 = vmatmul.mubr.bf16.gmra.mxu0 %v2577
        %v2689 = vpop.f32.mrf.mxu0
        %v2690 = vadd.f32 0.0, %v2689
        %v2691 = vpop.f32.mrf.mxu0
        %v2692 = vpop.f32.mrf.mxu0
        %v2693 = vadd.f32 0.0, %v2692
        %v2694 = vpop.f32.mrf.mxu0
        %2695 = vmatprep.mubr.bf16.mxu0 0
        %2696 = vmatmul.mubr.bf16.gmra.mxu0 %v2578
        %v2697 = vpop.f32.mrf.mxu0
        %v2698 = vadd.f32 0.0, %v2697
        %v2699 = vpop.f32.mrf.mxu0
        %v2700 = vpop.f32.mrf.mxu0
        %v2701 = vadd.f32 0.0, %v2700
        %v2702 = vpop.f32.mrf.mxu0
        %2703 = vmatprep.mubr.bf16.mxu0 0
        %2704 = vmatmul.mubr.bf16.gmra.mxu0 %v2579
        %v2705 = vpop.f32.mrf.mxu0
        %v2706 = vadd.f32 0.0, %v2705
        %v2707 = vpop.f32.mrf.mxu0
        %v2708 = vpop.f32.mrf.mxu0
        %v2709 = vadd.f32 0.0, %v2708
        %v2710 = vpop.f32.mrf.mxu0
        %2711 = vmatprep.mubr.bf16.mxu0 0
        %2712 = vmatmul.mubr.bf16.gmra.mxu0 %v2580
        %v2713 = vpop.f32.mrf.mxu0
        %v2714 = vadd.f32 0.0, %v2713
        %v2715 = vpop.f32.mrf.mxu0
        %v2716 = vpop.f32.mrf.mxu0
        %v2717 = vadd.f32 0.0, %v2716
        %v2718 = vpop.f32.mrf.mxu0
        %2719 = vmatprep.mubr.bf16.mxu0 0
        %2720 = vmatmul.mubr.bf16.gmra.mxu0 %v2581
        %v2721 = vpop.f32.mrf.mxu0
        %v2722 = vadd.f32 0.0, %v2721
        %v2723 = vpop.f32.mrf.mxu0
        %v2724 = vpop.f32.mrf.mxu0
        %v2725 = vadd.f32 0.0, %v2724
        %v2726 = vpop.f32.mrf.mxu0
        %2727 = vmatprep.mubr.bf16.mxu0 0
        %2728 = vmatmul.mubr.bf16.gmra.mxu0 %v2582
        %v2729 = vpop.f32.mrf.mxu0
        %v2730 = vadd.f32 0.0, %v2729
        %v2731 = vpop.f32.mrf.mxu0
        %v2732 = vpop.f32.mrf.mxu0
        %v2733 = vadd.f32 0.0, %v2732
        %v2734 = vpop.f32.mrf.mxu0
        %2735 = vdwg.mxu0
        %v2736 = vadd.f32 %v2310, %v2674
        %v2737 = vadd.f32 %v2311, %v2677
        %v2738 = vadd.f32 %v2312, %v2682
        %v2739 = vadd.f32 %v2313, %v2685
        %v2740 = vadd.f32 %v2314, %v2690
        %v2741 = vadd.f32 %v2315, %v2693
        %v2742 = vadd.f32 %v2316, %v2698
        %v2743 = vadd.f32 %v2317, %v2701
        %v2744 = vadd.f32 %v2318, %v2706
        %v2745 = vadd.f32 %v2319, %v2709
        %v2746 = vadd.f32 %v2320, %v2714
        %v2747 = vadd.f32 %v2321, %v2717
        %v2748 = vadd.f32 %v2322, %v2722
        %v2749 = vadd.f32 %v2323, %v2725
        %v2750 = vadd.f32 %v2324, %v2730
        %v2751 = vadd.f32 %v2325, %v2733
        %v2752 = vld [vmem:[%s2083] sm:$0xe]
        %v2753 = vld [vmem:[%s2083 + $0xc] sm:$0xe]
        %v2754 = vld [vmem:[%s2083 + $0x18] sm:$0xe]
        %v2755 = vld [vmem:[%s2083 + $0x24] sm:$0xe]
        %v2756 = vld [vmem:[%s2083 + $0x30] sm:$0xe]
        %v2757 = vld [vmem:[%s2083 + $0x3c] sm:$0xe]
        %v2758 = vld [vmem:[%s2083 + $0x48] sm:$0xe]
        %v2759 = vld [vmem:[%s2083 + $0x54] sm:$0xe]
        %v2784 = vrot.slane %v2752, 5
        %v2785 = vrot.slane %v2784, 4
        %v2786 = vrot.slane %v2327, 5
        %v2787 = vsel %vm843, %v2785, %v2786
        %v2788 = vrot.slane %v2786, 4
        %v2789 = vrot.slane %v2328, 5
        %v2790 = vsel %vm843, %v2788, %v2789
        %v2791 = vrot.slane %v2753, 5
        %v2792 = vrot.slane %v2791, 4
        %v2793 = vrot.slane %v2330, 5
        %v2794 = vsel %vm843, %v2792, %v2793
        %v2795 = vrot.slane %v2793, 4
        %v2796 = vrot.slane %v2331, 5
        %v2797 = vsel %vm843, %v2795, %v2796
        %v2798 = vrot.slane %v2754, 5
        %v2799 = vrot.slane %v2798, 4
        %v2800 = vrot.slane %v2333, 5
        %v2801 = vsel %vm843, %v2799, %v2800
        %v2802 = vrot.slane %v2800, 4
        %v2803 = vrot.slane %v2334, 5
        %v2804 = vsel %vm843, %v2802, %v2803
        %v2805 = vrot.slane %v2755, 5
        %v2806 = vrot.slane %v2805, 4
        %v2807 = vrot.slane %v2336, 5
        %v2808 = vsel %vm843, %v2806, %v2807
        %v2809 = vrot.slane %v2807, 4
        %v2810 = vrot.slane %v2337, 5
        %v2811 = vsel %vm843, %v2809, %v2810
        %v2812 = vrot.slane %v2756, 5
        %v2813 = vrot.slane %v2812, 4
        %v2814 = vrot.slane %v2339, 5
        %v2815 = vsel %vm843, %v2813, %v2814
        %v2816 = vrot.slane %v2814, 4
        %v2817 = vrot.slane %v2340, 5
        %v2818 = vsel %vm843, %v2816, %v2817
        %v2819 = vrot.slane %v2757, 5
        %v2820 = vrot.slane %v2819, 4
        %v2821 = vrot.slane %v2342, 5
        %v2822 = vsel %vm843, %v2820, %v2821
        %v2823 = vrot.slane %v2821, 4
        %v2824 = vrot.slane %v2343, 5
        %v2825 = vsel %vm843, %v2823, %v2824
        %v2826 = vrot.slane %v2758, 5
        %v2827 = vrot.slane %v2826, 4
        %v2828 = vrot.slane %v2345, 5
        %v2829 = vsel %vm843, %v2827, %v2828
        %v2830 = vrot.slane %v2828, 4
        %v2831 = vrot.slane %v2346, 5
        %v2832 = vsel %vm843, %v2830, %v2831
        %v2833 = vrot.slane %v2759, 5
        %v2834 = vrot.slane %v2833, 4
        %v2835 = vrot.slane %v2348, 5
        %v2836 = vsel %vm843, %v2834, %v2835
        %v2837 = vrot.slane %v2835, 4
        %v2838 = vrot.slane %v2349, 5
        %v2839 = vsel %vm843, %v2837, %v2838
        %s2840 = scalar_lea.vmem %s172, 512
        %v2841 = vld [vmem:[%s2840] sm:$0xf]
        %v2842 = vld [vmem:[%s2840 + $0x4] sm:$0xf]
        %v2843 = vld [vmem:[%s2840 + $0x8] sm:$0xf]
        %v2844 = vld [vmem:[%s2840 + $0xc] sm:$0xf]
        %v2845 = vld [vmem:[%s2840 + $0x10] sm:$0xf]
        %v2846 = vld [vmem:[%s2840 + $0x14] sm:$0xf]
        %v2847 = vld [vmem:[%s2840 + $0x18] sm:$0xf]
        %v2848 = vld [vmem:[%s2840 + $0x1c] sm:$0xf]
        %v2849 = vld [vmem:[%s2840 + $0x20] sm:$0xf]
        %v2850 = vld [vmem:[%s2840 + $0x24] sm:$0xf]
        %v2851 = vld [vmem:[%s2840 + $0x28] sm:$0xf]
        %v2852 = vld [vmem:[%s2840 + $0x2c] sm:$0xf]
        %v2853 = vld [vmem:[%s2840 + $0x30] sm:$0xf]
        %v2854 = vld [vmem:[%s2840 + $0x34] sm:$0xf]
        %v2855 = vld [vmem:[%s2840 + $0x38] sm:$0xf]
        %v2856 = vld [vmem:[%s2840 + $0x3c] sm:$0xf]
        %v2857 = vunpack.c.l.b16 %v2787
        %v2858 = vunpack.c.l.b16 %v2790
        %v2859 = vunpack.c.l.b16 %v2794
        %v2860 = vunpack.c.l.b16 %v2797
        %v2861 = vunpack.c.l.b16 %v2801
        %v2862 = vunpack.c.l.b16 %v2804
        %v2863 = vunpack.c.l.b16 %v2808
        %v2864 = vunpack.c.l.b16 %v2811
        %v2865 = vunpack.c.l.b16 %v2815
        %v2866 = vunpack.c.l.b16 %v2818
        %v2867 = vunpack.c.l.b16 %v2822
        %v2868 = vunpack.c.l.b16 %v2825
        %v2869 = vunpack.c.l.b16 %v2829
        %v2870 = vunpack.c.l.b16 %v2832
        %v2871 = vunpack.c.l.b16 %v2836
        %v2872 = vunpack.c.l.b16 %v2839
        %v2873 = vpack.c.b16 %v2858, %v2857
        %v2874 = vpack.c.b16 %v2860, %v2859
        %v2875 = vpack.c.b16 %v2862, %v2861
        %v2876 = vpack.c.b16 %v2864, %v2863
        %v2877 = vpack.c.b16 %v2866, %v2865
        %v2878 = vpack.c.b16 %v2868, %v2867
        %v2879 = vpack.c.b16 %v2870, %v2869
        %v2880 = vpack.c.b16 %v2872, %v2871
        %v2905 = vunpack.c.l.b16 %v2841
        %v2906 = vunpack.c.l.b16 %v2842
        %v2907 = vunpack.c.l.b16 %v2843
        %v2908 = vunpack.c.l.b16 %v2844
        %v2909 = vunpack.c.l.b16 %v2845
        %v2910 = vunpack.c.l.b16 %v2846
        %v2911 = vunpack.c.l.b16 %v2847
        %v2912 = vunpack.c.l.b16 %v2848
        %v2913 = vunpack.c.l.b16 %v2849
        %v2914 = vunpack.c.l.b16 %v2850
        %v2915 = vunpack.c.l.b16 %v2851
        %v2916 = vunpack.c.l.b16 %v2852
        %v2917 = vunpack.c.l.b16 %v2853
        %v2918 = vunpack.c.l.b16 %v2854
        %v2919 = vunpack.c.l.b16 %v2855
        %v2920 = vunpack.c.l.b16 %v2856
        %v2921 = vpack.c.b16 %v2906, %v2905
        %v2922 = vpack.c.b16 %v2908, %v2907
        %v2923 = vpack.c.b16 %v2910, %v2909
        %v2924 = vpack.c.b16 %v2912, %v2911
        %v2925 = vpack.c.b16 %v2914, %v2913
        %v2926 = vpack.c.b16 %v2916, %v2915
        %v2927 = vpack.c.b16 %v2918, %v2917
        %v2928 = vpack.c.b16 %v2920, %v2919
        %2937 = vmatprep.subr.bf16.mxu0 0
        %2938 = vmatpush1.bf16.msra.mxu0 %v2928
        %2939 = vmatprep.subr.bf16.mxu0 0
        %2940 = vmatpush1.bf16.msra.mxu0 %v2927
        %2941 = vmatprep.subr.bf16.mxu0 0
        %2942 = vmatpush1.bf16.msra.mxu0 %v2926
        %2943 = vmatprep.subr.bf16.mxu0 0
        %2944 = vmatpush1.bf16.msra.mxu0 %v2925
        %2945 = vmatprep.subr.bf16.mxu0 0
        %2946 = vmatpush1.bf16.msra.mxu0 %v2924
        %2947 = vmatprep.subr.bf16.mxu0 0
        %2948 = vmatpush1.bf16.msra.mxu0 %v2923
        %2949 = vmatprep.subr.bf16.mxu0 0
        %2950 = vmatpush1.bf16.msra.mxu0 %v2922
        %2951 = vmatprep.subr.bf16.mxu0 0
        %2952 = vmatpush1.bf16.msra.mxu0 %v2921
        %2953 = vmatprep.subr.bf16.mxu0 0
        %2954 = vmatpush2.bf16.msra.mxu0 0
        %2955 = vmatprep.subr.bf16.mxu0 0
        %2956 = vmatpush2.bf16.msra.mxu0 0
        %2957 = vmatprep.subr.bf16.mxu0 0
        %2958 = vmatpush2.bf16.msra.mxu0 0
        %2959 = vmatprep.subr.bf16.mxu0 0
        %2960 = vmatpush2.bf16.msra.mxu0 0
        %2961 = vmatprep.subr.bf16.mxu0 0
        %2962 = vmatpush2.bf16.msra.mxu0 0
        %2963 = vmatprep.subr.bf16.mxu0 0
        %2964 = vmatpush2.bf16.msra.mxu0 0
        %2965 = vmatprep.subr.bf16.mxu0 0
        %2966 = vmatpush2.bf16.msra.mxu0 0
        %2967 = vmatprep.subr.bf16.mxu0 0
        %2968 = vmatpush2.bf16.msra.mxu0 0
        %2969 = vmatprep.mubr.bf16.mxu0 0
        %2970 = vmatmul.mubr.bf16.gmra.mxu0 %v2873
        %v2971 = vpop.f32.mrf.mxu0
        %v2972 = vadd.f32 0.0, %v2971
        %v2973 = vpop.f32.mrf.mxu0
        %v2974 = vpop.f32.mrf.mxu0
        %v2975 = vadd.f32 0.0, %v2974
        %v2976 = vpop.f32.mrf.mxu0
        %2977 = vmatprep.mubr.bf16.mxu0 0
        %2978 = vmatmul.mubr.bf16.gmra.mxu0 %v2874
        %v2979 = vpop.f32.mrf.mxu0
        %v2980 = vadd.f32 0.0, %v2979
        %v2981 = vpop.f32.mrf.mxu0
        %v2982 = vpop.f32.mrf.mxu0
        %v2983 = vadd.f32 0.0, %v2982
        %v2984 = vpop.f32.mrf.mxu0
        %2985 = vmatprep.mubr.bf16.mxu0 0
        %2986 = vmatmul.mubr.bf16.gmra.mxu0 %v2875
        %v2987 = vpop.f32.mrf.mxu0
        %v2988 = vadd.f32 0.0, %v2987
        %v2989 = vpop.f32.mrf.mxu0
        %v2990 = vpop.f32.mrf.mxu0
        %v2991 = vadd.f32 0.0, %v2990
        %v2992 = vpop.f32.mrf.mxu0
        %2993 = vmatprep.mubr.bf16.mxu0 0
        %2994 = vmatmul.mubr.bf16.gmra.mxu0 %v2876
        %v2995 = vpop.f32.mrf.mxu0
        %v2996 = vadd.f32 0.0, %v2995
        %v2997 = vpop.f32.mrf.mxu0
        %v2998 = vpop.f32.mrf.mxu0
        %v2999 = vadd.f32 0.0, %v2998
        %v3000 = vpop.f32.mrf.mxu0
        %3001 = vmatprep.mubr.bf16.mxu0 0
        %3002 = vmatmul.mubr.bf16.gmra.mxu0 %v2877
        %v3003 = vpop.f32.mrf.mxu0
        %v3004 = vadd.f32 0.0, %v3003
        %v3005 = vpop.f32.mrf.mxu0
        %v3006 = vpop.f32.mrf.mxu0
        %v3007 = vadd.f32 0.0, %v3006
        %v3008 = vpop.f32.mrf.mxu0
        %3009 = vmatprep.mubr.bf16.mxu0 0
        %3010 = vmatmul.mubr.bf16.gmra.mxu0 %v2878
        %v3011 = vpop.f32.mrf.mxu0
        %v3012 = vadd.f32 0.0, %v3011
        %v3013 = vpop.f32.mrf.mxu0
        %v3014 = vpop.f32.mrf.mxu0
        %v3015 = vadd.f32 0.0, %v3014
        %v3016 = vpop.f32.mrf.mxu0
        %3017 = vmatprep.mubr.bf16.mxu0 0
        %3018 = vmatmul.mubr.bf16.gmra.mxu0 %v2879
        %v3019 = vpop.f32.mrf.mxu0
        %v3020 = vadd.f32 0.0, %v3019
        %v3021 = vpop.f32.mrf.mxu0
        %v3022 = vpop.f32.mrf.mxu0
        %v3023 = vadd.f32 0.0, %v3022
        %v3024 = vpop.f32.mrf.mxu0
        %3025 = vmatprep.mubr.bf16.mxu0 0
        %3026 = vmatmul.mubr.bf16.gmra.mxu0 %v2880
        %v3027 = vpop.f32.mrf.mxu0
        %v3028 = vadd.f32 0.0, %v3027
        %v3029 = vpop.f32.mrf.mxu0
        %v3030 = vpop.f32.mrf.mxu0
        %v3031 = vadd.f32 0.0, %v3030
        %v3032 = vpop.f32.mrf.mxu0
        %3033 = vdwg.mxu0
        %v3034 = vadd.f32 %v2736, %v2972
        %v3035 = vadd.f32 %v2737, %v2975
        %v3036 = vadd.f32 %v2738, %v2980
        %v3037 = vadd.f32 %v2739, %v2983
        %v3038 = vadd.f32 %v2740, %v2988
        %v3039 = vadd.f32 %v2741, %v2991
        %v3040 = vadd.f32 %v2742, %v2996
        %v3041 = vadd.f32 %v2743, %v2999
        %v3042 = vadd.f32 %v2744, %v3004
        %v3043 = vadd.f32 %v2745, %v3007
        %v3044 = vadd.f32 %v2746, %v3012
        %v3045 = vadd.f32 %v2747, %v3015
        %v3046 = vadd.f32 %v2748, %v3020
        %v3047 = vadd.f32 %v2749, %v3023
        %v3048 = vadd.f32 %v2750, %v3028
        %v3049 = vadd.f32 %v2751, %v3031
        %v3050 = vld [vmem:[#allocation3] sm:$0x1]
        %v3051 = vadd.f32 %v3034, %v3035
        %v3052 = vadd.f32 %v3051, %v3036
        %v3053 = vadd.f32 %v3052, %v3037
        %v3054 = vadd.f32 %v3053, %v3038
        %v3055 = vadd.f32 %v3054, %v3039
        %v3056 = vadd.f32 %v3055, %v3040
        %v3057 = vadd.f32 %v3056, %v3041
        %v3058 = vadd.f32 %v3057, %v3042
        %v3059 = vadd.f32 %v3058, %v3043
        %v3060 = vadd.f32 %v3059, %v3044
        %v3061 = vadd.f32 %v3060, %v3045
        %v3062 = vadd.f32 %v3061, %v3046
        %v3063 = vadd.f32 %v3062, %v3047
        %v3064 = vadd.f32 %v3063, %v3048
        %v3065 = vadd.f32 %v3064, %v3049
        %v3066 = vrot.slane %v3065, 4
        %v3067 = vadd.f32 %v3065, %v3066
        %v3068 = vrot.slane %v3067, 2
        %v3069 = vadd.f32 %v3067, %v3068
        %v3070 = vrot.slane %v3069, 1
        %v3071 = vadd.f32 %v3069, %v3070
        %v3072 = vadd.f32 %v3050, %v3071
        %3073 = vst [vmem:[#allocation3] sm:$0x1] %v3072
        %v3074 = vld [vmem:[#allocation4] sm:$0x1]
        %v3075 = vmul.f32 %v3034, %v3034
        %v3076 = vmul.f32 %v3035, %v3035
        %v3077 = vmul.f32 %v3036, %v3036
        %v3078 = vmul.f32 %v3037, %v3037
        %v3079 = vmul.f32 %v3038, %v3038
        %v3080 = vmul.f32 %v3039, %v3039
        %v3081 = vmul.f32 %v3040, %v3040
        %v3082 = vmul.f32 %v3041, %v3041
        %v3083 = vmul.f32 %v3042, %v3042
        %v3084 = vmul.f32 %v3043, %v3043
        %v3085 = vmul.f32 %v3044, %v3044
        %v3086 = vmul.f32 %v3045, %v3045
        %v3087 = vmul.f32 %v3046, %v3046
        %v3088 = vmul.f32 %v3047, %v3047
        %v3089 = vmul.f32 %v3048, %v3048
        %v3090 = vmul.f32 %v3049, %v3049
        %v3091 = vadd.f32 %v3075, %v3076
        %v3092 = vadd.f32 %v3091, %v3077
        %v3093 = vadd.f32 %v3092, %v3078
        %v3094 = vadd.f32 %v3093, %v3079
        %v3095 = vadd.f32 %v3094, %v3080
        %v3096 = vadd.f32 %v3095, %v3081
        %v3097 = vadd.f32 %v3096, %v3082
        %v3098 = vadd.f32 %v3097, %v3083
        %v3099 = vadd.f32 %v3098, %v3084
        %v3100 = vadd.f32 %v3099, %v3085
        %v3101 = vadd.f32 %v3100, %v3086
        %v3102 = vadd.f32 %v3101, %v3087
        %v3103 = vadd.f32 %v3102, %v3088
        %v3104 = vadd.f32 %v3103, %v3089
        %v3105 = vadd.f32 %v3104, %v3090
        %v3106 = vrot.slane %v3105, 4
        %v3107 = vadd.f32 %v3105, %v3106
        %v3108 = vrot.slane %v3107, 2
        %v3109 = vadd.f32 %v3107, %v3108
        %v3110 = vrot.slane %v3109, 1
        %v3111 = vadd.f32 %v3109, %v3110
        %v3112 = vadd.f32 %v3074, %v3111
        %3113 = vst [vmem:[#allocation4] sm:$0x1] %v3112
        %v3114 = vpack.c.bf16 %v3035, %v3034
        %v3115 = vpack.c.bf16 %v3037, %v3036
        %v3116 = vpack.c.bf16 %v3039, %v3038
        %v3117 = vpack.c.bf16 %v3041, %v3040
        %v3118 = vpack.c.bf16 %v3043, %v3042
        %v3119 = vpack.c.bf16 %v3045, %v3044
        %v3120 = vpack.c.bf16 %v3047, %v3046
        %v3121 = vpack.c.bf16 %v3049, %v3048
        %v3130 = vunpack.c.l.b16 %v3114
        %v3131 = vunpack.c.h.b16 %v3114
        %v3132 = vunpack.c.l.b16 %v3115
        %v3133 = vunpack.c.h.b16 %v3115
        %v3134 = vunpack.c.l.b16 %v3116
        %v3135 = vunpack.c.h.b16 %v3116
        %v3136 = vunpack.c.l.b16 %v3117
        %v3137 = vunpack.c.h.b16 %v3117
        %v3138 = vunpack.c.l.b16 %v3118
        %v3139 = vunpack.c.h.b16 %v3118
        %v3140 = vunpack.c.l.b16 %v3119
        %v3141 = vunpack.c.h.b16 %v3119
        %v3142 = vunpack.c.l.b16 %v3120
        %v3143 = vunpack.c.h.b16 %v3120
        %v3144 = vunpack.c.l.b16 %v3121
        %v3145 = vunpack.c.h.b16 %v3121
        %v3146 = vpack.c.b16 %v3130, %v3130
        %v3147 = vpack.c.b16 %v3131, %v3131
        %v3148 = vpack.c.b16 %v3132, %v3132
        %v3149 = vpack.c.b16 %v3133, %v3133
        %v3150 = vpack.c.b16 %v3134, %v3134
        %v3151 = vpack.c.b16 %v3135, %v3135
        %v3152 = vpack.c.b16 %v3136, %v3136
        %v3153 = vpack.c.b16 %v3137, %v3137
        %v3154 = vpack.c.b16 %v3138, %v3138
        %v3155 = vpack.c.b16 %v3139, %v3139
        %v3156 = vpack.c.b16 %v3140, %v3140
        %v3157 = vpack.c.b16 %v3141, %v3141
        %v3158 = vpack.c.b16 %v3142, %v3142
        %v3159 = vpack.c.b16 %v3143, %v3143
        %v3160 = vpack.c.b16 %v3144, %v3144
        %v3161 = vpack.c.b16 %v3145, %v3145
        %s3178 = sshra.s32 %s191, 3
        %s3179 = sand.u32 %s191, 7
        %s3180 = smul.addr %s3178, 4
        %s3181 = scalar_lea.vmem [#allocation2], %s3180
        %3182 = vst [vmem:[%s3181] sm:$0xf] %v3146
        %3183 = vst [vmem:[%s3181 + $0x4] sm:$0xf] %v3147
        %3184 = vst [vmem:[%s3181 + $0x8] sm:$0xf] %v3148
        %3185 = vst [vmem:[%s3181 + $0xc] sm:$0xf] %v3149
        %3186 = vst [vmem:[%s3181 + $0x10] sm:$0xf] %v3150
        %3187 = vst [vmem:[%s3181 + $0x14] sm:$0xf] %v3151
        %3188 = vst [vmem:[%s3181 + $0x18] sm:$0xf] %v3152
        %3189 = vst [vmem:[%s3181 + $0x1c] sm:$0xf] %v3153
        %3190 = vst [vmem:[%s3181 + $0x20] sm:$0xf] %v3154
        %3191 = vst [vmem:[%s3181 + $0x24] sm:$0xf] %v3155
        %3192 = vst [vmem:[%s3181 + $0x28] sm:$0xf] %v3156
        %3193 = vst [vmem:[%s3181 + $0x2c] sm:$0xf] %v3157
        %3194 = vst [vmem:[%s3181 + $0x30] sm:$0xf] %v3158
        %3195 = vst [vmem:[%s3181 + $0x34] sm:$0xf] %v3159
        %3196 = vst [vmem:[%s3181 + $0x38] sm:$0xf] %v3160
        %3197 = vst [vmem:[%s3181 + $0x3c] sm:$0xf] %v3161
      $region33: #{resnet_block_forward.2} parent=27 // loop_footer
        %s189 = sadd.s32 1, %s185
      $region34: #{resnet_block_forward.2} parent=27 // loop_footer_branch
        %184 = sbr.rel target = $region30
      $region35: #{resnet_block_forward.2} parent=27 // loop_exit
        _
      %v3198 = vld [vmem:[#allocation3] sm:$0x1]
      %v3199 = vmul.f32 %v3198, 0.00390625
      %v3200 = vld [vmem:[#allocation4] sm:$0x1]
      %v3201 = vmul.f32 %v3200, 0.00390625
      %v3202 = vmul.f32 %v3199, %v3199
      %v3203 = vsub.f32 %v3201, %v3202
      %v3204 = vmax.f32 %v3203, 0.0
      %v3205 = vadd.f32 %v3204, 1e-05
      %v3206 = vrsqrt.pop %v3205
      loop: start=0, step=1, limit=2
      $region36: #{resnet_block_forward.2} parent=27 // loop_pre_header
        _
      $region37: #{resnet_block_forward.2} parent=27 // loop_header
        %s3208 = sphi 0, %s3212
        %p3209 = scmp.ge.s32.totalorder %s3208, 2
      $region38: #{resnet_block_forward.2} parent=27 // loop_header_branch
        %3211 = sbr.rel (%p3209) target = $region42
      $region39: #{resnet_block_forward.2} parent=27 // loop_body
        %s3213 = smul.u32 %s3208, 8
        %s3214 = smul.u32 %s3208, 128
        %s3215 = sshra.s32 %s3214, 3
        %s3216 = sand.u32 %s3214, 7
        %s3217 = smul.addr %s3215, 4
        %s3218 = scalar_lea.vmem [#allocation2], %s3217
        %v3219 = vld [vmem:[%s3218] sm:$0xf]
        %v3220 = vld [vmem:[%s3218 + $0x4] sm:$0xf]
        %v3221 = vld [vmem:[%s3218 + $0x8] sm:$0xf]
        %v3222 = vld [vmem:[%s3218 + $0xc] sm:$0xf]
        %v3223 = vld [vmem:[%s3218 + $0x10] sm:$0xf]
        %v3224 = vld [vmem:[%s3218 + $0x14] sm:$0xf]
        %v3225 = vld [vmem:[%s3218 + $0x18] sm:$0xf]
        %v3226 = vld [vmem:[%s3218 + $0x1c] sm:$0xf]
        %v3227 = vld [vmem:[%s3218 + $0x20] sm:$0xf]
        %v3228 = vld [vmem:[%s3218 + $0x24] sm:$0xf]
        %v3229 = vld [vmem:[%s3218 + $0x28] sm:$0xf]
        %v3230 = vld [vmem:[%s3218 + $0x2c] sm:$0xf]
        %v3231 = vld [vmem:[%s3218 + $0x30] sm:$0xf]
        %v3232 = vld [vmem:[%s3218 + $0x34] sm:$0xf]
        %v3233 = vld [vmem:[%s3218 + $0x38] sm:$0xf]
        %v3234 = vld [vmem:[%s3218 + $0x3c] sm:$0xf]
        %v3235 = vunpack.c.l.bf16 %v3219
        %v3236 = vunpack.c.l.bf16 %v3220
        %v3237 = vunpack.c.l.bf16 %v3221
        %v3238 = vunpack.c.l.bf16 %v3222
        %v3239 = vunpack.c.l.bf16 %v3223
        %v3240 = vunpack.c.l.bf16 %v3224
        %v3241 = vunpack.c.l.bf16 %v3225
        %v3242 = vunpack.c.l.bf16 %v3226
        %v3243 = vunpack.c.l.bf16 %v3227
        %v3244 = vunpack.c.l.bf16 %v3228
        %v3245 = vunpack.c.l.bf16 %v3229
        %v3246 = vunpack.c.l.bf16 %v3230
        %v3247 = vunpack.c.l.bf16 %v3231
        %v3248 = vunpack.c.l.bf16 %v3232
        %v3249 = vunpack.c.l.bf16 %v3233
        %v3250 = vunpack.c.l.bf16 %v3234
        %v3252 = vlaneseq
        %v3253 = vshrl.u32 %v3252, 7
        %v3254 = vsub.s32 0, %v3253
        %v3255 = vrot.slane %v3199, %v3254
        %v3257 = vsub.f32 %v3235, %v3255
        %v3258 = vsub.f32 %v3236, %v3255
        %v3259 = vsub.f32 %v3237, %v3255
        %v3260 = vsub.f32 %v3238, %v3255
        %v3261 = vsub.f32 %v3239, %v3255
        %v3262 = vsub.f32 %v3240, %v3255
        %v3263 = vsub.f32 %v3241, %v3255
        %v3264 = vsub.f32 %v3242, %v3255
        %v3265 = vsub.f32 %v3243, %v3255
        %v3266 = vsub.f32 %v3244, %v3255
        %v3267 = vsub.f32 %v3245, %v3255
        %v3268 = vsub.f32 %v3246, %v3255
        %v3269 = vsub.f32 %v3247, %v3255
        %v3270 = vsub.f32 %v3248, %v3255
        %v3271 = vsub.f32 %v3249, %v3255
        %v3272 = vsub.f32 %v3250, %v3255
        %v3274 = vlaneseq
        %v3275 = vshrl.u32 %v3274, 7
        %v3276 = vsub.s32 0, %v3275
        %v3277 = vrot.slane %v3206, %v3276
        %v3279 = vmul.f32 %v3257, %v3277
        %v3280 = vmul.f32 %v3258, %v3277
        %v3281 = vmul.f32 %v3259, %v3277
        %v3282 = vmul.f32 %v3260, %v3277
        %v3283 = vmul.f32 %v3261, %v3277
        %v3284 = vmul.f32 %v3262, %v3277
        %v3285 = vmul.f32 %v3263, %v3277
        %v3286 = vmul.f32 %v3264, %v3277
        %v3287 = vmul.f32 %v3265, %v3277
        %v3288 = vmul.f32 %v3266, %v3277
        %v3289 = vmul.f32 %v3267, %v3277
        %v3290 = vmul.f32 %v3268, %v3277
        %v3291 = vmul.f32 %v3269, %v3277
        %v3292 = vmul.f32 %v3270, %v3277
        %v3293 = vmul.f32 %v3271, %v3277
        %v3294 = vmul.f32 %v3272, %v3277
        %v3295 = vmax.f32 %v3279, 0.0
        %v3296 = vmax.f32 %v3280, 0.0
        %v3297 = vmax.f32 %v3281, 0.0
        %v3298 = vmax.f32 %v3282, 0.0
        %v3299 = vmax.f32 %v3283, 0.0
        %v3300 = vmax.f32 %v3284, 0.0
        %v3301 = vmax.f32 %v3285, 0.0
        %v3302 = vmax.f32 %v3286, 0.0
        %v3303 = vmax.f32 %v3287, 0.0
        %v3304 = vmax.f32 %v3288, 0.0
        %v3305 = vmax.f32 %v3289, 0.0
        %v3306 = vmax.f32 %v3290, 0.0
        %v3307 = vmax.f32 %v3291, 0.0
        %v3308 = vmax.f32 %v3292, 0.0
        %v3309 = vmax.f32 %v3293, 0.0
        %v3310 = vmax.f32 %v3294, 0.0
        %v3319 = vrot.slane %v3295, 1
        %v3320 = vrot.slane %v3297, 1
        %v3321 = vrot.slane %v3299, 1
        %v3322 = vrot.slane %v3301, 1
        %v3323 = vrot.slane %v3303, 1
        %v3324 = vrot.slane %v3305, 1
        %v3325 = vrot.slane %v3307, 1
        %v3326 = vrot.slane %v3309, 1
        %vm3343 = vcmask 1040384
        %v3344 = vrot.slane %v3295, 7
        %v3345 = vrot.slane %v3296, 7
        %v3346 = vsel %vm3343, %v3344, %v3345
        %v3347 = vrot.slane %v3297, 7
        %v3348 = vrot.slane %v3298, 7
        %v3349 = vsel %vm3343, %v3347, %v3348
        %v3350 = vrot.slane %v3299, 7
        %v3351 = vrot.slane %v3300, 7
        %v3352 = vsel %vm3343, %v3350, %v3351
        %v3353 = vrot.slane %v3301, 7
        %v3354 = vrot.slane %v3302, 7
        %v3355 = vsel %vm3343, %v3353, %v3354
        %v3356 = vrot.slane %v3303, 7
        %v3357 = vrot.slane %v3304, 7
        %v3358 = vsel %vm3343, %v3356, %v3357
        %v3359 = vrot.slane %v3305, 7
        %v3360 = vrot.slane %v3306, 7
        %v3361 = vsel %vm3343, %v3359, %v3360
        %v3362 = vrot.slane %v3307, 7
        %v3363 = vrot.slane %v3308, 7
        %v3364 = vsel %vm3343, %v3362, %v3363
        %v3365 = vrot.slane %v3309, 7
        %v3366 = vrot.slane %v3310, 7
        %v3367 = vsel %vm3343, %v3365, %v3366
        %v3392 = vrot.slane %v3296, 5
        %v3393 = vrot.slane %v3298, 5
        %v3394 = vrot.slane %v3300, 5
        %v3395 = vrot.slane %v3302, 5
        %v3396 = vrot.slane %v3304, 5
        %v3397 = vrot.slane %v3306, 5
        %v3398 = vrot.slane %v3308, 5
        %v3399 = vrot.slane %v3310, 5
        %v3408 = vsel %vm3343, %v3319, %v3344
        %v3409 = vsel %vm3343, %v3320, %v3347
        %v3410 = vsel %vm3343, %v3321, %v3350
        %v3411 = vsel %vm3343, %v3322, %v3353
        %v3412 = vsel %vm3343, %v3323, %v3356
        %v3413 = vsel %vm3343, %v3324, %v3359
        %v3414 = vsel %vm3343, %v3325, %v3362
        %v3415 = vsel %vm3343, %v3326, %v3365
        %v3416 = vsel %vm3343, %v3345, %v3392
        %v3417 = vsel %vm3343, %v3348, %v3393
        %v3418 = vsel %vm3343, %v3351, %v3394
        %v3419 = vsel %vm3343, %v3354, %v3395
        %v3420 = vsel %vm3343, %v3357, %v3396
        %v3421 = vsel %vm3343, %v3360, %v3397
        %v3422 = vsel %vm3343, %v3363, %v3398
        %v3423 = vsel %vm3343, %v3366, %v3399
        %v3424 = vpack.c.bf16 %v3346, %v3408
        %v3425 = vpack.c.bf16 %v3416, %v3416
        %v3426 = vpack.c.bf16 %v3349, %v3409
        %v3427 = vpack.c.bf16 %v3417, %v3417
        %v3428 = vpack.c.bf16 %v3352, %v3410
        %v3429 = vpack.c.bf16 %v3418, %v3418
        %v3430 = vpack.c.bf16 %v3355, %v3411
        %v3431 = vpack.c.bf16 %v3419, %v3419
        %v3432 = vpack.c.bf16 %v3358, %v3412
        %v3433 = vpack.c.bf16 %v3420, %v3420
        %v3434 = vpack.c.bf16 %v3361, %v3413
        %v3435 = vpack.c.bf16 %v3421, %v3421
        %v3436 = vpack.c.bf16 %v3364, %v3414
        %v3437 = vpack.c.bf16 %v3422, %v3422
        %v3438 = vpack.c.bf16 %v3367, %v3415
        %v3439 = vpack.c.bf16 %v3423, %v3423
        %s3440 = sadd.s32 %s3213, 1
        %v3457 = vunpack.c.l.b16 %v3424
        %v3458 = vunpack.c.h.b16 %v3424
        %v3459 = vunpack.c.l.b16 %v3425
        %v3460 = vunpack.c.l.b16 %v3426
        %v3461 = vunpack.c.h.b16 %v3426
        %v3462 = vunpack.c.l.b16 %v3427
        %v3463 = vunpack.c.l.b16 %v3428
        %v3464 = vunpack.c.h.b16 %v3428
        %v3465 = vunpack.c.l.b16 %v3429
        %v3466 = vunpack.c.l.b16 %v3430
        %v3467 = vunpack.c.h.b16 %v3430
        %v3468 = vunpack.c.l.b16 %v3431
        %v3469 = vunpack.c.l.b16 %v3432
        %v3470 = vunpack.c.h.b16 %v3432
        %v3471 = vunpack.c.l.b16 %v3433
        %v3472 = vunpack.c.l.b16 %v3434
        %v3473 = vunpack.c.h.b16 %v3434
        %v3474 = vunpack.c.l.b16 %v3435
        %v3475 = vunpack.c.l.b16 %v3436
        %v3476 = vunpack.c.h.b16 %v3436
        %v3477 = vunpack.c.l.b16 %v3437
        %v3478 = vunpack.c.l.b16 %v3438
        %v3479 = vunpack.c.h.b16 %v3438
        %v3480 = vunpack.c.l.b16 %v3439
        %v3481 = vpack.c.b16 %v3457, %v3457
        %v3482 = vpack.c.b16 %v3458, %v3458
        %v3483 = vpack.c.b16 %v3459, %v3459
        %v3484 = vpack.c.b16 %v3460, %v3460
        %v3485 = vpack.c.b16 %v3461, %v3461
        %v3486 = vpack.c.b16 %v3462, %v3462
        %v3487 = vpack.c.b16 %v3463, %v3463
        %v3488 = vpack.c.b16 %v3464, %v3464
        %v3489 = vpack.c.b16 %v3465, %v3465
        %v3490 = vpack.c.b16 %v3466, %v3466
        %v3491 = vpack.c.b16 %v3467, %v3467
        %v3492 = vpack.c.b16 %v3468, %v3468
        %v3493 = vpack.c.b16 %v3469, %v3469
        %v3494 = vpack.c.b16 %v3470, %v3470
        %v3495 = vpack.c.b16 %v3471, %v3471
        %v3496 = vpack.c.b16 %v3472, %v3472
        %v3497 = vpack.c.b16 %v3473, %v3473
        %v3498 = vpack.c.b16 %v3474, %v3474
        %v3499 = vpack.c.b16 %v3475, %v3475
        %v3500 = vpack.c.b16 %v3476, %v3476
        %v3501 = vpack.c.b16 %v3477, %v3477
        %v3502 = vpack.c.b16 %v3478, %v3478
        %v3503 = vpack.c.b16 %v3479, %v3479
        %v3504 = vpack.c.b16 %v3480, %v3480
        %s3529 = smul.u32 %s3440, 3
        %s3530 = smul.addr %s3529, 4
        %s3531 = scalar_lea.vmem %s180, %s3530
        %3532 = vst [vmem:[%s3531] sm:$0xf] %v3481
        %3533 = vst [vmem:[%s3531 + $0x4] sm:$0xf] %v3482
        %3534 = vst [vmem:[%s3531 + $0x8] sm:$0x1] %v3483
        %3535 = vst [vmem:[%s3531 + $0xc] sm:$0xf] %v3484
        %3536 = vst [vmem:[%s3531 + $0x10] sm:$0xf] %v3485
        %3537 = vst [vmem:[%s3531 + $0x14] sm:$0x1] %v3486
        %3538 = vst [vmem:[%s3531 + $0x18] sm:$0xf] %v3487
        %3539 = vst [vmem:[%s3531 + $0x1c] sm:$0xf] %v3488
        %3540 = vst [vmem:[%s3531 + $0x20] sm:$0x1] %v3489
        %3541 = vst [vmem:[%s3531 + $0x24] sm:$0xf] %v3490
        %3542 = vst [vmem:[%s3531 + $0x28] sm:$0xf] %v3491
        %3543 = vst [vmem:[%s3531 + $0x2c] sm:$0x1] %v3492
        %3544 = vst [vmem:[%s3531 + $0x30] sm:$0xf] %v3493
        %3545 = vst [vmem:[%s3531 + $0x34] sm:$0xf] %v3494
        %3546 = vst [vmem:[%s3531 + $0x38] sm:$0x1] %v3495
        %3547 = vst [vmem:[%s3531 + $0x3c] sm:$0xf] %v3496
        %3548 = vst [vmem:[%s3531 + $0x40] sm:$0xf] %v3497
        %3549 = vst [vmem:[%s3531 + $0x44] sm:$0x1] %v3498
        %3550 = vst [vmem:[%s3531 + $0x48] sm:$0xf] %v3499
        %3551 = vst [vmem:[%s3531 + $0x4c] sm:$0xf] %v3500
        %3552 = vst [vmem:[%s3531 + $0x50] sm:$0x1] %v3501
        %3553 = vst [vmem:[%s3531 + $0x54] sm:$0xf] %v3502
        %3554 = vst [vmem:[%s3531 + $0x58] sm:$0xf] %v3503
        %3555 = vst [vmem:[%s3531 + $0x5c] sm:$0x1] %v3504
      $region40: #{resnet_block_forward.2} parent=27 // loop_footer
        %s3212 = sadd.s32 1, %s3208
      $region41: #{resnet_block_forward.2} parent=27 // loop_footer_branch
        %3207 = sbr.rel target = $region37
      $region42: #{resnet_block_forward.2} parent=27 // loop_exit
        _
      %s3556 = scalar_lea.vmem %s180, 24
      %v3557 = vld [vmem:[%s3556] sm:$0xf]
      %v3558 = vld [vmem:[%s3556 + $0x4] sm:$0xf]
      %v3559 = vld [vmem:[%s3556 + $0x8] sm:$0x1]
      %3560 = vst [vmem:[%s180] sm:$0xf] %v3557
      %3561 = vst [vmem:[%s180 + $0x4] sm:$0xf] %v3558
      %3562 = vst [vmem:[%s180 + $0x8] sm:$0x1] %v3559
      %s3563 = scalar_lea.vmem %s180, 180
      %v3564 = vld [vmem:[%s3563] sm:$0xf]
      %v3565 = vld [vmem:[%s3563 + $0x4] sm:$0xf]
      %v3566 = vld [vmem:[%s3563 + $0x8] sm:$0x1]
      %s3567 = scalar_lea.vmem %s180, 204
      %3568 = vst [vmem:[%s3567] sm:$0xf] %v3564
      %3569 = vst [vmem:[%s3567 + $0x4] sm:$0xf] %v3565
      %3570 = vst [vmem:[%s3567 + $0x8] sm:$0x1] %v3566
      %p3571 = scmp.lt.s32.totalorder %s17, 1
      %s3572 = scalar_select %p3571, %s17, 1
      %p3573 = scmp.lt.s32.totalorder %s18, 0
      %s3574 = scalar_select %p3573, %s18, 0
      %s3575 = smul.addr %s3572, 54
      %s3576 = sadd.s32 %s3574, %s3575
      %s3577 = smul.addr %s3576, 4
      %s3578 = scalar_lea.vmem %s2, %s3577
      // Predicated region
      $region43: #{resnet_block_forward.2} parent=27 // pred_check
        %p3579 = pneg %p97
      $region44: #{resnet_block_forward.2} parent=27 // pred_check_branch
        %3581 = sbr.rel (%p3579) target = $region46
      $region45: #{resnet_block_forward.2} parent=27 // pred_region
        _
      $region46: #{resnet_block_forward.2} parent=27 // pred_fallthru
        _
    $region28: #{resnet_block_forward.2} parent=5 // pred_fallthru
      _
    %p3582 = scmp.le.s32.totalorder 2, %s8
    // Predicated region
    $region47: #{resnet_block_forward.2} parent=5 // pred_check
      %p3583 = pneg %p3582
    $region48: #{resnet_block_forward.2} parent=5 // pred_check_branch
      %3585 = sbr.rel (%p3583) target = $region50
    $region49: #{resnet_block_forward.2} parent=5 // pred_region
      %s3586 = ssub.s32 %s8, 2
      // Predicated region
      $region51: #{resnet_block_forward.2} parent=49 // pred_check
        %p3587 = pneg %p103
      $region52: #{resnet_block_forward.2} parent=49 // pred_check_branch
        %3589 = sbr.rel (%p3587) target = $region54
      $region53: #{resnet_block_forward.2} parent=49 // pred_region
        %p3590 = scmp.lt.s32.totalorder %s19, 1
        %s3591 = scalar_select %p3590, %s19, 1
        %p3592 = scmp.lt.s32.totalorder %s20, 0
        %s3593 = scalar_select %p3592, %s20, 0
        %s3594 = smul.addr %s3591, 54
        %s3595 = sadd.s32 %s3593, %s3594
        %s3596 = smul.addr %s3595, 4
        %s3597 = scalar_lea.vmem %s2, %s3596
      $region54: #{resnet_block_forward.2} parent=49 // pred_fallthru
        _
    $region50: #{resnet_block_forward.2} parent=5 // pred_fallthru
      _
  $region6: #{resnet_block_forward.2} parent=0 // loop_footer
    %s12 = sadd.s32 1, %s8
  $region7: #{resnet_block_forward.2} parent=0 // loop_footer_branch
    %7 = sbr.rel target = $region3
  $region8: #{resnet_block_forward.2} parent=0 // loop_exit
    _

</llo_original>
